<compile_context>
chip_gen: v5e
topology: v5e:2x2
jax: 0.10.0
libtpu: 0.0.40
codegen_flags: <defaults>
</compile_context>

<pallas_src>
import functools

import jax
import jax.numpy as jnp
from jax.experimental import pallas as pl
from jax.experimental.pallas import tpu as pltpu


# ---------------------------------------------------------------------------
# In-kernel math helpers (operate on 2-D (tokens, features) f32 tiles in VMEM)
# ---------------------------------------------------------------------------
def _layernorm(x, w, b, eps=1e-6):   # nanofm custom LayerNorm default eps = 1e-6
    mu = jnp.mean(x, axis=-1, keepdims=True)
    var = jnp.mean(jnp.square(x - mu), axis=-1, keepdims=True)
    return (x - mu) * jax.lax.rsqrt(var + eps) * w + b


def _softmax(s):
    e = jnp.exp(s - jnp.max(s, axis=-1, keepdims=True))
    return e * pl.reciprocal(jnp.sum(e, axis=-1, keepdims=True), approx=True)


def _mha_into(o_scr, q, k, v, wo_ref, bt, lq, lk, num_heads, head_dim, mxu_dtype):
    """Multi-head attention on already-projected (q pre-scaled) activations, with the
    output projection folded per head and accumulated:
        out = sum_h softmax(q_h k_h^T) v_h @ Wo[h*hd:(h+1)*hd, :]
    Writes the (bt*lq, D_out) result into the f32 VMEM scratch `o_scr`
    (all stores are full lane width; no concatenate, no k transpose materialized)."""
    d_out = wo_ref.shape[1]
    for b in range(bt):
        qb = q[b * lq:(b + 1) * lq, :]
        kb = k[b * lk:(b + 1) * lk, :]
        vb = v[b * lk:(b + 1) * lk, :]
        acc = jnp.zeros((lq, d_out), jnp.float32)
        # NOTE: head_dim=64 column *reads* are half a lane tile; stores stay 128-wide.
        # TODO(synk): process heads in lane-aligned 128-wide pairs when head_dim < 128.
        for h in range(num_heads):
            sl = slice(h * head_dim, (h + 1) * head_dim)
            qh = qb[:, sl].astype(mxu_dtype)
            kh = kb[:, sl].astype(mxu_dtype)
            # scores = q_h @ k_h^T via dot_general contracting last dims (no .T relayout).
            s = jax.lax.dot_general(qh, kh, (((1,), (1,)), ((), ())),
                                    preferred_element_type=jnp.float32)
            p = _softmax(s)
            o_h = jnp.dot(p.astype(mxu_dtype), vb[:, sl].astype(mxu_dtype),
                          preferred_element_type=jnp.float32)
            acc = acc + jnp.dot(o_h.astype(mxu_dtype), wo_ref[sl, :],
                                preferred_element_type=jnp.float32)
        o_scr[b * lq:(b + 1) * lq, :] = acc


# ---------------------------------------------------------------------------
# Pallas kernel: one full decoder block for `block_b` batch elements per grid step.
# ---------------------------------------------------------------------------
def decoder_block_kernel(x_ref, ctx_ref,
                         n1w_ref, n1b_ref, qnw_ref, qnb_ref, cnw_ref, cnb_ref,
                         n2w_ref, n2b_ref,
                         wqkv_ref, wo_ref, cwq_ref, cwkv_ref, cwo_ref,
                         w1_ref, b1_ref, w2_ref, b2_ref,
                         out_ref, o_scr,
                         *, num_heads, head_dim, mxu_dtype):
    bt, l, d = x_ref.shape
    m = ctx_ref.shape[1]
    f32 = jnp.float32

    # Flatten (bt, L, D) -> (bt*L, D): fills MXU sublanes for projections / MLP.
    x = x_ref[...].astype(f32).reshape(bt * l, d)
    ctx = ctx_ref[...].astype(f32).reshape(bt * m, d)

    # --- self-attention + residual -----------------------------------------
    xn = _layernorm(x, n1w_ref[...], n1b_ref[...])
    qkv = jnp.dot(xn.astype(mxu_dtype), wqkv_ref[...],
                  preferred_element_type=f32)                 # (bt*L, 3D), q columns pre-scaled
    _mha_into(o_scr, qkv[:, :d], qkv[:, d:2 * d], qkv[:, 2 * d:], wo_ref,
              bt, l, l, num_heads, head_dim, mxu_dtype)
    x_a = o_scr[...] + x

    # --- cross-attention + residual ------------------------------------------
    qn = _layernorm(x_a, qnw_ref[...], qnb_ref[...])
    cn = _layernorm(ctx, cnw_ref[...], cnb_ref[...])
    q = jnp.dot(qn.astype(mxu_dtype), cwq_ref[...], preferred_element_type=f32)
    kv = jnp.dot(cn.astype(mxu_dtype), cwkv_ref[...], preferred_element_type=f32)  # (bt*M, 2D)
    # torch view(B,M,2,H,hd).permute(...) ordering: first D columns are k, last D are v.
    _mha_into(o_scr, q, kv[:, :d], kv[:, d:], cwo_ref,
              bt, l, m, num_heads, head_dim, mxu_dtype)
    x_b = o_scr[...] + x_a

    # --- MLP + residual -------------------------------------------------------
    xn2 = _layernorm(x_b, n2w_ref[...], n2b_ref[...])
    h = jnp.dot(xn2.astype(mxu_dtype), w1_ref[...], preferred_element_type=f32) + b1_ref[...]
    # tanh-approx GELU rides the EUP slot; <~1e-3 numeric delta vs torch's exact erf GELU.
    h = jax.nn.gelu(h, approximate=True)
    y = jnp.dot(h.astype(mxu_dtype), w2_ref[...], preferred_element_type=f32) + b2_ref[...] + x_b

    out_ref[...] = y.reshape(bt, l, d).astype(out_ref.dtype)
    # TODO(synk): optional sa_mask / xa_mask (masked_fill with -inf before softmax) not wired in;
    # this kernel matches the mask=None forward path only.


# ---------------------------------------------------------------------------
# Wrapper
# ---------------------------------------------------------------------------
def _choose_block_b(batch, seq_len, target_rows=256):
    """Smallest divisor of `batch` whose token count (bt*L) reaches ~target_rows."""
    want = min(batch, max(1, -(-target_rows // seq_len)))
    for bt in range(want, batch + 1):
        if batch % bt == 0:
            return bt
    return batch


def decoder_block(x, context, params, *, head_dim, block_b=None, mxu_dtype=jnp.bfloat16):
    B, L, D = x.shape
    _, M, _ = context.shape
    num_heads = D // head_dim
    scale = head_dim ** -0.5
    hidden = params["w1"].shape[1]

    if block_b is None:
        block_b = _choose_block_b(B, L)
    assert B % block_b == 0
    grid = (B // block_b,)

    f32 = jnp.float32
    # Fuse q/k/v into one (D, 3D) weight; fold the softmax scale into the q columns (and cwq)
    # once here, so the kernel never scales the per-head score matrices.
    wqkv = jnp.concatenate(
        [params["wq"] * scale, params["wk"], params["wv"]], axis=1).astype(mxu_dtype)
    weights = [
        params["n1w"].astype(f32), params["n1b"].astype(f32),
        params["qnw"].astype(f32), params["qnb"].astype(f32),
        params["cnw"].astype(f32), params["cnb"].astype(f32),
        params["n2w"].astype(f32), params["n2b"].astype(f32),
        wqkv,
        params["wo"].astype(mxu_dtype),
        (params["cwq"] * scale).astype(mxu_dtype),
        params["cwkv"].astype(mxu_dtype),
        params["cwo"].astype(mxu_dtype),
        params["w1"].astype(mxu_dtype), params["b1"].astype(f32),
        params["w2"].astype(mxu_dtype), params["b2"].astype(f32),
    ]

    kernel = functools.partial(decoder_block_kernel, num_heads=num_heads,
                               head_dim=head_dim, mxu_dtype=mxu_dtype)

    # Explicit VMEM budget: weights (x2 worst case), double-buffered x/ctx/out blocks,
    # f32 attention scratch, plus headroom for in-kernel intermediates (qkv, MLP hidden, ...).
    weight_bytes = sum(int(w.size) * w.dtype.itemsize for w in weights)
    io_bytes = 2 * (2 * block_b * L * D + block_b * M * D) * x.dtype.itemsize
    scratch_bytes = 4 * block_b * L * D
    act_bytes = 4 * (block_b * L * (11 * D + hidden) + 3 * block_b * M * D)
    vmem_limit = int(min(100 << 20,
                         max(32 << 20,
                             2 * weight_bytes + io_bytes + scratch_bytes
                             + act_bytes + (4 << 20))))

    flops = (2 * B * L * D * 3 * D            # self qkv
             + 4 * B * L * L * D              # self scores + pv
             + 2 * B * L * D * D              # self out proj
             + 2 * B * L * D * D              # cross q
             + 2 * B * M * D * 2 * D          # cross kv
             + 4 * B * L * M * D              # cross scores + pv
             + 2 * B * L * D * D              # cross out proj
             + 4 * B * L * D * hidden)        # mlp
    transcendentals = B * num_heads * (L * L + L * M) + B * L * hidden
    bytes_accessed = (2 * B * L * D + B * M * D) * x.dtype.itemsize + weight_bytes

    def make_call(perf_hints):
        def wspec(w):
            nd = w.ndim
            idx = lambda b, _nd=nd: (0,) * _nd
            if perf_hints:
                # Weight block index is grid-invariant -> single-buffer to halve weight VMEM.
                return pl.BlockSpec(w.shape, idx, pipeline_mode=pl.Buffered(buffer_count=1))
            return pl.BlockSpec(w.shape, idx)

        in_specs = [
            pl.BlockSpec((block_b, L, D), lambda b: (b, 0, 0)),
            pl.BlockSpec((block_b, M, D), lambda b: (b, 0, 0)),
        ] + [wspec(w) for w in weights]

        if perf_hints:
            cparams = pltpu.CompilerParams(dimension_semantics=("parallel",),
                                           vmem_limit_bytes=vmem_limit)
            cost = pl.CostEstimate(flops=int(flops),
                                   transcendentals=int(transcendentals),
                                   bytes_accessed=int(bytes_accessed))
        else:
            cparams = pltpu.CompilerParams(dimension_semantics=("parallel",))
            cost = None

        return pl.pallas_call(
            kernel,
            out_shape=jax.ShapeDtypeStruct((B, L, D), x.dtype),
            grid=grid,
            in_specs=in_specs,
            out_specs=pl.BlockSpec((block_b, L, D), lambda b: (b, 0, 0)),
            scratch_shapes=[pltpu.VMEM((block_b * L, D), jnp.float32)],
            compiler_params=cparams,
            cost_estimate=cost,
        )

    try:
        return make_call(True)(x, context, *weights)
    except Exception:
        # Fallback: if pl.Buffered(1) / CostEstimate hints are unsupported on this jax
        # version, rebuild with default (double-buffered) weight specs. Same kernel/math.
        return make_call(False)(x, context, *weights)


# ---------------------------------------------------------------------------
# Pure-JAX f32 reference (torch-faithful math: separate q/k/v weights, exact GELU).
# ---------------------------------------------------------------------------
def reference(x, context, params, *, head_dim):
    D = x.shape[-1]
    H = D // head_dim
    scale = head_dim ** -0.5
    p = params

    def ln(t, w, b):
        mu = jnp.mean(t, -1, keepdims=True)
        var = jnp.mean(jnp.square(t - mu), -1, keepdims=True)
        return (t - mu) * jax.lax.rsqrt(var + 1e-6) * w + b

    def mha(q, k, v, wo):
        lq, lk = q.shape[0], k.shape[0]
        qh = q.reshape(lq, H, head_dim).transpose(1, 0, 2)
        kh = k.reshape(lk, H, head_dim).transpose(1, 0, 2)
        vh = v.reshape(lk, H, head_dim).transpose(1, 0, 2)
        s = jnp.einsum("hld,hmd->hlm", qh, kh) * scale
        pr = jax.nn.softmax(s, axis=-1)
        o = jnp.einsum("hlm,hmd->hld", pr, vh).transpose(1, 0, 2).reshape(lq, D)
        return o @ wo

    def one(xb, cb):
        xn = ln(xb, p["n1w"], p["n1b"])
        x_a = mha(xn @ p["wq"], xn @ p["wk"], xn @ p["wv"], p["wo"]) + xb
        qn = ln(x_a, p["qnw"], p["qnb"])
        cn = ln(cb, p["cnw"], p["cnb"])
        kv = cn @ p["cwkv"]
        x_b = mha(qn @ p["cwq"], kv[:, :D], kv[:, D:], p["cwo"]) + x_a
        xn2 = ln(x_b, p["n2w"], p["n2b"])
        h = jax.nn.gelu(xn2 @ p["w1"] + p["b1"], approximate=False)
        return h @ p["w2"] + p["b2"] + x_b

    return jax.vmap(one)(x, context)


# ---------------------------------------------------------------------------
# Deterministic parameter construction (synthetic weights, no checkpoints).
# All linear weights are stored pre-transposed: y = x @ W  (W has shape (in, out)).
# ---------------------------------------------------------------------------
def init_params(key, dim, head_dim, mlp_ratio=4.0):
    hidden = int(dim * mlp_ratio)
    ks = jax.random.split(key, 12)
    f32 = jnp.float32
    std = 0.02
    return {
        # LayerNorms (use_bias=False -> bias buffer is zeros, still added)
        "n1w": jnp.ones((1, dim), f32),  "n1b": jnp.zeros((1, dim), f32),
        "qnw": jnp.ones((1, dim), f32),  "qnb": jnp.zeros((1, dim), f32),
        "cnw": jnp.ones((1, dim), f32),  "cnb": jnp.zeros((1, dim), f32),
        "n2w": jnp.ones((1, dim), f32),  "n2b": jnp.zeros((1, dim), f32),
        # Self-attention projections (no bias since use_bias=False)
        "wq": std * jax.random.normal(ks[0], (dim, dim), f32),
        "wk": std * jax.random.normal(ks[1], (dim, dim), f32),
        "wv": std * jax.random.normal(ks[2], (dim, dim), f32),
        "wo": std * jax.random.normal(ks[3], (dim, dim), f32),
        # Cross-attention projections (kv: k columns first, then v)
        "cwq":  std * jax.random.normal(ks[4], (dim, dim), f32),
        "cwkv": std * jax.random.normal(ks[5], (dim, 2 * dim), f32),
        "cwo":  std * jax.random.normal(ks[6], (dim, dim), f32),
        # MLP (nanofm Mlp ignores its `bias` arg -> nn.Linear default bias=True)
        "w1": std * jax.random.normal(ks[7], (dim, hidden), f32),
        "b1": std * jax.random.normal(ks[8], (1, hidden), f32),
        "w2": std * jax.random.normal(ks[9], (hidden, dim), f32),
        "b2": std * jax.random.normal(ks[10], (1, dim), f32),
    }


if __name__ == "__main__":
    B, L, M = 2, 8, 16
    dim, head_dim = 128, 64          # num_heads = 2, mlp_hidden = 512

    key = jax.random.PRNGKey(0)
    kx, kc, kp = jax.random.split(key, 3)
    x = jax.random.normal(kx, (B, L, dim), jnp.float32)
    context = jax.random.normal(kc, (B, M, dim), jnp.float32)
    params = init_params(kp, dim, head_dim)

    out = jax.block_until_ready(decoder_block(x, context, params, head_dim=head_dim))
    ref = jax.block_until_ready(reference(x, context, params, head_dim=head_dim))

    assert out.shape == (B, L, dim)
    # Tolerance accounts for bf16 MXU operands + approx reciprocal / tanh GELU vs the f32
    # erf-GELU reference (observed error is ~1e-3; residual path stays f32).
    assert jnp.allclose(out, ref, rtol=3e-2, atol=3e-2), (
        f"max abs err {jnp.max(jnp.abs(out - ref))}")

    print("KERNEL_OK")
</pallas_src>

<mosaic_0001>
module attributes {stable_mosaic.version = 11 : i64} {
  func.func @decoder_block_kernel(%arg0: i32, %arg1: memref<2x8x128xf32, #tpu.memory_space<vmem>>, %arg2: memref<2x16x128xf32, #tpu.memory_space<vmem>>, %arg3: memref<1x128xf32, #tpu.memory_space<vmem>>, %arg4: memref<1x128xf32, #tpu.memory_space<vmem>>, %arg5: memref<1x128xf32, #tpu.memory_space<vmem>>, %arg6: memref<1x128xf32, #tpu.memory_space<vmem>>, %arg7: memref<1x128xf32, #tpu.memory_space<vmem>>, %arg8: memref<1x128xf32, #tpu.memory_space<vmem>>, %arg9: memref<1x128xf32, #tpu.memory_space<vmem>>, %arg10: memref<1x128xf32, #tpu.memory_space<vmem>>, %arg11: memref<128x384xbf16, #tpu.memory_space<vmem>>, %arg12: memref<128x128xbf16, #tpu.memory_space<vmem>>, %arg13: memref<128x128xbf16, #tpu.memory_space<vmem>>, %arg14: memref<128x256xbf16, #tpu.memory_space<vmem>>, %arg15: memref<128x128xbf16, #tpu.memory_space<vmem>>, %arg16: memref<128x512xbf16, #tpu.memory_space<vmem>>, %arg17: memref<1x512xf32, #tpu.memory_space<vmem>>, %arg18: memref<512x128xbf16, #tpu.memory_space<vmem>>, %arg19: memref<1x128xf32, #tpu.memory_space<vmem>>, %arg20: memref<2x8x128xf32, #tpu.memory_space<vmem>>, %arg21: memref<16x128xf32, #tpu.memory_space<vmem>>) attributes {dimension_semantics = [#tpu.dimension_semantics<parallel>], iteration_bounds = array<i64: 1>, scalar_prefetch = 0 : i64, scratch_operands = 1 : i64, tpu.core_type = #tpu.core_type<tc>, window_params = [{transform_indices = @transform_0, window_bounds = array<i64: 2, 8, 128>}, {transform_indices = @transform_1, window_bounds = array<i64: 2, 16, 128>}, {pipeline_mode = #tpu.pipeline_mode<synchronous>, transform_indices = @transform_2, window_bounds = array<i64: 1, 128>}, {pipeline_mode = #tpu.pipeline_mode<synchronous>, transform_indices = @transform_3, window_bounds = array<i64: 1, 128>}, {pipeline_mode = #tpu.pipeline_mode<synchronous>, transform_indices = @transform_4, window_bounds = array<i64: 1, 128>}, {pipeline_mode = #tpu.pipeline_mode<synchronous>, transform_indices = @transform_5, window_bounds = array<i64: 1, 128>}, {pipeline_mode = #tpu.pipeline_mode<synchronous>, transform_indices = @transform_6, window_bounds = array<i64: 1, 128>}, {pipeline_mode = #tpu.pipeline_mode<synchronous>, transform_indices = @transform_7, window_bounds = array<i64: 1, 128>}, {pipeline_mode = #tpu.pipeline_mode<synchronous>, transform_indices = @transform_8, window_bounds = array<i64: 1, 128>}, {pipeline_mode = #tpu.pipeline_mode<synchronous>, transform_indices = @transform_9, window_bounds = array<i64: 1, 128>}, {pipeline_mode = #tpu.pipeline_mode<synchronous>, transform_indices = @transform_10, window_bounds = array<i64: 128, 384>}, {pipeline_mode = #tpu.pipeline_mode<synchronous>, transform_indices = @transform_11, window_bounds = array<i64: 128, 128>}, {pipeline_mode = #tpu.pipeline_mode<synchronous>, transform_indices = @transform_12, window_bounds = array<i64: 128, 128>}, {pipeline_mode = #tpu.pipeline_mode<synchronous>, transform_indices = @transform_13, window_bounds = array<i64: 128, 256>}, {pipeline_mode = #tpu.pipeline_mode<synchronous>, transform_indices = @transform_14, window_bounds = array<i64: 128, 128>}, {pipeline_mode = #tpu.pipeline_mode<synchronous>, transform_indices = @transform_15, window_bounds = array<i64: 128, 512>}, {pipeline_mode = #tpu.pipeline_mode<synchronous>, transform_indices = @transform_16, window_bounds = array<i64: 1, 512>}, {pipeline_mode = #tpu.pipeline_mode<synchronous>, transform_indices = @transform_17, window_bounds = array<i64: 512, 128>}, {pipeline_mode = #tpu.pipeline_mode<synchronous>, transform_indices = @transform_18, window_bounds = array<i64: 1, 128>}, {transform_indices = @transform_19, window_bounds = array<i64: 2, 8, 128>}]} {
    %c0 = arith.constant 0 : index
    %c0_0 = arith.constant 0 : index
    %c0_1 = arith.constant 0 : index
    %0 = vector.load %arg1[%c0, %c0_0, %c0_1] : memref<2x8x128xf32, #tpu.memory_space<vmem>>, vector<2x8x128xf32>
    %1 = vector.shape_cast %0 : vector<2x8x128xf32> to vector<16x128xf32>
    %c0_2 = arith.constant 0 : index
    %c0_3 = arith.constant 0 : index
    %c0_4 = arith.constant 0 : index
    %2 = vector.load %arg2[%c0_2, %c0_3, %c0_4] : memref<2x16x128xf32, #tpu.memory_space<vmem>>, vector<2x16x128xf32>
    %3 = vector.shape_cast %2 : vector<2x16x128xf32> to vector<32x128xf32>
    %c0_5 = arith.constant 0 : index
    %c0_6 = arith.constant 0 : index
    %4 = vector.load %arg3[%c0_5, %c0_6] : memref<1x128xf32, #tpu.memory_space<vmem>>, vector<1x128xf32>
    %c0_7 = arith.constant 0 : index
    %c0_8 = arith.constant 0 : index
    %5 = vector.load %arg4[%c0_7, %c0_8] : memref<1x128xf32, #tpu.memory_space<vmem>>, vector<1x128xf32>
    %cst = arith.constant dense<0.000000e+00> : vector<16xf32>
    %6 = vector.multi_reduction <add>, %1, %cst [1] : vector<16x128xf32> to vector<16xf32>
    %7 = vector.shape_cast %6 : vector<16xf32> to vector<16x1xf32>
    %cst_9 = arith.constant 1.280000e+02 : f32
    %8 = vector.broadcast %cst_9 : f32 to vector<16x1xf32>
    %9 = arith.divf %7, %8 : vector<16x1xf32>
    %10 = vector.broadcast %9 : vector<16x1xf32> to vector<16x128xf32>
    %11 = arith.subf %1, %10 : vector<16x128xf32>
    %12 = arith.mulf %11, %11 : vector<16x128xf32>
    %cst_10 = arith.constant dense<0.000000e+00> : vector<16xf32>
    %13 = vector.multi_reduction <add>, %12, %cst_10 [1] : vector<16x128xf32> to vector<16xf32>
    %14 = vector.shape_cast %13 : vector<16xf32> to vector<16x1xf32>
    %cst_11 = arith.constant 1.280000e+02 : f32
    %15 = vector.broadcast %cst_11 : f32 to vector<16x1xf32>
    %16 = arith.divf %14, %15 : vector<16x1xf32>
    %17 = vector.broadcast %9 : vector<16x1xf32> to vector<16x128xf32>
    %18 = arith.subf %1, %17 : vector<16x128xf32>
    %cst_12 = arith.constant 9.99999997E-7 : f32
    %19 = vector.broadcast %cst_12 : f32 to vector<16x1xf32>
    %20 = arith.addf %16, %19 : vector<16x1xf32>
    %21 = math.rsqrt %20 : vector<16x1xf32>
    %22 = vector.broadcast %21 : vector<16x1xf32> to vector<16x128xf32>
    %23 = arith.mulf %18, %22 : vector<16x128xf32>
    %24 = vector.broadcast %4 : vector<1x128xf32> to vector<16x128xf32>
    %25 = arith.mulf %23, %24 : vector<16x128xf32>
    %26 = vector.broadcast %5 : vector<1x128xf32> to vector<16x128xf32>
    %27 = arith.addf %25, %26 : vector<16x128xf32>
    %28 = arith.truncf %27 : vector<16x128xf32> to vector<16x128xbf16>
    %c0_13 = arith.constant 0 : index
    %c0_14 = arith.constant 0 : index
    %29 = vector.load %arg11[%c0_13, %c0_14] : memref<128x384xbf16, #tpu.memory_space<vmem>>, vector<128x384xbf16>
    %cst_15 = arith.constant dense<0.000000e+00> : vector<16x384xf32>
    %30 = tpu.matmul %28, %29, %cst_15 {dimension_numbers = #tpu.dot_dimension_numbers<[1], [0], [0], [1], [0, 0, 1, 1], [], []>} : vector<16x128xbf16>, vector<128x384xbf16>, vector<16x384xf32> -> vector<16x384xf32>
    %31 = vector.extract_strided_slice %30 {offsets = [0, 0], sizes = [16, 128], strides = [1, 1]} : vector<16x384xf32> to vector<16x128xf32>
    %32 = vector.extract_strided_slice %30 {offsets = [0, 128], sizes = [16, 128], strides = [1, 1]} : vector<16x384xf32> to vector<16x128xf32>
    %33 = vector.extract_strided_slice %30 {offsets = [0, 256], sizes = [16, 128], strides = [1, 1]} : vector<16x384xf32> to vector<16x128xf32>
    %34 = vector.extract_strided_slice %31 {offsets = [0, 0], sizes = [8, 128], strides = [1, 1]} : vector<16x128xf32> to vector<8x128xf32>
    %35 = vector.extract_strided_slice %32 {offsets = [0, 0], sizes = [8, 128], strides = [1, 1]} : vector<16x128xf32> to vector<8x128xf32>
    %36 = vector.extract_strided_slice %33 {offsets = [0, 0], sizes = [8, 128], strides = [1, 1]} : vector<16x128xf32> to vector<8x128xf32>
    %cst_16 = arith.constant 0.000000e+00 : f32
    %37 = vector.broadcast %cst_16 : f32 to vector<8x128xf32>
    %38 = vector.extract_strided_slice %34 {offsets = [0, 0], sizes = [8, 64], strides = [1, 1]} : vector<8x128xf32> to vector<8x64xf32>
    %39 = arith.truncf %38 : vector<8x64xf32> to vector<8x64xbf16>
    %40 = vector.extract_strided_slice %35 {offsets = [0, 0], sizes = [8, 64], strides = [1, 1]} : vector<8x128xf32> to vector<8x64xf32>
    %41 = arith.truncf %40 : vector<8x64xf32> to vector<8x64xbf16>
    %cst_17 = arith.constant dense<0.000000e+00> : vector<8x8xf32>
    %42 = tpu.matmul %39, %41, %cst_17 {dimension_numbers = #tpu.dot_dimension_numbers<[1], [1], [0], [0], [0, 0, 1, 0], [], []>} : vector<8x64xbf16>, vector<8x64xbf16>, vector<8x8xf32> -> vector<8x8xf32>
    %cst_18 = arith.constant dense<0xFF800000> : vector<8xf32>
    %43 = vector.multi_reduction <maximumf>, %42, %cst_18 [1] : vector<8x8xf32> to vector<8xf32>
    %44 = vector.shape_cast %43 : vector<8xf32> to vector<8x1xf32>
    %45 = vector.broadcast %44 : vector<8x1xf32> to vector<8x8xf32>
    %46 = arith.subf %42, %45 : vector<8x8xf32>
    %47 = math.exp %46 : vector<8x8xf32>
    %cst_19 = arith.constant dense<0.000000e+00> : vector<8xf32>
    %48 = vector.multi_reduction <add>, %47, %cst_19 [1] : vector<8x8xf32> to vector<8xf32>
    %49 = vector.shape_cast %48 : vector<8xf32> to vector<8x1xf32>
    %50 = tpu.reciprocal %49 {approx = true} : vector<8x1xf32> -> vector<8x1xf32>
    %51 = vector.broadcast %50 : vector<8x1xf32> to vector<8x8xf32>
    %52 = arith.mulf %47, %51 : vector<8x8xf32>
    %53 = arith.truncf %52 : vector<8x8xf32> to vector<8x8xbf16>
    %54 = vector.extract_strided_slice %36 {offsets = [0, 0], sizes = [8, 64], strides = [1, 1]} : vector<8x128xf32> to vector<8x64xf32>
    %55 = arith.truncf %54 : vector<8x64xf32> to vector<8x64xbf16>
    %cst_20 = arith.constant dense<0.000000e+00> : vector<8x64xf32>
    %56 = tpu.matmul %53, %55, %cst_20 {dimension_numbers = #tpu.dot_dimension_numbers<[1], [0], [0], [1], [0, 0, 1, 1], [], []>} : vector<8x8xbf16>, vector<8x64xbf16>, vector<8x64xf32> -> vector<8x64xf32>
    %57 = arith.truncf %56 : vector<8x64xf32> to vector<8x64xbf16>
    %c0_21 = arith.constant 0 : index
    %c0_22 = arith.constant 0 : index
    %58 = vector.load %arg12[%c0_21, %c0_22] : memref<128x128xbf16, #tpu.memory_space<vmem>>, vector<64x128xbf16>
    %cst_23 = arith.constant dense<0.000000e+00> : vector<8x128xf32>
    %59 = tpu.matmul %57, %58, %cst_23 {dimension_numbers = #tpu.dot_dimension_numbers<[1], [0], [0], [1], [0, 0, 1, 1], [], []>} : vector<8x64xbf16>, vector<64x128xbf16>, vector<8x128xf32> -> vector<8x128xf32>
    %60 = arith.addf %37, %59 : vector<8x128xf32>
    %61 = vector.extract_strided_slice %34 {offsets = [0, 64], sizes = [8, 64], strides = [1, 1]} : vector<8x128xf32> to vector<8x64xf32>
    %62 = arith.truncf %61 : vector<8x64xf32> to vector<8x64xbf16>
    %63 = vector.extract_strided_slice %35 {offsets = [0, 64], sizes = [8, 64], strides = [1, 1]} : vector<8x128xf32> to vector<8x64xf32>
    %64 = arith.truncf %63 : vector<8x64xf32> to vector<8x64xbf16>
    %cst_24 = arith.constant dense<0.000000e+00> : vector<8x8xf32>
    %65 = tpu.matmul %62, %64, %cst_24 {dimension_numbers = #tpu.dot_dimension_numbers<[1], [1], [0], [0], [0, 0, 1, 0], [], []>} : vector<8x64xbf16>, vector<8x64xbf16>, vector<8x8xf32> -> vector<8x8xf32>
    %cst_25 = arith.constant dense<0xFF800000> : vector<8xf32>
    %66 = vector.multi_reduction <maximumf>, %65, %cst_25 [1] : vector<8x8xf32> to vector<8xf32>
    %67 = vector.shape_cast %66 : vector<8xf32> to vector<8x1xf32>
    %68 = vector.broadcast %67 : vector<8x1xf32> to vector<8x8xf32>
    %69 = arith.subf %65, %68 : vector<8x8xf32>
    %70 = math.exp %69 : vector<8x8xf32>
    %cst_26 = arith.constant dense<0.000000e+00> : vector<8xf32>
    %71 = vector.multi_reduction <add>, %70, %cst_26 [1] : vector<8x8xf32> to vector<8xf32>
    %72 = vector.shape_cast %71 : vector<8xf32> to vector<8x1xf32>
    %73 = tpu.reciprocal %72 {approx = true} : vector<8x1xf32> -> vector<8x1xf32>
    %74 = vector.broadcast %73 : vector<8x1xf32> to vector<8x8xf32>
    %75 = arith.mulf %70, %74 : vector<8x8xf32>
    %76 = arith.truncf %75 : vector<8x8xf32> to vector<8x8xbf16>
    %77 = vector.extract_strided_slice %36 {offsets = [0, 64], sizes = [8, 64], strides = [1, 1]} : vector<8x128xf32> to vector<8x64xf32>
    %78 = arith.truncf %77 : vector<8x64xf32> to vector<8x64xbf16>
    %cst_27 = arith.constant dense<0.000000e+00> : vector<8x64xf32>
    %79 = tpu.matmul %76, %78, %cst_27 {dimension_numbers = #tpu.dot_dimension_numbers<[1], [0], [0], [1], [0, 0, 1, 1], [], []>} : vector<8x8xbf16>, vector<8x64xbf16>, vector<8x64xf32> -> vector<8x64xf32>
    %80 = arith.truncf %79 : vector<8x64xf32> to vector<8x64xbf16>
    %c64 = arith.constant 64 : index
    %c0_28 = arith.constant 0 : index
    %81 = vector.load %arg12[%c64, %c0_28] : memref<128x128xbf16, #tpu.memory_space<vmem>>, vector<64x128xbf16>
    %cst_29 = arith.constant dense<0.000000e+00> : vector<8x128xf32>
    %82 = tpu.matmul %80, %81, %cst_29 {dimension_numbers = #tpu.dot_dimension_numbers<[1], [0], [0], [1], [0, 0, 1, 1], [], []>} : vector<8x64xbf16>, vector<64x128xbf16>, vector<8x128xf32> -> vector<8x128xf32>
    %83 = arith.addf %60, %82 : vector<8x128xf32>
    %c0_30 = arith.constant 0 : index
    %c0_31 = arith.constant 0 : index
    %84 = vector.load %arg21[%c0_30, %c0_31] : memref<16x128xf32, #tpu.memory_space<vmem>>, vector<8x128xf32>
    tpu.vector_store %arg21[%c0_30, %c0_31], %83 {strides = array<i32>} : memref<16x128xf32, #tpu.memory_space<vmem>>, vector<8x128xf32>,
    %85 = vector.extract_strided_slice %31 {offsets = [8, 0], sizes = [8, 128], strides = [1, 1]} : vector<16x128xf32> to vector<8x128xf32>
    %86 = vector.extract_strided_slice %32 {offsets = [8, 0], sizes = [8, 128], strides = [1, 1]} : vector<16x128xf32> to vector<8x128xf32>
    %87 = vector.extract_strided_slice %33 {offsets = [8, 0], sizes = [8, 128], strides = [1, 1]} : vector<16x128xf32> to vector<8x128xf32>
    %cst_32 = arith.constant 0.000000e+00 : f32
    %88 = vector.broadcast %cst_32 : f32 to vector<8x128xf32>
    %89 = vector.extract_strided_slice %85 {offsets = [0, 0], sizes = [8, 64], strides = [1, 1]} : vector<8x128xf32> to vector<8x64xf32>
    %90 = arith.truncf %89 : vector<8x64xf32> to vector<8x64xbf16>
    %91 = vector.extract_strided_slice %86 {offsets = [0, 0], sizes = [8, 64], strides = [1, 1]} : vector<8x128xf32> to vector<8x64xf32>
    %92 = arith.truncf %91 : vector<8x64xf32> to vector<8x64xbf16>
    %cst_33 = arith.constant dense<0.000000e+00> : vector<8x8xf32>
    %93 = tpu.matmul %90, %92, %cst_33 {dimension_numbers = #tpu.dot_dimension_numbers<[1], [1], [0], [0], [0, 0, 1, 0], [], []>} : vector<8x64xbf16>, vector<8x64xbf16>, vector<8x8xf32> -> vector<8x8xf32>
    %cst_34 = arith.constant dense<0xFF800000> : vector<8xf32>
    %94 = vector.multi_reduction <maximumf>, %93, %cst_34 [1] : vector<8x8xf32> to vector<8xf32>
    %95 = vector.shape_cast %94 : vector<8xf32> to vector<8x1xf32>
    %96 = vector.broadcast %95 : vector<8x1xf32> to vector<8x8xf32>
    %97 = arith.subf %93, %96 : vector<8x8xf32>
    %98 = math.exp %97 : vector<8x8xf32>
    %cst_35 = arith.constant dense<0.000000e+00> : vector<8xf32>
    %99 = vector.multi_reduction <add>, %98, %cst_35 [1] : vector<8x8xf32> to vector<8xf32>
    %100 = vector.shape_cast %99 : vector<8xf32> to vector<8x1xf32>
    %101 = tpu.reciprocal %100 {approx = true} : vector<8x1xf32> -> vector<8x1xf32>
    %102 = vector.broadcast %101 : vector<8x1xf32> to vector<8x8xf32>
    %103 = arith.mulf %98, %102 : vector<8x8xf32>
    %104 = arith.truncf %103 : vector<8x8xf32> to vector<8x8xbf16>
    %105 = vector.extract_strided_slice %87 {offsets = [0, 0], sizes = [8, 64], strides = [1, 1]} : vector<8x128xf32> to vector<8x64xf32>
    %106 = arith.truncf %105 : vector<8x64xf32> to vector<8x64xbf16>
    %cst_36 = arith.constant dense<0.000000e+00> : vector<8x64xf32>
    %107 = tpu.matmul %104, %106, %cst_36 {dimension_numbers = #tpu.dot_dimension_numbers<[1], [0], [0], [1], [0, 0, 1, 1], [], []>} : vector<8x8xbf16>, vector<8x64xbf16>, vector<8x64xf32> -> vector<8x64xf32>
    %108 = arith.truncf %107 : vector<8x64xf32> to vector<8x64xbf16>
    %c0_37 = arith.constant 0 : index
    %c0_38 = arith.constant 0 : index
    %109 = vector.load %arg12[%c0_37, %c0_38] : memref<128x128xbf16, #tpu.memory_space<vmem>>, vector<64x128xbf16>
    %cst_39 = arith.constant dense<0.000000e+00> : vector<8x128xf32>
    %110 = tpu.matmul %108, %109, %cst_39 {dimension_numbers = #tpu.dot_dimension_numbers<[1], [0], [0], [1], [0, 0, 1, 1], [], []>} : vector<8x64xbf16>, vector<64x128xbf16>, vector<8x128xf32> -> vector<8x128xf32>
    %111 = arith.addf %88, %110 : vector<8x128xf32>
    %112 = vector.extract_strided_slice %85 {offsets = [0, 64], sizes = [8, 64], strides = [1, 1]} : vector<8x128xf32> to vector<8x64xf32>
    %113 = arith.truncf %112 : vector<8x64xf32> to vector<8x64xbf16>
    %114 = vector.extract_strided_slice %86 {offsets = [0, 64], sizes = [8, 64], strides = [1, 1]} : vector<8x128xf32> to vector<8x64xf32>
    %115 = arith.truncf %114 : vector<8x64xf32> to vector<8x64xbf16>
    %cst_40 = arith.constant dense<0.000000e+00> : vector<8x8xf32>
    %116 = tpu.matmul %113, %115, %cst_40 {dimension_numbers = #tpu.dot_dimension_numbers<[1], [1], [0], [0], [0, 0, 1, 0], [], []>} : vector<8x64xbf16>, vector<8x64xbf16>, vector<8x8xf32> -> vector<8x8xf32>
    %cst_41 = arith.constant dense<0xFF800000> : vector<8xf32>
    %117 = vector.multi_reduction <maximumf>, %116, %cst_41 [1] : vector<8x8xf32> to vector<8xf32>
    %118 = vector.shape_cast %117 : vector<8xf32> to vector<8x1xf32>
    %119 = vector.broadcast %118 : vector<8x1xf32> to vector<8x8xf32>
    %120 = arith.subf %116, %119 : vector<8x8xf32>
    %121 = math.exp %120 : vector<8x8xf32>
    %cst_42 = arith.constant dense<0.000000e+00> : vector<8xf32>
    %122 = vector.multi_reduction <add>, %121, %cst_42 [1] : vector<8x8xf32> to vector<8xf32>
    %123 = vector.shape_cast %122 : vector<8xf32> to vector<8x1xf32>
    %124 = tpu.reciprocal %123 {approx = true} : vector<8x1xf32> -> vector<8x1xf32>
    %125 = vector.broadcast %124 : vector<8x1xf32> to vector<8x8xf32>
    %126 = arith.mulf %121, %125 : vector<8x8xf32>
    %127 = arith.truncf %126 : vector<8x8xf32> to vector<8x8xbf16>
    %128 = vector.extract_strided_slice %87 {offsets = [0, 64], sizes = [8, 64], strides = [1, 1]} : vector<8x128xf32> to vector<8x64xf32>
    %129 = arith.truncf %128 : vector<8x64xf32> to vector<8x64xbf16>
    %cst_43 = arith.constant dense<0.000000e+00> : vector<8x64xf32>
    %130 = tpu.matmul %127, %129, %cst_43 {dimension_numbers = #tpu.dot_dimension_numbers<[1], [0], [0], [1], [0, 0, 1, 1], [], []>} : vector<8x8xbf16>, vector<8x64xbf16>, vector<8x64xf32> -> vector<8x64xf32>
    %131 = arith.truncf %130 : vector<8x64xf32> to vector<8x64xbf16>
    %c64_44 = arith.constant 64 : index
    %c0_45 = arith.constant 0 : index
    %132 = vector.load %arg12[%c64_44, %c0_45] : memref<128x128xbf16, #tpu.memory_space<vmem>>, vector<64x128xbf16>
    %cst_46 = arith.constant dense<0.000000e+00> : vector<8x128xf32>
    %133 = tpu.matmul %131, %132, %cst_46 {dimension_numbers = #tpu.dot_dimension_numbers<[1], [0], [0], [1], [0, 0, 1, 1], [], []>} : vector<8x64xbf16>, vector<64x128xbf16>, vector<8x128xf32> -> vector<8x128xf32>
    %134 = arith.addf %111, %133 : vector<8x128xf32>
    %c8 = arith.constant 8 : index
    %c0_47 = arith.constant 0 : index
    %135 = vector.load %arg21[%c8, %c0_47] : memref<16x128xf32, #tpu.memory_space<vmem>>, vector<8x128xf32>
    tpu.vector_store %arg21[%c8, %c0_47], %134 {strides = array<i32>} : memref<16x128xf32, #tpu.memory_space<vmem>>, vector<8x128xf32>,
    %c0_48 = arith.constant 0 : index
    %c0_49 = arith.constant 0 : index
    %136 = vector.load %arg21[%c0_48, %c0_49] : memref<16x128xf32, #tpu.memory_space<vmem>>, vector<16x128xf32>
    %137 = arith.addf %136, %1 : vector<16x128xf32>
    %c0_50 = arith.constant 0 : index
    %c0_51 = arith.constant 0 : index
    %138 = vector.load %arg5[%c0_50, %c0_51] : memref<1x128xf32, #tpu.memory_space<vmem>>, vector<1x128xf32>
    %c0_52 = arith.constant 0 : index
    %c0_53 = arith.constant 0 : index
    %139 = vector.load %arg6[%c0_52, %c0_53] : memref<1x128xf32, #tpu.memory_space<vmem>>, vector<1x128xf32>
    %cst_54 = arith.constant dense<0.000000e+00> : vector<16xf32>
    %140 = vector.multi_reduction <add>, %137, %cst_54 [1] : vector<16x128xf32> to vector<16xf32>
    %141 = vector.shape_cast %140 : vector<16xf32> to vector<16x1xf32>
    %cst_55 = arith.constant 1.280000e+02 : f32
    %142 = vector.broadcast %cst_55 : f32 to vector<16x1xf32>
    %143 = arith.divf %141, %142 : vector<16x1xf32>
    %144 = vector.broadcast %143 : vector<16x1xf32> to vector<16x128xf32>
    %145 = arith.subf %137, %144 : vector<16x128xf32>
    %146 = arith.mulf %145, %145 : vector<16x128xf32>
    %cst_56 = arith.constant dense<0.000000e+00> : vector<16xf32>
    %147 = vector.multi_reduction <add>, %146, %cst_56 [1] : vector<16x128xf32> to vector<16xf32>
    %148 = vector.shape_cast %147 : vector<16xf32> to vector<16x1xf32>
    %cst_57 = arith.constant 1.280000e+02 : f32
    %149 = vector.broadcast %cst_57 : f32 to vector<16x1xf32>
    %150 = arith.divf %148, %149 : vector<16x1xf32>
    %151 = vector.broadcast %143 : vector<16x1xf32> to vector<16x128xf32>
    %152 = arith.subf %137, %151 : vector<16x128xf32>
    %cst_58 = arith.constant 9.99999997E-7 : f32
    %153 = vector.broadcast %cst_58 : f32 to vector<16x1xf32>
    %154 = arith.addf %150, %153 : vector<16x1xf32>
    %155 = math.rsqrt %154 : vector<16x1xf32>
    %156 = vector.broadcast %155 : vector<16x1xf32> to vector<16x128xf32>
    %157 = arith.mulf %152, %156 : vector<16x128xf32>
    %158 = vector.broadcast %138 : vector<1x128xf32> to vector<16x128xf32>
    %159 = arith.mulf %157, %158 : vector<16x128xf32>
    %160 = vector.broadcast %139 : vector<1x128xf32> to vector<16x128xf32>
    %161 = arith.addf %159, %160 : vector<16x128xf32>
    %c0_59 = arith.constant 0 : index
    %c0_60 = arith.constant 0 : index
    %162 = vector.load %arg7[%c0_59, %c0_60] : memref<1x128xf32, #tpu.memory_space<vmem>>, vector<1x128xf32>
    %c0_61 = arith.constant 0 : index
    %c0_62 = arith.constant 0 : index
    %163 = vector.load %arg8[%c0_61, %c0_62] : memref<1x128xf32, #tpu.memory_space<vmem>>, vector<1x128xf32>
    %cst_63 = arith.constant dense<0.000000e+00> : vector<32xf32>
    %164 = vector.multi_reduction <add>, %3, %cst_63 [1] : vector<32x128xf32> to vector<32xf32>
    %165 = vector.shape_cast %164 : vector<32xf32> to vector<32x1xf32>
    %cst_64 = arith.constant 1.280000e+02 : f32
    %166 = vector.broadcast %cst_64 : f32 to vector<32x1xf32>
    %167 = arith.divf %165, %166 : vector<32x1xf32>
    %168 = vector.broadcast %167 : vector<32x1xf32> to vector<32x128xf32>
    %169 = arith.subf %3, %168 : vector<32x128xf32>
    %170 = arith.mulf %169, %169 : vector<32x128xf32>
    %cst_65 = arith.constant dense<0.000000e+00> : vector<32xf32>
    %171 = vector.multi_reduction <add>, %170, %cst_65 [1] : vector<32x128xf32> to vector<32xf32>
    %172 = vector.shape_cast %171 : vector<32xf32> to vector<32x1xf32>
    %cst_66 = arith.constant 1.280000e+02 : f32
    %173 = vector.broadcast %cst_66 : f32 to vector<32x1xf32>
    %174 = arith.divf %172, %173 : vector<32x1xf32>
    %175 = vector.broadcast %167 : vector<32x1xf32> to vector<32x128xf32>
    %176 = arith.subf %3, %175 : vector<32x128xf32>
    %cst_67 = arith.constant 9.99999997E-7 : f32
    %177 = vector.broadcast %cst_67 : f32 to vector<32x1xf32>
    %178 = arith.addf %174, %177 : vector<32x1xf32>
    %179 = math.rsqrt %178 : vector<32x1xf32>
    %180 = vector.broadcast %179 : vector<32x1xf32> to vector<32x128xf32>
    %181 = arith.mulf %176, %180 : vector<32x128xf32>
    %182 = vector.broadcast %162 : vector<1x128xf32> to vector<32x128xf32>
    %183 = arith.mulf %181, %182 : vector<32x128xf32>
    %184 = vector.broadcast %163 : vector<1x128xf32> to vector<32x128xf32>
    %185 = arith.addf %183, %184 : vector<32x128xf32>
    %186 = arith.truncf %161 : vector<16x128xf32> to vector<16x128xbf16>
    %c0_68 = arith.constant 0 : index
    %c0_69 = arith.constant 0 : index
    %187 = vector.load %arg13[%c0_68, %c0_69] : memref<128x128xbf16, #tpu.memory_space<vmem>>, vector<128x128xbf16>
    %cst_70 = arith.constant dense<0.000000e+00> : vector<16x128xf32>
    %188 = tpu.matmul %186, %187, %cst_70 {dimension_numbers = #tpu.dot_dimension_numbers<[1], [0], [0], [1], [0, 0, 1, 1], [], []>} : vector<16x128xbf16>, vector<128x128xbf16>, vector<16x128xf32> -> vector<16x128xf32>
    %189 = arith.truncf %185 : vector<32x128xf32> to vector<32x128xbf16>
    %c0_71 = arith.constant 0 : index
    %c0_72 = arith.constant 0 : index
    %190 = vector.load %arg14[%c0_71, %c0_72] : memref<128x256xbf16, #tpu.memory_space<vmem>>, vector<128x256xbf16>
    %cst_73 = arith.constant dense<0.000000e+00> : vector<32x256xf32>
    %191 = tpu.matmul %189, %190, %cst_73 {dimension_numbers = #tpu.dot_dimension_numbers<[1], [0], [0], [1], [0, 0, 1, 1], [], []>} : vector<32x128xbf16>, vector<128x256xbf16>, vector<32x256xf32> -> vector<32x256xf32>
    %192 = vector.extract_strided_slice %191 {offsets = [0, 0], sizes = [32, 128], strides = [1, 1]} : vector<32x256xf32> to vector<32x128xf32>
    %193 = vector.extract_strided_slice %191 {offsets = [0, 128], sizes = [32, 128], strides = [1, 1]} : vector<32x256xf32> to vector<32x128xf32>
    %194 = vector.extract_strided_slice %188 {offsets = [0, 0], sizes = [8, 128], strides = [1, 1]} : vector<16x128xf32> to vector<8x128xf32>
    %195 = vector.extract_strided_slice %192 {offsets = [0, 0], sizes = [16, 128], strides = [1, 1]} : vector<32x128xf32> to vector<16x128xf32>
    %196 = vector.extract_strided_slice %193 {offsets = [0, 0], sizes = [16, 128], strides = [1, 1]} : vector<32x128xf32> to vector<16x128xf32>
    %cst_74 = arith.constant 0.000000e+00 : f32
    %197 = vector.broadcast %cst_74 : f32 to vector<8x128xf32>
    %198 = vector.extract_strided_slice %194 {offsets = [0, 0], sizes = [8, 64], strides = [1, 1]} : vector<8x128xf32> to vector<8x64xf32>
    %199 = arith.truncf %198 : vector<8x64xf32> to vector<8x64xbf16>
    %200 = vector.extract_strided_slice %195 {offsets = [0, 0], sizes = [16, 64], strides = [1, 1]} : vector<16x128xf32> to vector<16x64xf32>
    %201 = arith.truncf %200 : vector<16x64xf32> to vector<16x64xbf16>
    %cst_75 = arith.constant dense<0.000000e+00> : vector<8x16xf32>
    %202 = tpu.matmul %199, %201, %cst_75 {dimension_numbers = #tpu.dot_dimension_numbers<[1], [1], [0], [0], [0, 0, 1, 0], [], []>} : vector<8x64xbf16>, vector<16x64xbf16>, vector<8x16xf32> -> vector<8x16xf32>
    %cst_76 = arith.constant dense<0xFF800000> : vector<8xf32>
    %203 = vector.multi_reduction <maximumf>, %202, %cst_76 [1] : vector<8x16xf32> to vector<8xf32>
    %204 = vector.shape_cast %203 : vector<8xf32> to vector<8x1xf32>
    %205 = vector.broadcast %204 : vector<8x1xf32> to vector<8x16xf32>
    %206 = arith.subf %202, %205 : vector<8x16xf32>
    %207 = math.exp %206 : vector<8x16xf32>
    %cst_77 = arith.constant dense<0.000000e+00> : vector<8xf32>
    %208 = vector.multi_reduction <add>, %207, %cst_77 [1] : vector<8x16xf32> to vector<8xf32>
    %209 = vector.shape_cast %208 : vector<8xf32> to vector<8x1xf32>
    %210 = tpu.reciprocal %209 {approx = true} : vector<8x1xf32> -> vector<8x1xf32>
    %211 = vector.broadcast %210 : vector<8x1xf32> to vector<8x16xf32>
    %212 = arith.mulf %207, %211 : vector<8x16xf32>
    %213 = arith.truncf %212 : vector<8x16xf32> to vector<8x16xbf16>
    %214 = vector.extract_strided_slice %196 {offsets = [0, 0], sizes = [16, 64], strides = [1, 1]} : vector<16x128xf32> to vector<16x64xf32>
    %215 = arith.truncf %214 : vector<16x64xf32> to vector<16x64xbf16>
    %cst_78 = arith.constant dense<0.000000e+00> : vector<8x64xf32>
    %216 = tpu.matmul %213, %215, %cst_78 {dimension_numbers = #tpu.dot_dimension_numbers<[1], [0], [0], [1], [0, 0, 1, 1], [], []>} : vector<8x16xbf16>, vector<16x64xbf16>, vector<8x64xf32> -> vector<8x64xf32>
    %217 = arith.truncf %216 : vector<8x64xf32> to vector<8x64xbf16>
    %c0_79 = arith.constant 0 : index
    %c0_80 = arith.constant 0 : index
    %218 = vector.load %arg15[%c0_79, %c0_80] : memref<128x128xbf16, #tpu.memory_space<vmem>>, vector<64x128xbf16>
    %cst_81 = arith.constant dense<0.000000e+00> : vector<8x128xf32>
    %219 = tpu.matmul %217, %218, %cst_81 {dimension_numbers = #tpu.dot_dimension_numbers<[1], [0], [0], [1], [0, 0, 1, 1], [], []>} : vector<8x64xbf16>, vector<64x128xbf16>, vector<8x128xf32> -> vector<8x128xf32>
    %220 = arith.addf %197, %219 : vector<8x128xf32>
    %221 = vector.extract_strided_slice %194 {offsets = [0, 64], sizes = [8, 64], strides = [1, 1]} : vector<8x128xf32> to vector<8x64xf32>
    %222 = arith.truncf %221 : vector<8x64xf32> to vector<8x64xbf16>
    %223 = vector.extract_strided_slice %195 {offsets = [0, 64], sizes = [16, 64], strides = [1, 1]} : vector<16x128xf32> to vector<16x64xf32>
    %224 = arith.truncf %223 : vector<16x64xf32> to vector<16x64xbf16>
    %cst_82 = arith.constant dense<0.000000e+00> : vector<8x16xf32>
    %225 = tpu.matmul %222, %224, %cst_82 {dimension_numbers = #tpu.dot_dimension_numbers<[1], [1], [0], [0], [0, 0, 1, 0], [], []>} : vector<8x64xbf16>, vector<16x64xbf16>, vector<8x16xf32> -> vector<8x16xf32>
    %cst_83 = arith.constant dense<0xFF800000> : vector<8xf32>
    %226 = vector.multi_reduction <maximumf>, %225, %cst_83 [1] : vector<8x16xf32> to vector<8xf32>
    %227 = vector.shape_cast %226 : vector<8xf32> to vector<8x1xf32>
    %228 = vector.broadcast %227 : vector<8x1xf32> to vector<8x16xf32>
    %229 = arith.subf %225, %228 : vector<8x16xf32>
    %230 = math.exp %229 : vector<8x16xf32>
    %cst_84 = arith.constant dense<0.000000e+00> : vector<8xf32>
    %231 = vector.multi_reduction <add>, %230, %cst_84 [1] : vector<8x16xf32> to vector<8xf32>
    %232 = vector.shape_cast %231 : vector<8xf32> to vector<8x1xf32>
    %233 = tpu.reciprocal %232 {approx = true} : vector<8x1xf32> -> vector<8x1xf32>
    %234 = vector.broadcast %233 : vector<8x1xf32> to vector<8x16xf32>
    %235 = arith.mulf %230, %234 : vector<8x16xf32>
    %236 = arith.truncf %235 : vector<8x16xf32> to vector<8x16xbf16>
    %237 = vector.extract_strided_slice %196 {offsets = [0, 64], sizes = [16, 64], strides = [1, 1]} : vector<16x128xf32> to vector<16x64xf32>
    %238 = arith.truncf %237 : vector<16x64xf32> to vector<16x64xbf16>
    %cst_85 = arith.constant dense<0.000000e+00> : vector<8x64xf32>
    %239 = tpu.matmul %236, %238, %cst_85 {dimension_numbers = #tpu.dot_dimension_numbers<[1], [0], [0], [1], [0, 0, 1, 1], [], []>} : vector<8x16xbf16>, vector<16x64xbf16>, vector<8x64xf32> -> vector<8x64xf32>
    %240 = arith.truncf %239 : vector<8x64xf32> to vector<8x64xbf16>
    %c64_86 = arith.constant 64 : index
    %c0_87 = arith.constant 0 : index
    %241 = vector.load %arg15[%c64_86, %c0_87] : memref<128x128xbf16, #tpu.memory_space<vmem>>, vector<64x128xbf16>
    %cst_88 = arith.constant dense<0.000000e+00> : vector<8x128xf32>
    %242 = tpu.matmul %240, %241, %cst_88 {dimension_numbers = #tpu.dot_dimension_numbers<[1], [0], [0], [1], [0, 0, 1, 1], [], []>} : vector<8x64xbf16>, vector<64x128xbf16>, vector<8x128xf32> -> vector<8x128xf32>
    %243 = arith.addf %220, %242 : vector<8x128xf32>
    %c0_89 = arith.constant 0 : index
    %c0_90 = arith.constant 0 : index
    %244 = vector.load %arg21[%c0_89, %c0_90] : memref<16x128xf32, #tpu.memory_space<vmem>>, vector<8x128xf32>
    tpu.vector_store %arg21[%c0_89, %c0_90], %243 {strides = array<i32>} : memref<16x128xf32, #tpu.memory_space<vmem>>, vector<8x128xf32>,
    %245 = vector.extract_strided_slice %188 {offsets = [8, 0], sizes = [8, 128], strides = [1, 1]} : vector<16x128xf32> to vector<8x128xf32>
    %246 = vector.extract_strided_slice %192 {offsets = [16, 0], sizes = [16, 128], strides = [1, 1]} : vector<32x128xf32> to vector<16x128xf32>
    %247 = vector.extract_strided_slice %193 {offsets = [16, 0], sizes = [16, 128], strides = [1, 1]} : vector<32x128xf32> to vector<16x128xf32>
    %cst_91 = arith.constant 0.000000e+00 : f32
    %248 = vector.broadcast %cst_91 : f32 to vector<8x128xf32>
    %249 = vector.extract_strided_slice %245 {offsets = [0, 0], sizes = [8, 64], strides = [1, 1]} : vector<8x128xf32> to vector<8x64xf32>
    %250 = arith.truncf %249 : vector<8x64xf32> to vector<8x64xbf16>
    %251 = vector.extract_strided_slice %246 {offsets = [0, 0], sizes = [16, 64], strides = [1, 1]} : vector<16x128xf32> to vector<16x64xf32>
    %252 = arith.truncf %251 : vector<16x64xf32> to vector<16x64xbf16>
    %cst_92 = arith.constant dense<0.000000e+00> : vector<8x16xf32>
    %253 = tpu.matmul %250, %252, %cst_92 {dimension_numbers = #tpu.dot_dimension_numbers<[1], [1], [0], [0], [0, 0, 1, 0], [], []>} : vector<8x64xbf16>, vector<16x64xbf16>, vector<8x16xf32> -> vector<8x16xf32>
    %cst_93 = arith.constant dense<0xFF800000> : vector<8xf32>
    %254 = vector.multi_reduction <maximumf>, %253, %cst_93 [1] : vector<8x16xf32> to vector<8xf32>
    %255 = vector.shape_cast %254 : vector<8xf32> to vector<8x1xf32>
    %256 = vector.broadcast %255 : vector<8x1xf32> to vector<8x16xf32>
    %257 = arith.subf %253, %256 : vector<8x16xf32>
    %258 = math.exp %257 : vector<8x16xf32>
    %cst_94 = arith.constant dense<0.000000e+00> : vector<8xf32>
    %259 = vector.multi_reduction <add>, %258, %cst_94 [1] : vector<8x16xf32> to vector<8xf32>
    %260 = vector.shape_cast %259 : vector<8xf32> to vector<8x1xf32>
    %261 = tpu.reciprocal %260 {approx = true} : vector<8x1xf32> -> vector<8x1xf32>
    %262 = vector.broadcast %261 : vector<8x1xf32> to vector<8x16xf32>
    %263 = arith.mulf %258, %262 : vector<8x16xf32>
    %264 = arith.truncf %263 : vector<8x16xf32> to vector<8x16xbf16>
    %265 = vector.extract_strided_slice %247 {offsets = [0, 0], sizes = [16, 64], strides = [1, 1]} : vector<16x128xf32> to vector<16x64xf32>
    %266 = arith.truncf %265 : vector<16x64xf32> to vector<16x64xbf16>
    %cst_95 = arith.constant dense<0.000000e+00> : vector<8x64xf32>
    %267 = tpu.matmul %264, %266, %cst_95 {dimension_numbers = #tpu.dot_dimension_numbers<[1], [0], [0], [1], [0, 0, 1, 1], [], []>} : vector<8x16xbf16>, vector<16x64xbf16>, vector<8x64xf32> -> vector<8x64xf32>
    %268 = arith.truncf %267 : vector<8x64xf32> to vector<8x64xbf16>
    %c0_96 = arith.constant 0 : index
    %c0_97 = arith.constant 0 : index
    %269 = vector.load %arg15[%c0_96, %c0_97] : memref<128x128xbf16, #tpu.memory_space<vmem>>, vector<64x128xbf16>
    %cst_98 = arith.constant dense<0.000000e+00> : vector<8x128xf32>
    %270 = tpu.matmul %268, %269, %cst_98 {dimension_numbers = #tpu.dot_dimension_numbers<[1], [0], [0], [1], [0, 0, 1, 1], [], []>} : vector<8x64xbf16>, vector<64x128xbf16>, vector<8x128xf32> -> vector<8x128xf32>
    %271 = arith.addf %248, %270 : vector<8x128xf32>
    %272 = vector.extract_strided_slice %245 {offsets = [0, 64], sizes = [8, 64], strides = [1, 1]} : vector<8x128xf32> to vector<8x64xf32>
    %273 = arith.truncf %272 : vector<8x64xf32> to vector<8x64xbf16>
    %274 = vector.extract_strided_slice %246 {offsets = [0, 64], sizes = [16, 64], strides = [1, 1]} : vector<16x128xf32> to vector<16x64xf32>
    %275 = arith.truncf %274 : vector<16x64xf32> to vector<16x64xbf16>
    %cst_99 = arith.constant dense<0.000000e+00> : vector<8x16xf32>
    %276 = tpu.matmul %273, %275, %cst_99 {dimension_numbers = #tpu.dot_dimension_numbers<[1], [1], [0], [0], [0, 0, 1, 0], [], []>} : vector<8x64xbf16>, vector<16x64xbf16>, vector<8x16xf32> -> vector<8x16xf32>
    %cst_100 = arith.constant dense<0xFF800000> : vector<8xf32>
    %277 = vector.multi_reduction <maximumf>, %276, %cst_100 [1] : vector<8x16xf32> to vector<8xf32>
    %278 = vector.shape_cast %277 : vector<8xf32> to vector<8x1xf32>
    %279 = vector.broadcast %278 : vector<8x1xf32> to vector<8x16xf32>
    %280 = arith.subf %276, %279 : vector<8x16xf32>
    %281 = math.exp %280 : vector<8x16xf32>
    %cst_101 = arith.constant dense<0.000000e+00> : vector<8xf32>
    %282 = vector.multi_reduction <add>, %281, %cst_101 [1] : vector<8x16xf32> to vector<8xf32>
    %283 = vector.shape_cast %282 : vector<8xf32> to vector<8x1xf32>
    %284 = tpu.reciprocal %283 {approx = true} : vector<8x1xf32> -> vector<8x1xf32>
    %285 = vector.broadcast %284 : vector<8x1xf32> to vector<8x16xf32>
    %286 = arith.mulf %281, %285 : vector<8x16xf32>
    %287 = arith.truncf %286 : vector<8x16xf32> to vector<8x16xbf16>
    %288 = vector.extract_strided_slice %247 {offsets = [0, 64], sizes = [16, 64], strides = [1, 1]} : vector<16x128xf32> to vector<16x64xf32>
    %289 = arith.truncf %288 : vector<16x64xf32> to vector<16x64xbf16>
    %cst_102 = arith.constant dense<0.000000e+00> : vector<8x64xf32>
    %290 = tpu.matmul %287, %289, %cst_102 {dimension_numbers = #tpu.dot_dimension_numbers<[1], [0], [0], [1], [0, 0, 1, 1], [], []>} : vector<8x16xbf16>, vector<16x64xbf16>, vector<8x64xf32> -> vector<8x64xf32>
    %291 = arith.truncf %290 : vector<8x64xf32> to vector<8x64xbf16>
    %c64_103 = arith.constant 64 : index
    %c0_104 = arith.constant 0 : index
    %292 = vector.load %arg15[%c64_103, %c0_104] : memref<128x128xbf16, #tpu.memory_space<vmem>>, vector<64x128xbf16>
    %cst_105 = arith.constant dense<0.000000e+00> : vector<8x128xf32>
    %293 = tpu.matmul %291, %292, %cst_105 {dimension_numbers = #tpu.dot_dimension_numbers<[1], [0], [0], [1], [0, 0, 1, 1], [], []>} : vector<8x64xbf16>, vector<64x128xbf16>, vector<8x128xf32> -> vector<8x128xf32>
    %294 = arith.addf %271, %293 : vector<8x128xf32>
    %c8_106 = arith.constant 8 : index
    %c0_107 = arith.constant 0 : index
    %295 = vector.load %arg21[%c8_106, %c0_107] : memref<16x128xf32, #tpu.memory_space<vmem>>, vector<8x128xf32>
    tpu.vector_store %arg21[%c8_106, %c0_107], %294 {strides = array<i32>} : memref<16x128xf32, #tpu.memory_space<vmem>>, vector<8x128xf32>,
    %c0_108 = arith.constant 0 : index
    %c0_109 = arith.constant 0 : index
    %296 = vector.load %arg21[%c0_108, %c0_109] : memref<16x128xf32, #tpu.memory_space<vmem>>, vector<16x128xf32>
    %297 = arith.addf %296, %137 : vector<16x128xf32>
    %c0_110 = arith.constant 0 : index
    %c0_111 = arith.constant 0 : index
    %298 = vector.load %arg9[%c0_110, %c0_111] : memref<1x128xf32, #tpu.memory_space<vmem>>, vector<1x128xf32>
    %c0_112 = arith.constant 0 : index
    %c0_113 = arith.constant 0 : index
    %299 = vector.load %arg10[%c0_112, %c0_113] : memref<1x128xf32, #tpu.memory_space<vmem>>, vector<1x128xf32>
    %cst_114 = arith.constant dense<0.000000e+00> : vector<16xf32>
    %300 = vector.multi_reduction <add>, %297, %cst_114 [1] : vector<16x128xf32> to vector<16xf32>
    %301 = vector.shape_cast %300 : vector<16xf32> to vector<16x1xf32>
    %cst_115 = arith.constant 1.280000e+02 : f32
    %302 = vector.broadcast %cst_115 : f32 to vector<16x1xf32>
    %303 = arith.divf %301, %302 : vector<16x1xf32>
    %304 = vector.broadcast %303 : vector<16x1xf32> to vector<16x128xf32>
    %305 = arith.subf %297, %304 : vector<16x128xf32>
    %306 = arith.mulf %305, %305 : vector<16x128xf32>
    %cst_116 = arith.constant dense<0.000000e+00> : vector<16xf32>
    %307 = vector.multi_reduction <add>, %306, %cst_116 [1] : vector<16x128xf32> to vector<16xf32>
    %308 = vector.shape_cast %307 : vector<16xf32> to vector<16x1xf32>
    %cst_117 = arith.constant 1.280000e+02 : f32
    %309 = vector.broadcast %cst_117 : f32 to vector<16x1xf32>
    %310 = arith.divf %308, %309 : vector<16x1xf32>
    %311 = vector.broadcast %303 : vector<16x1xf32> to vector<16x128xf32>
    %312 = arith.subf %297, %311 : vector<16x128xf32>
    %cst_118 = arith.constant 9.99999997E-7 : f32
    %313 = vector.broadcast %cst_118 : f32 to vector<16x1xf32>
    %314 = arith.addf %310, %313 : vector<16x1xf32>
    %315 = math.rsqrt %314 : vector<16x1xf32>
    %316 = vector.broadcast %315 : vector<16x1xf32> to vector<16x128xf32>
    %317 = arith.mulf %312, %316 : vector<16x128xf32>
    %318 = vector.broadcast %298 : vector<1x128xf32> to vector<16x128xf32>
    %319 = arith.mulf %317, %318 : vector<16x128xf32>
    %320 = vector.broadcast %299 : vector<1x128xf32> to vector<16x128xf32>
    %321 = arith.addf %319, %320 : vector<16x128xf32>
    %322 = arith.truncf %321 : vector<16x128xf32> to vector<16x128xbf16>
    %c0_119 = arith.constant 0 : index
    %c0_120 = arith.constant 0 : index
    %323 = vector.load %arg16[%c0_119, %c0_120] : memref<128x512xbf16, #tpu.memory_space<vmem>>, vector<128x512xbf16>
    %cst_121 = arith.constant dense<0.000000e+00> : vector<16x512xf32>
    %324 = tpu.matmul %322, %323, %cst_121 {dimension_numbers = #tpu.dot_dimension_numbers<[1], [0], [0], [1], [0, 0, 1, 1], [], []>} : vector<16x128xbf16>, vector<128x512xbf16>, vector<16x512xf32> -> vector<16x512xf32>
    %c0_122 = arith.constant 0 : index
    %c0_123 = arith.constant 0 : index
    %325 = vector.load %arg17[%c0_122, %c0_123] : memref<1x512xf32, #tpu.memory_space<vmem>>, vector<1x512xf32>
    %326 = vector.broadcast %325 : vector<1x512xf32> to vector<16x512xf32>
    %327 = arith.addf %324, %326 : vector<16x512xf32>
    %328 = arith.mulf %327, %327 : vector<16x512xf32>
    %329 = arith.mulf %327, %328 : vector<16x512xf32>
    %cst_124 = arith.constant 4.471500e-02 : f32
    %330 = vector.broadcast %cst_124 : f32 to vector<16x512xf32>
    %331 = arith.mulf %330, %329 : vector<16x512xf32>
    %332 = arith.addf %327, %331 : vector<16x512xf32>
    %cst_125 = arith.constant 0.797884583 : f32
    %333 = vector.broadcast %cst_125 : f32 to vector<16x512xf32>
    %334 = arith.mulf %333, %332 : vector<16x512xf32>
    %335 = math.tanh %334 : vector<16x512xf32>
    %cst_126 = arith.constant 1.000000e+00 : f32
    %336 = vector.broadcast %cst_126 : f32 to vector<16x512xf32>
    %337 = arith.addf %336, %335 : vector<16x512xf32>
    %cst_127 = arith.constant 5.000000e-01 : f32
    %338 = vector.broadcast %cst_127 : f32 to vector<16x512xf32>
    %339 = arith.mulf %338, %337 : vector<16x512xf32>
    %340 = arith.mulf %327, %339 : vector<16x512xf32>
    %341 = arith.truncf %340 : vector<16x512xf32> to vector<16x512xbf16>
    %c0_128 = arith.constant 0 : index
    %c0_129 = arith.constant 0 : index
    %342 = vector.load %arg18[%c0_128, %c0_129] : memref<512x128xbf16, #tpu.memory_space<vmem>>, vector<512x128xbf16>
    %cst_130 = arith.constant dense<0.000000e+00> : vector<16x128xf32>
    %343 = tpu.matmul %341, %342, %cst_130 {dimension_numbers = #tpu.dot_dimension_numbers<[1], [0], [0], [1], [0, 0, 1, 1], [], []>} : vector<16x512xbf16>, vector<512x128xbf16>, vector<16x128xf32> -> vector<16x128xf32>
    %c0_131 = arith.constant 0 : index
    %c0_132 = arith.constant 0 : index
    %344 = vector.load %arg19[%c0_131, %c0_132] : memref<1x128xf32, #tpu.memory_space<vmem>>, vector<1x128xf32>
    %345 = vector.broadcast %344 : vector<1x128xf32> to vector<16x128xf32>
    %346 = arith.addf %343, %345 : vector<16x128xf32>
    %347 = arith.addf %346, %297 : vector<16x128xf32>
    %348 = vector.shape_cast %347 : vector<16x128xf32> to vector<2x8x128xf32>
    %c0_133 = arith.constant 0 : index
    %c0_134 = arith.constant 0 : index
    %c0_135 = arith.constant 0 : index
    %349 = vector.load %arg20[%c0_133, %c0_134, %c0_135] : memref<2x8x128xf32, #tpu.memory_space<vmem>>, vector<2x8x128xf32>
    tpu.vector_store %arg20[%c0_133, %c0_134, %c0_135], %348 {strides = array<i32>} : memref<2x8x128xf32, #tpu.memory_space<vmem>>, vector<2x8x128xf32>,
    return
  }
  func.func @transform_0(%arg0: i32) -> (i32, i32, i32) {
    %c0_i32 = arith.constant 0 : i32
    %c0_i32_0 = arith.constant 0 : i32
    %c0_i32_1 = arith.constant 0 : i32
    return %arg0, %c0_i32, %c0_i32_0 : i32, i32, i32
  }
  func.func @transform_1(%arg0: i32) -> (i32, i32, i32) {
    %c0_i32 = arith.constant 0 : i32
    %c0_i32_0 = arith.constant 0 : i32
    %c0_i32_1 = arith.constant 0 : i32
    return %arg0, %c0_i32, %c0_i32_0 : i32, i32, i32
  }
  func.func @transform_2(%arg0: i32) -> (i32, i32) {
    %c0_i32 = arith.constant 0 : i32
    %c0_i32_0 = arith.constant 0 : i32
    %c0_i32_1 = arith.constant 0 : i32
    return %c0_i32, %c0_i32_0 : i32, i32
  }
  func.func @transform_3(%arg0: i32) -> (i32, i32) {
    %c0_i32 = arith.constant 0 : i32
    %c0_i32_0 = arith.constant 0 : i32
    %c0_i32_1 = arith.constant 0 : i32
    return %c0_i32, %c0_i32_0 : i32, i32
  }
  func.func @transform_4(%arg0: i32) -> (i32, i32) {
    %c0_i32 = arith.constant 0 : i32
    %c0_i32_0 = arith.constant 0 : i32
    %c0_i32_1 = arith.constant 0 : i32
    return %c0_i32, %c0_i32_0 : i32, i32
  }
  func.func @transform_5(%arg0: i32) -> (i32, i32) {
    %c0_i32 = arith.constant 0 : i32
    %c0_i32_0 = arith.constant 0 : i32
    %c0_i32_1 = arith.constant 0 : i32
    return %c0_i32, %c0_i32_0 : i32, i32
  }
  func.func @transform_6(%arg0: i32) -> (i32, i32) {
    %c0_i32 = arith.constant 0 : i32
    %c0_i32_0 = arith.constant 0 : i32
    %c0_i32_1 = arith.constant 0 : i32
    return %c0_i32, %c0_i32_0 : i32, i32
  }
  func.func @transform_7(%arg0: i32) -> (i32, i32) {
    %c0_i32 = arith.constant 0 : i32
    %c0_i32_0 = arith.constant 0 : i32
    %c0_i32_1 = arith.constant 0 : i32
    return %c0_i32, %c0_i32_0 : i32, i32
  }
  func.func @transform_8(%arg0: i32) -> (i32, i32) {
    %c0_i32 = arith.constant 0 : i32
    %c0_i32_0 = arith.constant 0 : i32
    %c0_i32_1 = arith.constant 0 : i32
    return %c0_i32, %c0_i32_0 : i32, i32
  }
  func.func @transform_9(%arg0: i32) -> (i32, i32) {
    %c0_i32 = arith.constant 0 : i32
    %c0_i32_0 = arith.constant 0 : i32
    %c0_i32_1 = arith.constant 0 : i32
    return %c0_i32, %c0_i32_0 : i32, i32
  }
  func.func @transform_10(%arg0: i32) -> (i32, i32) {
    %c0_i32 = arith.constant 0 : i32
    %c0_i32_0 = arith.constant 0 : i32
    %c0_i32_1 = arith.constant 0 : i32
    return %c0_i32, %c0_i32_0 : i32, i32
  }
  func.func @transform_11(%arg0: i32) -> (i32, i32) {
    %c0_i32 = arith.constant 0 : i32
    %c0_i32_0 = arith.constant 0 : i32
    %c0_i32_1 = arith.constant 0 : i32
    return %c0_i32, %c0_i32_0 : i32, i32
  }
  func.func @transform_12(%arg0: i32) -> (i32, i32) {
    %c0_i32 = arith.constant 0 : i32
    %c0_i32_0 = arith.constant 0 : i32
    %c0_i32_1 = arith.constant 0 : i32
    return %c0_i32, %c0_i32_0 : i32, i32
  }
  func.func @transform_13(%arg0: i32) -> (i32, i32) {
    %c0_i32 = arith.constant 0 : i32
    %c0_i32_0 = arith.constant 0 : i32
    %c0_i32_1 = arith.constant 0 : i32
    return %c0_i32, %c0_i32_0 : i32, i32
  }
  func.func @transform_14(%arg0: i32) -> (i32, i32) {
    %c0_i32 = arith.constant 0 : i32
    %c0_i32_0 = arith.constant 0 : i32
    %c0_i32_1 = arith.constant 0 : i32
    return %c0_i32, %c0_i32_0 : i32, i32
  }
  func.func @transform_15(%arg0: i32) -> (i32, i32) {
    %c0_i32 = arith.constant 0 : i32
    %c0_i32_0 = arith.constant 0 : i32
    %c0_i32_1 = arith.constant 0 : i32
    return %c0_i32, %c0_i32_0 : i32, i32
  }
  func.func @transform_16(%arg0: i32) -> (i32, i32) {
    %c0_i32 = arith.constant 0 : i32
    %c0_i32_0 = arith.constant 0 : i32
    %c0_i32_1 = arith.constant 0 : i32
    return %c0_i32, %c0_i32_0 : i32, i32
  }
  func.func @transform_17(%arg0: i32) -> (i32, i32) {
    %c0_i32 = arith.constant 0 : i32
    %c0_i32_0 = arith.constant 0 : i32
    %c0_i32_1 = arith.constant 0 : i32
    return %c0_i32, %c0_i32_0 : i32, i32
  }
  func.func @transform_18(%arg0: i32) -> (i32, i32) {
    %c0_i32 = arith.constant 0 : i32
    %c0_i32_0 = arith.constant 0 : i32
    %c0_i32_1 = arith.constant 0 : i32
    return %c0_i32, %c0_i32_0 : i32, i32
  }
  func.func @transform_19(%arg0: i32) -> (i32, i32, i32) {
    %c0_i32 = arith.constant 0 : i32
    %c0_i32_0 = arith.constant 0 : i32
    %c0_i32_1 = arith.constant 0 : i32
    return %arg0, %c0_i32, %c0_i32_0 : i32, i32, i32
  }
}

module attributes {stable_mosaic.version = 11 : i64} {
  func.func @decoder_block_kernel(%arg0: i32, %arg1: memref<2x8x128xf32, #tpu.memory_space<vmem>>, %arg2: memref<2x16x128xf32, #tpu.memory_space<vmem>>, %arg3: memref<1x128xf32, #tpu.memory_space<vmem>>, %arg4: memref<1x128xf32, #tpu.memory_space<vmem>>, %arg5: memref<1x128xf32, #tpu.memory_space<vmem>>, %arg6: memref<1x128xf32, #tpu.memory_space<vmem>>, %arg7: memref<1x128xf32, #tpu.memory_space<vmem>>, %arg8: memref<1x128xf32, #tpu.memory_space<vmem>>, %arg9: memref<1x128xf32, #tpu.memory_space<vmem>>, %arg10: memref<1x128xf32, #tpu.memory_space<vmem>>, %arg11: memref<128x384xbf16, #tpu.memory_space<vmem>>, %arg12: memref<128x128xbf16, #tpu.memory_space<vmem>>, %arg13: memref<128x128xbf16, #tpu.memory_space<vmem>>, %arg14: memref<128x256xbf16, #tpu.memory_space<vmem>>, %arg15: memref<128x128xbf16, #tpu.memory_space<vmem>>, %arg16: memref<128x512xbf16, #tpu.memory_space<vmem>>, %arg17: memref<1x512xf32, #tpu.memory_space<vmem>>, %arg18: memref<512x128xbf16, #tpu.memory_space<vmem>>, %arg19: memref<1x128xf32, #tpu.memory_space<vmem>>, %arg20: memref<2x8x128xf32, #tpu.memory_space<vmem>>, %arg21: memref<16x128xf32, #tpu.memory_space<vmem>>) attributes {dimension_semantics = [#tpu.dimension_semantics<parallel>], iteration_bounds = array<i64: 1>, scalar_prefetch = 0 : i64, scratch_operands = 1 : i64, tpu.core_type = #tpu.core_type<tc>, window_params = [{transform_indices = @transform_0, window_bounds = array<i64: 2, 8, 128>}, {transform_indices = @transform_1, window_bounds = array<i64: 2, 16, 128>}, {pipeline_mode = #tpu.pipeline_mode<synchronous>, transform_indices = @transform_2, window_bounds = array<i64: 1, 128>}, {pipeline_mode = #tpu.pipeline_mode<synchronous>, transform_indices = @transform_3, window_bounds = array<i64: 1, 128>}, {pipeline_mode = #tpu.pipeline_mode<synchronous>, transform_indices = @transform_4, window_bounds = array<i64: 1, 128>}, {pipeline_mode = #tpu.pipeline_mode<synchronous>, transform_indices = @transform_5, window_bounds = array<i64: 1, 128>}, {pipeline_mode = #tpu.pipeline_mode<synchronous>, transform_indices = @transform_6, window_bounds = array<i64: 1, 128>}, {pipeline_mode = #tpu.pipeline_mode<synchronous>, transform_indices = @transform_7, window_bounds = array<i64: 1, 128>}, {pipeline_mode = #tpu.pipeline_mode<synchronous>, transform_indices = @transform_8, window_bounds = array<i64: 1, 128>}, {pipeline_mode = #tpu.pipeline_mode<synchronous>, transform_indices = @transform_9, window_bounds = array<i64: 1, 128>}, {pipeline_mode = #tpu.pipeline_mode<synchronous>, transform_indices = @transform_10, window_bounds = array<i64: 128, 384>}, {pipeline_mode = #tpu.pipeline_mode<synchronous>, transform_indices = @transform_11, window_bounds = array<i64: 128, 128>}, {pipeline_mode = #tpu.pipeline_mode<synchronous>, transform_indices = @transform_12, window_bounds = array<i64: 128, 128>}, {pipeline_mode = #tpu.pipeline_mode<synchronous>, transform_indices = @transform_13, window_bounds = array<i64: 128, 256>}, {pipeline_mode = #tpu.pipeline_mode<synchronous>, transform_indices = @transform_14, window_bounds = array<i64: 128, 128>}, {pipeline_mode = #tpu.pipeline_mode<synchronous>, transform_indices = @transform_15, window_bounds = array<i64: 128, 512>}, {pipeline_mode = #tpu.pipeline_mode<synchronous>, transform_indices = @transform_16, window_bounds = array<i64: 1, 512>}, {pipeline_mode = #tpu.pipeline_mode<synchronous>, transform_indices = @transform_17, window_bounds = array<i64: 512, 128>}, {pipeline_mode = #tpu.pipeline_mode<synchronous>, transform_indices = @transform_18, window_bounds = array<i64: 1, 128>}, {transform_indices = @transform_19, window_bounds = array<i64: 2, 8, 128>}]} {
    %c0 = arith.constant 0 : index
    %c0_0 = arith.constant 0 : index
    %c0_1 = arith.constant 0 : index
    %0 = vector.load %arg1[%c0, %c0_0, %c0_1] : memref<2x8x128xf32, #tpu.memory_space<vmem>>, vector<2x8x128xf32>
    %1 = vector.shape_cast %0 : vector<2x8x128xf32> to vector<16x128xf32>
    %c0_2 = arith.constant 0 : index
    %c0_3 = arith.constant 0 : index
    %c0_4 = arith.constant 0 : index
    %2 = vector.load %arg2[%c0_2, %c0_3, %c0_4] : memref<2x16x128xf32, #tpu.memory_space<vmem>>, vector<2x16x128xf32>
    %3 = vector.shape_cast %2 : vector<2x16x128xf32> to vector<32x128xf32>
    %c0_5 = arith.constant 0 : index
    %c0_6 = arith.constant 0 : index
    %4 = vector.load %arg3[%c0_5, %c0_6] : memref<1x128xf32, #tpu.memory_space<vmem>>, vector<1x128xf32>
    %c0_7 = arith.constant 0 : index
    %c0_8 = arith.constant 0 : index
    %5 = vector.load %arg4[%c0_7, %c0_8] : memref<1x128xf32, #tpu.memory_space<vmem>>, vector<1x128xf32>
    %cst = arith.constant dense<0.000000e+00> : vector<16xf32>
    %6 = vector.multi_reduction <add>, %1, %cst [1] : vector<16x128xf32> to vector<16xf32>
    %7 = vector.shape_cast %6 : vector<16xf32> to vector<16x1xf32>
    %cst_9 = arith.constant 1.280000e+02 : f32
    %8 = vector.broadcast %cst_9 : f32 to vector<16x1xf32>
    %9 = arith.divf %7, %8 : vector<16x1xf32>
    %10 = vector.broadcast %9 : vector<16x1xf32> to vector<16x128xf32>
    %11 = arith.subf %1, %10 : vector<16x128xf32>
    %12 = arith.mulf %11, %11 : vector<16x128xf32>
    %cst_10 = arith.constant dense<0.000000e+00> : vector<16xf32>
    %13 = vector.multi_reduction <add>, %12, %cst_10 [1] : vector<16x128xf32> to vector<16xf32>
    %14 = vector.shape_cast %13 : vector<16xf32> to vector<16x1xf32>
    %cst_11 = arith.constant 1.280000e+02 : f32
    %15 = vector.broadcast %cst_11 : f32 to vector<16x1xf32>
    %16 = arith.divf %14, %15 : vector<16x1xf32>
    %17 = vector.broadcast %9 : vector<16x1xf32> to vector<16x128xf32>
    %18 = arith.subf %1, %17 : vector<16x128xf32>
    %cst_12 = arith.constant 9.99999997E-7 : f32
    %19 = vector.broadcast %cst_12 : f32 to vector<16x1xf32>
    %20 = arith.addf %16, %19 : vector<16x1xf32>
    %21 = math.rsqrt %20 : vector<16x1xf32>
    %22 = vector.broadcast %21 : vector<16x1xf32> to vector<16x128xf32>
    %23 = arith.mulf %18, %22 : vector<16x128xf32>
    %24 = vector.broadcast %4 : vector<1x128xf32> to vector<16x128xf32>
    %25 = arith.mulf %23, %24 : vector<16x128xf32>
    %26 = vector.broadcast %5 : vector<1x128xf32> to vector<16x128xf32>
    %27 = arith.addf %25, %26 : vector<16x128xf32>
    %28 = arith.truncf %27 : vector<16x128xf32> to vector<16x128xbf16>
    %c0_13 = arith.constant 0 : index
    %c0_14 = arith.constant 0 : index
    %29 = vector.load %arg11[%c0_13, %c0_14] : memref<128x384xbf16, #tpu.memory_space<vmem>>, vector<128x384xbf16>
    %cst_15 = arith.constant dense<0.000000e+00> : vector<16x384xf32>
    %30 = tpu.matmul %28, %29, %cst_15 {dimension_numbers = #tpu.dot_dimension_numbers<[1], [0], [0], [1], [0, 0, 1, 1], [], []>} : vector<16x128xbf16>, vector<128x384xbf16>, vector<16x384xf32> -> vector<16x384xf32>
    %31 = vector.extract_strided_slice %30 {offsets = [0, 0], sizes = [16, 128], strides = [1, 1]} : vector<16x384xf32> to vector<16x128xf32>
    %32 = vector.extract_strided_slice %30 {offsets = [0, 128], sizes = [16, 128], strides = [1, 1]} : vector<16x384xf32> to vector<16x128xf32>
    %33 = vector.extract_strided_slice %30 {offsets = [0, 256], sizes = [16, 128], strides = [1, 1]} : vector<16x384xf32> to vector<16x128xf32>
    %34 = vector.extract_strided_slice %31 {offsets = [0, 0], sizes = [8, 128], strides = [1, 1]} : vector<16x128xf32> to vector<8x128xf32>
    %35 = vector.extract_strided_slice %32 {offsets = [0, 0], sizes = [8, 128], strides = [1, 1]} : vector<16x128xf32> to vector<8x128xf32>
    %36 = vector.extract_strided_slice %33 {offsets = [0, 0], sizes = [8, 128], strides = [1, 1]} : vector<16x128xf32> to vector<8x128xf32>
    %cst_16 = arith.constant 0.000000e+00 : f32
    %37 = vector.broadcast %cst_16 : f32 to vector<8x128xf32>
    %38 = vector.extract_strided_slice %34 {offsets = [0, 0], sizes = [8, 64], strides = [1, 1]} : vector<8x128xf32> to vector<8x64xf32>
    %39 = arith.truncf %38 : vector<8x64xf32> to vector<8x64xbf16>
    %40 = vector.extract_strided_slice %35 {offsets = [0, 0], sizes = [8, 64], strides = [1, 1]} : vector<8x128xf32> to vector<8x64xf32>
    %41 = arith.truncf %40 : vector<8x64xf32> to vector<8x64xbf16>
    %cst_17 = arith.constant dense<0.000000e+00> : vector<8x8xf32>
    %42 = tpu.matmul %39, %41, %cst_17 {dimension_numbers = #tpu.dot_dimension_numbers<[1], [1], [0], [0], [0, 0, 1, 0], [], []>} : vector<8x64xbf16>, vector<8x64xbf16>, vector<8x8xf32> -> vector<8x8xf32>
    %cst_18 = arith.constant dense<0xFF800000> : vector<8xf32>
    %43 = vector.multi_reduction <maximumf>, %42, %cst_18 [1] : vector<8x8xf32> to vector<8xf32>
    %44 = vector.shape_cast %43 : vector<8xf32> to vector<8x1xf32>
    %45 = vector.broadcast %44 : vector<8x1xf32> to vector<8x8xf32>
    %46 = arith.subf %42, %45 : vector<8x8xf32>
    %47 = math.exp %46 : vector<8x8xf32>
    %cst_19 = arith.constant dense<0.000000e+00> : vector<8xf32>
    %48 = vector.multi_reduction <add>, %47, %cst_19 [1] : vector<8x8xf32> to vector<8xf32>
    %49 = vector.shape_cast %48 : vector<8xf32> to vector<8x1xf32>
    %50 = tpu.reciprocal %49 {approx = true} : vector<8x1xf32> -> vector<8x1xf32>
    %51 = vector.broadcast %50 : vector<8x1xf32> to vector<8x8xf32>
    %52 = arith.mulf %47, %51 : vector<8x8xf32>
    %53 = arith.truncf %52 : vector<8x8xf32> to vector<8x8xbf16>
    %54 = vector.extract_strided_slice %36 {offsets = [0, 0], sizes = [8, 64], strides = [1, 1]} : vector<8x128xf32> to vector<8x64xf32>
    %55 = arith.truncf %54 : vector<8x64xf32> to vector<8x64xbf16>
    %cst_20 = arith.constant dense<0.000000e+00> : vector<8x64xf32>
    %56 = tpu.matmul %53, %55, %cst_20 {dimension_numbers = #tpu.dot_dimension_numbers<[1], [0], [0], [1], [0, 0, 1, 1], [], []>} : vector<8x8xbf16>, vector<8x64xbf16>, vector<8x64xf32> -> vector<8x64xf32>
    %57 = arith.truncf %56 : vector<8x64xf32> to vector<8x64xbf16>
    %c0_21 = arith.constant 0 : index
    %c0_22 = arith.constant 0 : index
    %58 = vector.load %arg12[%c0_21, %c0_22] : memref<128x128xbf16, #tpu.memory_space<vmem>>, vector<64x128xbf16>
    %cst_23 = arith.constant dense<0.000000e+00> : vector<8x128xf32>
    %59 = tpu.matmul %57, %58, %cst_23 {dimension_numbers = #tpu.dot_dimension_numbers<[1], [0], [0], [1], [0, 0, 1, 1], [], []>} : vector<8x64xbf16>, vector<64x128xbf16>, vector<8x128xf32> -> vector<8x128xf32>
    %60 = arith.addf %37, %59 : vector<8x128xf32>
    %61 = vector.extract_strided_slice %34 {offsets = [0, 64], sizes = [8, 64], strides = [1, 1]} : vector<8x128xf32> to vector<8x64xf32>
    %62 = arith.truncf %61 : vector<8x64xf32> to vector<8x64xbf16>
    %63 = vector.extract_strided_slice %35 {offsets = [0, 64], sizes = [8, 64], strides = [1, 1]} : vector<8x128xf32> to vector<8x64xf32>
    %64 = arith.truncf %63 : vector<8x64xf32> to vector<8x64xbf16>
    %cst_24 = arith.constant dense<0.000000e+00> : vector<8x8xf32>
    %65 = tpu.matmul %62, %64, %cst_24 {dimension_numbers = #tpu.dot_dimension_numbers<[1], [1], [0], [0], [0, 0, 1, 0], [], []>} : vector<8x64xbf16>, vector<8x64xbf16>, vector<8x8xf32> -> vector<8x8xf32>
    %cst_25 = arith.constant dense<0xFF800000> : vector<8xf32>
    %66 = vector.multi_reduction <maximumf>, %65, %cst_25 [1] : vector<8x8xf32> to vector<8xf32>
    %67 = vector.shape_cast %66 : vector<8xf32> to vector<8x1xf32>
    %68 = vector.broadcast %67 : vector<8x1xf32> to vector<8x8xf32>
    %69 = arith.subf %65, %68 : vector<8x8xf32>
    %70 = math.exp %69 : vector<8x8xf32>
    %cst_26 = arith.constant dense<0.000000e+00> : vector<8xf32>
    %71 = vector.multi_reduction <add>, %70, %cst_26 [1] : vector<8x8xf32> to vector<8xf32>
    %72 = vector.shape_cast %71 : vector<8xf32> to vector<8x1xf32>
    %73 = tpu.reciprocal %72 {approx = true} : vector<8x1xf32> -> vector<8x1xf32>
    %74 = vector.broadcast %73 : vector<8x1xf32> to vector<8x8xf32>
    %75 = arith.mulf %70, %74 : vector<8x8xf32>
    %76 = arith.truncf %75 : vector<8x8xf32> to vector<8x8xbf16>
    %77 = vector.extract_strided_slice %36 {offsets = [0, 64], sizes = [8, 64], strides = [1, 1]} : vector<8x128xf32> to vector<8x64xf32>
    %78 = arith.truncf %77 : vector<8x64xf32> to vector<8x64xbf16>
    %cst_27 = arith.constant dense<0.000000e+00> : vector<8x64xf32>
    %79 = tpu.matmul %76, %78, %cst_27 {dimension_numbers = #tpu.dot_dimension_numbers<[1], [0], [0], [1], [0, 0, 1, 1], [], []>} : vector<8x8xbf16>, vector<8x64xbf16>, vector<8x64xf32> -> vector<8x64xf32>
    %80 = arith.truncf %79 : vector<8x64xf32> to vector<8x64xbf16>
    %c64 = arith.constant 64 : index
    %c0_28 = arith.constant 0 : index
    %81 = vector.load %arg12[%c64, %c0_28] : memref<128x128xbf16, #tpu.memory_space<vmem>>, vector<64x128xbf16>
    %cst_29 = arith.constant dense<0.000000e+00> : vector<8x128xf32>
    %82 = tpu.matmul %80, %81, %cst_29 {dimension_numbers = #tpu.dot_dimension_numbers<[1], [0], [0], [1], [0, 0, 1, 1], [], []>} : vector<8x64xbf16>, vector<64x128xbf16>, vector<8x128xf32> -> vector<8x128xf32>
    %83 = arith.addf %60, %82 : vector<8x128xf32>
    %c0_30 = arith.constant 0 : index
    %c0_31 = arith.constant 0 : index
    %84 = vector.load %arg21[%c0_30, %c0_31] : memref<16x128xf32, #tpu.memory_space<vmem>>, vector<8x128xf32>
    tpu.vector_store %arg21[%c0_30, %c0_31], %83 {strides = array<i32>} : memref<16x128xf32, #tpu.memory_space<vmem>>, vector<8x128xf32>,
    %85 = vector.extract_strided_slice %31 {offsets = [8, 0], sizes = [8, 128], strides = [1, 1]} : vector<16x128xf32> to vector<8x128xf32>
    %86 = vector.extract_strided_slice %32 {offsets = [8, 0], sizes = [8, 128], strides = [1, 1]} : vector<16x128xf32> to vector<8x128xf32>
    %87 = vector.extract_strided_slice %33 {offsets = [8, 0], sizes = [8, 128], strides = [1, 1]} : vector<16x128xf32> to vector<8x128xf32>
    %cst_32 = arith.constant 0.000000e+00 : f32
    %88 = vector.broadcast %cst_32 : f32 to vector<8x128xf32>
    %89 = vector.extract_strided_slice %85 {offsets = [0, 0], sizes = [8, 64], strides = [1, 1]} : vector<8x128xf32> to vector<8x64xf32>
    %90 = arith.truncf %89 : vector<8x64xf32> to vector<8x64xbf16>
    %91 = vector.extract_strided_slice %86 {offsets = [0, 0], sizes = [8, 64], strides = [1, 1]} : vector<8x128xf32> to vector<8x64xf32>
    %92 = arith.truncf %91 : vector<8x64xf32> to vector<8x64xbf16>
    %cst_33 = arith.constant dense<0.000000e+00> : vector<8x8xf32>
    %93 = tpu.matmul %90, %92, %cst_33 {dimension_numbers = #tpu.dot_dimension_numbers<[1], [1], [0], [0], [0, 0, 1, 0], [], []>} : vector<8x64xbf16>, vector<8x64xbf16>, vector<8x8xf32> -> vector<8x8xf32>
    %cst_34 = arith.constant dense<0xFF800000> : vector<8xf32>
    %94 = vector.multi_reduction <maximumf>, %93, %cst_34 [1] : vector<8x8xf32> to vector<8xf32>
    %95 = vector.shape_cast %94 : vector<8xf32> to vector<8x1xf32>
    %96 = vector.broadcast %95 : vector<8x1xf32> to vector<8x8xf32>
    %97 = arith.subf %93, %96 : vector<8x8xf32>
    %98 = math.exp %97 : vector<8x8xf32>
    %cst_35 = arith.constant dense<0.000000e+00> : vector<8xf32>
    %99 = vector.multi_reduction <add>, %98, %cst_35 [1] : vector<8x8xf32> to vector<8xf32>
    %100 = vector.shape_cast %99 : vector<8xf32> to vector<8x1xf32>
    %101 = tpu.reciprocal %100 {approx = true} : vector<8x1xf32> -> vector<8x1xf32>
    %102 = vector.broadcast %101 : vector<8x1xf32> to vector<8x8xf32>
    %103 = arith.mulf %98, %102 : vector<8x8xf32>
    %104 = arith.truncf %103 : vector<8x8xf32> to vector<8x8xbf16>
    %105 = vector.extract_strided_slice %87 {offsets = [0, 0], sizes = [8, 64], strides = [1, 1]} : vector<8x128xf32> to vector<8x64xf32>
    %106 = arith.truncf %105 : vector<8x64xf32> to vector<8x64xbf16>
    %cst_36 = arith.constant dense<0.000000e+00> : vector<8x64xf32>
    %107 = tpu.matmul %104, %106, %cst_36 {dimension_numbers = #tpu.dot_dimension_numbers<[1], [0], [0], [1], [0, 0, 1, 1], [], []>} : vector<8x8xbf16>, vector<8x64xbf16>, vector<8x64xf32> -> vector<8x64xf32>
    %108 = arith.truncf %107 : vector<8x64xf32> to vector<8x64xbf16>
    %c0_37 = arith.constant 0 : index
    %c0_38 = arith.constant 0 : index
    %109 = vector.load %arg12[%c0_37, %c0_38] : memref<128x128xbf16, #tpu.memory_space<vmem>>, vector<64x128xbf16>
    %cst_39 = arith.constant dense<0.000000e+00> : vector<8x128xf32>
    %110 = tpu.matmul %108, %109, %cst_39 {dimension_numbers = #tpu.dot_dimension_numbers<[1], [0], [0], [1], [0, 0, 1, 1], [], []>} : vector<8x64xbf16>, vector<64x128xbf16>, vector<8x128xf32> -> vector<8x128xf32>
    %111 = arith.addf %88, %110 : vector<8x128xf32>
    %112 = vector.extract_strided_slice %85 {offsets = [0, 64], sizes = [8, 64], strides = [1, 1]} : vector<8x128xf32> to vector<8x64xf32>
    %113 = arith.truncf %112 : vector<8x64xf32> to vector<8x64xbf16>
    %114 = vector.extract_strided_slice %86 {offsets = [0, 64], sizes = [8, 64], strides = [1, 1]} : vector<8x128xf32> to vector<8x64xf32>
    %115 = arith.truncf %114 : vector<8x64xf32> to vector<8x64xbf16>
    %cst_40 = arith.constant dense<0.000000e+00> : vector<8x8xf32>
    %116 = tpu.matmul %113, %115, %cst_40 {dimension_numbers = #tpu.dot_dimension_numbers<[1], [1], [0], [0], [0, 0, 1, 0], [], []>} : vector<8x64xbf16>, vector<8x64xbf16>, vector<8x8xf32> -> vector<8x8xf32>
    %cst_41 = arith.constant dense<0xFF800000> : vector<8xf32>
    %117 = vector.multi_reduction <maximumf>, %116, %cst_41 [1] : vector<8x8xf32> to vector<8xf32>
    %118 = vector.shape_cast %117 : vector<8xf32> to vector<8x1xf32>
    %119 = vector.broadcast %118 : vector<8x1xf32> to vector<8x8xf32>
    %120 = arith.subf %116, %119 : vector<8x8xf32>
    %121 = math.exp %120 : vector<8x8xf32>
    %cst_42 = arith.constant dense<0.000000e+00> : vector<8xf32>
    %122 = vector.multi_reduction <add>, %121, %cst_42 [1] : vector<8x8xf32> to vector<8xf32>
    %123 = vector.shape_cast %122 : vector<8xf32> to vector<8x1xf32>
    %124 = tpu.reciprocal %123 {approx = true} : vector<8x1xf32> -> vector<8x1xf32>
    %125 = vector.broadcast %124 : vector<8x1xf32> to vector<8x8xf32>
    %126 = arith.mulf %121, %125 : vector<8x8xf32>
    %127 = arith.truncf %126 : vector<8x8xf32> to vector<8x8xbf16>
    %128 = vector.extract_strided_slice %87 {offsets = [0, 64], sizes = [8, 64], strides = [1, 1]} : vector<8x128xf32> to vector<8x64xf32>
    %129 = arith.truncf %128 : vector<8x64xf32> to vector<8x64xbf16>
    %cst_43 = arith.constant dense<0.000000e+00> : vector<8x64xf32>
    %130 = tpu.matmul %127, %129, %cst_43 {dimension_numbers = #tpu.dot_dimension_numbers<[1], [0], [0], [1], [0, 0, 1, 1], [], []>} : vector<8x8xbf16>, vector<8x64xbf16>, vector<8x64xf32> -> vector<8x64xf32>
    %131 = arith.truncf %130 : vector<8x64xf32> to vector<8x64xbf16>
    %c64_44 = arith.constant 64 : index
    %c0_45 = arith.constant 0 : index
    %132 = vector.load %arg12[%c64_44, %c0_45] : memref<128x128xbf16, #tpu.memory_space<vmem>>, vector<64x128xbf16>
    %cst_46 = arith.constant dense<0.000000e+00> : vector<8x128xf32>
    %133 = tpu.matmul %131, %132, %cst_46 {dimension_numbers = #tpu.dot_dimension_numbers<[1], [0], [0], [1], [0, 0, 1, 1], [], []>} : vector<8x64xbf16>, vector<64x128xbf16>, vector<8x128xf32> -> vector<8x128xf32>
    %134 = arith.addf %111, %133 : vector<8x128xf32>
    %c8 = arith.constant 8 : index
    %c0_47 = arith.constant 0 : index
    %135 = vector.load %arg21[%c8, %c0_47] : memref<16x128xf32, #tpu.memory_space<vmem>>, vector<8x128xf32>
    tpu.vector_store %arg21[%c8, %c0_47], %134 {strides = array<i32>} : memref<16x128xf32, #tpu.memory_space<vmem>>, vector<8x128xf32>,
    %c0_48 = arith.constant 0 : index
    %c0_49 = arith.constant 0 : index
    %136 = vector.load %arg21[%c0_48, %c0_49] : memref<16x128xf32, #tpu.memory_space<vmem>>, vector<16x128xf32>
    %137 = arith.addf %136, %1 : vector<16x128xf32>
    %c0_50 = arith.constant 0 : index
    %c0_51 = arith.constant 0 : index
    %138 = vector.load %arg5[%c0_50, %c0_51] : memref<1x128xf32, #tpu.memory_space<vmem>>, vector<1x128xf32>
    %c0_52 = arith.constant 0 : index
    %c0_53 = arith.constant 0 : index
    %139 = vector.load %arg6[%c0_52, %c0_53] : memref<1x128xf32, #tpu.memory_space<vmem>>, vector<1x128xf32>
    %cst_54 = arith.constant dense<0.000000e+00> : vector<16xf32>
    %140 = vector.multi_reduction <add>, %137, %cst_54 [1] : vector<16x128xf32> to vector<16xf32>
    %141 = vector.shape_cast %140 : vector<16xf32> to vector<16x1xf32>
    %cst_55 = arith.constant 1.280000e+02 : f32
    %142 = vector.broadcast %cst_55 : f32 to vector<16x1xf32>
    %143 = arith.divf %141, %142 : vector<16x1xf32>
    %144 = vector.broadcast %143 : vector<16x1xf32> to vector<16x128xf32>
    %145 = arith.subf %137, %144 : vector<16x128xf32>
    %146 = arith.mulf %145, %145 : vector<16x128xf32>
    %cst_56 = arith.constant dense<0.000000e+00> : vector<16xf32>
    %147 = vector.multi_reduction <add>, %146, %cst_56 [1] : vector<16x128xf32> to vector<16xf32>
    %148 = vector.shape_cast %147 : vector<16xf32> to vector<16x1xf32>
    %cst_57 = arith.constant 1.280000e+02 : f32
    %149 = vector.broadcast %cst_57 : f32 to vector<16x1xf32>
    %150 = arith.divf %148, %149 : vector<16x1xf32>
    %151 = vector.broadcast %143 : vector<16x1xf32> to vector<16x128xf32>
    %152 = arith.subf %137, %151 : vector<16x128xf32>
    %cst_58 = arith.constant 9.99999997E-7 : f32
    %153 = vector.broadcast %cst_58 : f32 to vector<16x1xf32>
    %154 = arith.addf %150, %153 : vector<16x1xf32>
    %155 = math.rsqrt %154 : vector<16x1xf32>
    %156 = vector.broadcast %155 : vector<16x1xf32> to vector<16x128xf32>
    %157 = arith.mulf %152, %156 : vector<16x128xf32>
    %158 = vector.broadcast %138 : vector<1x128xf32> to vector<16x128xf32>
    %159 = arith.mulf %157, %158 : vector<16x128xf32>
    %160 = vector.broadcast %139 : vector<1x128xf32> to vector<16x128xf32>
    %161 = arith.addf %159, %160 : vector<16x128xf32>
    %c0_59 = arith.constant 0 : index
    %c0_60 = arith.constant 0 : index
    %162 = vector.load %arg7[%c0_59, %c0_60] : memref<1x128xf32, #tpu.memory_space<vmem>>, vector<1x128xf32>
    %c0_61 = arith.constant 0 : index
    %c0_62 = arith.constant 0 : index
    %163 = vector.load %arg8[%c0_61, %c0_62] : memref<1x128xf32, #tpu.memory_space<vmem>>, vector<1x128xf32>
    %cst_63 = arith.constant dense<0.000000e+00> : vector<32xf32>
    %164 = vector.multi_reduction <add>, %3, %cst_63 [1] : vector<32x128xf32> to vector<32xf32>
    %165 = vector.shape_cast %164 : vector<32xf32> to vector<32x1xf32>
    %cst_64 = arith.constant 1.280000e+02 : f32
    %166 = vector.broadcast %cst_64 : f32 to vector<32x1xf32>
    %167 = arith.divf %165, %166 : vector<32x1xf32>
    %168 = vector.broadcast %167 : vector<32x1xf32> to vector<32x128xf32>
    %169 = arith.subf %3, %168 : vector<32x128xf32>
    %170 = arith.mulf %169, %169 : vector<32x128xf32>
    %cst_65 = arith.constant dense<0.000000e+00> : vector<32xf32>
    %171 = vector.multi_reduction <add>, %170, %cst_65 [1] : vector<32x128xf32> to vector<32xf32>
    %172 = vector.shape_cast %171 : vector<32xf32> to vector<32x1xf32>
    %cst_66 = arith.constant 1.280000e+02 : f32
    %173 = vector.broadcast %cst_66 : f32 to vector<32x1xf32>
    %174 = arith.divf %172, %173 : vector<32x1xf32>
    %175 = vector.broadcast %167 : vector<32x1xf32> to vector<32x128xf32>
    %176 = arith.subf %3, %175 : vector<32x128xf32>
    %cst_67 = arith.constant 9.99999997E-7 : f32
    %177 = vector.broadcast %cst_67 : f32 to vector<32x1xf32>
    %178 = arith.addf %174, %177 : vector<32x1xf32>
    %179 = math.rsqrt %178 : vector<32x1xf32>
    %180 = vector.broadcast %179 : vector<32x1xf32> to vector<32x128xf32>
    %181 = arith.mulf %176, %180 : vector<32x128xf32>
    %182 = vector.broadcast %162 : vector<1x128xf32> to vector<32x128xf32>
    %183 = arith.mulf %181, %182 : vector<32x128xf32>
    %184 = vector.broadcast %163 : vector<1x128xf32> to vector<32x128xf32>
    %185 = arith.addf %183, %184 : vector<32x128xf32>
    %186 = arith.truncf %161 : vector<16x128xf32> to vector<16x128xbf16>
    %c0_68 = arith.constant 0 : index
    %c0_69 = arith.constant 0 : index
    %187 = vector.load %arg13[%c0_68, %c0_69] : memref<128x128xbf16, #tpu.memory_space<vmem>>, vector<128x128xbf16>
    %cst_70 = arith.constant dense<0.000000e+00> : vector<16x128xf32>
    %188 = tpu.matmul %186, %187, %cst_70 {dimension_numbers = #tpu.dot_dimension_numbers<[1], [0], [0], [1], [0, 0, 1, 1], [], []>} : vector<16x128xbf16>, vector<128x128xbf16>, vector<16x128xf32> -> vector<16x128xf32>
    %189 = arith.truncf %185 : vector<32x128xf32> to vector<32x128xbf16>
    %c0_71 = arith.constant 0 : index
    %c0_72 = arith.constant 0 : index
    %190 = vector.load %arg14[%c0_71, %c0_72] : memref<128x256xbf16, #tpu.memory_space<vmem>>, vector<128x256xbf16>
    %cst_73 = arith.constant dense<0.000000e+00> : vector<32x256xf32>
    %191 = tpu.matmul %189, %190, %cst_73 {dimension_numbers = #tpu.dot_dimension_numbers<[1], [0], [0], [1], [0, 0, 1, 1], [], []>} : vector<32x128xbf16>, vector<128x256xbf16>, vector<32x256xf32> -> vector<32x256xf32>
    %192 = vector.extract_strided_slice %191 {offsets = [0, 0], sizes = [32, 128], strides = [1, 1]} : vector<32x256xf32> to vector<32x128xf32>
    %193 = vector.extract_strided_slice %191 {offsets = [0, 128], sizes = [32, 128], strides = [1, 1]} : vector<32x256xf32> to vector<32x128xf32>
    %194 = vector.extract_strided_slice %188 {offsets = [0, 0], sizes = [8, 128], strides = [1, 1]} : vector<16x128xf32> to vector<8x128xf32>
    %195 = vector.extract_strided_slice %192 {offsets = [0, 0], sizes = [16, 128], strides = [1, 1]} : vector<32x128xf32> to vector<16x128xf32>
    %196 = vector.extract_strided_slice %193 {offsets = [0, 0], sizes = [16, 128], strides = [1, 1]} : vector<32x128xf32> to vector<16x128xf32>
    %cst_74 = arith.constant 0.000000e+00 : f32
    %197 = vector.broadcast %cst_74 : f32 to vector<8x128xf32>
    %198 = vector.extract_strided_slice %194 {offsets = [0, 0], sizes = [8, 64], strides = [1, 1]} : vector<8x128xf32> to vector<8x64xf32>
    %199 = arith.truncf %198 : vector<8x64xf32> to vector<8x64xbf16>
    %200 = vector.extract_strided_slice %195 {offsets = [0, 0], sizes = [16, 64], strides = [1, 1]} : vector<16x128xf32> to vector<16x64xf32>
    %201 = arith.truncf %200 : vector<16x64xf32> to vector<16x64xbf16>
    %cst_75 = arith.constant dense<0.000000e+00> : vector<8x16xf32>
    %202 = tpu.matmul %199, %201, %cst_75 {dimension_numbers = #tpu.dot_dimension_numbers<[1], [1], [0], [0], [0, 0, 1, 0], [], []>} : vector<8x64xbf16>, vector<16x64xbf16>, vector<8x16xf32> -> vector<8x16xf32>
    %cst_76 = arith.constant dense<0xFF800000> : vector<8xf32>
    %203 = vector.multi_reduction <maximumf>, %202, %cst_76 [1] : vector<8x16xf32> to vector<8xf32>
    %204 = vector.shape_cast %203 : vector<8xf32> to vector<8x1xf32>
    %205 = vector.broadcast %204 : vector<8x1xf32> to vector<8x16xf32>
    %206 = arith.subf %202, %205 : vector<8x16xf32>
    %207 = math.exp %206 : vector<8x16xf32>
    %cst_77 = arith.constant dense<0.000000e+00> : vector<8xf32>
    %208 = vector.multi_reduction <add>, %207, %cst_77 [1] : vector<8x16xf32> to vector<8xf32>
    %209 = vector.shape_cast %208 : vector<8xf32> to vector<8x1xf32>
    %210 = tpu.reciprocal %209 {approx = true} : vector<8x1xf32> -> vector<8x1xf32>
    %211 = vector.broadcast %210 : vector<8x1xf32> to vector<8x16xf32>
    %212 = arith.mulf %207, %211 : vector<8x16xf32>
    %213 = arith.truncf %212 : vector<8x16xf32> to vector<8x16xbf16>
    %214 = vector.extract_strided_slice %196 {offsets = [0, 0], sizes = [16, 64], strides = [1, 1]} : vector<16x128xf32> to vector<16x64xf32>
    %215 = arith.truncf %214 : vector<16x64xf32> to vector<16x64xbf16>
    %cst_78 = arith.constant dense<0.000000e+00> : vector<8x64xf32>
    %216 = tpu.matmul %213, %215, %cst_78 {dimension_numbers = #tpu.dot_dimension_numbers<[1], [0], [0], [1], [0, 0, 1, 1], [], []>} : vector<8x16xbf16>, vector<16x64xbf16>, vector<8x64xf32> -> vector<8x64xf32>
    %217 = arith.truncf %216 : vector<8x64xf32> to vector<8x64xbf16>
    %c0_79 = arith.constant 0 : index
    %c0_80 = arith.constant 0 : index
    %218 = vector.load %arg15[%c0_79, %c0_80] : memref<128x128xbf16, #tpu.memory_space<vmem>>, vector<64x128xbf16>
    %cst_81 = arith.constant dense<0.000000e+00> : vector<8x128xf32>
    %219 = tpu.matmul %217, %218, %cst_81 {dimension_numbers = #tpu.dot_dimension_numbers<[1], [0], [0], [1], [0, 0, 1, 1], [], []>} : vector<8x64xbf16>, vector<64x128xbf16>, vector<8x128xf32> -> vector<8x128xf32>
    %220 = arith.addf %197, %219 : vector<8x128xf32>
    %221 = vector.extract_strided_slice %194 {offsets = [0, 64], sizes = [8, 64], strides = [1, 1]} : vector<8x128xf32> to vector<8x64xf32>
    %222 = arith.truncf %221 : vector<8x64xf32> to vector<8x64xbf16>
    %223 = vector.extract_strided_slice %195 {offsets = [0, 64], sizes = [16, 64], strides = [1, 1]} : vector<16x128xf32> to vector<16x64xf32>
    %224 = arith.truncf %223 : vector<16x64xf32> to vector<16x64xbf16>
    %cst_82 = arith.constant dense<0.000000e+00> : vector<8x16xf32>
    %225 = tpu.matmul %222, %224, %cst_82 {dimension_numbers = #tpu.dot_dimension_numbers<[1], [1], [0], [0], [0, 0, 1, 0], [], []>} : vector<8x64xbf16>, vector<16x64xbf16>, vector<8x16xf32> -> vector<8x16xf32>
    %cst_83 = arith.constant dense<0xFF800000> : vector<8xf32>
    %226 = vector.multi_reduction <maximumf>, %225, %cst_83 [1] : vector<8x16xf32> to vector<8xf32>
    %227 = vector.shape_cast %226 : vector<8xf32> to vector<8x1xf32>
    %228 = vector.broadcast %227 : vector<8x1xf32> to vector<8x16xf32>
    %229 = arith.subf %225, %228 : vector<8x16xf32>
    %230 = math.exp %229 : vector<8x16xf32>
    %cst_84 = arith.constant dense<0.000000e+00> : vector<8xf32>
    %231 = vector.multi_reduction <add>, %230, %cst_84 [1] : vector<8x16xf32> to vector<8xf32>
    %232 = vector.shape_cast %231 : vector<8xf32> to vector<8x1xf32>
    %233 = tpu.reciprocal %232 {approx = true} : vector<8x1xf32> -> vector<8x1xf32>
    %234 = vector.broadcast %233 : vector<8x1xf32> to vector<8x16xf32>
    %235 = arith.mulf %230, %234 : vector<8x16xf32>
    %236 = arith.truncf %235 : vector<8x16xf32> to vector<8x16xbf16>
    %237 = vector.extract_strided_slice %196 {offsets = [0, 64], sizes = [16, 64], strides = [1, 1]} : vector<16x128xf32> to vector<16x64xf32>
    %238 = arith.truncf %237 : vector<16x64xf32> to vector<16x64xbf16>
    %cst_85 = arith.constant dense<0.000000e+00> : vector<8x64xf32>
    %239 = tpu.matmul %236, %238, %cst_85 {dimension_numbers = #tpu.dot_dimension_numbers<[1], [0], [0], [1], [0, 0, 1, 1], [], []>} : vector<8x16xbf16>, vector<16x64xbf16>, vector<8x64xf32> -> vector<8x64xf32>
    %240 = arith.truncf %239 : vector<8x64xf32> to vector<8x64xbf16>
    %c64_86 = arith.constant 64 : index
    %c0_87 = arith.constant 0 : index
    %241 = vector.load %arg15[%c64_86, %c0_87] : memref<128x128xbf16, #tpu.memory_space<vmem>>, vector<64x128xbf16>
    %cst_88 = arith.constant dense<0.000000e+00> : vector<8x128xf32>
    %242 = tpu.matmul %240, %241, %cst_88 {dimension_numbers = #tpu.dot_dimension_numbers<[1], [0], [0], [1], [0, 0, 1, 1], [], []>} : vector<8x64xbf16>, vector<64x128xbf16>, vector<8x128xf32> -> vector<8x128xf32>
    %243 = arith.addf %220, %242 : vector<8x128xf32>
    %c0_89 = arith.constant 0 : index
    %c0_90 = arith.constant 0 : index
    %244 = vector.load %arg21[%c0_89, %c0_90] : memref<16x128xf32, #tpu.memory_space<vmem>>, vector<8x128xf32>
    tpu.vector_store %arg21[%c0_89, %c0_90], %243 {strides = array<i32>} : memref<16x128xf32, #tpu.memory_space<vmem>>, vector<8x128xf32>,
    %245 = vector.extract_strided_slice %188 {offsets = [8, 0], sizes = [8, 128], strides = [1, 1]} : vector<16x128xf32> to vector<8x128xf32>
    %246 = vector.extract_strided_slice %192 {offsets = [16, 0], sizes = [16, 128], strides = [1, 1]} : vector<32x128xf32> to vector<16x128xf32>
    %247 = vector.extract_strided_slice %193 {offsets = [16, 0], sizes = [16, 128], strides = [1, 1]} : vector<32x128xf32> to vector<16x128xf32>
    %cst_91 = arith.constant 0.000000e+00 : f32
    %248 = vector.broadcast %cst_91 : f32 to vector<8x128xf32>
    %249 = vector.extract_strided_slice %245 {offsets = [0, 0], sizes = [8, 64], strides = [1, 1]} : vector<8x128xf32> to vector<8x64xf32>
    %250 = arith.truncf %249 : vector<8x64xf32> to vector<8x64xbf16>
    %251 = vector.extract_strided_slice %246 {offsets = [0, 0], sizes = [16, 64], strides = [1, 1]} : vector<16x128xf32> to vector<16x64xf32>
    %252 = arith.truncf %251 : vector<16x64xf32> to vector<16x64xbf16>
    %cst_92 = arith.constant dense<0.000000e+00> : vector<8x16xf32>
    %253 = tpu.matmul %250, %252, %cst_92 {dimension_numbers = #tpu.dot_dimension_numbers<[1], [1], [0], [0], [0, 0, 1, 0], [], []>} : vector<8x64xbf16>, vector<16x64xbf16>, vector<8x16xf32> -> vector<8x16xf32>
    %cst_93 = arith.constant dense<0xFF800000> : vector<8xf32>
    %254 = vector.multi_reduction <maximumf>, %253, %cst_93 [1] : vector<8x16xf32> to vector<8xf32>
    %255 = vector.shape_cast %254 : vector<8xf32> to vector<8x1xf32>
    %256 = vector.broadcast %255 : vector<8x1xf32> to vector<8x16xf32>
    %257 = arith.subf %253, %256 : vector<8x16xf32>
    %258 = math.exp %257 : vector<8x16xf32>
    %cst_94 = arith.constant dense<0.000000e+00> : vector<8xf32>
    %259 = vector.multi_reduction <add>, %258, %cst_94 [1] : vector<8x16xf32> to vector<8xf32>
    %260 = vector.shape_cast %259 : vector<8xf32> to vector<8x1xf32>
    %261 = tpu.reciprocal %260 {approx = true} : vector<8x1xf32> -> vector<8x1xf32>
    %262 = vector.broadcast %261 : vector<8x1xf32> to vector<8x16xf32>
    %263 = arith.mulf %258, %262 : vector<8x16xf32>
    %264 = arith.truncf %263 : vector<8x16xf32> to vector<8x16xbf16>
    %265 = vector.extract_strided_slice %247 {offsets = [0, 0], sizes = [16, 64], strides = [1, 1]} : vector<16x128xf32> to vector<16x64xf32>
    %266 = arith.truncf %265 : vector<16x64xf32> to vector<16x64xbf16>
    %cst_95 = arith.constant dense<0.000000e+00> : vector<8x64xf32>
    %267 = tpu.matmul %264, %266, %cst_95 {dimension_numbers = #tpu.dot_dimension_numbers<[1], [0], [0], [1], [0, 0, 1, 1], [], []>} : vector<8x16xbf16>, vector<16x64xbf16>, vector<8x64xf32> -> vector<8x64xf32>
    %268 = arith.truncf %267 : vector<8x64xf32> to vector<8x64xbf16>
    %c0_96 = arith.constant 0 : index
    %c0_97 = arith.constant 0 : index
    %269 = vector.load %arg15[%c0_96, %c0_97] : memref<128x128xbf16, #tpu.memory_space<vmem>>, vector<64x128xbf16>
    %cst_98 = arith.constant dense<0.000000e+00> : vector<8x128xf32>
    %270 = tpu.matmul %268, %269, %cst_98 {dimension_numbers = #tpu.dot_dimension_numbers<[1], [0], [0], [1], [0, 0, 1, 1], [], []>} : vector<8x64xbf16>, vector<64x128xbf16>, vector<8x128xf32> -> vector<8x128xf32>
    %271 = arith.addf %248, %270 : vector<8x128xf32>
    %272 = vector.extract_strided_slice %245 {offsets = [0, 64], sizes = [8, 64], strides = [1, 1]} : vector<8x128xf32> to vector<8x64xf32>
    %273 = arith.truncf %272 : vector<8x64xf32> to vector<8x64xbf16>
    %274 = vector.extract_strided_slice %246 {offsets = [0, 64], sizes = [16, 64], strides = [1, 1]} : vector<16x128xf32> to vector<16x64xf32>
    %275 = arith.truncf %274 : vector<16x64xf32> to vector<16x64xbf16>
    %cst_99 = arith.constant dense<0.000000e+00> : vector<8x16xf32>
    %276 = tpu.matmul %273, %275, %cst_99 {dimension_numbers = #tpu.dot_dimension_numbers<[1], [1], [0], [0], [0, 0, 1, 0], [], []>} : vector<8x64xbf16>, vector<16x64xbf16>, vector<8x16xf32> -> vector<8x16xf32>
    %cst_100 = arith.constant dense<0xFF800000> : vector<8xf32>
    %277 = vector.multi_reduction <maximumf>, %276, %cst_100 [1] : vector<8x16xf32> to vector<8xf32>
    %278 = vector.shape_cast %277 : vector<8xf32> to vector<8x1xf32>
    %279 = vector.broadcast %278 : vector<8x1xf32> to vector<8x16xf32>
    %280 = arith.subf %276, %279 : vector<8x16xf32>
    %281 = math.exp %280 : vector<8x16xf32>
    %cst_101 = arith.constant dense<0.000000e+00> : vector<8xf32>
    %282 = vector.multi_reduction <add>, %281, %cst_101 [1] : vector<8x16xf32> to vector<8xf32>
    %283 = vector.shape_cast %282 : vector<8xf32> to vector<8x1xf32>
    %284 = tpu.reciprocal %283 {approx = true} : vector<8x1xf32> -> vector<8x1xf32>
    %285 = vector.broadcast %284 : vector<8x1xf32> to vector<8x16xf32>
    %286 = arith.mulf %281, %285 : vector<8x16xf32>
    %287 = arith.truncf %286 : vector<8x16xf32> to vector<8x16xbf16>
    %288 = vector.extract_strided_slice %247 {offsets = [0, 64], sizes = [16, 64], strides = [1, 1]} : vector<16x128xf32> to vector<16x64xf32>
    %289 = arith.truncf %288 : vector<16x64xf32> to vector<16x64xbf16>
    %cst_102 = arith.constant dense<0.000000e+00> : vector<8x64xf32>
    %290 = tpu.matmul %287, %289, %cst_102 {dimension_numbers = #tpu.dot_dimension_numbers<[1], [0], [0], [1], [0, 0, 1, 1], [], []>} : vector<8x16xbf16>, vector<16x64xbf16>, vector<8x64xf32> -> vector<8x64xf32>
    %291 = arith.truncf %290 : vector<8x64xf32> to vector<8x64xbf16>
    %c64_103 = arith.constant 64 : index
    %c0_104 = arith.constant 0 : index
    %292 = vector.load %arg15[%c64_103, %c0_104] : memref<128x128xbf16, #tpu.memory_space<vmem>>, vector<64x128xbf16>
    %cst_105 = arith.constant dense<0.000000e+00> : vector<8x128xf32>
    %293 = tpu.matmul %291, %292, %cst_105 {dimension_numbers = #tpu.dot_dimension_numbers<[1], [0], [0], [1], [0, 0, 1, 1], [], []>} : vector<8x64xbf16>, vector<64x128xbf16>, vector<8x128xf32> -> vector<8x128xf32>
    %294 = arith.addf %271, %293 : vector<8x128xf32>
    %c8_106 = arith.constant 8 : index
    %c0_107 = arith.constant 0 : index
    %295 = vector.load %arg21[%c8_106, %c0_107] : memref<16x128xf32, #tpu.memory_space<vmem>>, vector<8x128xf32>
    tpu.vector_store %arg21[%c8_106, %c0_107], %294 {strides = array<i32>} : memref<16x128xf32, #tpu.memory_space<vmem>>, vector<8x128xf32>,
    %c0_108 = arith.constant 0 : index
    %c0_109 = arith.constant 0 : index
    %296 = vector.load %arg21[%c0_108, %c0_109] : memref<16x128xf32, #tpu.memory_space<vmem>>, vector<16x128xf32>
    %297 = arith.addf %296, %137 : vector<16x128xf32>
    %c0_110 = arith.constant 0 : index
    %c0_111 = arith.constant 0 : index
    %298 = vector.load %arg9[%c0_110, %c0_111] : memref<1x128xf32, #tpu.memory_space<vmem>>, vector<1x128xf32>
    %c0_112 = arith.constant 0 : index
    %c0_113 = arith.constant 0 : index
    %299 = vector.load %arg10[%c0_112, %c0_113] : memref<1x128xf32, #tpu.memory_space<vmem>>, vector<1x128xf32>
    %cst_114 = arith.constant dense<0.000000e+00> : vector<16xf32>
    %300 = vector.multi_reduction <add>, %297, %cst_114 [1] : vector<16x128xf32> to vector<16xf32>
    %301 = vector.shape_cast %300 : vector<16xf32> to vector<16x1xf32>
    %cst_115 = arith.constant 1.280000e+02 : f32
    %302 = vector.broadcast %cst_115 : f32 to vector<16x1xf32>
    %303 = arith.divf %301, %302 : vector<16x1xf32>
    %304 = vector.broadcast %303 : vector<16x1xf32> to vector<16x128xf32>
    %305 = arith.subf %297, %304 : vector<16x128xf32>
    %306 = arith.mulf %305, %305 : vector<16x128xf32>
    %cst_116 = arith.constant dense<0.000000e+00> : vector<16xf32>
    %307 = vector.multi_reduction <add>, %306, %cst_116 [1] : vector<16x128xf32> to vector<16xf32>
    %308 = vector.shape_cast %307 : vector<16xf32> to vector<16x1xf32>
    %cst_117 = arith.constant 1.280000e+02 : f32
    %309 = vector.broadcast %cst_117 : f32 to vector<16x1xf32>
    %310 = arith.divf %308, %309 : vector<16x1xf32>
    %311 = vector.broadcast %303 : vector<16x1xf32> to vector<16x128xf32>
    %312 = arith.subf %297, %311 : vector<16x128xf32>
    %cst_118 = arith.constant 9.99999997E-7 : f32
    %313 = vector.broadcast %cst_118 : f32 to vector<16x1xf32>
    %314 = arith.addf %310, %313 : vector<16x1xf32>
    %315 = math.rsqrt %314 : vector<16x1xf32>
    %316 = vector.broadcast %315 : vector<16x1xf32> to vector<16x128xf32>
    %317 = arith.mulf %312, %316 : vector<16x128xf32>
    %318 = vector.broadcast %298 : vector<1x128xf32> to vector<16x128xf32>
    %319 = arith.mulf %317, %318 : vector<16x128xf32>
    %320 = vector.broadcast %299 : vector<1x128xf32> to vector<16x128xf32>
    %321 = arith.addf %319, %320 : vector<16x128xf32>
    %322 = arith.truncf %321 : vector<16x128xf32> to vector<16x128xbf16>
    %c0_119 = arith.constant 0 : index
    %c0_120 = arith.constant 0 : index
    %323 = vector.load %arg16[%c0_119, %c0_120] : memref<128x512xbf16, #tpu.memory_space<vmem>>, vector<128x512xbf16>
    %cst_121 = arith.constant dense<0.000000e+00> : vector<16x512xf32>
    %324 = tpu.matmul %322, %323, %cst_121 {dimension_numbers = #tpu.dot_dimension_numbers<[1], [0], [0], [1], [0, 0, 1, 1], [], []>} : vector<16x128xbf16>, vector<128x512xbf16>, vector<16x512xf32> -> vector<16x512xf32>
    %c0_122 = arith.constant 0 : index
    %c0_123 = arith.constant 0 : index
    %325 = vector.load %arg17[%c0_122, %c0_123] : memref<1x512xf32, #tpu.memory_space<vmem>>, vector<1x512xf32>
    %326 = vector.broadcast %325 : vector<1x512xf32> to vector<16x512xf32>
    %327 = arith.addf %324, %326 : vector<16x512xf32>
    %328 = arith.mulf %327, %327 : vector<16x512xf32>
    %329 = arith.mulf %327, %328 : vector<16x512xf32>
    %cst_124 = arith.constant 4.471500e-02 : f32
    %330 = vector.broadcast %cst_124 : f32 to vector<16x512xf32>
    %331 = arith.mulf %330, %329 : vector<16x512xf32>
    %332 = arith.addf %327, %331 : vector<16x512xf32>
    %cst_125 = arith.constant 0.797884583 : f32
    %333 = vector.broadcast %cst_125 : f32 to vector<16x512xf32>
    %334 = arith.mulf %333, %332 : vector<16x512xf32>
    %335 = math.tanh %334 : vector<16x512xf32>
    %cst_126 = arith.constant 1.000000e+00 : f32
    %336 = vector.broadcast %cst_126 : f32 to vector<16x512xf32>
    %337 = arith.addf %336, %335 : vector<16x512xf32>
    %cst_127 = arith.constant 5.000000e-01 : f32
    %338 = vector.broadcast %cst_127 : f32 to vector<16x512xf32>
    %339 = arith.mulf %338, %337 : vector<16x512xf32>
    %340 = arith.mulf %327, %339 : vector<16x512xf32>
    %341 = arith.truncf %340 : vector<16x512xf32> to vector<16x512xbf16>
    %c0_128 = arith.constant 0 : index
    %c0_129 = arith.constant 0 : index
    %342 = vector.load %arg18[%c0_128, %c0_129] : memref<512x128xbf16, #tpu.memory_space<vmem>>, vector<512x128xbf16>
    %cst_130 = arith.constant dense<0.000000e+00> : vector<16x128xf32>
    %343 = tpu.matmul %341, %342, %cst_130 {dimension_numbers = #tpu.dot_dimension_numbers<[1], [0], [0], [1], [0, 0, 1, 1], [], []>} : vector<16x512xbf16>, vector<512x128xbf16>, vector<16x128xf32> -> vector<16x128xf32>
    %c0_131 = arith.constant 0 : index
    %c0_132 = arith.constant 0 : index
    %344 = vector.load %arg19[%c0_131, %c0_132] : memref<1x128xf32, #tpu.memory_space<vmem>>, vector<1x128xf32>
    %345 = vector.broadcast %344 : vector<1x128xf32> to vector<16x128xf32>
    %346 = arith.addf %343, %345 : vector<16x128xf32>
    %347 = arith.addf %346, %297 : vector<16x128xf32>
    %348 = vector.shape_cast %347 : vector<16x128xf32> to vector<2x8x128xf32>
    %c0_133 = arith.constant 0 : index
    %c0_134 = arith.constant 0 : index
    %c0_135 = arith.constant 0 : index
    %349 = vector.load %arg20[%c0_133, %c0_134, %c0_135] : memref<2x8x128xf32, #tpu.memory_space<vmem>>, vector<2x8x128xf32>
    tpu.vector_store %arg20[%c0_133, %c0_134, %c0_135], %348 {strides = array<i32>} : memref<2x8x128xf32, #tpu.memory_space<vmem>>, vector<2x8x128xf32>,
    return
  }
  func.func @transform_0(%arg0: i32) -> (i32, i32, i32) {
    %c0_i32 = arith.constant 0 : i32
    %c0_i32_0 = arith.constant 0 : i32
    %c0_i32_1 = arith.constant 0 : i32
    return %arg0, %c0_i32, %c0_i32_0 : i32, i32, i32
  }
  func.func @transform_1(%arg0: i32) -> (i32, i32, i32) {
    %c0_i32 = arith.constant 0 : i32
    %c0_i32_0 = arith.constant 0 : i32
    %c0_i32_1 = arith.constant 0 : i32
    return %arg0, %c0_i32, %c0_i32_0 : i32, i32, i32
  }
  func.func @transform_2(%arg0: i32) -> (i32, i32) {
    %c0_i32 = arith.constant 0 : i32
    %c0_i32_0 = arith.constant 0 : i32
    %c0_i32_1 = arith.constant 0 : i32
    return %c0_i32, %c0_i32_0 : i32, i32
  }
  func.func @transform_3(%arg0: i32) -> (i32, i32) {
    %c0_i32 = arith.constant 0 : i32
    %c0_i32_0 = arith.constant 0 : i32
    %c0_i32_1 = arith.constant 0 : i32
    return %c0_i32, %c0_i32_0 : i32, i32
  }
  func.func @transform_4(%arg0: i32) -> (i32, i32) {
    %c0_i32 = arith.constant 0 : i32
    %c0_i32_0 = arith.constant 0 : i32
    %c0_i32_1 = arith.constant 0 : i32
    return %c0_i32, %c0_i32_0 : i32, i32
  }
  func.func @transform_5(%arg0: i32) -> (i32, i32) {
    %c0_i32 = arith.constant 0 : i32
    %c0_i32_0 = arith.constant 0 : i32
    %c0_i32_1 = arith.constant 0 : i32
    return %c0_i32, %c0_i32_0 : i32, i32
  }
  func.func @transform_6(%arg0: i32) -> (i32, i32) {
    %c0_i32 = arith.constant 0 : i32
    %c0_i32_0 = arith.constant 0 : i32
    %c0_i32_1 = arith.constant 0 : i32
    return %c0_i32, %c0_i32_0 : i32, i32
  }
  func.func @transform_7(%arg0: i32) -> (i32, i32) {
    %c0_i32 = arith.constant 0 : i32
    %c0_i32_0 = arith.constant 0 : i32
    %c0_i32_1 = arith.constant 0 : i32
    return %c0_i32, %c0_i32_0 : i32, i32
  }
  func.func @transform_8(%arg0: i32) -> (i32, i32) {
    %c0_i32 = arith.constant 0 : i32
    %c0_i32_0 = arith.constant 0 : i32
    %c0_i32_1 = arith.constant 0 : i32
    return %c0_i32, %c0_i32_0 : i32, i32
  }
  func.func @transform_9(%arg0: i32) -> (i32, i32) {
    %c0_i32 = arith.constant 0 : i32
    %c0_i32_0 = arith.constant 0 : i32
    %c0_i32_1 = arith.constant 0 : i32
    return %c0_i32, %c0_i32_0 : i32, i32
  }
  func.func @transform_10(%arg0: i32) -> (i32, i32) {
    %c0_i32 = arith.constant 0 : i32
    %c0_i32_0 = arith.constant 0 : i32
    %c0_i32_1 = arith.constant 0 : i32
    return %c0_i32, %c0_i32_0 : i32, i32
  }
  func.func @transform_11(%arg0: i32) -> (i32, i32) {
    %c0_i32 = arith.constant 0 : i32
    %c0_i32_0 = arith.constant 0 : i32
    %c0_i32_1 = arith.constant 0 : i32
    return %c0_i32, %c0_i32_0 : i32, i32
  }
  func.func @transform_12(%arg0: i32) -> (i32, i32) {
    %c0_i32 = arith.constant 0 : i32
    %c0_i32_0 = arith.constant 0 : i32
    %c0_i32_1 = arith.constant 0 : i32
    return %c0_i32, %c0_i32_0 : i32, i32
  }
  func.func @transform_13(%arg0: i32) -> (i32, i32) {
    %c0_i32 = arith.constant 0 : i32
    %c0_i32_0 = arith.constant 0 : i32
    %c0_i32_1 = arith.constant 0 : i32
    return %c0_i32, %c0_i32_0 : i32, i32
  }
  func.func @transform_14(%arg0: i32) -> (i32, i32) {
    %c0_i32 = arith.constant 0 : i32
    %c0_i32_0 = arith.constant 0 : i32
    %c0_i32_1 = arith.constant 0 : i32
    return %c0_i32, %c0_i32_0 : i32, i32
  }
  func.func @transform_15(%arg0: i32) -> (i32, i32) {
    %c0_i32 = arith.constant 0 : i32
    %c0_i32_0 = arith.constant 0 : i32
    %c0_i32_1 = arith.constant 0 : i32
    return %c0_i32, %c0_i32_0 : i32, i32
  }
  func.func @transform_16(%arg0: i32) -> (i32, i32) {
    %c0_i32 = arith.constant 0 : i32
    %c0_i32_0 = arith.constant 0 : i32
    %c0_i32_1 = arith.constant 0 : i32
    return %c0_i32, %c0_i32_0 : i32, i32
  }
  func.func @transform_17(%arg0: i32) -> (i32, i32) {
    %c0_i32 = arith.constant 0 : i32
    %c0_i32_0 = arith.constant 0 : i32
    %c0_i32_1 = arith.constant 0 : i32
    return %c0_i32, %c0_i32_0 : i32, i32
  }
  func.func @transform_18(%arg0: i32) -> (i32, i32) {
    %c0_i32 = arith.constant 0 : i32
    %c0_i32_0 = arith.constant 0 : i32
    %c0_i32_1 = arith.constant 0 : i32
    return %c0_i32, %c0_i32_0 : i32, i32
  }
  func.func @transform_19(%arg0: i32) -> (i32, i32, i32) {
    %c0_i32 = arith.constant 0 : i32
    %c0_i32_0 = arith.constant 0 : i32
    %c0_i32_1 = arith.constant 0 : i32
    return %arg0, %c0_i32, %c0_i32_0 : i32, i32, i32
  }
}

</mosaic_0001>

<llo_original>
// kernel: tpu_custom_call.1
$region0: #{tpu_custom_call.1}
  #allocation0 [shape = 'u32[]', space=smem, size = 0x4, offset = 0x4, fixed_abs, tag = 'smem constant byte address 0x4 - core index']
  #allocation1 [shape = 'u32[72,128]{1,0:T(1,128)}', space=vmem, size = 0x9000, scoped, tag = 'internal scratch']
  #allocation2 [shape = 'f32[16,128]{1,0:T(8,128)}', space=vmem, size = 0x2000, scoped, tag = 'scratch operand']
  %s0 = inlined_call_operand.hbm [shape: f32[2,8,128], index: 0, kind: input, shape index: {}]
  %s1 = inlined_call_operand.hbm [shape: f32[2,16,128], index: 1, kind: input, shape index: {}]
  %s2 = inlined_call_operand.vmem [shape: f32[1,128], index: 2, kind: input, shape index: {}]
  %s3 = inlined_call_operand.vmem [shape: f32[1,128], index: 3, kind: input, shape index: {}]
  %s4 = inlined_call_operand.vmem [shape: f32[1,128], index: 4, kind: input, shape index: {}]
  %s5 = inlined_call_operand.hbm [shape: f32[1,128], index: 5, kind: input, shape index: {}]
  %s6 = inlined_call_operand.hbm [shape: f32[1,128], index: 6, kind: input, shape index: {}]
  %s7 = inlined_call_operand.hbm [shape: f32[1,128], index: 7, kind: input, shape index: {}]
  %s8 = inlined_call_operand.hbm [shape: f32[1,128], index: 8, kind: input, shape index: {}]
  %s9 = inlined_call_operand.vmem [shape: f32[1,128], index: 9, kind: input, shape index: {}]
  %s10 = inlined_call_operand.hbm [shape: bf16[128,384], index: 10, kind: input, shape index: {}]
  %s11 = inlined_call_operand.hbm [shape: bf16[128,128], index: 11, kind: input, shape index: {}]
  %s12 = inlined_call_operand.hbm [shape: bf16[128,128], index: 12, kind: input, shape index: {}]
  %s13 = inlined_call_operand.hbm [shape: bf16[128,256], index: 13, kind: input, shape index: {}]
  %s14 = inlined_call_operand.hbm [shape: bf16[128,128], index: 14, kind: input, shape index: {}]
  %s15 = inlined_call_operand.hbm [shape: bf16[128,512], index: 15, kind: input, shape index: {}]
  %s16 = inlined_call_operand.vmem [shape: f32[1,512], index: 16, kind: input, shape index: {}]
  %s17 = inlined_call_operand.hbm [shape: bf16[512,128], index: 17, kind: input, shape index: {}]
  %s18 = inlined_call_operand.vmem [shape: f32[1,128], index: 18, kind: input, shape index: {}]
  %s19 = inlined_call_operand.hbm [shape: f32[2,8,128], index: 19, kind: output, shape index: {}]
  %s20 = sld [smem:[#allocation0]]
  $region138: #{tpu_custom_call.1} parent=0
    _
  %s22 = ssub.s32 1, %s20
  %s23 = scalar_select 0, %s22, %s20
  $region1: #{tpu_custom_call.1} parent=0
    #allocation3 [shape = 'u8[8192]{0}', space=vmem, size = 0x2000, scoped, tag = 'input window, operand 0, single buffered']
    #allocation4 [shape = 's32[1]{0}', space=sflag, size = 0x4, scoped, tag = 'scoped memory for tpu_custom_call.1']
    #allocation5 [shape = 's32[1]{0}', space=sflag, size = 0x4, scoped, tag = 'scoped memory for tpu_custom_call.1']
    #allocation6 [shape = 'u8[16384]{0}', space=vmem, size = 0x4000, scoped, tag = 'input window, operand 1, single buffered']
    #allocation7 [shape = 's32[1]{0}', space=sflag, size = 0x4, scoped, tag = 'scoped memory for tpu_custom_call.1']
    #allocation8 [shape = 'u8[512]{0}', space=vmem, size = 0x400, scoped, tag = 'input window, operand 5, single buffered']
    #allocation9 [shape = 'u8[512]{0}', space=vmem, size = 0x400, scoped, tag = 'input window, operand 6, single buffered']
    #allocation10 [shape = 's32[1]{0}', space=sflag, size = 0x4, scoped, tag = 'scoped memory for tpu_custom_call.1']
    #allocation11 [shape = 'u8[512]{0}', space=vmem, size = 0x400, scoped, tag = 'input window, operand 7, single buffered']
    #allocation12 [shape = 'u8[512]{0}', space=vmem, size = 0x400, scoped, tag = 'input window, operand 8, single buffered']
    #allocation13 [shape = 's32[1]{0}', space=sflag, size = 0x4, scoped, tag = 'scoped memory for tpu_custom_call.1']
    #allocation14 [shape = 'u8[98304]{0}', space=vmem, size = 0x18000, scoped, tag = 'input window, operand 10, single buffered']
    #allocation15 [shape = 'u8[32768]{0}', space=vmem, size = 0x8000, scoped, tag = 'input window, operand 11, single buffered']
    #allocation16 [shape = 's32[1]{0}', space=sflag, size = 0x4, scoped, tag = 'scoped memory for tpu_custom_call.1']
    #allocation17 [shape = 'u8[32768]{0}', space=vmem, size = 0x8000, scoped, tag = 'input window, operand 12, single buffered']
    #allocation18 [shape = 'u8[65536]{0}', space=vmem, size = 0x10000, scoped, tag = 'input window, operand 13, single buffered']
    #allocation19 [shape = 's32[1]{0}', space=sflag, size = 0x4, scoped, tag = 'scoped memory for tpu_custom_call.1']
    #allocation20 [shape = 'u8[32768]{0}', space=vmem, size = 0x8000, scoped, tag = 'input window, operand 14, single buffered']
    #allocation21 [shape = 'u8[131072]{0}', space=vmem, size = 0x20000, scoped, tag = 'input window, operand 15, single buffered']
    #allocation22 [shape = 's32[1]{0}', space=sflag, size = 0x4, scoped, tag = 'scoped memory for tpu_custom_call.1']
    #allocation23 [shape = 'u8[131072]{0}', space=vmem, size = 0x20000, scoped, tag = 'input window, operand 17, single buffered']
    #allocation24 [shape = 'u8[8192]{0}', space=vmem, size = 0x2000, scoped, tag = 'output window, operand 0, single buffered']
    %24 = vsyncpa [#allocation4], 0
    %25 = vsyncpa [#allocation7], 0
    %26 = vsyncpa [#allocation10], 0
    %27 = vsyncpa [#allocation13], 0
    %28 = vsyncpa [#allocation16], 0
    %29 = vsyncpa [#allocation19], 0
    %30 = vsyncpa [#allocation22], 0
    %31 = vsyncpa [#allocation5], 0
    // Predicated region
    $region2: #{tpu_custom_call.1} parent=1 // pred_check
      _
    $region3: #{tpu_custom_call.1} parent=1 // pred_check_branch
      %33 = sbr.rel (0) target = $region5
    $region4: #{tpu_custom_call.1} parent=1 // pred_region
      %35 = vsyncadd [#allocation4], 0
      %s36 = sshll.u32 %s0, 4
      %s37 = int_to_ptr.hbm [resolvable:$true] %s36
      %s38 = sshll.u32 [#allocation3], 4
      %s39 = int_to_ptr.vmem [resolvable:$true] %s38
      %44 = dma.hbm_to_vmem [thread:$0]  %s37, 256, %s39, [#allocation4], 128, 128, 8
    $region5: #{tpu_custom_call.1} parent=1 // pred_fallthru
      _
    // Predicated region
    $region6: #{tpu_custom_call.1} parent=1 // pred_check
      _
    $region7: #{tpu_custom_call.1} parent=1 // pred_check_branch
      %46 = sbr.rel (0) target = $region9
    $region8: #{tpu_custom_call.1} parent=1 // pred_region
      %48 = vsyncadd [#allocation7], 0
      %s49 = sshll.u32 %s1, 4
      %s50 = int_to_ptr.hbm [resolvable:$true] %s49
      %s51 = sshll.u32 [#allocation6], 4
      %s52 = int_to_ptr.vmem [resolvable:$true] %s51
      %57 = dma.hbm_to_vmem [thread:$0]  %s50, 512, %s52, [#allocation7], 128, 128, 8
    $region9: #{tpu_custom_call.1} parent=1 // pred_fallthru
      _
    // Predicated region
    $region10: #{tpu_custom_call.1} parent=1 // pred_check
      _
    $region11: #{tpu_custom_call.1} parent=1 // pred_check_branch
      %59 = sbr.rel (0) target = $region13
    $region12: #{tpu_custom_call.1} parent=1 // pred_region
      _
    $region13: #{tpu_custom_call.1} parent=1 // pred_fallthru
      _
    // Predicated region
    $region14: #{tpu_custom_call.1} parent=1 // pred_check
      _
    $region15: #{tpu_custom_call.1} parent=1 // pred_check_branch
      %61 = sbr.rel (0) target = $region17
    $region16: #{tpu_custom_call.1} parent=1 // pred_region
      _
    $region17: #{tpu_custom_call.1} parent=1 // pred_fallthru
      _
    // Predicated region
    $region18: #{tpu_custom_call.1} parent=1 // pred_check
      _
    $region19: #{tpu_custom_call.1} parent=1 // pred_check_branch
      %63 = sbr.rel (0) target = $region21
    $region20: #{tpu_custom_call.1} parent=1 // pred_region
      _
    $region21: #{tpu_custom_call.1} parent=1 // pred_fallthru
      _
    // Predicated region
    $region22: #{tpu_custom_call.1} parent=1 // pred_check
      _
    $region23: #{tpu_custom_call.1} parent=1 // pred_check_branch
      %65 = sbr.rel (0) target = $region25
    $region24: #{tpu_custom_call.1} parent=1 // pred_region
      %67 = vsyncadd [#allocation7], 0
      %s69 = sshll.u32 %s5, 4
      %s70 = int_to_ptr.hbm [resolvable:$true] %s69
      %s71 = sshll.u32 [#allocation8], 4
      %s72 = int_to_ptr.vmem [resolvable:$true] %s71
      %74 = dma.hbm_to_vmem [thread:$0]  %s70, 16, %s72, [#allocation7]
    $region25: #{tpu_custom_call.1} parent=1 // pred_fallthru
      _
    // Predicated region
    $region26: #{tpu_custom_call.1} parent=1 // pred_check
      _
    $region27: #{tpu_custom_call.1} parent=1 // pred_check_branch
      %76 = sbr.rel (0) target = $region29
    $region28: #{tpu_custom_call.1} parent=1 // pred_region
      %78 = vsyncadd [#allocation10], 0
      %s80 = sshll.u32 %s6, 4
      %s81 = int_to_ptr.hbm [resolvable:$true] %s80
      %s82 = sshll.u32 [#allocation9], 4
      %s83 = int_to_ptr.vmem [resolvable:$true] %s82
      %85 = dma.hbm_to_vmem [thread:$0]  %s81, 16, %s83, [#allocation10]
    $region29: #{tpu_custom_call.1} parent=1 // pred_fallthru
      _
    // Predicated region
    $region30: #{tpu_custom_call.1} parent=1 // pred_check
      _
    $region31: #{tpu_custom_call.1} parent=1 // pred_check_branch
      %87 = sbr.rel (0) target = $region33
    $region32: #{tpu_custom_call.1} parent=1 // pred_region
      %89 = vsyncadd [#allocation10], 0
      %s91 = sshll.u32 %s7, 4
      %s92 = int_to_ptr.hbm [resolvable:$true] %s91
      %s93 = sshll.u32 [#allocation11], 4
      %s94 = int_to_ptr.vmem [resolvable:$true] %s93
      %96 = dma.hbm_to_vmem [thread:$0]  %s92, 16, %s94, [#allocation10]
    $region33: #{tpu_custom_call.1} parent=1 // pred_fallthru
      _
    // Predicated region
    $region34: #{tpu_custom_call.1} parent=1 // pred_check
      _
    $region35: #{tpu_custom_call.1} parent=1 // pred_check_branch
      %98 = sbr.rel (0) target = $region37
    $region36: #{tpu_custom_call.1} parent=1 // pred_region
      %100 = vsyncadd [#allocation13], 0
      %s102 = sshll.u32 %s8, 4
      %s103 = int_to_ptr.hbm [resolvable:$true] %s102
      %s104 = sshll.u32 [#allocation12], 4
      %s105 = int_to_ptr.vmem [resolvable:$true] %s104
      %107 = dma.hbm_to_vmem [thread:$0]  %s103, 16, %s105, [#allocation13]
    $region37: #{tpu_custom_call.1} parent=1 // pred_fallthru
      _
    // Predicated region
    $region38: #{tpu_custom_call.1} parent=1 // pred_check
      _
    $region39: #{tpu_custom_call.1} parent=1 // pred_check_branch
      %109 = sbr.rel (0) target = $region41
    $region40: #{tpu_custom_call.1} parent=1 // pred_region
      _
    $region41: #{tpu_custom_call.1} parent=1 // pred_fallthru
      _
    // Predicated region
    $region42: #{tpu_custom_call.1} parent=1 // pred_check
      _
    $region43: #{tpu_custom_call.1} parent=1 // pred_check_branch
      %111 = sbr.rel (0) target = $region45
    $region44: #{tpu_custom_call.1} parent=1 // pred_region
      %113 = vsyncadd [#allocation13], 0
      %s114 = sshll.u32 %s10, 4
      %s115 = int_to_ptr.hbm [resolvable:$true] %s114
      %s116 = sshll.u32 [#allocation14], 4
      %s117 = int_to_ptr.vmem [resolvable:$true] %s116
      %122 = dma.hbm_to_vmem [thread:$0]  %s115, 3072, %s117, [#allocation13], 192, 192, 12
    $region45: #{tpu_custom_call.1} parent=1 // pred_fallthru
      _
    // Predicated region
    $region46: #{tpu_custom_call.1} parent=1 // pred_check
      _
    $region47: #{tpu_custom_call.1} parent=1 // pred_check_branch
      %124 = sbr.rel (0) target = $region49
    $region48: #{tpu_custom_call.1} parent=1 // pred_region
      %126 = vsyncadd [#allocation16], 0
      %s127 = sshll.u32 %s11, 4
      %s128 = int_to_ptr.hbm [resolvable:$true] %s127
      %s129 = sshll.u32 [#allocation15], 4
      %s130 = int_to_ptr.vmem [resolvable:$true] %s129
      %135 = dma.hbm_to_vmem [thread:$0]  %s128, 1024, %s130, [#allocation16], 64, 64, 4
    $region49: #{tpu_custom_call.1} parent=1 // pred_fallthru
      _
    // Predicated region
    $region50: #{tpu_custom_call.1} parent=1 // pred_check
      _
    $region51: #{tpu_custom_call.1} parent=1 // pred_check_branch
      %137 = sbr.rel (0) target = $region53
    $region52: #{tpu_custom_call.1} parent=1 // pred_region
      %139 = vsyncadd [#allocation16], 0
      %s140 = sshll.u32 %s12, 4
      %s141 = int_to_ptr.hbm [resolvable:$true] %s140
      %s142 = sshll.u32 [#allocation17], 4
      %s143 = int_to_ptr.vmem [resolvable:$true] %s142
      %148 = dma.hbm_to_vmem [thread:$0]  %s141, 1024, %s143, [#allocation16], 64, 64, 4
    $region53: #{tpu_custom_call.1} parent=1 // pred_fallthru
      _
    // Predicated region
    $region54: #{tpu_custom_call.1} parent=1 // pred_check
      _
    $region55: #{tpu_custom_call.1} parent=1 // pred_check_branch
      %150 = sbr.rel (0) target = $region57
    $region56: #{tpu_custom_call.1} parent=1 // pred_region
      %152 = vsyncadd [#allocation19], 0
      %s153 = sshll.u32 %s13, 4
      %s154 = int_to_ptr.hbm [resolvable:$true] %s153
      %s155 = sshll.u32 [#allocation18], 4
      %s156 = int_to_ptr.vmem [resolvable:$true] %s155
      %161 = dma.hbm_to_vmem [thread:$0]  %s154, 2048, %s156, [#allocation19], 128, 128, 8
    $region57: #{tpu_custom_call.1} parent=1 // pred_fallthru
      _
    // Predicated region
    $region58: #{tpu_custom_call.1} parent=1 // pred_check
      _
    $region59: #{tpu_custom_call.1} parent=1 // pred_check_branch
      %163 = sbr.rel (0) target = $region61
    $region60: #{tpu_custom_call.1} parent=1 // pred_region
      %165 = vsyncadd [#allocation19], 0
      %s166 = sshll.u32 %s14, 4
      %s167 = int_to_ptr.hbm [resolvable:$true] %s166
      %s168 = sshll.u32 [#allocation20], 4
      %s169 = int_to_ptr.vmem [resolvable:$true] %s168
      %174 = dma.hbm_to_vmem [thread:$0]  %s167, 1024, %s169, [#allocation19], 64, 64, 4
    $region61: #{tpu_custom_call.1} parent=1 // pred_fallthru
      _
    // Predicated region
    $region62: #{tpu_custom_call.1} parent=1 // pred_check
      _
    $region63: #{tpu_custom_call.1} parent=1 // pred_check_branch
      %176 = sbr.rel (0) target = $region65
    $region64: #{tpu_custom_call.1} parent=1 // pred_region
      %178 = vsyncadd [#allocation22], 0
      %s179 = sshll.u32 %s15, 4
      %s180 = int_to_ptr.hbm [resolvable:$true] %s179
      %s181 = sshll.u32 [#allocation21], 4
      %s182 = int_to_ptr.vmem [resolvable:$true] %s181
      %187 = dma.hbm_to_vmem [thread:$0]  %s180, 4096, %s182, [#allocation22], 256, 256, 16
    $region65: #{tpu_custom_call.1} parent=1 // pred_fallthru
      _
    // Predicated region
    $region66: #{tpu_custom_call.1} parent=1 // pred_check
      _
    $region67: #{tpu_custom_call.1} parent=1 // pred_check_branch
      %189 = sbr.rel (0) target = $region69
    $region68: #{tpu_custom_call.1} parent=1 // pred_region
      _
    $region69: #{tpu_custom_call.1} parent=1 // pred_fallthru
      _
    // Predicated region
    $region70: #{tpu_custom_call.1} parent=1 // pred_check
      _
    $region71: #{tpu_custom_call.1} parent=1 // pred_check_branch
      %191 = sbr.rel (0) target = $region73
    $region72: #{tpu_custom_call.1} parent=1 // pred_region
      %193 = vsyncadd [#allocation22], 0
      %s194 = sshll.u32 %s17, 4
      %s195 = int_to_ptr.hbm [resolvable:$true] %s194
      %s196 = sshll.u32 [#allocation23], 4
      %s197 = int_to_ptr.vmem [resolvable:$true] %s196
      %202 = dma.hbm_to_vmem [thread:$0]  %s195, 4096, %s197, [#allocation22], 64, 64, 4
    $region73: #{tpu_custom_call.1} parent=1 // pred_fallthru
      _
    // Predicated region
    $region74: #{tpu_custom_call.1} parent=1 // pred_check
      _
    $region75: #{tpu_custom_call.1} parent=1 // pred_check_branch
      %204 = sbr.rel (0) target = $region77
    $region76: #{tpu_custom_call.1} parent=1 // pred_region
      _
    $region77: #{tpu_custom_call.1} parent=1 // pred_fallthru
      _
    // Predicated region
    $region78: #{tpu_custom_call.1} parent=1 // pred_check
      _
    $region79: #{tpu_custom_call.1} parent=1 // pred_check_branch
      %206 = sbr.rel (0) target = $region81
    $region80: #{tpu_custom_call.1} parent=1 // pred_region
      %208 = dma.done [#allocation4], 256
    $region81: #{tpu_custom_call.1} parent=1 // pred_fallthru
      _
    // Predicated region
    $region82: #{tpu_custom_call.1} parent=1 // pred_check
      _
    $region83: #{tpu_custom_call.1} parent=1 // pred_check_branch
      %210 = sbr.rel (0) target = $region85
    $region84: #{tpu_custom_call.1} parent=1 // pred_region
      %212 = dma.done [#allocation7], 512
    $region85: #{tpu_custom_call.1} parent=1 // pred_fallthru
      _
    // Predicated region
    $region86: #{tpu_custom_call.1} parent=1 // pred_check
      _
    $region87: #{tpu_custom_call.1} parent=1 // pred_check_branch
      %214 = sbr.rel (0) target = $region89
    $region88: #{tpu_custom_call.1} parent=1 // pred_region
      %216 = dma.done [#allocation7], 16
    $region89: #{tpu_custom_call.1} parent=1 // pred_fallthru
      _
    // Predicated region
    $region90: #{tpu_custom_call.1} parent=1 // pred_check
      _
    $region91: #{tpu_custom_call.1} parent=1 // pred_check_branch
      %218 = sbr.rel (0) target = $region93
    $region92: #{tpu_custom_call.1} parent=1 // pred_region
      %220 = dma.done [#allocation10], 16
    $region93: #{tpu_custom_call.1} parent=1 // pred_fallthru
      _
    // Predicated region
    $region94: #{tpu_custom_call.1} parent=1 // pred_check
      _
    $region95: #{tpu_custom_call.1} parent=1 // pred_check_branch
      %222 = sbr.rel (0) target = $region97
    $region96: #{tpu_custom_call.1} parent=1 // pred_region
      %224 = dma.done [#allocation10], 16
    $region97: #{tpu_custom_call.1} parent=1 // pred_fallthru
      _
    // Predicated region
    $region98: #{tpu_custom_call.1} parent=1 // pred_check
      _
    $region99: #{tpu_custom_call.1} parent=1 // pred_check_branch
      %226 = sbr.rel (0) target = $region101
    $region100: #{tpu_custom_call.1} parent=1 // pred_region
      %228 = dma.done [#allocation13], 16
    $region101: #{tpu_custom_call.1} parent=1 // pred_fallthru
      _
    // Predicated region
    $region102: #{tpu_custom_call.1} parent=1 // pred_check
      _
    $region103: #{tpu_custom_call.1} parent=1 // pred_check_branch
      %230 = sbr.rel (0) target = $region105
    $region104: #{tpu_custom_call.1} parent=1 // pred_region
      %232 = dma.done [#allocation13], 3072
    $region105: #{tpu_custom_call.1} parent=1 // pred_fallthru
      _
    // Predicated region
    $region106: #{tpu_custom_call.1} parent=1 // pred_check
      _
    $region107: #{tpu_custom_call.1} parent=1 // pred_check_branch
      %234 = sbr.rel (0) target = $region109
    $region108: #{tpu_custom_call.1} parent=1 // pred_region
      %236 = dma.done [#allocation16], 1024
    $region109: #{tpu_custom_call.1} parent=1 // pred_fallthru
      _
    // Predicated region
    $region110: #{tpu_custom_call.1} parent=1 // pred_check
      _
    $region111: #{tpu_custom_call.1} parent=1 // pred_check_branch
      %238 = sbr.rel (0) target = $region113
    $region112: #{tpu_custom_call.1} parent=1 // pred_region
      %240 = dma.done [#allocation16], 1024
    $region113: #{tpu_custom_call.1} parent=1 // pred_fallthru
      _
    // Predicated region
    $region114: #{tpu_custom_call.1} parent=1 // pred_check
      _
    $region115: #{tpu_custom_call.1} parent=1 // pred_check_branch
      %242 = sbr.rel (0) target = $region117
    $region116: #{tpu_custom_call.1} parent=1 // pred_region
      %244 = dma.done [#allocation19], 2048
    $region117: #{tpu_custom_call.1} parent=1 // pred_fallthru
      _
    // Predicated region
    $region118: #{tpu_custom_call.1} parent=1 // pred_check
      _
    $region119: #{tpu_custom_call.1} parent=1 // pred_check_branch
      %246 = sbr.rel (0) target = $region121
    $region120: #{tpu_custom_call.1} parent=1 // pred_region
      %248 = dma.done [#allocation19], 1024
    $region121: #{tpu_custom_call.1} parent=1 // pred_fallthru
      _
    // Predicated region
    $region122: #{tpu_custom_call.1} parent=1 // pred_check
      _
    $region123: #{tpu_custom_call.1} parent=1 // pred_check_branch
      %250 = sbr.rel (0) target = $region125
    $region124: #{tpu_custom_call.1} parent=1 // pred_region
      %252 = dma.done [#allocation22], 4096
    $region125: #{tpu_custom_call.1} parent=1 // pred_fallthru
      _
    // Predicated region
    $region126: #{tpu_custom_call.1} parent=1 // pred_check
      _
    $region127: #{tpu_custom_call.1} parent=1 // pred_check_branch
      %254 = sbr.rel (0) target = $region129
    $region128: #{tpu_custom_call.1} parent=1 // pred_region
      %256 = dma.done [#allocation22], 4096
    $region129: #{tpu_custom_call.1} parent=1 // pred_fallthru
      _
    %v258 = vld [vmem:[#allocation3] sm:$0xff]
    %v259 = vld [vmem:[#allocation3 + $0x8] sm:$0xff]
    %v260 = vld [vmem:[#allocation6] sm:$0xff]
    %v261 = vld [vmem:[#allocation6 + $0x8] sm:$0xff]
    %v262 = vld [vmem:[#allocation6 + $0x10] sm:$0xff]
    %v263 = vld [vmem:[#allocation6 + $0x18] sm:$0xff]
    %v264 = vld [vmem:[%s2] sm:$0x1]
    %v265 = vld [vmem:[%s3] sm:$0x1]
    %266 = vadd.xlane.f32.xlu0 %v258
    %v267 = vpop.xlane.xlu0 %266
    %268 = vadd.xlane.f32.xlu0 %v259
    %v269 = vpop.xlane.xlu0 %268
    %v270 = vrcp.pop 128.0
    %v271 = vmul.f32 128.0, %v270
    %v272 = vsub.f32 1.0, %v271
    %v273 = vmul.f32 %v270, %v272
    %v274 = vadd.f32 %v270, %v273
    %vm275 = vweird.f32 %v270
    %v276 = vsel %vm275, %v270, %v274
    %v277 = vmul.f32 %v267, %v276
    %v278 = vmul.f32 %v269, %v276
    %v279 = vsub.f32 %v258, %v277
    %v280 = vsub.f32 %v259, %v278
    %v281 = vmul.f32 %v279, %v279
    %v282 = vmul.f32 %v280, %v280
    %283 = vadd.xlane.f32.xlu0 %v281
    %v284 = vpop.xlane.xlu0 %283
    %285 = vadd.xlane.f32.xlu0 %v282
    %v286 = vpop.xlane.xlu0 %285
    %v287 = vmul.f32 %v284, %v276
    %v288 = vmul.f32 %v286, %v276
    %v289 = vadd.f32 %v287, 1e-06
    %v290 = vadd.f32 %v288, 1e-06
    %v291 = vrsqrt.pop %v289
    %v292 = vmul.f32 %v291, %v289
    %v293 = vmul.f32 %v292, %v291
    %v294 = vmul.f32 0.5, %v293
    %v295 = vsub.f32 1.5, %v294
    %v296 = vmul.f32 %v291, %v295
    %vm297 = vweird.f32 %v289
    %vm298 = vweird.f32 %v291
    %vm299 = vmor %vm297, %vm298
    %v300 = vsel %vm299, %v291, %v296
    %v301 = vrsqrt.pop %v290
    %v302 = vmul.f32 %v301, %v290
    %v303 = vmul.f32 %v302, %v301
    %v304 = vmul.f32 0.5, %v303
    %v305 = vsub.f32 1.5, %v304
    %v306 = vmul.f32 %v301, %v305
    %vm307 = vweird.f32 %v290
    %vm308 = vweird.f32 %v301
    %vm309 = vmor %vm307, %vm308
    %v310 = vsel %vm309, %v301, %v306
    %v311 = vmul.f32 %v279, %v300
    %v312 = vmul.f32 %v280, %v310
    %v314 = vperm.slane %v264, 0
    %v316 = vmul.f32 %v311, %v314
    %v317 = vmul.f32 %v312, %v314
    %v319 = vperm.slane %v265, 0
    %v321 = vadd.f32 %v316, %v319
    %v322 = vadd.f32 %v317, %v319
    %v323 = vpack.c.bf16 %v322, %v321
    %v324 = vld [vmem:[#allocation14] sm:$0xff]
    %v325 = vld [vmem:[#allocation14 + $0x8] sm:$0xf]
    %v326 = vld [vmem:[#allocation14 + $0xc] sm:$0xff]
    %v327 = vld [vmem:[#allocation14 + $0x14] sm:$0xf]
    %v328 = vld [vmem:[#allocation14 + $0x18] sm:$0xff]
    %v329 = vld [vmem:[#allocation14 + $0x20] sm:$0xf]
    %v330 = vld [vmem:[#allocation14 + $0x24] sm:$0xff]
    %v331 = vld [vmem:[#allocation14 + $0x2c] sm:$0xf]
    %v332 = vld [vmem:[#allocation14 + $0x30] sm:$0xff]
    %v333 = vld [vmem:[#allocation14 + $0x38] sm:$0xf]
    %v334 = vld [vmem:[#allocation14 + $0x3c] sm:$0xff]
    %v335 = vld [vmem:[#allocation14 + $0x44] sm:$0xf]
    %v336 = vld [vmem:[#allocation14 + $0x48] sm:$0xff]
    %v337 = vld [vmem:[#allocation14 + $0x50] sm:$0xf]
    %v338 = vld [vmem:[#allocation14 + $0x54] sm:$0xff]
    %v339 = vld [vmem:[#allocation14 + $0x5c] sm:$0xf]
    %v340 = vld [vmem:[#allocation14 + $0x60] sm:$0xff]
    %v341 = vld [vmem:[#allocation14 + $0x68] sm:$0xf]
    %v342 = vld [vmem:[#allocation14 + $0x6c] sm:$0xff]
    %v343 = vld [vmem:[#allocation14 + $0x74] sm:$0xf]
    %v344 = vld [vmem:[#allocation14 + $0x78] sm:$0xff]
    %v345 = vld [vmem:[#allocation14 + $0x80] sm:$0xf]
    %v346 = vld [vmem:[#allocation14 + $0x84] sm:$0xff]
    %v347 = vld [vmem:[#allocation14 + $0x8c] sm:$0xf]
    %v348 = vld [vmem:[#allocation14 + $0x90] sm:$0xff]
    %v349 = vld [vmem:[#allocation14 + $0x98] sm:$0xf]
    %v350 = vld [vmem:[#allocation14 + $0x9c] sm:$0xff]
    %v351 = vld [vmem:[#allocation14 + $0xa4] sm:$0xf]
    %v352 = vld [vmem:[#allocation14 + $0xa8] sm:$0xff]
    %v353 = vld [vmem:[#allocation14 + $0xb0] sm:$0xf]
    %v354 = vld [vmem:[#allocation14 + $0xb4] sm:$0xff]
    %v355 = vld [vmem:[#allocation14 + $0xbc] sm:$0xf]
    %v388 = vunpack.c.l.b16 %v324
    %v389 = vunpack.c.h.b16 %v324
    %v390 = vunpack.c.l.b16 %v325
    %v391 = vunpack.c.l.b16 %v326
    %v392 = vunpack.c.h.b16 %v326
    %v393 = vunpack.c.l.b16 %v327
    %v394 = vunpack.c.l.b16 %v328
    %v395 = vunpack.c.h.b16 %v328
    %v396 = vunpack.c.l.b16 %v329
    %v397 = vunpack.c.l.b16 %v330
    %v398 = vunpack.c.h.b16 %v330
    %v399 = vunpack.c.l.b16 %v331
    %v400 = vunpack.c.l.b16 %v332
    %v401 = vunpack.c.h.b16 %v332
    %v402 = vunpack.c.l.b16 %v333
    %v403 = vunpack.c.l.b16 %v334
    %v404 = vunpack.c.h.b16 %v334
    %v405 = vunpack.c.l.b16 %v335
    %v406 = vunpack.c.l.b16 %v336
    %v407 = vunpack.c.h.b16 %v336
    %v408 = vunpack.c.l.b16 %v337
    %v409 = vunpack.c.l.b16 %v338
    %v410 = vunpack.c.h.b16 %v338
    %v411 = vunpack.c.l.b16 %v339
    %v412 = vunpack.c.l.b16 %v340
    %v413 = vunpack.c.h.b16 %v340
    %v414 = vunpack.c.l.b16 %v341
    %v415 = vunpack.c.l.b16 %v342
    %v416 = vunpack.c.h.b16 %v342
    %v417 = vunpack.c.l.b16 %v343
    %v418 = vunpack.c.l.b16 %v344
    %v419 = vunpack.c.h.b16 %v344
    %v420 = vunpack.c.l.b16 %v345
    %v421 = vunpack.c.l.b16 %v346
    %v422 = vunpack.c.h.b16 %v346
    %v423 = vunpack.c.l.b16 %v347
    %v424 = vunpack.c.l.b16 %v348
    %v425 = vunpack.c.h.b16 %v348
    %v426 = vunpack.c.l.b16 %v349
    %v427 = vunpack.c.l.b16 %v350
    %v428 = vunpack.c.h.b16 %v350
    %v429 = vunpack.c.l.b16 %v351
    %v430 = vunpack.c.l.b16 %v352
    %v431 = vunpack.c.h.b16 %v352
    %v432 = vunpack.c.l.b16 %v353
    %v433 = vunpack.c.l.b16 %v354
    %v434 = vunpack.c.h.b16 %v354
    %v435 = vunpack.c.l.b16 %v355
    %v436 = vpack.c.b16 %v391, %v388
    %v437 = vpack.c.b16 %v392, %v389
    %v438 = vpack.c.b16 %v393, %v390
    %v439 = vpack.c.b16 %v397, %v394
    %v440 = vpack.c.b16 %v398, %v395
    %v441 = vpack.c.b16 %v399, %v396
    %v442 = vpack.c.b16 %v403, %v400
    %v443 = vpack.c.b16 %v404, %v401
    %v444 = vpack.c.b16 %v405, %v402
    %v445 = vpack.c.b16 %v409, %v406
    %v446 = vpack.c.b16 %v410, %v407
    %v447 = vpack.c.b16 %v411, %v408
    %v448 = vpack.c.b16 %v415, %v412
    %v449 = vpack.c.b16 %v416, %v413
    %v450 = vpack.c.b16 %v417, %v414
    %v451 = vpack.c.b16 %v421, %v418
    %v452 = vpack.c.b16 %v422, %v419
    %v453 = vpack.c.b16 %v423, %v420
    %v454 = vpack.c.b16 %v427, %v424
    %v455 = vpack.c.b16 %v428, %v425
    %v456 = vpack.c.b16 %v429, %v426
    %v457 = vpack.c.b16 %v433, %v430
    %v458 = vpack.c.b16 %v434, %v431
    %v459 = vpack.c.b16 %v435, %v432
    %484 = vmatpush.bf16.msra.mxu0 %v457
    %485 = vmatpush.bf16.msra.mxu0 %v454
    %486 = vmatpush.bf16.msra.mxu0 %v451
    %487 = vmatpush.bf16.msra.mxu0 %v448
    %488 = vmatpush.bf16.msra.mxu0 %v445
    %489 = vmatpush.bf16.msra.mxu0 %v442
    %490 = vmatpush.bf16.msra.mxu0 %v439
    %491 = vmatpush.bf16.msra.mxu0 %v436
    %492 = vmatmul.bf16.gmra.mxu0 %v323
    %v493 = vpop.f32.mrf.mxu0
    %v494 = vadd.f32 0.0, %v493
    %v495 = vpop.f32.mrf.mxu0
    %v496 = vadd.f32 0.0, %v495
    %497 = vdwg.mxu0
    %498 = vmatpush.bf16.msra.mxu0 %v458
    %499 = vmatpush.bf16.msra.mxu0 %v455
    %500 = vmatpush.bf16.msra.mxu0 %v452
    %501 = vmatpush.bf16.msra.mxu0 %v449
    %502 = vmatpush.bf16.msra.mxu0 %v446
    %503 = vmatpush.bf16.msra.mxu0 %v443
    %504 = vmatpush.bf16.msra.mxu0 %v440
    %505 = vmatpush.bf16.msra.mxu0 %v437
    %506 = vmatmul.bf16.gmra.mxu0 %v323
    %v507 = vpop.f32.mrf.mxu0
    %v508 = vadd.f32 0.0, %v507
    %v509 = vpop.f32.mrf.mxu0
    %v510 = vadd.f32 0.0, %v509
    %511 = vdwg.mxu0
    %512 = vmatpush.bf16.msra.mxu0 %v459
    %513 = vmatpush.bf16.msra.mxu0 %v456
    %514 = vmatpush.bf16.msra.mxu0 %v453
    %515 = vmatpush.bf16.msra.mxu0 %v450
    %516 = vmatpush.bf16.msra.mxu0 %v447
    %517 = vmatpush.bf16.msra.mxu0 %v444
    %518 = vmatpush.bf16.msra.mxu0 %v441
    %519 = vmatpush.bf16.msra.mxu0 %v438
    %520 = vmatmul.bf16.gmra.mxu0 %v323
    %v521 = vpop.f32.mrf.mxu0
    %v522 = vadd.f32 0.0, %v521
    %v523 = vpop.f32.mrf.mxu0
    %v524 = vadd.f32 0.0, %v523
    %525 = vdwg.mxu0
    %v526 = vpack.c.bf16 %v494, %v494
    %v527 = vpack.c.bf16 %v508, %v508
    %vm528 = vcmask 523264
    %v530 = vsel %vm528, %v526, 0
    %v533 = vsel %vm528, %v527, 0
    %535 = vmatpush.bf16.xpose.msra.mxu0 0
    %536 = vmatpush.bf16.xpose.msra.mxu0 0
    %537 = vmatpush.bf16.xpose.msra.mxu0 0
    %538 = vmatpush.bf16.xpose.msra.mxu0 0
    %539 = vmatpush.bf16.xpose.msra.mxu0 0
    %540 = vmatpush.bf16.xpose.msra.mxu0 0
    %541 = vmatpush.bf16.xpose.msra.mxu0 0
    %542 = vmatpush.bf16.xpose.msra.mxu0 %v533
    %543 = vmatmul.bf16.gmra.mxu0 %v530
    %v544 = vpop.f32.mrf.mxu0
    %v545 = vadd.f32 0.0, %v544
    %v546 = vpop.f32.mrf.mxu0
    %547 = vdwg.mxu0
    %vm548 = vcmask 64512
    %v549 = vsel %vm548, %v545, -inf
    %550 = vmax.xlane.f32.xlu0 %v549
    %v551 = vpop.xlane.xlu0 %550
    %v552 = vsub.f32 %v545, %v551
    %v553 = vmul.f32 %v552, 1.442695
    %v554 = vpow.pop %v553
    %v555 = vsel %vm548, %v554, 0.0
    %556 = vadd.xlane.f32.xlu0 %v555
    %v557 = vpop.xlane.xlu0 %556
    %v558 = vrcp.pop %v557
    %v559 = vmul.f32 %v554, %v558
    %v560 = vpack.c.bf16 %v559, %v559
    %v561 = vpack.c.bf16 %v522, %v522
    %v563 = vsel %vm548, %v560, 0
    %vm565 = vcmask 1043456
    %v567 = vsel %vm565, %v561, 0
    %569 = vmatpush.bf16.msra.mxu0 0
    %570 = vmatpush.bf16.msra.mxu0 0
    %571 = vmatpush.bf16.msra.mxu0 0
    %572 = vmatpush.bf16.msra.mxu0 0
    %573 = vmatpush.bf16.msra.mxu0 0
    %574 = vmatpush.bf16.msra.mxu0 0
    %575 = vmatpush.bf16.msra.mxu0 0
    %576 = vmatpush.bf16.msra.mxu0 %v567
    %577 = vmatmul.bf16.gmra.mxu0 %v563
    %v578 = vpop.f32.mrf.mxu0
    %v579 = vadd.f32 0.0, %v578
    %v580 = vpop.f32.mrf.mxu0
    %581 = vdwg.mxu0
    %v582 = vpack.c.bf16 %v579, %v579
    %v583 = vld [vmem:[#allocation15] sm:$0xf]
    %v584 = vld [vmem:[#allocation15 + $0x4] sm:$0xf]
    %v585 = vld [vmem:[#allocation15 + $0x8] sm:$0xf]
    %v586 = vld [vmem:[#allocation15 + $0xc] sm:$0xf]
    %v587 = vld [vmem:[#allocation15 + $0x10] sm:$0xf]
    %v588 = vld [vmem:[#allocation15 + $0x14] sm:$0xf]
    %v589 = vld [vmem:[#allocation15 + $0x18] sm:$0xf]
    %v590 = vld [vmem:[#allocation15 + $0x1c] sm:$0xf]
    %592 = vrot.lane.b32.xlu0 %v526, 64
    %v593 = vpop.permute.xlu0 %592
    %595 = vrot.lane.b32.xlu0 %v527, 64
    %v596 = vpop.permute.xlu0 %595
    %v598 = vsel %vm528, %v593, 0
    %v601 = vsel %vm528, %v596, 0
    %603 = vmatpush.bf16.xpose.msra.mxu0 0
    %604 = vmatpush.bf16.xpose.msra.mxu0 0
    %605 = vmatpush.bf16.xpose.msra.mxu0 0
    %606 = vmatpush.bf16.xpose.msra.mxu0 0
    %607 = vmatpush.bf16.xpose.msra.mxu0 0
    %608 = vmatpush.bf16.xpose.msra.mxu0 0
    %609 = vmatpush.bf16.xpose.msra.mxu0 0
    %610 = vmatpush.bf16.xpose.msra.mxu0 %v601
    %611 = vmatmul.bf16.gmra.mxu0 %v598
    %v612 = vpop.f32.mrf.mxu0
    %v613 = vadd.f32 0.0, %v612
    %v614 = vpop.f32.mrf.mxu0
    %615 = vdwg.mxu0
    %v616 = vsel %vm548, %v613, -inf
    %617 = vmax.xlane.f32.xlu0 %v616
    %v618 = vpop.xlane.xlu0 %617
    %v619 = vsub.f32 %v613, %v618
    %v620 = vmul.f32 %v619, 1.442695
    %v621 = vpow.pop %v620
    %v622 = vsel %vm548, %v621, 0.0
    %623 = vadd.xlane.f32.xlu0 %v622
    %v624 = vpop.xlane.xlu0 %623
    %v625 = vrcp.pop %v624
    %v626 = vmul.f32 %v621, %v625
    %v627 = vpack.c.bf16 %v626, %v626
    %629 = vrot.lane.b32.xlu0 %v561, 64
    %v630 = vpop.permute.xlu0 %629
    %v632 = vsel %vm548, %v627, 0
    %v635 = vsel %vm565, %v630, 0
    %637 = vmatpush.bf16.msra.mxu0 0
    %638 = vmatpush.bf16.msra.mxu0 0
    %639 = vmatpush.bf16.msra.mxu0 0
    %640 = vmatpush.bf16.msra.mxu0 0
    %641 = vmatpush.bf16.msra.mxu0 0
    %642 = vmatpush.bf16.msra.mxu0 0
    %643 = vmatpush.bf16.msra.mxu0 0
    %644 = vmatpush.bf16.msra.mxu0 %v635
    %645 = vmatmul.bf16.gmra.mxu0 %v632
    %v646 = vpop.f32.mrf.mxu0
    %v647 = vadd.f32 0.0, %v646
    %v648 = vpop.f32.mrf.mxu0
    %649 = vdwg.mxu0
    %v650 = vpack.c.bf16 %v647, %v647
    %v651 = vld [vmem:[#allocation15 + $0x20] sm:$0xf]
    %v652 = vld [vmem:[#allocation15 + $0x24] sm:$0xf]
    %v653 = vld [vmem:[#allocation15 + $0x28] sm:$0xf]
    %v654 = vld [vmem:[#allocation15 + $0x2c] sm:$0xf]
    %v655 = vld [vmem:[#allocation15 + $0x30] sm:$0xf]
    %v656 = vld [vmem:[#allocation15 + $0x34] sm:$0xf]
    %v657 = vld [vmem:[#allocation15 + $0x38] sm:$0xf]
    %v658 = vld [vmem:[#allocation15 + $0x3c] sm:$0xf]
    %v667 = vunpack.c.l.b16 %v651
    %v668 = vunpack.c.l.b16 %v652
    %v669 = vunpack.c.l.b16 %v653
    %v670 = vunpack.c.l.b16 %v654
    %v671 = vunpack.c.l.b16 %v655
    %v672 = vunpack.c.l.b16 %v656
    %v673 = vunpack.c.l.b16 %v657
    %v674 = vunpack.c.l.b16 %v658
    %v675 = vpack.c.b16 %v668, %v667
    %v676 = vpack.c.b16 %v670, %v669
    %v677 = vpack.c.b16 %v672, %v671
    %v678 = vpack.c.b16 %v674, %v673
    %v684 = vsel %vm528, %v650, 0
    %686 = vmatpush.bf16.msra.mxu0 0
    %687 = vmatpush.bf16.msra.mxu0 0
    %688 = vmatpush.bf16.msra.mxu0 0
    %689 = vmatpush.bf16.msra.mxu0 0
    %690 = vmatpush.bf16.msra.mxu0 %v678
    %691 = vmatpush.bf16.msra.mxu0 %v677
    %692 = vmatpush.bf16.msra.mxu0 %v676
    %693 = vmatpush.bf16.msra.mxu0 %v675
    %694 = vmatmul.bf16.gmra.mxu0 %v684
    %v695 = vpop.f32.mrf.mxu0
    %v696 = vadd.f32 0.0, %v695
    %v697 = vpop.f32.mrf.mxu0
    %698 = vdwg.mxu0
    %v707 = vunpack.c.l.b16 %v583
    %v708 = vunpack.c.l.b16 %v584
    %v709 = vunpack.c.l.b16 %v585
    %v710 = vunpack.c.l.b16 %v586
    %v711 = vunpack.c.l.b16 %v587
    %v712 = vunpack.c.l.b16 %v588
    %v713 = vunpack.c.l.b16 %v589
    %v714 = vunpack.c.l.b16 %v590
    %v715 = vpack.c.b16 %v708, %v707
    %v716 = vpack.c.b16 %v710, %v709
    %v717 = vpack.c.b16 %v712, %v711
    %v718 = vpack.c.b16 %v714, %v713
    %v724 = vsel %vm528, %v582, 0
    %726 = vmatpush.bf16.msra.mxu0 0
    %727 = vmatpush.bf16.msra.mxu0 0
    %728 = vmatpush.bf16.msra.mxu0 0
    %729 = vmatpush.bf16.msra.mxu0 0
    %730 = vmatpush.bf16.msra.mxu0 %v718
    %731 = vmatpush.bf16.msra.mxu0 %v717
    %732 = vmatpush.bf16.msra.mxu0 %v716
    %733 = vmatpush.bf16.msra.mxu0 %v715
    %734 = vmatmul.bf16.gmra.mxu0 %v724
    %v735 = vpop.f32.mrf.mxu0
    %v736 = vadd.f32 %v696, %v735
    %v737 = vpop.f32.mrf.mxu0
    %738 = vdwg.mxu0
    %739 = vst [vmem:[#allocation2] sm:$0xff] %v736
    %v740 = vpack.c.bf16 %v496, %v496
    %v741 = vpack.c.bf16 %v510, %v510
    %v743 = vsel %vm528, %v740, 0
    %v746 = vsel %vm528, %v741, 0
    %748 = vmatpush.bf16.xpose.msra.mxu0 0
    %749 = vmatpush.bf16.xpose.msra.mxu0 0
    %750 = vmatpush.bf16.xpose.msra.mxu0 0
    %751 = vmatpush.bf16.xpose.msra.mxu0 0
    %752 = vmatpush.bf16.xpose.msra.mxu0 0
    %753 = vmatpush.bf16.xpose.msra.mxu0 0
    %754 = vmatpush.bf16.xpose.msra.mxu0 0
    %755 = vmatpush.bf16.xpose.msra.mxu0 %v746
    %756 = vmatmul.bf16.gmra.mxu0 %v743
    %v757 = vpop.f32.mrf.mxu0
    %v758 = vadd.f32 0.0, %v757
    %v759 = vpop.f32.mrf.mxu0
    %760 = vdwg.mxu0
    %v761 = vsel %vm548, %v758, -inf
    %762 = vmax.xlane.f32.xlu0 %v761
    %v763 = vpop.xlane.xlu0 %762
    %v764 = vsub.f32 %v758, %v763
    %v765 = vmul.f32 %v764, 1.442695
    %v766 = vpow.pop %v765
    %v767 = vsel %vm548, %v766, 0.0
    %768 = vadd.xlane.f32.xlu0 %v767
    %v769 = vpop.xlane.xlu0 %768
    %v770 = vrcp.pop %v769
    %v771 = vmul.f32 %v766, %v770
    %v772 = vpack.c.bf16 %v771, %v771
    %v773 = vpack.c.bf16 %v524, %v524
    %v775 = vsel %vm548, %v772, 0
    %v778 = vsel %vm565, %v773, 0
    %780 = vmatpush.bf16.msra.mxu0 0
    %781 = vmatpush.bf16.msra.mxu0 0
    %782 = vmatpush.bf16.msra.mxu0 0
    %783 = vmatpush.bf16.msra.mxu0 0
    %784 = vmatpush.bf16.msra.mxu0 0
    %785 = vmatpush.bf16.msra.mxu0 0
    %786 = vmatpush.bf16.msra.mxu0 0
    %787 = vmatpush.bf16.msra.mxu0 %v778
    %788 = vmatmul.bf16.gmra.mxu0 %v775
    %v789 = vpop.f32.mrf.mxu0
    %v790 = vadd.f32 0.0, %v789
    %v791 = vpop.f32.mrf.mxu0
    %792 = vdwg.mxu0
    %v793 = vpack.c.bf16 %v790, %v790
    %v794 = vld [vmem:[#allocation15] sm:$0xf]
    %v795 = vld [vmem:[#allocation15 + $0x4] sm:$0xf]
    %v796 = vld [vmem:[#allocation15 + $0x8] sm:$0xf]
    %v797 = vld [vmem:[#allocation15 + $0xc] sm:$0xf]
    %v798 = vld [vmem:[#allocation15 + $0x10] sm:$0xf]
    %v799 = vld [vmem:[#allocation15 + $0x14] sm:$0xf]
    %v800 = vld [vmem:[#allocation15 + $0x18] sm:$0xf]
    %v801 = vld [vmem:[#allocation15 + $0x1c] sm:$0xf]
    %803 = vrot.lane.b32.xlu0 %v740, 64
    %v804 = vpop.permute.xlu0 %803
    %806 = vrot.lane.b32.xlu0 %v741, 64
    %v807 = vpop.permute.xlu0 %806
    %v809 = vsel %vm528, %v804, 0
    %v812 = vsel %vm528, %v807, 0
    %814 = vmatpush.bf16.xpose.msra.mxu0 0
    %815 = vmatpush.bf16.xpose.msra.mxu0 0
    %816 = vmatpush.bf16.xpose.msra.mxu0 0
    %817 = vmatpush.bf16.xpose.msra.mxu0 0
    %818 = vmatpush.bf16.xpose.msra.mxu0 0
    %819 = vmatpush.bf16.xpose.msra.mxu0 0
    %820 = vmatpush.bf16.xpose.msra.mxu0 0
    %821 = vmatpush.bf16.xpose.msra.mxu0 %v812
    %822 = vmatmul.bf16.gmra.mxu0 %v809
    %v823 = vpop.f32.mrf.mxu0
    %v824 = vadd.f32 0.0, %v823
    %v825 = vpop.f32.mrf.mxu0
    %826 = vdwg.mxu0
    %v827 = vsel %vm548, %v824, -inf
    %828 = vmax.xlane.f32.xlu0 %v827
    %v829 = vpop.xlane.xlu0 %828
    %v830 = vsub.f32 %v824, %v829
    %v831 = vmul.f32 %v830, 1.442695
    %v832 = vpow.pop %v831
    %v833 = vsel %vm548, %v832, 0.0
    %834 = vadd.xlane.f32.xlu0 %v833
    %v835 = vpop.xlane.xlu0 %834
    %v836 = vrcp.pop %v835
    %v837 = vmul.f32 %v832, %v836
    %v838 = vpack.c.bf16 %v837, %v837
    %840 = vrot.lane.b32.xlu0 %v773, 64
    %v841 = vpop.permute.xlu0 %840
    %v843 = vsel %vm548, %v838, 0
    %v846 = vsel %vm565, %v841, 0
    %848 = vmatpush.bf16.msra.mxu0 0
    %849 = vmatpush.bf16.msra.mxu0 0
    %850 = vmatpush.bf16.msra.mxu0 0
    %851 = vmatpush.bf16.msra.mxu0 0
    %852 = vmatpush.bf16.msra.mxu0 0
    %853 = vmatpush.bf16.msra.mxu0 0
    %854 = vmatpush.bf16.msra.mxu0 0
    %855 = vmatpush.bf16.msra.mxu0 %v846
    %856 = vmatmul.bf16.gmra.mxu0 %v843
    %v857 = vpop.f32.mrf.mxu0
    %v858 = vadd.f32 0.0, %v857
    %v859 = vpop.f32.mrf.mxu0
    %860 = vdwg.mxu0
    %v861 = vpack.c.bf16 %v858, %v858
    %v862 = vld [vmem:[#allocation15 + $0x20] sm:$0xf]
    %v863 = vld [vmem:[#allocation15 + $0x24] sm:$0xf]
    %v864 = vld [vmem:[#allocation15 + $0x28] sm:$0xf]
    %v865 = vld [vmem:[#allocation15 + $0x2c] sm:$0xf]
    %v866 = vld [vmem:[#allocation15 + $0x30] sm:$0xf]
    %v867 = vld [vmem:[#allocation15 + $0x34] sm:$0xf]
    %v868 = vld [vmem:[#allocation15 + $0x38] sm:$0xf]
    %v869 = vld [vmem:[#allocation15 + $0x3c] sm:$0xf]
    %v878 = vunpack.c.l.b16 %v862
    %v879 = vunpack.c.l.b16 %v863
    %v880 = vunpack.c.l.b16 %v864
    %v881 = vunpack.c.l.b16 %v865
    %v882 = vunpack.c.l.b16 %v866
    %v883 = vunpack.c.l.b16 %v867
    %v884 = vunpack.c.l.b16 %v868
    %v885 = vunpack.c.l.b16 %v869
    %v886 = vpack.c.b16 %v879, %v878
    %v887 = vpack.c.b16 %v881, %v880
    %v888 = vpack.c.b16 %v883, %v882
    %v889 = vpack.c.b16 %v885, %v884
    %v895 = vsel %vm528, %v861, 0
    %897 = vmatpush.bf16.msra.mxu0 0
    %898 = vmatpush.bf16.msra.mxu0 0
    %899 = vmatpush.bf16.msra.mxu0 0
    %900 = vmatpush.bf16.msra.mxu0 0
    %901 = vmatpush.bf16.msra.mxu0 %v889
    %902 = vmatpush.bf16.msra.mxu0 %v888
    %903 = vmatpush.bf16.msra.mxu0 %v887
    %904 = vmatpush.bf16.msra.mxu0 %v886
    %905 = vmatmul.bf16.gmra.mxu0 %v895
    %v906 = vpop.f32.mrf.mxu0
    %v907 = vadd.f32 0.0, %v906
    %v908 = vpop.f32.mrf.mxu0
    %909 = vdwg.mxu0
    %v918 = vunpack.c.l.b16 %v794
    %v919 = vunpack.c.l.b16 %v795
    %v920 = vunpack.c.l.b16 %v796
    %v921 = vunpack.c.l.b16 %v797
    %v922 = vunpack.c.l.b16 %v798
    %v923 = vunpack.c.l.b16 %v799
    %v924 = vunpack.c.l.b16 %v800
    %v925 = vunpack.c.l.b16 %v801
    %v926 = vpack.c.b16 %v919, %v918
    %v927 = vpack.c.b16 %v921, %v920
    %v928 = vpack.c.b16 %v923, %v922
    %v929 = vpack.c.b16 %v925, %v924
    %v935 = vsel %vm528, %v793, 0
    %937 = vmatpush.bf16.msra.mxu0 0
    %938 = vmatpush.bf16.msra.mxu0 0
    %939 = vmatpush.bf16.msra.mxu0 0
    %940 = vmatpush.bf16.msra.mxu0 0
    %941 = vmatpush.bf16.msra.mxu0 %v929
    %942 = vmatpush.bf16.msra.mxu0 %v928
    %943 = vmatpush.bf16.msra.mxu0 %v927
    %944 = vmatpush.bf16.msra.mxu0 %v926
    %945 = vmatmul.bf16.gmra.mxu0 %v935
    %v946 = vpop.f32.mrf.mxu0
    %v947 = vadd.f32 %v907, %v946
    %v948 = vpop.f32.mrf.mxu0
    %949 = vdwg.mxu0
    %950 = vst [vmem:[#allocation2 + $0x8] sm:$0xff] %v947
    %v951 = vld [vmem:[#allocation2] sm:$0xff]
    %v952 = vld [vmem:[#allocation2 + $0x8] sm:$0xff]
    %v953 = vadd.f32 %v951, %v258
    %v954 = vadd.f32 %v952, %v259
    %v955 = vld [vmem:[%s4] sm:$0x1]
    %v956 = vld [vmem:[#allocation8] sm:$0x1]
    %957 = vadd.xlane.f32.xlu0 %v953
    %v958 = vpop.xlane.xlu0 %957
    %959 = vadd.xlane.f32.xlu0 %v954
    %v960 = vpop.xlane.xlu0 %959
    %v961 = vmul.f32 %v958, %v276
    %v962 = vmul.f32 %v960, %v276
    %v963 = vsub.f32 %v953, %v961
    %v964 = vsub.f32 %v954, %v962
    %v965 = vmul.f32 %v963, %v963
    %v966 = vmul.f32 %v964, %v964
    %967 = vadd.xlane.f32.xlu0 %v965
    %v968 = vpop.xlane.xlu0 %967
    %969 = vadd.xlane.f32.xlu0 %v966
    %v970 = vpop.xlane.xlu0 %969
    %v971 = vmul.f32 %v968, %v276
    %v972 = vmul.f32 %v970, %v276
    %v973 = vadd.f32 %v971, 1e-06
    %v974 = vadd.f32 %v972, 1e-06
    %v975 = vrsqrt.pop %v973
    %v976 = vmul.f32 %v975, %v973
    %v977 = vmul.f32 %v976, %v975
    %v978 = vmul.f32 0.5, %v977
    %v979 = vsub.f32 1.5, %v978
    %v980 = vmul.f32 %v975, %v979
    %vm981 = vweird.f32 %v973
    %vm982 = vweird.f32 %v975
    %vm983 = vmor %vm981, %vm982
    %v984 = vsel %vm983, %v975, %v980
    %v985 = vrsqrt.pop %v974
    %v986 = vmul.f32 %v985, %v974
    %v987 = vmul.f32 %v986, %v985
    %v988 = vmul.f32 0.5, %v987
    %v989 = vsub.f32 1.5, %v988
    %v990 = vmul.f32 %v985, %v989
    %vm991 = vweird.f32 %v974
    %vm992 = vweird.f32 %v985
    %vm993 = vmor %vm991, %vm992
    %v994 = vsel %vm993, %v985, %v990
    %v995 = vmul.f32 %v963, %v984
    %v996 = vmul.f32 %v964, %v994
    %v998 = vperm.slane %v955, 0
    %v1000 = vmul.f32 %v995, %v998
    %v1001 = vmul.f32 %v996, %v998
    %v1003 = vperm.slane %v956, 0
    %v1005 = vadd.f32 %v1000, %v1003
    %v1006 = vadd.f32 %v1001, %v1003
    %v1007 = vld [vmem:[#allocation9] sm:$0x1]
    %v1008 = vld [vmem:[#allocation11] sm:$0x1]
    %1009 = vadd.xlane.f32.xlu0 %v260
    %v1010 = vpop.xlane.xlu0 %1009
    %1011 = vadd.xlane.f32.xlu0 %v261
    %v1012 = vpop.xlane.xlu0 %1011
    %1013 = vadd.xlane.f32.xlu0 %v262
    %v1014 = vpop.xlane.xlu0 %1013
    %1015 = vadd.xlane.f32.xlu0 %v263
    %v1016 = vpop.xlane.xlu0 %1015
    %v1017 = vmul.f32 %v1010, %v276
    %v1018 = vmul.f32 %v1012, %v276
    %v1019 = vmul.f32 %v1014, %v276
    %v1020 = vmul.f32 %v1016, %v276
    %v1021 = vsub.f32 %v260, %v1017
    %v1022 = vsub.f32 %v261, %v1018
    %v1023 = vsub.f32 %v262, %v1019
    %v1024 = vsub.f32 %v263, %v1020
    %v1025 = vmul.f32 %v1021, %v1021
    %v1026 = vmul.f32 %v1022, %v1022
    %v1027 = vmul.f32 %v1023, %v1023
    %v1028 = vmul.f32 %v1024, %v1024
    %1029 = vadd.xlane.f32.xlu0 %v1025
    %v1030 = vpop.xlane.xlu0 %1029
    %1031 = vadd.xlane.f32.xlu0 %v1026
    %v1032 = vpop.xlane.xlu0 %1031
    %1033 = vadd.xlane.f32.xlu0 %v1027
    %v1034 = vpop.xlane.xlu0 %1033
    %1035 = vadd.xlane.f32.xlu0 %v1028
    %v1036 = vpop.xlane.xlu0 %1035
    %v1037 = vmul.f32 %v1030, %v276
    %v1038 = vmul.f32 %v1032, %v276
    %v1039 = vmul.f32 %v1034, %v276
    %v1040 = vmul.f32 %v1036, %v276
    %v1041 = vadd.f32 %v1037, 1e-06
    %v1042 = vadd.f32 %v1038, 1e-06
    %v1043 = vadd.f32 %v1039, 1e-06
    %v1044 = vadd.f32 %v1040, 1e-06
    %v1045 = vrsqrt.pop %v1041
    %v1046 = vmul.f32 %v1045, %v1041
    %v1047 = vmul.f32 %v1046, %v1045
    %v1048 = vmul.f32 0.5, %v1047
    %v1049 = vsub.f32 1.5, %v1048
    %v1050 = vmul.f32 %v1045, %v1049
    %vm1051 = vweird.f32 %v1041
    %vm1052 = vweird.f32 %v1045
    %vm1053 = vmor %vm1051, %vm1052
    %v1054 = vsel %vm1053, %v1045, %v1050
    %v1055 = vrsqrt.pop %v1042
    %v1056 = vmul.f32 %v1055, %v1042
    %v1057 = vmul.f32 %v1056, %v1055
    %v1058 = vmul.f32 0.5, %v1057
    %v1059 = vsub.f32 1.5, %v1058
    %v1060 = vmul.f32 %v1055, %v1059
    %vm1061 = vweird.f32 %v1042
    %vm1062 = vweird.f32 %v1055
    %vm1063 = vmor %vm1061, %vm1062
    %v1064 = vsel %vm1063, %v1055, %v1060
    %v1065 = vrsqrt.pop %v1043
    %v1066 = vmul.f32 %v1065, %v1043
    %v1067 = vmul.f32 %v1066, %v1065
    %v1068 = vmul.f32 0.5, %v1067
    %v1069 = vsub.f32 1.5, %v1068
    %v1070 = vmul.f32 %v1065, %v1069
    %vm1071 = vweird.f32 %v1043
    %vm1072 = vweird.f32 %v1065
    %vm1073 = vmor %vm1071, %vm1072
    %v1074 = vsel %vm1073, %v1065, %v1070
    %v1075 = vrsqrt.pop %v1044
    %v1076 = vmul.f32 %v1075, %v1044
    %v1077 = vmul.f32 %v1076, %v1075
    %v1078 = vmul.f32 0.5, %v1077
    %v1079 = vsub.f32 1.5, %v1078
    %v1080 = vmul.f32 %v1075, %v1079
    %vm1081 = vweird.f32 %v1044
    %vm1082 = vweird.f32 %v1075
    %vm1083 = vmor %vm1081, %vm1082
    %v1084 = vsel %vm1083, %v1075, %v1080
    %v1085 = vmul.f32 %v1021, %v1054
    %v1086 = vmul.f32 %v1022, %v1064
    %v1087 = vmul.f32 %v1023, %v1074
    %v1088 = vmul.f32 %v1024, %v1084
    %v1090 = vperm.slane %v1007, 0
    %v1092 = vmul.f32 %v1085, %v1090
    %v1093 = vmul.f32 %v1086, %v1090
    %v1094 = vmul.f32 %v1087, %v1090
    %v1095 = vmul.f32 %v1088, %v1090
    %v1097 = vperm.slane %v1008, 0
    %v1099 = vadd.f32 %v1092, %v1097
    %v1100 = vadd.f32 %v1093, %v1097
    %v1101 = vadd.f32 %v1094, %v1097
    %v1102 = vadd.f32 %v1095, %v1097
    %v1103 = vpack.c.bf16 %v1006, %v1005
    %v1104 = vld [vmem:[#allocation17] sm:$0xf]
    %v1105 = vld [vmem:[#allocation17 + $0x4] sm:$0xf]
    %v1106 = vld [vmem:[#allocation17 + $0x8] sm:$0xf]
    %v1107 = vld [vmem:[#allocation17 + $0xc] sm:$0xf]
    %v1108 = vld [vmem:[#allocation17 + $0x10] sm:$0xf]
    %v1109 = vld [vmem:[#allocation17 + $0x14] sm:$0xf]
    %v1110 = vld [vmem:[#allocation17 + $0x18] sm:$0xf]
    %v1111 = vld [vmem:[#allocation17 + $0x1c] sm:$0xf]
    %v1112 = vld [vmem:[#allocation17 + $0x20] sm:$0xf]
    %v1113 = vld [vmem:[#allocation17 + $0x24] sm:$0xf]
    %v1114 = vld [vmem:[#allocation17 + $0x28] sm:$0xf]
    %v1115 = vld [vmem:[#allocation17 + $0x2c] sm:$0xf]
    %v1116 = vld [vmem:[#allocation17 + $0x30] sm:$0xf]
    %v1117 = vld [vmem:[#allocation17 + $0x34] sm:$0xf]
    %v1118 = vld [vmem:[#allocation17 + $0x38] sm:$0xf]
    %v1119 = vld [vmem:[#allocation17 + $0x3c] sm:$0xf]
    %v1136 = vunpack.c.l.b16 %v1104
    %v1137 = vunpack.c.l.b16 %v1105
    %v1138 = vunpack.c.l.b16 %v1106
    %v1139 = vunpack.c.l.b16 %v1107
    %v1140 = vunpack.c.l.b16 %v1108
    %v1141 = vunpack.c.l.b16 %v1109
    %v1142 = vunpack.c.l.b16 %v1110
    %v1143 = vunpack.c.l.b16 %v1111
    %v1144 = vunpack.c.l.b16 %v1112
    %v1145 = vunpack.c.l.b16 %v1113
    %v1146 = vunpack.c.l.b16 %v1114
    %v1147 = vunpack.c.l.b16 %v1115
    %v1148 = vunpack.c.l.b16 %v1116
    %v1149 = vunpack.c.l.b16 %v1117
    %v1150 = vunpack.c.l.b16 %v1118
    %v1151 = vunpack.c.l.b16 %v1119
    %v1152 = vpack.c.b16 %v1137, %v1136
    %v1153 = vpack.c.b16 %v1139, %v1138
    %v1154 = vpack.c.b16 %v1141, %v1140
    %v1155 = vpack.c.b16 %v1143, %v1142
    %v1156 = vpack.c.b16 %v1145, %v1144
    %v1157 = vpack.c.b16 %v1147, %v1146
    %v1158 = vpack.c.b16 %v1149, %v1148
    %v1159 = vpack.c.b16 %v1151, %v1150
    %1168 = vmatpush.bf16.msra.mxu0 %v1159
    %1169 = vmatpush.bf16.msra.mxu0 %v1158
    %1170 = vmatpush.bf16.msra.mxu0 %v1157
    %1171 = vmatpush.bf16.msra.mxu0 %v1156
    %1172 = vmatpush.bf16.msra.mxu0 %v1155
    %1173 = vmatpush.bf16.msra.mxu0 %v1154
    %1174 = vmatpush.bf16.msra.mxu0 %v1153
    %1175 = vmatpush.bf16.msra.mxu0 %v1152
    %1176 = vmatmul.bf16.gmra.mxu0 %v1103
    %v1177 = vpop.f32.mrf.mxu0
    %v1178 = vadd.f32 0.0, %v1177
    %v1179 = vpop.f32.mrf.mxu0
    %v1180 = vadd.f32 0.0, %v1179
    %1181 = vdwg.mxu0
    %v1182 = vpack.c.bf16 %v1100, %v1099
    %v1183 = vpack.c.bf16 %v1102, %v1101
    %v1184 = vld [vmem:[#allocation18] sm:$0xff]
    %v1185 = vld [vmem:[#allocation18 + $0x8] sm:$0xff]
    %v1186 = vld [vmem:[#allocation18 + $0x10] sm:$0xff]
    %v1187 = vld [vmem:[#allocation18 + $0x18] sm:$0xff]
    %v1188 = vld [vmem:[#allocation18 + $0x20] sm:$0xff]
    %v1189 = vld [vmem:[#allocation18 + $0x28] sm:$0xff]
    %v1190 = vld [vmem:[#allocation18 + $0x30] sm:$0xff]
    %v1191 = vld [vmem:[#allocation18 + $0x38] sm:$0xff]
    %v1192 = vld [vmem:[#allocation18 + $0x40] sm:$0xff]
    %v1193 = vld [vmem:[#allocation18 + $0x48] sm:$0xff]
    %v1194 = vld [vmem:[#allocation18 + $0x50] sm:$0xff]
    %v1195 = vld [vmem:[#allocation18 + $0x58] sm:$0xff]
    %v1196 = vld [vmem:[#allocation18 + $0x60] sm:$0xff]
    %v1197 = vld [vmem:[#allocation18 + $0x68] sm:$0xff]
    %v1198 = vld [vmem:[#allocation18 + $0x70] sm:$0xff]
    %v1199 = vld [vmem:[#allocation18 + $0x78] sm:$0xff]
    %v1216 = vunpack.c.l.b16 %v1184
    %v1217 = vunpack.c.h.b16 %v1184
    %v1218 = vunpack.c.l.b16 %v1185
    %v1219 = vunpack.c.h.b16 %v1185
    %v1220 = vunpack.c.l.b16 %v1186
    %v1221 = vunpack.c.h.b16 %v1186
    %v1222 = vunpack.c.l.b16 %v1187
    %v1223 = vunpack.c.h.b16 %v1187
    %v1224 = vunpack.c.l.b16 %v1188
    %v1225 = vunpack.c.h.b16 %v1188
    %v1226 = vunpack.c.l.b16 %v1189
    %v1227 = vunpack.c.h.b16 %v1189
    %v1228 = vunpack.c.l.b16 %v1190
    %v1229 = vunpack.c.h.b16 %v1190
    %v1230 = vunpack.c.l.b16 %v1191
    %v1231 = vunpack.c.h.b16 %v1191
    %v1232 = vunpack.c.l.b16 %v1192
    %v1233 = vunpack.c.h.b16 %v1192
    %v1234 = vunpack.c.l.b16 %v1193
    %v1235 = vunpack.c.h.b16 %v1193
    %v1236 = vunpack.c.l.b16 %v1194
    %v1237 = vunpack.c.h.b16 %v1194
    %v1238 = vunpack.c.l.b16 %v1195
    %v1239 = vunpack.c.h.b16 %v1195
    %v1240 = vunpack.c.l.b16 %v1196
    %v1241 = vunpack.c.h.b16 %v1196
    %v1242 = vunpack.c.l.b16 %v1197
    %v1243 = vunpack.c.h.b16 %v1197
    %v1244 = vunpack.c.l.b16 %v1198
    %v1245 = vunpack.c.h.b16 %v1198
    %v1246 = vunpack.c.l.b16 %v1199
    %v1247 = vunpack.c.h.b16 %v1199
    %v1248 = vpack.c.b16 %v1218, %v1216
    %v1249 = vpack.c.b16 %v1219, %v1217
    %v1250 = vpack.c.b16 %v1222, %v1220
    %v1251 = vpack.c.b16 %v1223, %v1221
    %v1252 = vpack.c.b16 %v1226, %v1224
    %v1253 = vpack.c.b16 %v1227, %v1225
    %v1254 = vpack.c.b16 %v1230, %v1228
    %v1255 = vpack.c.b16 %v1231, %v1229
    %v1256 = vpack.c.b16 %v1234, %v1232
    %v1257 = vpack.c.b16 %v1235, %v1233
    %v1258 = vpack.c.b16 %v1238, %v1236
    %v1259 = vpack.c.b16 %v1239, %v1237
    %v1260 = vpack.c.b16 %v1242, %v1240
    %v1261 = vpack.c.b16 %v1243, %v1241
    %v1262 = vpack.c.b16 %v1246, %v1244
    %v1263 = vpack.c.b16 %v1247, %v1245
    %1280 = vmatpush.bf16.msra.mxu0 %v1262
    %1281 = vmatpush.bf16.msra.mxu0 %v1260
    %1282 = vmatpush.bf16.msra.mxu0 %v1258
    %1283 = vmatpush.bf16.msra.mxu0 %v1256
    %1284 = vmatpush.bf16.msra.mxu0 %v1254
    %1285 = vmatpush.bf16.msra.mxu0 %v1252
    %1286 = vmatpush.bf16.msra.mxu0 %v1250
    %1287 = vmatpush.bf16.msra.mxu0 %v1248
    %1288 = vmatmul.bf16.gmra.mxu0 %v1182
    %v1289 = vpop.f32.mrf.mxu0
    %v1290 = vadd.f32 0.0, %v1289
    %v1291 = vpop.f32.mrf.mxu0
    %v1292 = vadd.f32 0.0, %v1291
    %1293 = vmatmul.bf16.gmra.mxu0 %v1183
    %v1294 = vpop.f32.mrf.mxu0
    %v1295 = vadd.f32 0.0, %v1294
    %v1296 = vpop.f32.mrf.mxu0
    %v1297 = vadd.f32 0.0, %v1296
    %1298 = vdwg.mxu0
    %1299 = vmatpush.bf16.msra.mxu0 %v1263
    %1300 = vmatpush.bf16.msra.mxu0 %v1261
    %1301 = vmatpush.bf16.msra.mxu0 %v1259
    %1302 = vmatpush.bf16.msra.mxu0 %v1257
    %1303 = vmatpush.bf16.msra.mxu0 %v1255
    %1304 = vmatpush.bf16.msra.mxu0 %v1253
    %1305 = vmatpush.bf16.msra.mxu0 %v1251
    %1306 = vmatpush.bf16.msra.mxu0 %v1249
    %1307 = vmatmul.bf16.gmra.mxu0 %v1182
    %v1308 = vpop.f32.mrf.mxu0
    %v1309 = vadd.f32 0.0, %v1308
    %v1310 = vpop.f32.mrf.mxu0
    %v1311 = vadd.f32 0.0, %v1310
    %1312 = vmatmul.bf16.gmra.mxu0 %v1183
    %v1313 = vpop.f32.mrf.mxu0
    %v1314 = vadd.f32 0.0, %v1313
    %v1315 = vpop.f32.mrf.mxu0
    %v1316 = vadd.f32 0.0, %v1315
    %1317 = vdwg.mxu0
    %v1318 = vpack.c.bf16 %v1178, %v1178
    %v1319 = vpack.c.bf16 %v1292, %v1290
    %v1321 = vsel %vm528, %v1318, 0
    %v1324 = vsel %vm528, %v1319, 0
    %1326 = vmatpush.bf16.xpose.msra.mxu0 0
    %1327 = vmatpush.bf16.xpose.msra.mxu0 0
    %1328 = vmatpush.bf16.xpose.msra.mxu0 0
    %1329 = vmatpush.bf16.xpose.msra.mxu0 0
    %1330 = vmatpush.bf16.xpose.msra.mxu0 0
    %1331 = vmatpush.bf16.xpose.msra.mxu0 0
    %1332 = vmatpush.bf16.xpose.msra.mxu0 0
    %1333 = vmatpush.bf16.xpose.msra.mxu0 %v1324
    %1334 = vmatmul.bf16.gmra.mxu0 %v1321
    %v1335 = vpop.f32.mrf.mxu0
    %v1336 = vadd.f32 0.0, %v1335
    %v1337 = vpop.f32.mrf.mxu0
    %1338 = vdwg.mxu0
    %vm1339 = vcmask 130048
    %v1340 = vsel %vm1339, %v1336, -inf
    %1341 = vmax.xlane.f32.xlu0 %v1340
    %v1342 = vpop.xlane.xlu0 %1341
    %v1343 = vsub.f32 %v1336, %v1342
    %v1344 = vmul.f32 %v1343, 1.442695
    %v1345 = vpow.pop %v1344
    %v1346 = vsel %vm1339, %v1345, 0.0
    %1347 = vadd.xlane.f32.xlu0 %v1346
    %v1348 = vpop.xlane.xlu0 %1347
    %v1349 = vrcp.pop %v1348
    %v1350 = vmul.f32 %v1345, %v1349
    %v1351 = vpack.c.bf16 %v1350, %v1350
    %v1352 = vpack.c.bf16 %v1311, %v1309
    %v1354 = vsel %vm1339, %v1351, 0
    %1356 = vmatpush.bf16.msra.mxu0 0
    %1357 = vmatpush.bf16.msra.mxu0 0
    %1358 = vmatpush.bf16.msra.mxu0 0
    %1359 = vmatpush.bf16.msra.mxu0 0
    %1360 = vmatpush.bf16.msra.mxu0 0
    %1361 = vmatpush.bf16.msra.mxu0 0
    %1362 = vmatpush.bf16.msra.mxu0 0
    %1363 = vmatpush.bf16.msra.mxu0 %v1352
    %1364 = vmatmul.bf16.gmra.mxu0 %v1354
    %v1365 = vpop.f32.mrf.mxu0
    %v1366 = vadd.f32 0.0, %v1365
    %v1367 = vpop.f32.mrf.mxu0
    %1368 = vdwg.mxu0
    %v1369 = vpack.c.bf16 %v1366, %v1366
    %v1370 = vld [vmem:[#allocation20] sm:$0xf]
    %v1371 = vld [vmem:[#allocation20 + $0x4] sm:$0xf]
    %v1372 = vld [vmem:[#allocation20 + $0x8] sm:$0xf]
    %v1373 = vld [vmem:[#allocation20 + $0xc] sm:$0xf]
    %v1374 = vld [vmem:[#allocation20 + $0x10] sm:$0xf]
    %v1375 = vld [vmem:[#allocation20 + $0x14] sm:$0xf]
    %v1376 = vld [vmem:[#allocation20 + $0x18] sm:$0xf]
    %v1377 = vld [vmem:[#allocation20 + $0x1c] sm:$0xf]
    %1379 = vrot.lane.b32.xlu0 %v1318, 64
    %v1380 = vpop.permute.xlu0 %1379
    %1382 = vrot.lane.b32.xlu0 %v1319, 64
    %v1383 = vpop.permute.xlu0 %1382
    %v1385 = vsel %vm528, %v1380, 0
    %v1388 = vsel %vm528, %v1383, 0
    %1390 = vmatpush.bf16.xpose.msra.mxu0 0
    %1391 = vmatpush.bf16.xpose.msra.mxu0 0
    %1392 = vmatpush.bf16.xpose.msra.mxu0 0
    %1393 = vmatpush.bf16.xpose.msra.mxu0 0
    %1394 = vmatpush.bf16.xpose.msra.mxu0 0
    %1395 = vmatpush.bf16.xpose.msra.mxu0 0
    %1396 = vmatpush.bf16.xpose.msra.mxu0 0
    %1397 = vmatpush.bf16.xpose.msra.mxu0 %v1388
    %1398 = vmatmul.bf16.gmra.mxu0 %v1385
    %v1399 = vpop.f32.mrf.mxu0
    %v1400 = vadd.f32 0.0, %v1399
    %v1401 = vpop.f32.mrf.mxu0
    %1402 = vdwg.mxu0
    %v1403 = vsel %vm1339, %v1400, -inf
    %1404 = vmax.xlane.f32.xlu0 %v1403
    %v1405 = vpop.xlane.xlu0 %1404
    %v1406 = vsub.f32 %v1400, %v1405
    %v1407 = vmul.f32 %v1406, 1.442695
    %v1408 = vpow.pop %v1407
    %v1409 = vsel %vm1339, %v1408, 0.0
    %1410 = vadd.xlane.f32.xlu0 %v1409
    %v1411 = vpop.xlane.xlu0 %1410
    %v1412 = vrcp.pop %v1411
    %v1413 = vmul.f32 %v1408, %v1412
    %v1414 = vpack.c.bf16 %v1413, %v1413
    %1416 = vrot.lane.b32.xlu0 %v1352, 64
    %v1417 = vpop.permute.xlu0 %1416
    %v1420 = vsel %vm1339, %v1414, 0
    %1422 = vmatpush.bf16.msra.mxu0 0
    %1423 = vmatpush.bf16.msra.mxu0 0
    %1424 = vmatpush.bf16.msra.mxu0 0
    %1425 = vmatpush.bf16.msra.mxu0 0
    %1426 = vmatpush.bf16.msra.mxu0 0
    %1427 = vmatpush.bf16.msra.mxu0 0
    %1428 = vmatpush.bf16.msra.mxu0 0
    %1429 = vmatpush.bf16.msra.mxu0 %v1417
    %1430 = vmatmul.bf16.gmra.mxu0 %v1420
    %v1431 = vpop.f32.mrf.mxu0
    %v1432 = vadd.f32 0.0, %v1431
    %v1433 = vpop.f32.mrf.mxu0
    %1434 = vdwg.mxu0
    %v1435 = vpack.c.bf16 %v1432, %v1432
    %v1436 = vld [vmem:[#allocation20 + $0x20] sm:$0xf]
    %v1437 = vld [vmem:[#allocation20 + $0x24] sm:$0xf]
    %v1438 = vld [vmem:[#allocation20 + $0x28] sm:$0xf]
    %v1439 = vld [vmem:[#allocation20 + $0x2c] sm:$0xf]
    %v1440 = vld [vmem:[#allocation20 + $0x30] sm:$0xf]
    %v1441 = vld [vmem:[#allocation20 + $0x34] sm:$0xf]
    %v1442 = vld [vmem:[#allocation20 + $0x38] sm:$0xf]
    %v1443 = vld [vmem:[#allocation20 + $0x3c] sm:$0xf]
    %v1452 = vunpack.c.l.b16 %v1436
    %v1453 = vunpack.c.l.b16 %v1437
    %v1454 = vunpack.c.l.b16 %v1438
    %v1455 = vunpack.c.l.b16 %v1439
    %v1456 = vunpack.c.l.b16 %v1440
    %v1457 = vunpack.c.l.b16 %v1441
    %v1458 = vunpack.c.l.b16 %v1442
    %v1459 = vunpack.c.l.b16 %v1443
    %v1460 = vpack.c.b16 %v1453, %v1452
    %v1461 = vpack.c.b16 %v1455, %v1454
    %v1462 = vpack.c.b16 %v1457, %v1456
    %v1463 = vpack.c.b16 %v1459, %v1458
    %v1469 = vsel %vm528, %v1435, 0
    %1471 = vmatpush.bf16.msra.mxu0 0
    %1472 = vmatpush.bf16.msra.mxu0 0
    %1473 = vmatpush.bf16.msra.mxu0 0
    %1474 = vmatpush.bf16.msra.mxu0 0
    %1475 = vmatpush.bf16.msra.mxu0 %v1463
    %1476 = vmatpush.bf16.msra.mxu0 %v1462
    %1477 = vmatpush.bf16.msra.mxu0 %v1461
    %1478 = vmatpush.bf16.msra.mxu0 %v1460
    %1479 = vmatmul.bf16.gmra.mxu0 %v1469
    %v1480 = vpop.f32.mrf.mxu0
    %v1481 = vadd.f32 0.0, %v1480
    %v1482 = vpop.f32.mrf.mxu0
    %1483 = vdwg.mxu0
    %v1492 = vunpack.c.l.b16 %v1370
    %v1493 = vunpack.c.l.b16 %v1371
    %v1494 = vunpack.c.l.b16 %v1372
    %v1495 = vunpack.c.l.b16 %v1373
    %v1496 = vunpack.c.l.b16 %v1374
    %v1497 = vunpack.c.l.b16 %v1375
    %v1498 = vunpack.c.l.b16 %v1376
    %v1499 = vunpack.c.l.b16 %v1377
    %v1500 = vpack.c.b16 %v1493, %v1492
    %v1501 = vpack.c.b16 %v1495, %v1494
    %v1502 = vpack.c.b16 %v1497, %v1496
    %v1503 = vpack.c.b16 %v1499, %v1498
    %v1509 = vsel %vm528, %v1369, 0
    %1511 = vmatpush.bf16.msra.mxu0 0
    %1512 = vmatpush.bf16.msra.mxu0 0
    %1513 = vmatpush.bf16.msra.mxu0 0
    %1514 = vmatpush.bf16.msra.mxu0 0
    %1515 = vmatpush.bf16.msra.mxu0 %v1503
    %1516 = vmatpush.bf16.msra.mxu0 %v1502
    %1517 = vmatpush.bf16.msra.mxu0 %v1501
    %1518 = vmatpush.bf16.msra.mxu0 %v1500
    %1519 = vmatmul.bf16.gmra.mxu0 %v1509
    %v1520 = vpop.f32.mrf.mxu0
    %v1521 = vadd.f32 %v1481, %v1520
    %v1522 = vpop.f32.mrf.mxu0
    %1523 = vdwg.mxu0
    %1524 = vst [vmem:[#allocation2] sm:$0xff] %v1521
    %v1525 = vpack.c.bf16 %v1180, %v1180
    %v1526 = vpack.c.bf16 %v1297, %v1295
    %v1528 = vsel %vm528, %v1525, 0
    %v1531 = vsel %vm528, %v1526, 0
    %1533 = vmatpush.bf16.xpose.msra.mxu0 0
    %1534 = vmatpush.bf16.xpose.msra.mxu0 0
    %1535 = vmatpush.bf16.xpose.msra.mxu0 0
    %1536 = vmatpush.bf16.xpose.msra.mxu0 0
    %1537 = vmatpush.bf16.xpose.msra.mxu0 0
    %1538 = vmatpush.bf16.xpose.msra.mxu0 0
    %1539 = vmatpush.bf16.xpose.msra.mxu0 0
    %1540 = vmatpush.bf16.xpose.msra.mxu0 %v1531
    %1541 = vmatmul.bf16.gmra.mxu0 %v1528
    %v1542 = vpop.f32.mrf.mxu0
    %v1543 = vadd.f32 0.0, %v1542
    %v1544 = vpop.f32.mrf.mxu0
    %1545 = vdwg.mxu0
    %v1546 = vsel %vm1339, %v1543, -inf
    %1547 = vmax.xlane.f32.xlu0 %v1546
    %v1548 = vpop.xlane.xlu0 %1547
    %v1549 = vsub.f32 %v1543, %v1548
    %v1550 = vmul.f32 %v1549, 1.442695
    %v1551 = vpow.pop %v1550
    %v1552 = vsel %vm1339, %v1551, 0.0
    %1553 = vadd.xlane.f32.xlu0 %v1552
    %v1554 = vpop.xlane.xlu0 %1553
    %v1555 = vrcp.pop %v1554
    %v1556 = vmul.f32 %v1551, %v1555
    %v1557 = vpack.c.bf16 %v1556, %v1556
    %v1558 = vpack.c.bf16 %v1316, %v1314
    %v1560 = vsel %vm1339, %v1557, 0
    %1562 = vmatpush.bf16.msra.mxu0 0
    %1563 = vmatpush.bf16.msra.mxu0 0
    %1564 = vmatpush.bf16.msra.mxu0 0
    %1565 = vmatpush.bf16.msra.mxu0 0
    %1566 = vmatpush.bf16.msra.mxu0 0
    %1567 = vmatpush.bf16.msra.mxu0 0
    %1568 = vmatpush.bf16.msra.mxu0 0
    %1569 = vmatpush.bf16.msra.mxu0 %v1558
    %1570 = vmatmul.bf16.gmra.mxu0 %v1560
    %v1571 = vpop.f32.mrf.mxu0
    %v1572 = vadd.f32 0.0, %v1571
    %v1573 = vpop.f32.mrf.mxu0
    %1574 = vdwg.mxu0
    %v1575 = vpack.c.bf16 %v1572, %v1572
    %v1576 = vld [vmem:[#allocation20] sm:$0xf]
    %v1577 = vld [vmem:[#allocation20 + $0x4] sm:$0xf]
    %v1578 = vld [vmem:[#allocation20 + $0x8] sm:$0xf]
    %v1579 = vld [vmem:[#allocation20 + $0xc] sm:$0xf]
    %v1580 = vld [vmem:[#allocation20 + $0x10] sm:$0xf]
    %v1581 = vld [vmem:[#allocation20 + $0x14] sm:$0xf]
    %v1582 = vld [vmem:[#allocation20 + $0x18] sm:$0xf]
    %v1583 = vld [vmem:[#allocation20 + $0x1c] sm:$0xf]
    %1585 = vrot.lane.b32.xlu0 %v1525, 64
    %v1586 = vpop.permute.xlu0 %1585
    %1588 = vrot.lane.b32.xlu0 %v1526, 64
    %v1589 = vpop.permute.xlu0 %1588
    %v1591 = vsel %vm528, %v1586, 0
    %v1594 = vsel %vm528, %v1589, 0
    %1596 = vmatpush.bf16.xpose.msra.mxu0 0
    %1597 = vmatpush.bf16.xpose.msra.mxu0 0
    %1598 = vmatpush.bf16.xpose.msra.mxu0 0
    %1599 = vmatpush.bf16.xpose.msra.mxu0 0
    %1600 = vmatpush.bf16.xpose.msra.mxu0 0
    %1601 = vmatpush.bf16.xpose.msra.mxu0 0
    %1602 = vmatpush.bf16.xpose.msra.mxu0 0
    %1603 = vmatpush.bf16.xpose.msra.mxu0 %v1594
    %1604 = vmatmul.bf16.gmra.mxu0 %v1591
    %v1605 = vpop.f32.mrf.mxu0
    %v1606 = vadd.f32 0.0, %v1605
    %v1607 = vpop.f32.mrf.mxu0
    %1608 = vdwg.mxu0
    %v1609 = vsel %vm1339, %v1606, -inf
    %1610 = vmax.xlane.f32.xlu0 %v1609
    %v1611 = vpop.xlane.xlu0 %1610
    %v1612 = vsub.f32 %v1606, %v1611
    %v1613 = vmul.f32 %v1612, 1.442695
    %v1614 = vpow.pop %v1613
    %v1615 = vsel %vm1339, %v1614, 0.0
    %1616 = vadd.xlane.f32.xlu0 %v1615
    %v1617 = vpop.xlane.xlu0 %1616
    %v1618 = vrcp.pop %v1617
    %v1619 = vmul.f32 %v1614, %v1618
    %v1620 = vpack.c.bf16 %v1619, %v1619
    %1622 = vrot.lane.b32.xlu0 %v1558, 64
    %v1623 = vpop.permute.xlu0 %1622
    %v1626 = vsel %vm1339, %v1620, 0
    %1628 = vmatpush.bf16.msra.mxu0 0
    %1629 = vmatpush.bf16.msra.mxu0 0
    %1630 = vmatpush.bf16.msra.mxu0 0
    %1631 = vmatpush.bf16.msra.mxu0 0
    %1632 = vmatpush.bf16.msra.mxu0 0
    %1633 = vmatpush.bf16.msra.mxu0 0
    %1634 = vmatpush.bf16.msra.mxu0 0
    %1635 = vmatpush.bf16.msra.mxu0 %v1623
    %1636 = vmatmul.bf16.gmra.mxu0 %v1626
    %v1637 = vpop.f32.mrf.mxu0
    %v1638 = vadd.f32 0.0, %v1637
    %v1639 = vpop.f32.mrf.mxu0
    %1640 = vdwg.mxu0
    %v1641 = vpack.c.bf16 %v1638, %v1638
    %v1642 = vld [vmem:[#allocation20 + $0x20] sm:$0xf]
    %v1643 = vld [vmem:[#allocation20 + $0x24] sm:$0xf]
    %v1644 = vld [vmem:[#allocation20 + $0x28] sm:$0xf]
    %v1645 = vld [vmem:[#allocation20 + $0x2c] sm:$0xf]
    %v1646 = vld [vmem:[#allocation20 + $0x30] sm:$0xf]
    %v1647 = vld [vmem:[#allocation20 + $0x34] sm:$0xf]
    %v1648 = vld [vmem:[#allocation20 + $0x38] sm:$0xf]
    %v1649 = vld [vmem:[#allocation20 + $0x3c] sm:$0xf]
    %v1658 = vunpack.c.l.b16 %v1642
    %v1659 = vunpack.c.l.b16 %v1643
    %v1660 = vunpack.c.l.b16 %v1644
    %v1661 = vunpack.c.l.b16 %v1645
    %v1662 = vunpack.c.l.b16 %v1646
    %v1663 = vunpack.c.l.b16 %v1647
    %v1664 = vunpack.c.l.b16 %v1648
    %v1665 = vunpack.c.l.b16 %v1649
    %v1666 = vpack.c.b16 %v1659, %v1658
    %v1667 = vpack.c.b16 %v1661, %v1660
    %v1668 = vpack.c.b16 %v1663, %v1662
    %v1669 = vpack.c.b16 %v1665, %v1664
    %v1675 = vsel %vm528, %v1641, 0
    %1677 = vmatpush.bf16.msra.mxu0 0
    %1678 = vmatpush.bf16.msra.mxu0 0
    %1679 = vmatpush.bf16.msra.mxu0 0
    %1680 = vmatpush.bf16.msra.mxu0 0
    %1681 = vmatpush.bf16.msra.mxu0 %v1669
    %1682 = vmatpush.bf16.msra.mxu0 %v1668
    %1683 = vmatpush.bf16.msra.mxu0 %v1667
    %1684 = vmatpush.bf16.msra.mxu0 %v1666
    %1685 = vmatmul.bf16.gmra.mxu0 %v1675
    %v1686 = vpop.f32.mrf.mxu0
    %v1687 = vadd.f32 0.0, %v1686
    %v1688 = vpop.f32.mrf.mxu0
    %1689 = vdwg.mxu0
    %v1698 = vunpack.c.l.b16 %v1576
    %v1699 = vunpack.c.l.b16 %v1577
    %v1700 = vunpack.c.l.b16 %v1578
    %v1701 = vunpack.c.l.b16 %v1579
    %v1702 = vunpack.c.l.b16 %v1580
    %v1703 = vunpack.c.l.b16 %v1581
    %v1704 = vunpack.c.l.b16 %v1582
    %v1705 = vunpack.c.l.b16 %v1583
    %v1706 = vpack.c.b16 %v1699, %v1698
    %v1707 = vpack.c.b16 %v1701, %v1700
    %v1708 = vpack.c.b16 %v1703, %v1702
    %v1709 = vpack.c.b16 %v1705, %v1704
    %v1715 = vsel %vm528, %v1575, 0
    %1717 = vmatpush.bf16.msra.mxu0 0
    %1718 = vmatpush.bf16.msra.mxu0 0
    %1719 = vmatpush.bf16.msra.mxu0 0
    %1720 = vmatpush.bf16.msra.mxu0 0
    %1721 = vmatpush.bf16.msra.mxu0 %v1709
    %1722 = vmatpush.bf16.msra.mxu0 %v1708
    %1723 = vmatpush.bf16.msra.mxu0 %v1707
    %1724 = vmatpush.bf16.msra.mxu0 %v1706
    %1725 = vmatmul.bf16.gmra.mxu0 %v1715
    %v1726 = vpop.f32.mrf.mxu0
    %v1727 = vadd.f32 %v1687, %v1726
    %v1728 = vpop.f32.mrf.mxu0
    %1729 = vdwg.mxu0
    %1730 = vst [vmem:[#allocation2 + $0x8] sm:$0xff] %v1727
    %v1731 = vld [vmem:[#allocation2] sm:$0xff]
    %v1732 = vld [vmem:[#allocation2 + $0x8] sm:$0xff]
    %v1733 = vadd.f32 %v1731, %v953
    %v1734 = vadd.f32 %v1732, %v954
    %v1735 = vld [vmem:[#allocation12] sm:$0x1]
    %v1736 = vld [vmem:[%s9] sm:$0x1]
    %1737 = vadd.xlane.f32.xlu0 %v1733
    %v1738 = vpop.xlane.xlu0 %1737
    %1739 = vadd.xlane.f32.xlu0 %v1734
    %v1740 = vpop.xlane.xlu0 %1739
    %v1741 = vmul.f32 %v1738, %v276
    %v1742 = vmul.f32 %v1740, %v276
    %v1743 = vsub.f32 %v1733, %v1741
    %v1744 = vsub.f32 %v1734, %v1742
    %v1745 = vmul.f32 %v1743, %v1743
    %v1746 = vmul.f32 %v1744, %v1744
    %1747 = vadd.xlane.f32.xlu0 %v1745
    %v1748 = vpop.xlane.xlu0 %1747
    %1749 = vadd.xlane.f32.xlu0 %v1746
    %v1750 = vpop.xlane.xlu0 %1749
    %v1751 = vmul.f32 %v1748, %v276
    %v1752 = vmul.f32 %v1750, %v276
    %v1753 = vadd.f32 %v1751, 1e-06
    %v1754 = vadd.f32 %v1752, 1e-06
    %v1755 = vrsqrt.pop %v1753
    %v1756 = vmul.f32 %v1755, %v1753
    %v1757 = vmul.f32 %v1756, %v1755
    %v1758 = vmul.f32 0.5, %v1757
    %v1759 = vsub.f32 1.5, %v1758
    %v1760 = vmul.f32 %v1755, %v1759
    %vm1761 = vweird.f32 %v1753
    %vm1762 = vweird.f32 %v1755
    %vm1763 = vmor %vm1761, %vm1762
    %v1764 = vsel %vm1763, %v1755, %v1760
    %v1765 = vrsqrt.pop %v1754
    %v1766 = vmul.f32 %v1765, %v1754
    %v1767 = vmul.f32 %v1766, %v1765
    %v1768 = vmul.f32 0.5, %v1767
    %v1769 = vsub.f32 1.5, %v1768
    %v1770 = vmul.f32 %v1765, %v1769
    %vm1771 = vweird.f32 %v1754
    %vm1772 = vweird.f32 %v1765
    %vm1773 = vmor %vm1771, %vm1772
    %v1774 = vsel %vm1773, %v1765, %v1770
    %v1775 = vmul.f32 %v1743, %v1764
    %v1776 = vmul.f32 %v1744, %v1774
    %v1778 = vperm.slane %v1735, 0
    %v1780 = vmul.f32 %v1775, %v1778
    %v1781 = vmul.f32 %v1776, %v1778
    %v1783 = vperm.slane %v1736, 0
    %v1785 = vadd.f32 %v1780, %v1783
    %v1786 = vadd.f32 %v1781, %v1783
    %v1787 = vpack.c.bf16 %v1786, %v1785
    %v1788 = vld [vmem:[#allocation21] sm:$0xff]
    %v1789 = vld [vmem:[#allocation21 + $0x8] sm:$0xff]
    %v1790 = vld [vmem:[#allocation21 + $0x10] sm:$0xff]
    %v1791 = vld [vmem:[#allocation21 + $0x18] sm:$0xff]
    %v1792 = vld [vmem:[#allocation21 + $0x20] sm:$0xff]
    %v1793 = vld [vmem:[#allocation21 + $0x28] sm:$0xff]
    %v1794 = vld [vmem:[#allocation21 + $0x30] sm:$0xff]
    %v1795 = vld [vmem:[#allocation21 + $0x38] sm:$0xff]
    %v1796 = vld [vmem:[#allocation21 + $0x40] sm:$0xff]
    %v1797 = vld [vmem:[#allocation21 + $0x48] sm:$0xff]
    %v1798 = vld [vmem:[#allocation21 + $0x50] sm:$0xff]
    %v1799 = vld [vmem:[#allocation21 + $0x58] sm:$0xff]
    %v1800 = vld [vmem:[#allocation21 + $0x60] sm:$0xff]
    %v1801 = vld [vmem:[#allocation21 + $0x68] sm:$0xff]
    %v1802 = vld [vmem:[#allocation21 + $0x70] sm:$0xff]
    %v1803 = vld [vmem:[#allocation21 + $0x78] sm:$0xff]
    %v1804 = vld [vmem:[#allocation21 + $0x80] sm:$0xff]
    %v1805 = vld [vmem:[#allocation21 + $0x88] sm:$0xff]
    %v1806 = vld [vmem:[#allocation21 + $0x90] sm:$0xff]
    %v1807 = vld [vmem:[#allocation21 + $0x98] sm:$0xff]
    %v1808 = vld [vmem:[#allocation21 + $0xa0] sm:$0xff]
    %v1809 = vld [vmem:[#allocation21 + $0xa8] sm:$0xff]
    %v1810 = vld [vmem:[#allocation21 + $0xb0] sm:$0xff]
    %v1811 = vld [vmem:[#allocation21 + $0xb8] sm:$0xff]
    %v1812 = vld [vmem:[#allocation21 + $0xc0] sm:$0xff]
    %v1813 = vld [vmem:[#allocation21 + $0xc8] sm:$0xff]
    %v1814 = vld [vmem:[#allocation21 + $0xd0] sm:$0xff]
    %v1815 = vld [vmem:[#allocation21 + $0xd8] sm:$0xff]
    %v1816 = vld [vmem:[#allocation21 + $0xe0] sm:$0xff]
    %v1817 = vld [vmem:[#allocation21 + $0xe8] sm:$0xff]
    %v1818 = vld [vmem:[#allocation21 + $0xf0] sm:$0xff]
    %v1819 = vld [vmem:[#allocation21 + $0xf8] sm:$0xff]
    %v1820 = vld [vmem:[%s16] sm:$0xf]
    %v1822 = vperm.slane %v1820, 0
    %v1823 = vperm.slane %v1820, 1
    %v1824 = vperm.slane %v1820, 2
    %v1825 = vperm.slane %v1820, 3
    %v1862 = vunpack.c.l.b16 %v1788
    %v1863 = vunpack.c.h.b16 %v1788
    %v1864 = vunpack.c.l.b16 %v1789
    %v1865 = vunpack.c.h.b16 %v1789
    %v1866 = vunpack.c.l.b16 %v1790
    %v1867 = vunpack.c.h.b16 %v1790
    %v1868 = vunpack.c.l.b16 %v1791
    %v1869 = vunpack.c.h.b16 %v1791
    %v1870 = vunpack.c.l.b16 %v1792
    %v1871 = vunpack.c.h.b16 %v1792
    %v1872 = vunpack.c.l.b16 %v1793
    %v1873 = vunpack.c.h.b16 %v1793
    %v1874 = vunpack.c.l.b16 %v1794
    %v1875 = vunpack.c.h.b16 %v1794
    %v1876 = vunpack.c.l.b16 %v1795
    %v1877 = vunpack.c.h.b16 %v1795
    %v1878 = vunpack.c.l.b16 %v1796
    %v1879 = vunpack.c.h.b16 %v1796
    %v1880 = vunpack.c.l.b16 %v1797
    %v1881 = vunpack.c.h.b16 %v1797
    %v1882 = vunpack.c.l.b16 %v1798
    %v1883 = vunpack.c.h.b16 %v1798
    %v1884 = vunpack.c.l.b16 %v1799
    %v1885 = vunpack.c.h.b16 %v1799
    %v1886 = vunpack.c.l.b16 %v1800
    %v1887 = vunpack.c.h.b16 %v1800
    %v1888 = vunpack.c.l.b16 %v1801
    %v1889 = vunpack.c.h.b16 %v1801
    %v1890 = vunpack.c.l.b16 %v1802
    %v1891 = vunpack.c.h.b16 %v1802
    %v1892 = vunpack.c.l.b16 %v1803
    %v1893 = vunpack.c.h.b16 %v1803
    %v1894 = vunpack.c.l.b16 %v1804
    %v1895 = vunpack.c.h.b16 %v1804
    %v1896 = vunpack.c.l.b16 %v1805
    %v1897 = vunpack.c.h.b16 %v1805
    %v1898 = vunpack.c.l.b16 %v1806
    %v1899 = vunpack.c.h.b16 %v1806
    %v1900 = vunpack.c.l.b16 %v1807
    %v1901 = vunpack.c.h.b16 %v1807
    %v1902 = vunpack.c.l.b16 %v1808
    %v1903 = vunpack.c.h.b16 %v1808
    %v1904 = vunpack.c.l.b16 %v1809
    %v1905 = vunpack.c.h.b16 %v1809
    %v1906 = vunpack.c.l.b16 %v1810
    %v1907 = vunpack.c.h.b16 %v1810
    %v1908 = vunpack.c.l.b16 %v1811
    %v1909 = vunpack.c.h.b16 %v1811
    %v1910 = vunpack.c.l.b16 %v1812
    %v1911 = vunpack.c.h.b16 %v1812
    %v1912 = vunpack.c.l.b16 %v1813
    %v1913 = vunpack.c.h.b16 %v1813
    %v1914 = vunpack.c.l.b16 %v1814
    %v1915 = vunpack.c.h.b16 %v1814
    %v1916 = vunpack.c.l.b16 %v1815
    %v1917 = vunpack.c.h.b16 %v1815
    %v1918 = vunpack.c.l.b16 %v1816
    %v1919 = vunpack.c.h.b16 %v1816
    %v1920 = vunpack.c.l.b16 %v1817
    %v1921 = vunpack.c.h.b16 %v1817
    %v1922 = vunpack.c.l.b16 %v1818
    %v1923 = vunpack.c.h.b16 %v1818
    %v1924 = vunpack.c.l.b16 %v1819
    %v1925 = vunpack.c.h.b16 %v1819
    %v1926 = vpack.c.b16 %v1866, %v1862
    %v1927 = vpack.c.b16 %v1867, %v1863
    %v1928 = vpack.c.b16 %v1868, %v1864
    %v1929 = vpack.c.b16 %v1869, %v1865
    %v1930 = vpack.c.b16 %v1874, %v1870
    %v1931 = vpack.c.b16 %v1875, %v1871
    %v1932 = vpack.c.b16 %v1876, %v1872
    %v1933 = vpack.c.b16 %v1877, %v1873
    %v1934 = vpack.c.b16 %v1882, %v1878
    %v1935 = vpack.c.b16 %v1883, %v1879
    %v1936 = vpack.c.b16 %v1884, %v1880
    %v1937 = vpack.c.b16 %v1885, %v1881
    %v1938 = vpack.c.b16 %v1890, %v1886
    %v1939 = vpack.c.b16 %v1891, %v1887
    %v1940 = vpack.c.b16 %v1892, %v1888
    %v1941 = vpack.c.b16 %v1893, %v1889
    %v1942 = vpack.c.b16 %v1898, %v1894
    %v1943 = vpack.c.b16 %v1899, %v1895
    %v1944 = vpack.c.b16 %v1900, %v1896
    %v1945 = vpack.c.b16 %v1901, %v1897
    %v1946 = vpack.c.b16 %v1906, %v1902
    %v1947 = vpack.c.b16 %v1907, %v1903
    %v1948 = vpack.c.b16 %v1908, %v1904
    %v1949 = vpack.c.b16 %v1909, %v1905
    %v1950 = vpack.c.b16 %v1914, %v1910
    %v1951 = vpack.c.b16 %v1915, %v1911
    %v1952 = vpack.c.b16 %v1916, %v1912
    %v1953 = vpack.c.b16 %v1917, %v1913
    %v1954 = vpack.c.b16 %v1922, %v1918
    %v1955 = vpack.c.b16 %v1923, %v1919
    %v1956 = vpack.c.b16 %v1924, %v1920
    %v1957 = vpack.c.b16 %v1925, %v1921
    %1990 = vmatpush.bf16.msra.mxu0 %v1954
    %1991 = vmatpush.bf16.msra.mxu0 %v1950
    %1992 = vmatpush.bf16.msra.mxu0 %v1946
    %1993 = vmatpush.bf16.msra.mxu0 %v1942
    %1994 = vmatpush.bf16.msra.mxu0 %v1938
    %1995 = vmatpush.bf16.msra.mxu0 %v1934
    %1996 = vmatpush.bf16.msra.mxu0 %v1930
    %1997 = vmatpush.bf16.msra.mxu0 %v1926
    %1998 = vmatmul.bf16.gmra.mxu0 %v1787
    %v1999 = vpop.f32.mrf.mxu0
    %v2000 = vadd.f32 %v1822, %v1999
    %v2001 = vpop.f32.mrf.mxu0
    %v2002 = vadd.f32 %v1822, %v2001
    %2003 = vdwg.mxu0
    %2004 = vmatpush.bf16.msra.mxu0 %v1955
    %2005 = vmatpush.bf16.msra.mxu0 %v1951
    %2006 = vmatpush.bf16.msra.mxu0 %v1947
    %2007 = vmatpush.bf16.msra.mxu0 %v1943
    %2008 = vmatpush.bf16.msra.mxu0 %v1939
    %2009 = vmatpush.bf16.msra.mxu0 %v1935
    %2010 = vmatpush.bf16.msra.mxu0 %v1931
    %2011 = vmatpush.bf16.msra.mxu0 %v1927
    %2012 = vmatmul.bf16.gmra.mxu0 %v1787
    %v2013 = vpop.f32.mrf.mxu0
    %v2014 = vadd.f32 %v1823, %v2013
    %v2015 = vpop.f32.mrf.mxu0
    %v2016 = vadd.f32 %v1823, %v2015
    %2017 = vdwg.mxu0
    %2018 = vmatpush.bf16.msra.mxu0 %v1956
    %2019 = vmatpush.bf16.msra.mxu0 %v1952
    %2020 = vmatpush.bf16.msra.mxu0 %v1948
    %2021 = vmatpush.bf16.msra.mxu0 %v1944
    %2022 = vmatpush.bf16.msra.mxu0 %v1940
    %2023 = vmatpush.bf16.msra.mxu0 %v1936
    %2024 = vmatpush.bf16.msra.mxu0 %v1932
    %2025 = vmatpush.bf16.msra.mxu0 %v1928
    %2026 = vmatmul.bf16.gmra.mxu0 %v1787
    %v2027 = vpop.f32.mrf.mxu0
    %v2028 = vadd.f32 %v1824, %v2027
    %v2029 = vpop.f32.mrf.mxu0
    %v2030 = vadd.f32 %v1824, %v2029
    %2031 = vdwg.mxu0
    %2032 = vmatpush.bf16.msra.mxu0 %v1957
    %2033 = vmatpush.bf16.msra.mxu0 %v1953
    %2034 = vmatpush.bf16.msra.mxu0 %v1949
    %2035 = vmatpush.bf16.msra.mxu0 %v1945
    %2036 = vmatpush.bf16.msra.mxu0 %v1941
    %2037 = vmatpush.bf16.msra.mxu0 %v1937
    %2038 = vmatpush.bf16.msra.mxu0 %v1933
    %2039 = vmatpush.bf16.msra.mxu0 %v1929
    %2040 = vmatmul.bf16.gmra.mxu0 %v1787
    %v2041 = vpop.f32.mrf.mxu0
    %v2042 = vadd.f32 %v1825, %v2041
    %v2043 = vpop.f32.mrf.mxu0
    %v2044 = vadd.f32 %v1825, %v2043
    %2045 = vdwg.mxu0
    %v2046 = vmul.f32 %v2000, %v2000
    %v2047 = vmul.f32 %v2014, %v2014
    %v2048 = vmul.f32 %v2028, %v2028
    %v2049 = vmul.f32 %v2042, %v2042
    %v2050 = vmul.f32 %v2002, %v2002
    %v2051 = vmul.f32 %v2016, %v2016
    %v2052 = vmul.f32 %v2030, %v2030
    %v2053 = vmul.f32 %v2044, %v2044
    %v2054 = vmul.f32 %v2000, %v2046
    %v2055 = vmul.f32 %v2014, %v2047
    %v2056 = vmul.f32 %v2028, %v2048
    %v2057 = vmul.f32 %v2042, %v2049
    %v2058 = vmul.f32 %v2002, %v2050
    %v2059 = vmul.f32 %v2016, %v2051
    %v2060 = vmul.f32 %v2030, %v2052
    %v2061 = vmul.f32 %v2044, %v2053
    %v2062 = vmul.f32 %v2054, 0.044715
    %v2063 = vmul.f32 %v2055, 0.044715
    %v2064 = vmul.f32 %v2056, 0.044715
    %v2065 = vmul.f32 %v2057, 0.044715
    %v2066 = vmul.f32 %v2058, 0.044715
    %v2067 = vmul.f32 %v2059, 0.044715
    %v2068 = vmul.f32 %v2060, 0.044715
    %v2069 = vmul.f32 %v2061, 0.044715
    %v2070 = vadd.f32 %v2000, %v2062
    %v2071 = vadd.f32 %v2014, %v2063
    %v2072 = vadd.f32 %v2028, %v2064
    %v2073 = vadd.f32 %v2042, %v2065
    %v2074 = vadd.f32 %v2002, %v2066
    %v2075 = vadd.f32 %v2016, %v2067
    %v2076 = vadd.f32 %v2030, %v2068
    %v2077 = vadd.f32 %v2044, %v2069
    %v2078 = vmul.f32 %v2070, 0.7978846
    %v2079 = vmul.f32 %v2071, 0.7978846
    %v2080 = vmul.f32 %v2072, 0.7978846
    %v2081 = vmul.f32 %v2073, 0.7978846
    %v2082 = vmul.f32 %v2074, 0.7978846
    %v2083 = vmul.f32 %v2075, 0.7978846
    %v2084 = vmul.f32 %v2076, 0.7978846
    %v2085 = vmul.f32 %v2077, 0.7978846
    %v2086 = vtanh.pop %v2078
    %v2087 = vtanh.pop %v2079
    %v2088 = vtanh.pop %v2080
    %v2089 = vtanh.pop %v2081
    %v2090 = vtanh.pop %v2082
    %v2091 = vtanh.pop %v2083
    %v2092 = vtanh.pop %v2084
    %v2093 = vtanh.pop %v2085
    %v2094 = vadd.f32 %v2086, 1.0
    %v2095 = vadd.f32 %v2087, 1.0
    %v2096 = vadd.f32 %v2088, 1.0
    %v2097 = vadd.f32 %v2089, 1.0
    %v2098 = vadd.f32 %v2090, 1.0
    %v2099 = vadd.f32 %v2091, 1.0
    %v2100 = vadd.f32 %v2092, 1.0
    %v2101 = vadd.f32 %v2093, 1.0
    %v2102 = vmul.f32 %v2094, 0.5
    %v2103 = vmul.f32 %v2095, 0.5
    %v2104 = vmul.f32 %v2096, 0.5
    %v2105 = vmul.f32 %v2097, 0.5
    %v2106 = vmul.f32 %v2098, 0.5
    %v2107 = vmul.f32 %v2099, 0.5
    %v2108 = vmul.f32 %v2100, 0.5
    %v2109 = vmul.f32 %v2101, 0.5
    %v2110 = vmul.f32 %v2000, %v2102
    %v2111 = vmul.f32 %v2014, %v2103
    %v2112 = vmul.f32 %v2028, %v2104
    %v2113 = vmul.f32 %v2042, %v2105
    %v2114 = vmul.f32 %v2002, %v2106
    %v2115 = vmul.f32 %v2016, %v2107
    %v2116 = vmul.f32 %v2030, %v2108
    %v2117 = vmul.f32 %v2044, %v2109
    %v2118 = vpack.c.bf16 %v2114, %v2110
    %v2119 = vpack.c.bf16 %v2115, %v2111
    %v2120 = vpack.c.bf16 %v2116, %v2112
    %v2121 = vpack.c.bf16 %v2117, %v2113
    %v2122 = vld [vmem:[#allocation23] sm:$0xf]
    %v2123 = vld [vmem:[#allocation23 + $0x4] sm:$0xf]
    %v2124 = vld [vmem:[#allocation23 + $0x8] sm:$0xf]
    %v2125 = vld [vmem:[#allocation23 + $0xc] sm:$0xf]
    %v2126 = vld [vmem:[#allocation23 + $0x10] sm:$0xf]
    %v2127 = vld [vmem:[#allocation23 + $0x14] sm:$0xf]
    %v2128 = vld [vmem:[#allocation23 + $0x18] sm:$0xf]
    %v2129 = vld [vmem:[#allocation23 + $0x1c] sm:$0xf]
    %v2130 = vld [vmem:[#allocation23 + $0x20] sm:$0xf]
    %v2131 = vld [vmem:[#allocation23 + $0x24] sm:$0xf]
    %v2132 = vld [vmem:[#allocation23 + $0x28] sm:$0xf]
    %v2133 = vld [vmem:[#allocation23 + $0x2c] sm:$0xf]
    %v2134 = vld [vmem:[#allocation23 + $0x30] sm:$0xf]
    %v2135 = vld [vmem:[#allocation23 + $0x34] sm:$0xf]
    %v2136 = vld [vmem:[#allocation23 + $0x38] sm:$0xf]
    %v2137 = vld [vmem:[#allocation23 + $0x3c] sm:$0xf]
    %v2138 = vld [vmem:[#allocation23 + $0x40] sm:$0xf]
    %v2139 = vld [vmem:[#allocation23 + $0x44] sm:$0xf]
    %v2140 = vld [vmem:[#allocation23 + $0x48] sm:$0xf]
    %v2141 = vld [vmem:[#allocation23 + $0x4c] sm:$0xf]
    %v2142 = vld [vmem:[#allocation23 + $0x50] sm:$0xf]
    %v2143 = vld [vmem:[#allocation23 + $0x54] sm:$0xf]
    %v2144 = vld [vmem:[#allocation23 + $0x58] sm:$0xf]
    %v2145 = vld [vmem:[#allocation23 + $0x5c] sm:$0xf]
    %v2146 = vld [vmem:[#allocation23 + $0x60] sm:$0xf]
    %v2147 = vld [vmem:[#allocation23 + $0x64] sm:$0xf]
    %v2148 = vld [vmem:[#allocation23 + $0x68] sm:$0xf]
    %v2149 = vld [vmem:[#allocation23 + $0x6c] sm:$0xf]
    %v2150 = vld [vmem:[#allocation23 + $0x70] sm:$0xf]
    %v2151 = vld [vmem:[#allocation23 + $0x74] sm:$0xf]
    %v2152 = vld [vmem:[#allocation23 + $0x78] sm:$0xf]
    %v2153 = vld [vmem:[#allocation23 + $0x7c] sm:$0xf]
    %v2154 = vld [vmem:[#allocation23 + $0x80] sm:$0xf]
    %v2155 = vld [vmem:[#allocation23 + $0x84] sm:$0xf]
    %v2156 = vld [vmem:[#allocation23 + $0x88] sm:$0xf]
    %v2157 = vld [vmem:[#allocation23 + $0x8c] sm:$0xf]
    %v2158 = vld [vmem:[#allocation23 + $0x90] sm:$0xf]
    %v2159 = vld [vmem:[#allocation23 + $0x94] sm:$0xf]
    %v2160 = vld [vmem:[#allocation23 + $0x98] sm:$0xf]
    %v2161 = vld [vmem:[#allocation23 + $0x9c] sm:$0xf]
    %v2162 = vld [vmem:[#allocation23 + $0xa0] sm:$0xf]
    %v2163 = vld [vmem:[#allocation23 + $0xa4] sm:$0xf]
    %v2164 = vld [vmem:[#allocation23 + $0xa8] sm:$0xf]
    %v2165 = vld [vmem:[#allocation23 + $0xac] sm:$0xf]
    %v2166 = vld [vmem:[#allocation23 + $0xb0] sm:$0xf]
    %v2167 = vld [vmem:[#allocation23 + $0xb4] sm:$0xf]
    %v2168 = vld [vmem:[#allocation23 + $0xb8] sm:$0xf]
    %v2169 = vld [vmem:[#allocation23 + $0xbc] sm:$0xf]
    %v2170 = vld [vmem:[#allocation23 + $0xc0] sm:$0xf]
    %v2171 = vld [vmem:[#allocation23 + $0xc4] sm:$0xf]
    %v2172 = vld [vmem:[#allocation23 + $0xc8] sm:$0xf]
    %v2173 = vld [vmem:[#allocation23 + $0xcc] sm:$0xf]
    %v2174 = vld [vmem:[#allocation23 + $0xd0] sm:$0xf]
    %v2175 = vld [vmem:[#allocation23 + $0xd4] sm:$0xf]
    %v2176 = vld [vmem:[#allocation23 + $0xd8] sm:$0xf]
    %v2177 = vld [vmem:[#allocation23 + $0xdc] sm:$0xf]
    %v2178 = vld [vmem:[#allocation23 + $0xe0] sm:$0xf]
    %v2179 = vld [vmem:[#allocation23 + $0xe4] sm:$0xf]
    %v2180 = vld [vmem:[#allocation23 + $0xe8] sm:$0xf]
    %v2181 = vld [vmem:[#allocation23 + $0xec] sm:$0xf]
    %v2182 = vld [vmem:[#allocation23 + $0xf0] sm:$0xf]
    %v2183 = vld [vmem:[#allocation23 + $0xf4] sm:$0xf]
    %v2184 = vld [vmem:[#allocation23 + $0xf8] sm:$0xf]
    %v2185 = vld [vmem:[#allocation23 + $0xfc] sm:$0xf]
    %v2186 = vld [vmem:[%s18] sm:$0x1]
    %v2188 = vperm.slane %v2186, 0
    %v2254 = vunpack.c.l.b16 %v2122
    %v2255 = vunpack.c.l.b16 %v2123
    %v2256 = vunpack.c.l.b16 %v2124
    %v2257 = vunpack.c.l.b16 %v2125
    %v2258 = vunpack.c.l.b16 %v2126
    %v2259 = vunpack.c.l.b16 %v2127
    %v2260 = vunpack.c.l.b16 %v2128
    %v2261 = vunpack.c.l.b16 %v2129
    %v2262 = vunpack.c.l.b16 %v2130
    %v2263 = vunpack.c.l.b16 %v2131
    %v2264 = vunpack.c.l.b16 %v2132
    %v2265 = vunpack.c.l.b16 %v2133
    %v2266 = vunpack.c.l.b16 %v2134
    %v2267 = vunpack.c.l.b16 %v2135
    %v2268 = vunpack.c.l.b16 %v2136
    %v2269 = vunpack.c.l.b16 %v2137
    %v2270 = vunpack.c.l.b16 %v2138
    %v2271 = vunpack.c.l.b16 %v2139
    %v2272 = vunpack.c.l.b16 %v2140
    %v2273 = vunpack.c.l.b16 %v2141
    %v2274 = vunpack.c.l.b16 %v2142
    %v2275 = vunpack.c.l.b16 %v2143
    %v2276 = vunpack.c.l.b16 %v2144
    %v2277 = vunpack.c.l.b16 %v2145
    %v2278 = vunpack.c.l.b16 %v2146
    %v2279 = vunpack.c.l.b16 %v2147
    %v2280 = vunpack.c.l.b16 %v2148
    %v2281 = vunpack.c.l.b16 %v2149
    %v2282 = vunpack.c.l.b16 %v2150
    %v2283 = vunpack.c.l.b16 %v2151
    %v2284 = vunpack.c.l.b16 %v2152
    %v2285 = vunpack.c.l.b16 %v2153
    %v2286 = vunpack.c.l.b16 %v2154
    %v2287 = vunpack.c.l.b16 %v2155
    %v2288 = vunpack.c.l.b16 %v2156
    %v2289 = vunpack.c.l.b16 %v2157
    %v2290 = vunpack.c.l.b16 %v2158
    %v2291 = vunpack.c.l.b16 %v2159
    %v2292 = vunpack.c.l.b16 %v2160
    %v2293 = vunpack.c.l.b16 %v2161
    %v2294 = vunpack.c.l.b16 %v2162
    %v2295 = vunpack.c.l.b16 %v2163
    %v2296 = vunpack.c.l.b16 %v2164
    %v2297 = vunpack.c.l.b16 %v2165
    %v2298 = vunpack.c.l.b16 %v2166
    %v2299 = vunpack.c.l.b16 %v2167
    %v2300 = vunpack.c.l.b16 %v2168
    %v2301 = vunpack.c.l.b16 %v2169
    %v2302 = vunpack.c.l.b16 %v2170
    %v2303 = vunpack.c.l.b16 %v2171
    %v2304 = vunpack.c.l.b16 %v2172
    %v2305 = vunpack.c.l.b16 %v2173
    %v2306 = vunpack.c.l.b16 %v2174
    %v2307 = vunpack.c.l.b16 %v2175
    %v2308 = vunpack.c.l.b16 %v2176
    %v2309 = vunpack.c.l.b16 %v2177
    %v2310 = vunpack.c.l.b16 %v2178
    %v2311 = vunpack.c.l.b16 %v2179
    %v2312 = vunpack.c.l.b16 %v2180
    %v2313 = vunpack.c.l.b16 %v2181
    %v2314 = vunpack.c.l.b16 %v2182
    %v2315 = vunpack.c.l.b16 %v2183
    %v2316 = vunpack.c.l.b16 %v2184
    %v2317 = vunpack.c.l.b16 %v2185
    %v2318 = vpack.c.b16 %v2255, %v2254
    %v2319 = vpack.c.b16 %v2257, %v2256
    %v2320 = vpack.c.b16 %v2259, %v2258
    %v2321 = vpack.c.b16 %v2261, %v2260
    %v2322 = vpack.c.b16 %v2263, %v2262
    %v2323 = vpack.c.b16 %v2265, %v2264
    %v2324 = vpack.c.b16 %v2267, %v2266
    %v2325 = vpack.c.b16 %v2269, %v2268
    %v2326 = vpack.c.b16 %v2271, %v2270
    %v2327 = vpack.c.b16 %v2273, %v2272
    %v2328 = vpack.c.b16 %v2275, %v2274
    %v2329 = vpack.c.b16 %v2277, %v2276
    %v2330 = vpack.c.b16 %v2279, %v2278
    %v2331 = vpack.c.b16 %v2281, %v2280
    %v2332 = vpack.c.b16 %v2283, %v2282
    %v2333 = vpack.c.b16 %v2285, %v2284
    %v2334 = vpack.c.b16 %v2287, %v2286
    %v2335 = vpack.c.b16 %v2289, %v2288
    %v2336 = vpack.c.b16 %v2291, %v2290
    %v2337 = vpack.c.b16 %v2293, %v2292
    %v2338 = vpack.c.b16 %v2295, %v2294
    %v2339 = vpack.c.b16 %v2297, %v2296
    %v2340 = vpack.c.b16 %v2299, %v2298
    %v2341 = vpack.c.b16 %v2301, %v2300
    %v2342 = vpack.c.b16 %v2303, %v2302
    %v2343 = vpack.c.b16 %v2305, %v2304
    %v2344 = vpack.c.b16 %v2307, %v2306
    %v2345 = vpack.c.b16 %v2309, %v2308
    %v2346 = vpack.c.b16 %v2311, %v2310
    %v2347 = vpack.c.b16 %v2313, %v2312
    %v2348 = vpack.c.b16 %v2315, %v2314
    %v2349 = vpack.c.b16 %v2317, %v2316
    %2382 = vmatpush.bf16.msra.mxu0 %v2325
    %2383 = vmatpush.bf16.msra.mxu0 %v2324
    %2384 = vmatpush.bf16.msra.mxu0 %v2323
    %2385 = vmatpush.bf16.msra.mxu0 %v2322
    %2386 = vmatpush.bf16.msra.mxu0 %v2321
    %2387 = vmatpush.bf16.msra.mxu0 %v2320
    %2388 = vmatpush.bf16.msra.mxu0 %v2319
    %2389 = vmatpush.bf16.msra.mxu0 %v2318
    %2390 = vmatmul.bf16.gmra.mxu0 %v2118
    %v2391 = vpop.f32.mrf.mxu0
    %v2392 = vadd.f32 %v2188, %v2391
    %v2393 = vpop.f32.mrf.mxu0
    %v2394 = vadd.f32 %v2188, %v2393
    %2395 = vdwg.mxu0
    %2396 = vmatpush.bf16.msra.mxu0 %v2333
    %2397 = vmatpush.bf16.msra.mxu0 %v2332
    %2398 = vmatpush.bf16.msra.mxu0 %v2331
    %2399 = vmatpush.bf16.msra.mxu0 %v2330
    %2400 = vmatpush.bf16.msra.mxu0 %v2329
    %2401 = vmatpush.bf16.msra.mxu0 %v2328
    %2402 = vmatpush.bf16.msra.mxu0 %v2327
    %2403 = vmatpush.bf16.msra.mxu0 %v2326
    %2404 = vmatmul.bf16.gmra.mxu0 %v2119
    %v2405 = vpop.f32.mrf.mxu0
    %v2406 = vadd.f32 %v2392, %v2405
    %v2407 = vpop.f32.mrf.mxu0
    %v2408 = vadd.f32 %v2394, %v2407
    %2409 = vdwg.mxu0
    %2410 = vmatpush.bf16.msra.mxu0 %v2341
    %2411 = vmatpush.bf16.msra.mxu0 %v2340
    %2412 = vmatpush.bf16.msra.mxu0 %v2339
    %2413 = vmatpush.bf16.msra.mxu0 %v2338
    %2414 = vmatpush.bf16.msra.mxu0 %v2337
    %2415 = vmatpush.bf16.msra.mxu0 %v2336
    %2416 = vmatpush.bf16.msra.mxu0 %v2335
    %2417 = vmatpush.bf16.msra.mxu0 %v2334
    %2418 = vmatmul.bf16.gmra.mxu0 %v2120
    %v2419 = vpop.f32.mrf.mxu0
    %v2420 = vadd.f32 %v2406, %v2419
    %v2421 = vpop.f32.mrf.mxu0
    %v2422 = vadd.f32 %v2408, %v2421
    %2423 = vdwg.mxu0
    %2424 = vmatpush.bf16.msra.mxu0 %v2349
    %2425 = vmatpush.bf16.msra.mxu0 %v2348
    %2426 = vmatpush.bf16.msra.mxu0 %v2347
    %2427 = vmatpush.bf16.msra.mxu0 %v2346
    %2428 = vmatpush.bf16.msra.mxu0 %v2345
    %2429 = vmatpush.bf16.msra.mxu0 %v2344
    %2430 = vmatpush.bf16.msra.mxu0 %v2343
    %2431 = vmatpush.bf16.msra.mxu0 %v2342
    %2432 = vmatmul.bf16.gmra.mxu0 %v2121
    %v2433 = vpop.f32.mrf.mxu0
    %v2434 = vadd.f32 %v2420, %v2433
    %v2435 = vpop.f32.mrf.mxu0
    %v2436 = vadd.f32 %v2422, %v2435
    %2437 = vdwg.mxu0
    %v2438 = vadd.f32 %v2434, %v1733
    %v2439 = vadd.f32 %v2436, %v1734
    %2440 = vst [vmem:[#allocation24] sm:$0xff] %v2438
    %2441 = vst [vmem:[#allocation24 + $0x8] sm:$0xff] %v2439
    // Predicated region
    $region130: #{tpu_custom_call.1} parent=1 // pred_check
      _
    $region131: #{tpu_custom_call.1} parent=1 // pred_check_branch
      %2443 = sbr.rel (0) target = $region133
    $region132: #{tpu_custom_call.1} parent=1 // pred_region
      %2445 = vsyncadd [#allocation5], 0
      %s2446 = sshll.u32 [#allocation24], 4
      %s2447 = int_to_ptr.vmem [resolvable:$true] %s2446
      %s2448 = sshll.u32 %s19, 4
      %s2449 = int_to_ptr.hbm [resolvable:$true] %s2448
      %2454 = dma.vmem_to_hbm [thread:$0]  %s2447, 256, %s2449, [#allocation5], 128, 128, 8
    $region133: #{tpu_custom_call.1} parent=1 // pred_fallthru
      _
    // Predicated region
    $region134: #{tpu_custom_call.1} parent=1 // pred_check
      _
    $region135: #{tpu_custom_call.1} parent=1 // pred_check_branch
      %2456 = sbr.rel (0) target = $region137
    $region136: #{tpu_custom_call.1} parent=1 // pred_region
      %2458 = dma.done [#allocation5], 256
    $region137: #{tpu_custom_call.1} parent=1 // pred_fallthru
      _
    %2459 = vsyncpa [#allocation4], 1
    %2460 = vsyncpa [#allocation7], 1
    %2461 = vsyncpa [#allocation10], 1
    %2462 = vsyncpa [#allocation13], 1
    %2463 = vsyncpa [#allocation16], 1
    %2464 = vsyncpa [#allocation19], 1
    %2465 = vsyncpa [#allocation22], 1
    %2466 = vsyncpa [#allocation5], 1

// kernel: tpu_custom_call.1
$region0: #{tpu_custom_call.1}
  #allocation0 [shape = 'u32[]', space=smem, size = 0x4, offset = 0x4, fixed_abs, tag = 'smem constant byte address 0x4 - core index']
  #allocation1 [shape = 'u32[72,128]{1,0:T(1,128)}', space=vmem, size = 0x9000, scoped, tag = 'internal scratch']
  #allocation2 [shape = 'f32[16,128]{1,0:T(8,128)}', space=vmem, size = 0x2000, scoped, tag = 'scratch operand']
  %s0 = inlined_call_operand.hbm [shape: f32[2,8,128], index: 0, kind: input, shape index: {}]
  %s1 = inlined_call_operand.hbm [shape: f32[2,16,128], index: 1, kind: input, shape index: {}]
  %s2 = inlined_call_operand.vmem [shape: f32[1,128], index: 2, kind: input, shape index: {}]
  %s3 = inlined_call_operand.vmem [shape: f32[1,128], index: 3, kind: input, shape index: {}]
  %s4 = inlined_call_operand.vmem [shape: f32[1,128], index: 4, kind: input, shape index: {}]
  %s5 = inlined_call_operand.hbm [shape: f32[1,128], index: 5, kind: input, shape index: {}]
  %s6 = inlined_call_operand.hbm [shape: f32[1,128], index: 6, kind: input, shape index: {}]
  %s7 = inlined_call_operand.hbm [shape: f32[1,128], index: 7, kind: input, shape index: {}]
  %s8 = inlined_call_operand.hbm [shape: f32[1,128], index: 8, kind: input, shape index: {}]
  %s9 = inlined_call_operand.vmem [shape: f32[1,128], index: 9, kind: input, shape index: {}]
  %s10 = inlined_call_operand.hbm [shape: bf16[128,384], index: 10, kind: input, shape index: {}]
  %s11 = inlined_call_operand.hbm [shape: bf16[128,128], index: 11, kind: input, shape index: {}]
  %s12 = inlined_call_operand.hbm [shape: bf16[128,128], index: 12, kind: input, shape index: {}]
  %s13 = inlined_call_operand.hbm [shape: bf16[128,256], index: 13, kind: input, shape index: {}]
  %s14 = inlined_call_operand.hbm [shape: bf16[128,128], index: 14, kind: input, shape index: {}]
  %s15 = inlined_call_operand.hbm [shape: bf16[128,512], index: 15, kind: input, shape index: {}]
  %s16 = inlined_call_operand.vmem [shape: f32[1,512], index: 16, kind: input, shape index: {}]
  %s17 = inlined_call_operand.hbm [shape: bf16[512,128], index: 17, kind: input, shape index: {}]
  %s18 = inlined_call_operand.vmem [shape: f32[1,128], index: 18, kind: input, shape index: {}]
  %s19 = inlined_call_operand.hbm [shape: f32[2,8,128], index: 19, kind: output, shape index: {}]
  %s20 = sld [smem:[#allocation0]]
  $region138: #{tpu_custom_call.1} parent=0
    _
  %s22 = ssub.s32 1, %s20
  %s23 = scalar_select 0, %s22, %s20
  $region1: #{tpu_custom_call.1} parent=0
    #allocation3 [shape = 'u8[8192]{0}', space=vmem, size = 0x2000, scoped, tag = 'input window, operand 0, single buffered']
    #allocation4 [shape = 's32[1]{0}', space=sflag, size = 0x4, scoped, tag = 'scoped memory for tpu_custom_call.1']
    #allocation5 [shape = 's32[1]{0}', space=sflag, size = 0x4, scoped, tag = 'scoped memory for tpu_custom_call.1']
    #allocation6 [shape = 'u8[16384]{0}', space=vmem, size = 0x4000, scoped, tag = 'input window, operand 1, single buffered']
    #allocation7 [shape = 's32[1]{0}', space=sflag, size = 0x4, scoped, tag = 'scoped memory for tpu_custom_call.1']
    #allocation8 [shape = 'u8[512]{0}', space=vmem, size = 0x400, scoped, tag = 'input window, operand 5, single buffered']
    #allocation9 [shape = 'u8[512]{0}', space=vmem, size = 0x400, scoped, tag = 'input window, operand 6, single buffered']
    #allocation10 [shape = 's32[1]{0}', space=sflag, size = 0x4, scoped, tag = 'scoped memory for tpu_custom_call.1']
    #allocation11 [shape = 'u8[512]{0}', space=vmem, size = 0x400, scoped, tag = 'input window, operand 7, single buffered']
    #allocation12 [shape = 'u8[512]{0}', space=vmem, size = 0x400, scoped, tag = 'input window, operand 8, single buffered']
    #allocation13 [shape = 's32[1]{0}', space=sflag, size = 0x4, scoped, tag = 'scoped memory for tpu_custom_call.1']
    #allocation14 [shape = 'u8[98304]{0}', space=vmem, size = 0x18000, scoped, tag = 'input window, operand 10, single buffered']
    #allocation15 [shape = 'u8[32768]{0}', space=vmem, size = 0x8000, scoped, tag = 'input window, operand 11, single buffered']
    #allocation16 [shape = 's32[1]{0}', space=sflag, size = 0x4, scoped, tag = 'scoped memory for tpu_custom_call.1']
    #allocation17 [shape = 'u8[32768]{0}', space=vmem, size = 0x8000, scoped, tag = 'input window, operand 12, single buffered']
    #allocation18 [shape = 'u8[65536]{0}', space=vmem, size = 0x10000, scoped, tag = 'input window, operand 13, single buffered']
    #allocation19 [shape = 's32[1]{0}', space=sflag, size = 0x4, scoped, tag = 'scoped memory for tpu_custom_call.1']
    #allocation20 [shape = 'u8[32768]{0}', space=vmem, size = 0x8000, scoped, tag = 'input window, operand 14, single buffered']
    #allocation21 [shape = 'u8[131072]{0}', space=vmem, size = 0x20000, scoped, tag = 'input window, operand 15, single buffered']
    #allocation22 [shape = 's32[1]{0}', space=sflag, size = 0x4, scoped, tag = 'scoped memory for tpu_custom_call.1']
    #allocation23 [shape = 'u8[131072]{0}', space=vmem, size = 0x20000, scoped, tag = 'input window, operand 17, single buffered']
    #allocation24 [shape = 'u8[8192]{0}', space=vmem, size = 0x2000, scoped, tag = 'output window, operand 0, single buffered']
    %24 = vsyncpa [#allocation4], 0
    %25 = vsyncpa [#allocation7], 0
    %26 = vsyncpa [#allocation10], 0
    %27 = vsyncpa [#allocation13], 0
    %28 = vsyncpa [#allocation16], 0
    %29 = vsyncpa [#allocation19], 0
    %30 = vsyncpa [#allocation22], 0
    %31 = vsyncpa [#allocation5], 0
    // Predicated region
    $region2: #{tpu_custom_call.1} parent=1 // pred_check
      _
    $region3: #{tpu_custom_call.1} parent=1 // pred_check_branch
      %33 = sbr.rel (0) target = $region5
    $region4: #{tpu_custom_call.1} parent=1 // pred_region
      %35 = vsyncadd [#allocation4], 0
      %s36 = sshll.u32 %s0, 4
      %s37 = int_to_ptr.hbm [resolvable:$true] %s36
      %s38 = sshll.u32 [#allocation3], 4
      %s39 = int_to_ptr.vmem [resolvable:$true] %s38
      %44 = dma.hbm_to_vmem [thread:$0]  %s37, 256, %s39, [#allocation4], 128, 128, 8
    $region5: #{tpu_custom_call.1} parent=1 // pred_fallthru
      _
    // Predicated region
    $region6: #{tpu_custom_call.1} parent=1 // pred_check
      _
    $region7: #{tpu_custom_call.1} parent=1 // pred_check_branch
      %46 = sbr.rel (0) target = $region9
    $region8: #{tpu_custom_call.1} parent=1 // pred_region
      %48 = vsyncadd [#allocation7], 0
      %s49 = sshll.u32 %s1, 4
      %s50 = int_to_ptr.hbm [resolvable:$true] %s49
      %s51 = sshll.u32 [#allocation6], 4
      %s52 = int_to_ptr.vmem [resolvable:$true] %s51
      %57 = dma.hbm_to_vmem [thread:$0]  %s50, 512, %s52, [#allocation7], 128, 128, 8
    $region9: #{tpu_custom_call.1} parent=1 // pred_fallthru
      _
    // Predicated region
    $region10: #{tpu_custom_call.1} parent=1 // pred_check
      _
    $region11: #{tpu_custom_call.1} parent=1 // pred_check_branch
      %59 = sbr.rel (0) target = $region13
    $region12: #{tpu_custom_call.1} parent=1 // pred_region
      _
    $region13: #{tpu_custom_call.1} parent=1 // pred_fallthru
      _
    // Predicated region
    $region14: #{tpu_custom_call.1} parent=1 // pred_check
      _
    $region15: #{tpu_custom_call.1} parent=1 // pred_check_branch
      %61 = sbr.rel (0) target = $region17
    $region16: #{tpu_custom_call.1} parent=1 // pred_region
      _
    $region17: #{tpu_custom_call.1} parent=1 // pred_fallthru
      _
    // Predicated region
    $region18: #{tpu_custom_call.1} parent=1 // pred_check
      _
    $region19: #{tpu_custom_call.1} parent=1 // pred_check_branch
      %63 = sbr.rel (0) target = $region21
    $region20: #{tpu_custom_call.1} parent=1 // pred_region
      _
    $region21: #{tpu_custom_call.1} parent=1 // pred_fallthru
      _
    // Predicated region
    $region22: #{tpu_custom_call.1} parent=1 // pred_check
      _
    $region23: #{tpu_custom_call.1} parent=1 // pred_check_branch
      %65 = sbr.rel (0) target = $region25
    $region24: #{tpu_custom_call.1} parent=1 // pred_region
      %67 = vsyncadd [#allocation7], 0
      %s69 = sshll.u32 %s5, 4
      %s70 = int_to_ptr.hbm [resolvable:$true] %s69
      %s71 = sshll.u32 [#allocation8], 4
      %s72 = int_to_ptr.vmem [resolvable:$true] %s71
      %74 = dma.hbm_to_vmem [thread:$0]  %s70, 16, %s72, [#allocation7]
    $region25: #{tpu_custom_call.1} parent=1 // pred_fallthru
      _
    // Predicated region
    $region26: #{tpu_custom_call.1} parent=1 // pred_check
      _
    $region27: #{tpu_custom_call.1} parent=1 // pred_check_branch
      %76 = sbr.rel (0) target = $region29
    $region28: #{tpu_custom_call.1} parent=1 // pred_region
      %78 = vsyncadd [#allocation10], 0
      %s80 = sshll.u32 %s6, 4
      %s81 = int_to_ptr.hbm [resolvable:$true] %s80
      %s82 = sshll.u32 [#allocation9], 4
      %s83 = int_to_ptr.vmem [resolvable:$true] %s82
      %85 = dma.hbm_to_vmem [thread:$0]  %s81, 16, %s83, [#allocation10]
    $region29: #{tpu_custom_call.1} parent=1 // pred_fallthru
      _
    // Predicated region
    $region30: #{tpu_custom_call.1} parent=1 // pred_check
      _
    $region31: #{tpu_custom_call.1} parent=1 // pred_check_branch
      %87 = sbr.rel (0) target = $region33
    $region32: #{tpu_custom_call.1} parent=1 // pred_region
      %89 = vsyncadd [#allocation10], 0
      %s91 = sshll.u32 %s7, 4
      %s92 = int_to_ptr.hbm [resolvable:$true] %s91
      %s93 = sshll.u32 [#allocation11], 4
      %s94 = int_to_ptr.vmem [resolvable:$true] %s93
      %96 = dma.hbm_to_vmem [thread:$0]  %s92, 16, %s94, [#allocation10]
    $region33: #{tpu_custom_call.1} parent=1 // pred_fallthru
      _
    // Predicated region
    $region34: #{tpu_custom_call.1} parent=1 // pred_check
      _
    $region35: #{tpu_custom_call.1} parent=1 // pred_check_branch
      %98 = sbr.rel (0) target = $region37
    $region36: #{tpu_custom_call.1} parent=1 // pred_region
      %100 = vsyncadd [#allocation13], 0
      %s102 = sshll.u32 %s8, 4
      %s103 = int_to_ptr.hbm [resolvable:$true] %s102
      %s104 = sshll.u32 [#allocation12], 4
      %s105 = int_to_ptr.vmem [resolvable:$true] %s104
      %107 = dma.hbm_to_vmem [thread:$0]  %s103, 16, %s105, [#allocation13]
    $region37: #{tpu_custom_call.1} parent=1 // pred_fallthru
      _
    // Predicated region
    $region38: #{tpu_custom_call.1} parent=1 // pred_check
      _
    $region39: #{tpu_custom_call.1} parent=1 // pred_check_branch
      %109 = sbr.rel (0) target = $region41
    $region40: #{tpu_custom_call.1} parent=1 // pred_region
      _
    $region41: #{tpu_custom_call.1} parent=1 // pred_fallthru
      _
    // Predicated region
    $region42: #{tpu_custom_call.1} parent=1 // pred_check
      _
    $region43: #{tpu_custom_call.1} parent=1 // pred_check_branch
      %111 = sbr.rel (0) target = $region45
    $region44: #{tpu_custom_call.1} parent=1 // pred_region
      %113 = vsyncadd [#allocation13], 0
      %s114 = sshll.u32 %s10, 4
      %s115 = int_to_ptr.hbm [resolvable:$true] %s114
      %s116 = sshll.u32 [#allocation14], 4
      %s117 = int_to_ptr.vmem [resolvable:$true] %s116
      %122 = dma.hbm_to_vmem [thread:$0]  %s115, 3072, %s117, [#allocation13], 192, 192, 12
    $region45: #{tpu_custom_call.1} parent=1 // pred_fallthru
      _
    // Predicated region
    $region46: #{tpu_custom_call.1} parent=1 // pred_check
      _
    $region47: #{tpu_custom_call.1} parent=1 // pred_check_branch
      %124 = sbr.rel (0) target = $region49
    $region48: #{tpu_custom_call.1} parent=1 // pred_region
      %126 = vsyncadd [#allocation16], 0
      %s127 = sshll.u32 %s11, 4
      %s128 = int_to_ptr.hbm [resolvable:$true] %s127
      %s129 = sshll.u32 [#allocation15], 4
      %s130 = int_to_ptr.vmem [resolvable:$true] %s129
      %135 = dma.hbm_to_vmem [thread:$0]  %s128, 1024, %s130, [#allocation16], 64, 64, 4
    $region49: #{tpu_custom_call.1} parent=1 // pred_fallthru
      _
    // Predicated region
    $region50: #{tpu_custom_call.1} parent=1 // pred_check
      _
    $region51: #{tpu_custom_call.1} parent=1 // pred_check_branch
      %137 = sbr.rel (0) target = $region53
    $region52: #{tpu_custom_call.1} parent=1 // pred_region
      %139 = vsyncadd [#allocation16], 0
      %s140 = sshll.u32 %s12, 4
      %s141 = int_to_ptr.hbm [resolvable:$true] %s140
      %s142 = sshll.u32 [#allocation17], 4
      %s143 = int_to_ptr.vmem [resolvable:$true] %s142
      %148 = dma.hbm_to_vmem [thread:$0]  %s141, 1024, %s143, [#allocation16], 64, 64, 4
    $region53: #{tpu_custom_call.1} parent=1 // pred_fallthru
      _
    // Predicated region
    $region54: #{tpu_custom_call.1} parent=1 // pred_check
      _
    $region55: #{tpu_custom_call.1} parent=1 // pred_check_branch
      %150 = sbr.rel (0) target = $region57
    $region56: #{tpu_custom_call.1} parent=1 // pred_region
      %152 = vsyncadd [#allocation19], 0
      %s153 = sshll.u32 %s13, 4
      %s154 = int_to_ptr.hbm [resolvable:$true] %s153
      %s155 = sshll.u32 [#allocation18], 4
      %s156 = int_to_ptr.vmem [resolvable:$true] %s155
      %161 = dma.hbm_to_vmem [thread:$0]  %s154, 2048, %s156, [#allocation19], 128, 128, 8
    $region57: #{tpu_custom_call.1} parent=1 // pred_fallthru
      _
    // Predicated region
    $region58: #{tpu_custom_call.1} parent=1 // pred_check
      _
    $region59: #{tpu_custom_call.1} parent=1 // pred_check_branch
      %163 = sbr.rel (0) target = $region61
    $region60: #{tpu_custom_call.1} parent=1 // pred_region
      %165 = vsyncadd [#allocation19], 0
      %s166 = sshll.u32 %s14, 4
      %s167 = int_to_ptr.hbm [resolvable:$true] %s166
      %s168 = sshll.u32 [#allocation20], 4
      %s169 = int_to_ptr.vmem [resolvable:$true] %s168
      %174 = dma.hbm_to_vmem [thread:$0]  %s167, 1024, %s169, [#allocation19], 64, 64, 4
    $region61: #{tpu_custom_call.1} parent=1 // pred_fallthru
      _
    // Predicated region
    $region62: #{tpu_custom_call.1} parent=1 // pred_check
      _
    $region63: #{tpu_custom_call.1} parent=1 // pred_check_branch
      %176 = sbr.rel (0) target = $region65
    $region64: #{tpu_custom_call.1} parent=1 // pred_region
      %178 = vsyncadd [#allocation22], 0
      %s179 = sshll.u32 %s15, 4
      %s180 = int_to_ptr.hbm [resolvable:$true] %s179
      %s181 = sshll.u32 [#allocation21], 4
      %s182 = int_to_ptr.vmem [resolvable:$true] %s181
      %187 = dma.hbm_to_vmem [thread:$0]  %s180, 4096, %s182, [#allocation22], 256, 256, 16
    $region65: #{tpu_custom_call.1} parent=1 // pred_fallthru
      _
    // Predicated region
    $region66: #{tpu_custom_call.1} parent=1 // pred_check
      _
    $region67: #{tpu_custom_call.1} parent=1 // pred_check_branch
      %189 = sbr.rel (0) target = $region69
    $region68: #{tpu_custom_call.1} parent=1 // pred_region
      _
    $region69: #{tpu_custom_call.1} parent=1 // pred_fallthru
      _
    // Predicated region
    $region70: #{tpu_custom_call.1} parent=1 // pred_check
      _
    $region71: #{tpu_custom_call.1} parent=1 // pred_check_branch
      %191 = sbr.rel (0) target = $region73
    $region72: #{tpu_custom_call.1} parent=1 // pred_region
      %193 = vsyncadd [#allocation22], 0
      %s194 = sshll.u32 %s17, 4
      %s195 = int_to_ptr.hbm [resolvable:$true] %s194
      %s196 = sshll.u32 [#allocation23], 4
      %s197 = int_to_ptr.vmem [resolvable:$true] %s196
      %202 = dma.hbm_to_vmem [thread:$0]  %s195, 4096, %s197, [#allocation22], 64, 64, 4
    $region73: #{tpu_custom_call.1} parent=1 // pred_fallthru
      _
    // Predicated region
    $region74: #{tpu_custom_call.1} parent=1 // pred_check
      _
    $region75: #{tpu_custom_call.1} parent=1 // pred_check_branch
      %204 = sbr.rel (0) target = $region77
    $region76: #{tpu_custom_call.1} parent=1 // pred_region
      _
    $region77: #{tpu_custom_call.1} parent=1 // pred_fallthru
      _
    // Predicated region
    $region78: #{tpu_custom_call.1} parent=1 // pred_check
      _
    $region79: #{tpu_custom_call.1} parent=1 // pred_check_branch
      %206 = sbr.rel (0) target = $region81
    $region80: #{tpu_custom_call.1} parent=1 // pred_region
      %208 = dma.done [#allocation4], 256
    $region81: #{tpu_custom_call.1} parent=1 // pred_fallthru
      _
    // Predicated region
    $region82: #{tpu_custom_call.1} parent=1 // pred_check
      _
    $region83: #{tpu_custom_call.1} parent=1 // pred_check_branch
      %210 = sbr.rel (0) target = $region85
    $region84: #{tpu_custom_call.1} parent=1 // pred_region
      %212 = dma.done [#allocation7], 512
    $region85: #{tpu_custom_call.1} parent=1 // pred_fallthru
      _
    // Predicated region
    $region86: #{tpu_custom_call.1} parent=1 // pred_check
      _
    $region87: #{tpu_custom_call.1} parent=1 // pred_check_branch
      %214 = sbr.rel (0) target = $region89
    $region88: #{tpu_custom_call.1} parent=1 // pred_region
      %216 = dma.done [#allocation7], 16
    $region89: #{tpu_custom_call.1} parent=1 // pred_fallthru
      _
    // Predicated region
    $region90: #{tpu_custom_call.1} parent=1 // pred_check
      _
    $region91: #{tpu_custom_call.1} parent=1 // pred_check_branch
      %218 = sbr.rel (0) target = $region93
    $region92: #{tpu_custom_call.1} parent=1 // pred_region
      %220 = dma.done [#allocation10], 16
    $region93: #{tpu_custom_call.1} parent=1 // pred_fallthru
      _
    // Predicated region
    $region94: #{tpu_custom_call.1} parent=1 // pred_check
      _
    $region95: #{tpu_custom_call.1} parent=1 // pred_check_branch
      %222 = sbr.rel (0) target = $region97
    $region96: #{tpu_custom_call.1} parent=1 // pred_region
      %224 = dma.done [#allocation10], 16
    $region97: #{tpu_custom_call.1} parent=1 // pred_fallthru
      _
    // Predicated region
    $region98: #{tpu_custom_call.1} parent=1 // pred_check
      _
    $region99: #{tpu_custom_call.1} parent=1 // pred_check_branch
      %226 = sbr.rel (0) target = $region101
    $region100: #{tpu_custom_call.1} parent=1 // pred_region
      %228 = dma.done [#allocation13], 16
    $region101: #{tpu_custom_call.1} parent=1 // pred_fallthru
      _
    // Predicated region
    $region102: #{tpu_custom_call.1} parent=1 // pred_check
      _
    $region103: #{tpu_custom_call.1} parent=1 // pred_check_branch
      %230 = sbr.rel (0) target = $region105
    $region104: #{tpu_custom_call.1} parent=1 // pred_region
      %232 = dma.done [#allocation13], 3072
    $region105: #{tpu_custom_call.1} parent=1 // pred_fallthru
      _
    // Predicated region
    $region106: #{tpu_custom_call.1} parent=1 // pred_check
      _
    $region107: #{tpu_custom_call.1} parent=1 // pred_check_branch
      %234 = sbr.rel (0) target = $region109
    $region108: #{tpu_custom_call.1} parent=1 // pred_region
      %236 = dma.done [#allocation16], 1024
    $region109: #{tpu_custom_call.1} parent=1 // pred_fallthru
      _
    // Predicated region
    $region110: #{tpu_custom_call.1} parent=1 // pred_check
      _
    $region111: #{tpu_custom_call.1} parent=1 // pred_check_branch
      %238 = sbr.rel (0) target = $region113
    $region112: #{tpu_custom_call.1} parent=1 // pred_region
      %240 = dma.done [#allocation16], 1024
    $region113: #{tpu_custom_call.1} parent=1 // pred_fallthru
      _
    // Predicated region
    $region114: #{tpu_custom_call.1} parent=1 // pred_check
      _
    $region115: #{tpu_custom_call.1} parent=1 // pred_check_branch
      %242 = sbr.rel (0) target = $region117
    $region116: #{tpu_custom_call.1} parent=1 // pred_region
      %244 = dma.done [#allocation19], 2048
    $region117: #{tpu_custom_call.1} parent=1 // pred_fallthru
      _
    // Predicated region
    $region118: #{tpu_custom_call.1} parent=1 // pred_check
      _
    $region119: #{tpu_custom_call.1} parent=1 // pred_check_branch
      %246 = sbr.rel (0) target = $region121
    $region120: #{tpu_custom_call.1} parent=1 // pred_region
      %248 = dma.done [#allocation19], 1024
    $region121: #{tpu_custom_call.1} parent=1 // pred_fallthru
      _
    // Predicated region
    $region122: #{tpu_custom_call.1} parent=1 // pred_check
      _
    $region123: #{tpu_custom_call.1} parent=1 // pred_check_branch
      %250 = sbr.rel (0) target = $region125
    $region124: #{tpu_custom_call.1} parent=1 // pred_region
      %252 = dma.done [#allocation22], 4096
    $region125: #{tpu_custom_call.1} parent=1 // pred_fallthru
      _
    // Predicated region
    $region126: #{tpu_custom_call.1} parent=1 // pred_check
      _
    $region127: #{tpu_custom_call.1} parent=1 // pred_check_branch
      %254 = sbr.rel (0) target = $region129
    $region128: #{tpu_custom_call.1} parent=1 // pred_region
      %256 = dma.done [#allocation22], 4096
    $region129: #{tpu_custom_call.1} parent=1 // pred_fallthru
      _
    %v258 = vld [vmem:[#allocation3] sm:$0xff]
    %v259 = vld [vmem:[#allocation3 + $0x8] sm:$0xff]
    %v260 = vld [vmem:[#allocation6] sm:$0xff]
    %v261 = vld [vmem:[#allocation6 + $0x8] sm:$0xff]
    %v262 = vld [vmem:[#allocation6 + $0x10] sm:$0xff]
    %v263 = vld [vmem:[#allocation6 + $0x18] sm:$0xff]
    %v264 = vld [vmem:[%s2] sm:$0x1]
    %v265 = vld [vmem:[%s3] sm:$0x1]
    %266 = vadd.xlane.f32.xlu0 %v258
    %v267 = vpop.xlane.xlu0 %266
    %268 = vadd.xlane.f32.xlu0 %v259
    %v269 = vpop.xlane.xlu0 %268
    %v270 = vrcp.pop 128.0
    %v271 = vmul.f32 128.0, %v270
    %v272 = vsub.f32 1.0, %v271
    %v273 = vmul.f32 %v270, %v272
    %v274 = vadd.f32 %v270, %v273
    %vm275 = vweird.f32 %v270
    %v276 = vsel %vm275, %v270, %v274
    %v277 = vmul.f32 %v267, %v276
    %v278 = vmul.f32 %v269, %v276
    %v279 = vsub.f32 %v258, %v277
    %v280 = vsub.f32 %v259, %v278
    %v281 = vmul.f32 %v279, %v279
    %v282 = vmul.f32 %v280, %v280
    %283 = vadd.xlane.f32.xlu0 %v281
    %v284 = vpop.xlane.xlu0 %283
    %285 = vadd.xlane.f32.xlu0 %v282
    %v286 = vpop.xlane.xlu0 %285
    %v287 = vmul.f32 %v284, %v276
    %v288 = vmul.f32 %v286, %v276
    %v289 = vadd.f32 %v287, 1e-06
    %v290 = vadd.f32 %v288, 1e-06
    %v291 = vrsqrt.pop %v289
    %v292 = vmul.f32 %v291, %v289
    %v293 = vmul.f32 %v292, %v291
    %v294 = vmul.f32 0.5, %v293
    %v295 = vsub.f32 1.5, %v294
    %v296 = vmul.f32 %v291, %v295
    %vm297 = vweird.f32 %v289
    %vm298 = vweird.f32 %v291
    %vm299 = vmor %vm297, %vm298
    %v300 = vsel %vm299, %v291, %v296
    %v301 = vrsqrt.pop %v290
    %v302 = vmul.f32 %v301, %v290
    %v303 = vmul.f32 %v302, %v301
    %v304 = vmul.f32 0.5, %v303
    %v305 = vsub.f32 1.5, %v304
    %v306 = vmul.f32 %v301, %v305
    %vm307 = vweird.f32 %v290
    %vm308 = vweird.f32 %v301
    %vm309 = vmor %vm307, %vm308
    %v310 = vsel %vm309, %v301, %v306
    %v311 = vmul.f32 %v279, %v300
    %v312 = vmul.f32 %v280, %v310
    %v314 = vperm.slane %v264, 0
    %v316 = vmul.f32 %v311, %v314
    %v317 = vmul.f32 %v312, %v314
    %v319 = vperm.slane %v265, 0
    %v321 = vadd.f32 %v316, %v319
    %v322 = vadd.f32 %v317, %v319
    %v323 = vpack.c.bf16 %v322, %v321
    %v324 = vld [vmem:[#allocation14] sm:$0xff]
    %v325 = vld [vmem:[#allocation14 + $0x8] sm:$0xf]
    %v326 = vld [vmem:[#allocation14 + $0xc] sm:$0xff]
    %v327 = vld [vmem:[#allocation14 + $0x14] sm:$0xf]
    %v328 = vld [vmem:[#allocation14 + $0x18] sm:$0xff]
    %v329 = vld [vmem:[#allocation14 + $0x20] sm:$0xf]
    %v330 = vld [vmem:[#allocation14 + $0x24] sm:$0xff]
    %v331 = vld [vmem:[#allocation14 + $0x2c] sm:$0xf]
    %v332 = vld [vmem:[#allocation14 + $0x30] sm:$0xff]
    %v333 = vld [vmem:[#allocation14 + $0x38] sm:$0xf]
    %v334 = vld [vmem:[#allocation14 + $0x3c] sm:$0xff]
    %v335 = vld [vmem:[#allocation14 + $0x44] sm:$0xf]
    %v336 = vld [vmem:[#allocation14 + $0x48] sm:$0xff]
    %v337 = vld [vmem:[#allocation14 + $0x50] sm:$0xf]
    %v338 = vld [vmem:[#allocation14 + $0x54] sm:$0xff]
    %v339 = vld [vmem:[#allocation14 + $0x5c] sm:$0xf]
    %v340 = vld [vmem:[#allocation14 + $0x60] sm:$0xff]
    %v341 = vld [vmem:[#allocation14 + $0x68] sm:$0xf]
    %v342 = vld [vmem:[#allocation14 + $0x6c] sm:$0xff]
    %v343 = vld [vmem:[#allocation14 + $0x74] sm:$0xf]
    %v344 = vld [vmem:[#allocation14 + $0x78] sm:$0xff]
    %v345 = vld [vmem:[#allocation14 + $0x80] sm:$0xf]
    %v346 = vld [vmem:[#allocation14 + $0x84] sm:$0xff]
    %v347 = vld [vmem:[#allocation14 + $0x8c] sm:$0xf]
    %v348 = vld [vmem:[#allocation14 + $0x90] sm:$0xff]
    %v349 = vld [vmem:[#allocation14 + $0x98] sm:$0xf]
    %v350 = vld [vmem:[#allocation14 + $0x9c] sm:$0xff]
    %v351 = vld [vmem:[#allocation14 + $0xa4] sm:$0xf]
    %v352 = vld [vmem:[#allocation14 + $0xa8] sm:$0xff]
    %v353 = vld [vmem:[#allocation14 + $0xb0] sm:$0xf]
    %v354 = vld [vmem:[#allocation14 + $0xb4] sm:$0xff]
    %v355 = vld [vmem:[#allocation14 + $0xbc] sm:$0xf]
    %v388 = vunpack.c.l.b16 %v324
    %v389 = vunpack.c.h.b16 %v324
    %v390 = vunpack.c.l.b16 %v325
    %v391 = vunpack.c.l.b16 %v326
    %v392 = vunpack.c.h.b16 %v326
    %v393 = vunpack.c.l.b16 %v327
    %v394 = vunpack.c.l.b16 %v328
    %v395 = vunpack.c.h.b16 %v328
    %v396 = vunpack.c.l.b16 %v329
    %v397 = vunpack.c.l.b16 %v330
    %v398 = vunpack.c.h.b16 %v330
    %v399 = vunpack.c.l.b16 %v331
    %v400 = vunpack.c.l.b16 %v332
    %v401 = vunpack.c.h.b16 %v332
    %v402 = vunpack.c.l.b16 %v333
    %v403 = vunpack.c.l.b16 %v334
    %v404 = vunpack.c.h.b16 %v334
    %v405 = vunpack.c.l.b16 %v335
    %v406 = vunpack.c.l.b16 %v336
    %v407 = vunpack.c.h.b16 %v336
    %v408 = vunpack.c.l.b16 %v337
    %v409 = vunpack.c.l.b16 %v338
    %v410 = vunpack.c.h.b16 %v338
    %v411 = vunpack.c.l.b16 %v339
    %v412 = vunpack.c.l.b16 %v340
    %v413 = vunpack.c.h.b16 %v340
    %v414 = vunpack.c.l.b16 %v341
    %v415 = vunpack.c.l.b16 %v342
    %v416 = vunpack.c.h.b16 %v342
    %v417 = vunpack.c.l.b16 %v343
    %v418 = vunpack.c.l.b16 %v344
    %v419 = vunpack.c.h.b16 %v344
    %v420 = vunpack.c.l.b16 %v345
    %v421 = vunpack.c.l.b16 %v346
    %v422 = vunpack.c.h.b16 %v346
    %v423 = vunpack.c.l.b16 %v347
    %v424 = vunpack.c.l.b16 %v348
    %v425 = vunpack.c.h.b16 %v348
    %v426 = vunpack.c.l.b16 %v349
    %v427 = vunpack.c.l.b16 %v350
    %v428 = vunpack.c.h.b16 %v350
    %v429 = vunpack.c.l.b16 %v351
    %v430 = vunpack.c.l.b16 %v352
    %v431 = vunpack.c.h.b16 %v352
    %v432 = vunpack.c.l.b16 %v353
    %v433 = vunpack.c.l.b16 %v354
    %v434 = vunpack.c.h.b16 %v354
    %v435 = vunpack.c.l.b16 %v355
    %v436 = vpack.c.b16 %v391, %v388
    %v437 = vpack.c.b16 %v392, %v389
    %v438 = vpack.c.b16 %v393, %v390
    %v439 = vpack.c.b16 %v397, %v394
    %v440 = vpack.c.b16 %v398, %v395
    %v441 = vpack.c.b16 %v399, %v396
    %v442 = vpack.c.b16 %v403, %v400
    %v443 = vpack.c.b16 %v404, %v401
    %v444 = vpack.c.b16 %v405, %v402
    %v445 = vpack.c.b16 %v409, %v406
    %v446 = vpack.c.b16 %v410, %v407
    %v447 = vpack.c.b16 %v411, %v408
    %v448 = vpack.c.b16 %v415, %v412
    %v449 = vpack.c.b16 %v416, %v413
    %v450 = vpack.c.b16 %v417, %v414
    %v451 = vpack.c.b16 %v421, %v418
    %v452 = vpack.c.b16 %v422, %v419
    %v453 = vpack.c.b16 %v423, %v420
    %v454 = vpack.c.b16 %v427, %v424
    %v455 = vpack.c.b16 %v428, %v425
    %v456 = vpack.c.b16 %v429, %v426
    %v457 = vpack.c.b16 %v433, %v430
    %v458 = vpack.c.b16 %v434, %v431
    %v459 = vpack.c.b16 %v435, %v432
    %484 = vmatpush.bf16.msra.mxu0 %v457
    %485 = vmatpush.bf16.msra.mxu0 %v454
    %486 = vmatpush.bf16.msra.mxu0 %v451
    %487 = vmatpush.bf16.msra.mxu0 %v448
    %488 = vmatpush.bf16.msra.mxu0 %v445
    %489 = vmatpush.bf16.msra.mxu0 %v442
    %490 = vmatpush.bf16.msra.mxu0 %v439
    %491 = vmatpush.bf16.msra.mxu0 %v436
    %492 = vmatmul.bf16.gmra.mxu0 %v323
    %v493 = vpop.f32.mrf.mxu0
    %v494 = vadd.f32 0.0, %v493
    %v495 = vpop.f32.mrf.mxu0
    %v496 = vadd.f32 0.0, %v495
    %497 = vdwg.mxu0
    %498 = vmatpush.bf16.msra.mxu0 %v458
    %499 = vmatpush.bf16.msra.mxu0 %v455
    %500 = vmatpush.bf16.msra.mxu0 %v452
    %501 = vmatpush.bf16.msra.mxu0 %v449
    %502 = vmatpush.bf16.msra.mxu0 %v446
    %503 = vmatpush.bf16.msra.mxu0 %v443
    %504 = vmatpush.bf16.msra.mxu0 %v440
    %505 = vmatpush.bf16.msra.mxu0 %v437
    %506 = vmatmul.bf16.gmra.mxu0 %v323
    %v507 = vpop.f32.mrf.mxu0
    %v508 = vadd.f32 0.0, %v507
    %v509 = vpop.f32.mrf.mxu0
    %v510 = vadd.f32 0.0, %v509
    %511 = vdwg.mxu0
    %512 = vmatpush.bf16.msra.mxu0 %v459
    %513 = vmatpush.bf16.msra.mxu0 %v456
    %514 = vmatpush.bf16.msra.mxu0 %v453
    %515 = vmatpush.bf16.msra.mxu0 %v450
    %516 = vmatpush.bf16.msra.mxu0 %v447
    %517 = vmatpush.bf16.msra.mxu0 %v444
    %518 = vmatpush.bf16.msra.mxu0 %v441
    %519 = vmatpush.bf16.msra.mxu0 %v438
    %520 = vmatmul.bf16.gmra.mxu0 %v323
    %v521 = vpop.f32.mrf.mxu0
    %v522 = vadd.f32 0.0, %v521
    %v523 = vpop.f32.mrf.mxu0
    %v524 = vadd.f32 0.0, %v523
    %525 = vdwg.mxu0
    %v526 = vpack.c.bf16 %v494, %v494
    %v527 = vpack.c.bf16 %v508, %v508
    %vm528 = vcmask 523264
    %v530 = vsel %vm528, %v526, 0
    %v533 = vsel %vm528, %v527, 0
    %535 = vmatpush.bf16.xpose.msra.mxu0 0
    %536 = vmatpush.bf16.xpose.msra.mxu0 0
    %537 = vmatpush.bf16.xpose.msra.mxu0 0
    %538 = vmatpush.bf16.xpose.msra.mxu0 0
    %539 = vmatpush.bf16.xpose.msra.mxu0 0
    %540 = vmatpush.bf16.xpose.msra.mxu0 0
    %541 = vmatpush.bf16.xpose.msra.mxu0 0
    %542 = vmatpush.bf16.xpose.msra.mxu0 %v533
    %543 = vmatmul.bf16.gmra.mxu0 %v530
    %v544 = vpop.f32.mrf.mxu0
    %v545 = vadd.f32 0.0, %v544
    %v546 = vpop.f32.mrf.mxu0
    %547 = vdwg.mxu0
    %vm548 = vcmask 64512
    %v549 = vsel %vm548, %v545, -inf
    %550 = vmax.xlane.f32.xlu0 %v549
    %v551 = vpop.xlane.xlu0 %550
    %v552 = vsub.f32 %v545, %v551
    %v553 = vmul.f32 %v552, 1.442695
    %v554 = vpow.pop %v553
    %v555 = vsel %vm548, %v554, 0.0
    %556 = vadd.xlane.f32.xlu0 %v555
    %v557 = vpop.xlane.xlu0 %556
    %v558 = vrcp.pop %v557
    %v559 = vmul.f32 %v554, %v558
    %v560 = vpack.c.bf16 %v559, %v559
    %v561 = vpack.c.bf16 %v522, %v522
    %v563 = vsel %vm548, %v560, 0
    %vm565 = vcmask 1043456
    %v567 = vsel %vm565, %v561, 0
    %569 = vmatpush.bf16.msra.mxu0 0
    %570 = vmatpush.bf16.msra.mxu0 0
    %571 = vmatpush.bf16.msra.mxu0 0
    %572 = vmatpush.bf16.msra.mxu0 0
    %573 = vmatpush.bf16.msra.mxu0 0
    %574 = vmatpush.bf16.msra.mxu0 0
    %575 = vmatpush.bf16.msra.mxu0 0
    %576 = vmatpush.bf16.msra.mxu0 %v567
    %577 = vmatmul.bf16.gmra.mxu0 %v563
    %v578 = vpop.f32.mrf.mxu0
    %v579 = vadd.f32 0.0, %v578
    %v580 = vpop.f32.mrf.mxu0
    %581 = vdwg.mxu0
    %v582 = vpack.c.bf16 %v579, %v579
    %v583 = vld [vmem:[#allocation15] sm:$0xf]
    %v584 = vld [vmem:[#allocation15 + $0x4] sm:$0xf]
    %v585 = vld [vmem:[#allocation15 + $0x8] sm:$0xf]
    %v586 = vld [vmem:[#allocation15 + $0xc] sm:$0xf]
    %v587 = vld [vmem:[#allocation15 + $0x10] sm:$0xf]
    %v588 = vld [vmem:[#allocation15 + $0x14] sm:$0xf]
    %v589 = vld [vmem:[#allocation15 + $0x18] sm:$0xf]
    %v590 = vld [vmem:[#allocation15 + $0x1c] sm:$0xf]
    %592 = vrot.lane.b32.xlu0 %v526, 64
    %v593 = vpop.permute.xlu0 %592
    %595 = vrot.lane.b32.xlu0 %v527, 64
    %v596 = vpop.permute.xlu0 %595
    %v598 = vsel %vm528, %v593, 0
    %v601 = vsel %vm528, %v596, 0
    %603 = vmatpush.bf16.xpose.msra.mxu0 0
    %604 = vmatpush.bf16.xpose.msra.mxu0 0
    %605 = vmatpush.bf16.xpose.msra.mxu0 0
    %606 = vmatpush.bf16.xpose.msra.mxu0 0
    %607 = vmatpush.bf16.xpose.msra.mxu0 0
    %608 = vmatpush.bf16.xpose.msra.mxu0 0
    %609 = vmatpush.bf16.xpose.msra.mxu0 0
    %610 = vmatpush.bf16.xpose.msra.mxu0 %v601
    %611 = vmatmul.bf16.gmra.mxu0 %v598
    %v612 = vpop.f32.mrf.mxu0
    %v613 = vadd.f32 0.0, %v612
    %v614 = vpop.f32.mrf.mxu0
    %615 = vdwg.mxu0
    %v616 = vsel %vm548, %v613, -inf
    %617 = vmax.xlane.f32.xlu0 %v616
    %v618 = vpop.xlane.xlu0 %617
    %v619 = vsub.f32 %v613, %v618
    %v620 = vmul.f32 %v619, 1.442695
    %v621 = vpow.pop %v620
    %v622 = vsel %vm548, %v621, 0.0
    %623 = vadd.xlane.f32.xlu0 %v622
    %v624 = vpop.xlane.xlu0 %623
    %v625 = vrcp.pop %v624
    %v626 = vmul.f32 %v621, %v625
    %v627 = vpack.c.bf16 %v626, %v626
    %629 = vrot.lane.b32.xlu0 %v561, 64
    %v630 = vpop.permute.xlu0 %629
    %v632 = vsel %vm548, %v627, 0
    %v635 = vsel %vm565, %v630, 0
    %637 = vmatpush.bf16.msra.mxu0 0
    %638 = vmatpush.bf16.msra.mxu0 0
    %639 = vmatpush.bf16.msra.mxu0 0
    %640 = vmatpush.bf16.msra.mxu0 0
    %641 = vmatpush.bf16.msra.mxu0 0
    %642 = vmatpush.bf16.msra.mxu0 0
    %643 = vmatpush.bf16.msra.mxu0 0
    %644 = vmatpush.bf16.msra.mxu0 %v635
    %645 = vmatmul.bf16.gmra.mxu0 %v632
    %v646 = vpop.f32.mrf.mxu0
    %v647 = vadd.f32 0.0, %v646
    %v648 = vpop.f32.mrf.mxu0
    %649 = vdwg.mxu0
    %v650 = vpack.c.bf16 %v647, %v647
    %v651 = vld [vmem:[#allocation15 + $0x20] sm:$0xf]
    %v652 = vld [vmem:[#allocation15 + $0x24] sm:$0xf]
    %v653 = vld [vmem:[#allocation15 + $0x28] sm:$0xf]
    %v654 = vld [vmem:[#allocation15 + $0x2c] sm:$0xf]
    %v655 = vld [vmem:[#allocation15 + $0x30] sm:$0xf]
    %v656 = vld [vmem:[#allocation15 + $0x34] sm:$0xf]
    %v657 = vld [vmem:[#allocation15 + $0x38] sm:$0xf]
    %v658 = vld [vmem:[#allocation15 + $0x3c] sm:$0xf]
    %v667 = vunpack.c.l.b16 %v651
    %v668 = vunpack.c.l.b16 %v652
    %v669 = vunpack.c.l.b16 %v653
    %v670 = vunpack.c.l.b16 %v654
    %v671 = vunpack.c.l.b16 %v655
    %v672 = vunpack.c.l.b16 %v656
    %v673 = vunpack.c.l.b16 %v657
    %v674 = vunpack.c.l.b16 %v658
    %v675 = vpack.c.b16 %v668, %v667
    %v676 = vpack.c.b16 %v670, %v669
    %v677 = vpack.c.b16 %v672, %v671
    %v678 = vpack.c.b16 %v674, %v673
    %v684 = vsel %vm528, %v650, 0
    %686 = vmatpush.bf16.msra.mxu0 0
    %687 = vmatpush.bf16.msra.mxu0 0
    %688 = vmatpush.bf16.msra.mxu0 0
    %689 = vmatpush.bf16.msra.mxu0 0
    %690 = vmatpush.bf16.msra.mxu0 %v678
    %691 = vmatpush.bf16.msra.mxu0 %v677
    %692 = vmatpush.bf16.msra.mxu0 %v676
    %693 = vmatpush.bf16.msra.mxu0 %v675
    %694 = vmatmul.bf16.gmra.mxu0 %v684
    %v695 = vpop.f32.mrf.mxu0
    %v696 = vadd.f32 0.0, %v695
    %v697 = vpop.f32.mrf.mxu0
    %698 = vdwg.mxu0
    %v707 = vunpack.c.l.b16 %v583
    %v708 = vunpack.c.l.b16 %v584
    %v709 = vunpack.c.l.b16 %v585
    %v710 = vunpack.c.l.b16 %v586
    %v711 = vunpack.c.l.b16 %v587
    %v712 = vunpack.c.l.b16 %v588
    %v713 = vunpack.c.l.b16 %v589
    %v714 = vunpack.c.l.b16 %v590
    %v715 = vpack.c.b16 %v708, %v707
    %v716 = vpack.c.b16 %v710, %v709
    %v717 = vpack.c.b16 %v712, %v711
    %v718 = vpack.c.b16 %v714, %v713
    %v724 = vsel %vm528, %v582, 0
    %726 = vmatpush.bf16.msra.mxu0 0
    %727 = vmatpush.bf16.msra.mxu0 0
    %728 = vmatpush.bf16.msra.mxu0 0
    %729 = vmatpush.bf16.msra.mxu0 0
    %730 = vmatpush.bf16.msra.mxu0 %v718
    %731 = vmatpush.bf16.msra.mxu0 %v717
    %732 = vmatpush.bf16.msra.mxu0 %v716
    %733 = vmatpush.bf16.msra.mxu0 %v715
    %734 = vmatmul.bf16.gmra.mxu0 %v724
    %v735 = vpop.f32.mrf.mxu0
    %v736 = vadd.f32 %v696, %v735
    %v737 = vpop.f32.mrf.mxu0
    %738 = vdwg.mxu0
    %739 = vst [vmem:[#allocation2] sm:$0xff] %v736
    %v740 = vpack.c.bf16 %v496, %v496
    %v741 = vpack.c.bf16 %v510, %v510
    %v743 = vsel %vm528, %v740, 0
    %v746 = vsel %vm528, %v741, 0
    %748 = vmatpush.bf16.xpose.msra.mxu0 0
    %749 = vmatpush.bf16.xpose.msra.mxu0 0
    %750 = vmatpush.bf16.xpose.msra.mxu0 0
    %751 = vmatpush.bf16.xpose.msra.mxu0 0
    %752 = vmatpush.bf16.xpose.msra.mxu0 0
    %753 = vmatpush.bf16.xpose.msra.mxu0 0
    %754 = vmatpush.bf16.xpose.msra.mxu0 0
    %755 = vmatpush.bf16.xpose.msra.mxu0 %v746
    %756 = vmatmul.bf16.gmra.mxu0 %v743
    %v757 = vpop.f32.mrf.mxu0
    %v758 = vadd.f32 0.0, %v757
    %v759 = vpop.f32.mrf.mxu0
    %760 = vdwg.mxu0
    %v761 = vsel %vm548, %v758, -inf
    %762 = vmax.xlane.f32.xlu0 %v761
    %v763 = vpop.xlane.xlu0 %762
    %v764 = vsub.f32 %v758, %v763
    %v765 = vmul.f32 %v764, 1.442695
    %v766 = vpow.pop %v765
    %v767 = vsel %vm548, %v766, 0.0
    %768 = vadd.xlane.f32.xlu0 %v767
    %v769 = vpop.xlane.xlu0 %768
    %v770 = vrcp.pop %v769
    %v771 = vmul.f32 %v766, %v770
    %v772 = vpack.c.bf16 %v771, %v771
    %v773 = vpack.c.bf16 %v524, %v524
    %v775 = vsel %vm548, %v772, 0
    %v778 = vsel %vm565, %v773, 0
    %780 = vmatpush.bf16.msra.mxu0 0
    %781 = vmatpush.bf16.msra.mxu0 0
    %782 = vmatpush.bf16.msra.mxu0 0
    %783 = vmatpush.bf16.msra.mxu0 0
    %784 = vmatpush.bf16.msra.mxu0 0
    %785 = vmatpush.bf16.msra.mxu0 0
    %786 = vmatpush.bf16.msra.mxu0 0
    %787 = vmatpush.bf16.msra.mxu0 %v778
    %788 = vmatmul.bf16.gmra.mxu0 %v775
    %v789 = vpop.f32.mrf.mxu0
    %v790 = vadd.f32 0.0, %v789
    %v791 = vpop.f32.mrf.mxu0
    %792 = vdwg.mxu0
    %v793 = vpack.c.bf16 %v790, %v790
    %v794 = vld [vmem:[#allocation15] sm:$0xf]
    %v795 = vld [vmem:[#allocation15 + $0x4] sm:$0xf]
    %v796 = vld [vmem:[#allocation15 + $0x8] sm:$0xf]
    %v797 = vld [vmem:[#allocation15 + $0xc] sm:$0xf]
    %v798 = vld [vmem:[#allocation15 + $0x10] sm:$0xf]
    %v799 = vld [vmem:[#allocation15 + $0x14] sm:$0xf]
    %v800 = vld [vmem:[#allocation15 + $0x18] sm:$0xf]
    %v801 = vld [vmem:[#allocation15 + $0x1c] sm:$0xf]
    %803 = vrot.lane.b32.xlu0 %v740, 64
    %v804 = vpop.permute.xlu0 %803
    %806 = vrot.lane.b32.xlu0 %v741, 64
    %v807 = vpop.permute.xlu0 %806
    %v809 = vsel %vm528, %v804, 0
    %v812 = vsel %vm528, %v807, 0
    %814 = vmatpush.bf16.xpose.msra.mxu0 0
    %815 = vmatpush.bf16.xpose.msra.mxu0 0
    %816 = vmatpush.bf16.xpose.msra.mxu0 0
    %817 = vmatpush.bf16.xpose.msra.mxu0 0
    %818 = vmatpush.bf16.xpose.msra.mxu0 0
    %819 = vmatpush.bf16.xpose.msra.mxu0 0
    %820 = vmatpush.bf16.xpose.msra.mxu0 0
    %821 = vmatpush.bf16.xpose.msra.mxu0 %v812
    %822 = vmatmul.bf16.gmra.mxu0 %v809
    %v823 = vpop.f32.mrf.mxu0
    %v824 = vadd.f32 0.0, %v823
    %v825 = vpop.f32.mrf.mxu0
    %826 = vdwg.mxu0
    %v827 = vsel %vm548, %v824, -inf
    %828 = vmax.xlane.f32.xlu0 %v827
    %v829 = vpop.xlane.xlu0 %828
    %v830 = vsub.f32 %v824, %v829
    %v831 = vmul.f32 %v830, 1.442695
    %v832 = vpow.pop %v831
    %v833 = vsel %vm548, %v832, 0.0
    %834 = vadd.xlane.f32.xlu0 %v833
    %v835 = vpop.xlane.xlu0 %834
    %v836 = vrcp.pop %v835
    %v837 = vmul.f32 %v832, %v836
    %v838 = vpack.c.bf16 %v837, %v837
    %840 = vrot.lane.b32.xlu0 %v773, 64
    %v841 = vpop.permute.xlu0 %840
    %v843 = vsel %vm548, %v838, 0
    %v846 = vsel %vm565, %v841, 0
    %848 = vmatpush.bf16.msra.mxu0 0
    %849 = vmatpush.bf16.msra.mxu0 0
    %850 = vmatpush.bf16.msra.mxu0 0
    %851 = vmatpush.bf16.msra.mxu0 0
    %852 = vmatpush.bf16.msra.mxu0 0
    %853 = vmatpush.bf16.msra.mxu0 0
    %854 = vmatpush.bf16.msra.mxu0 0
    %855 = vmatpush.bf16.msra.mxu0 %v846
    %856 = vmatmul.bf16.gmra.mxu0 %v843
    %v857 = vpop.f32.mrf.mxu0
    %v858 = vadd.f32 0.0, %v857
    %v859 = vpop.f32.mrf.mxu0
    %860 = vdwg.mxu0
    %v861 = vpack.c.bf16 %v858, %v858
    %v862 = vld [vmem:[#allocation15 + $0x20] sm:$0xf]
    %v863 = vld [vmem:[#allocation15 + $0x24] sm:$0xf]
    %v864 = vld [vmem:[#allocation15 + $0x28] sm:$0xf]
    %v865 = vld [vmem:[#allocation15 + $0x2c] sm:$0xf]
    %v866 = vld [vmem:[#allocation15 + $0x30] sm:$0xf]
    %v867 = vld [vmem:[#allocation15 + $0x34] sm:$0xf]
    %v868 = vld [vmem:[#allocation15 + $0x38] sm:$0xf]
    %v869 = vld [vmem:[#allocation15 + $0x3c] sm:$0xf]
    %v878 = vunpack.c.l.b16 %v862
    %v879 = vunpack.c.l.b16 %v863
    %v880 = vunpack.c.l.b16 %v864
    %v881 = vunpack.c.l.b16 %v865
    %v882 = vunpack.c.l.b16 %v866
    %v883 = vunpack.c.l.b16 %v867
    %v884 = vunpack.c.l.b16 %v868
    %v885 = vunpack.c.l.b16 %v869
    %v886 = vpack.c.b16 %v879, %v878
    %v887 = vpack.c.b16 %v881, %v880
    %v888 = vpack.c.b16 %v883, %v882
    %v889 = vpack.c.b16 %v885, %v884
    %v895 = vsel %vm528, %v861, 0
    %897 = vmatpush.bf16.msra.mxu0 0
    %898 = vmatpush.bf16.msra.mxu0 0
    %899 = vmatpush.bf16.msra.mxu0 0
    %900 = vmatpush.bf16.msra.mxu0 0
    %901 = vmatpush.bf16.msra.mxu0 %v889
    %902 = vmatpush.bf16.msra.mxu0 %v888
    %903 = vmatpush.bf16.msra.mxu0 %v887
    %904 = vmatpush.bf16.msra.mxu0 %v886
    %905 = vmatmul.bf16.gmra.mxu0 %v895
    %v906 = vpop.f32.mrf.mxu0
    %v907 = vadd.f32 0.0, %v906
    %v908 = vpop.f32.mrf.mxu0
    %909 = vdwg.mxu0
    %v918 = vunpack.c.l.b16 %v794
    %v919 = vunpack.c.l.b16 %v795
    %v920 = vunpack.c.l.b16 %v796
    %v921 = vunpack.c.l.b16 %v797
    %v922 = vunpack.c.l.b16 %v798
    %v923 = vunpack.c.l.b16 %v799
    %v924 = vunpack.c.l.b16 %v800
    %v925 = vunpack.c.l.b16 %v801
    %v926 = vpack.c.b16 %v919, %v918
    %v927 = vpack.c.b16 %v921, %v920
    %v928 = vpack.c.b16 %v923, %v922
    %v929 = vpack.c.b16 %v925, %v924
    %v935 = vsel %vm528, %v793, 0
    %937 = vmatpush.bf16.msra.mxu0 0
    %938 = vmatpush.bf16.msra.mxu0 0
    %939 = vmatpush.bf16.msra.mxu0 0
    %940 = vmatpush.bf16.msra.mxu0 0
    %941 = vmatpush.bf16.msra.mxu0 %v929
    %942 = vmatpush.bf16.msra.mxu0 %v928
    %943 = vmatpush.bf16.msra.mxu0 %v927
    %944 = vmatpush.bf16.msra.mxu0 %v926
    %945 = vmatmul.bf16.gmra.mxu0 %v935
    %v946 = vpop.f32.mrf.mxu0
    %v947 = vadd.f32 %v907, %v946
    %v948 = vpop.f32.mrf.mxu0
    %949 = vdwg.mxu0
    %950 = vst [vmem:[#allocation2 + $0x8] sm:$0xff] %v947
    %v951 = vld [vmem:[#allocation2] sm:$0xff]
    %v952 = vld [vmem:[#allocation2 + $0x8] sm:$0xff]
    %v953 = vadd.f32 %v951, %v258
    %v954 = vadd.f32 %v952, %v259
    %v955 = vld [vmem:[%s4] sm:$0x1]
    %v956 = vld [vmem:[#allocation8] sm:$0x1]
    %957 = vadd.xlane.f32.xlu0 %v953
    %v958 = vpop.xlane.xlu0 %957
    %959 = vadd.xlane.f32.xlu0 %v954
    %v960 = vpop.xlane.xlu0 %959
    %v961 = vmul.f32 %v958, %v276
    %v962 = vmul.f32 %v960, %v276
    %v963 = vsub.f32 %v953, %v961
    %v964 = vsub.f32 %v954, %v962
    %v965 = vmul.f32 %v963, %v963
    %v966 = vmul.f32 %v964, %v964
    %967 = vadd.xlane.f32.xlu0 %v965
    %v968 = vpop.xlane.xlu0 %967
    %969 = vadd.xlane.f32.xlu0 %v966
    %v970 = vpop.xlane.xlu0 %969
    %v971 = vmul.f32 %v968, %v276
    %v972 = vmul.f32 %v970, %v276
    %v973 = vadd.f32 %v971, 1e-06
    %v974 = vadd.f32 %v972, 1e-06
    %v975 = vrsqrt.pop %v973
    %v976 = vmul.f32 %v975, %v973
    %v977 = vmul.f32 %v976, %v975
    %v978 = vmul.f32 0.5, %v977
    %v979 = vsub.f32 1.5, %v978
    %v980 = vmul.f32 %v975, %v979
    %vm981 = vweird.f32 %v973
    %vm982 = vweird.f32 %v975
    %vm983 = vmor %vm981, %vm982
    %v984 = vsel %vm983, %v975, %v980
    %v985 = vrsqrt.pop %v974
    %v986 = vmul.f32 %v985, %v974
    %v987 = vmul.f32 %v986, %v985
    %v988 = vmul.f32 0.5, %v987
    %v989 = vsub.f32 1.5, %v988
    %v990 = vmul.f32 %v985, %v989
    %vm991 = vweird.f32 %v974
    %vm992 = vweird.f32 %v985
    %vm993 = vmor %vm991, %vm992
    %v994 = vsel %vm993, %v985, %v990
    %v995 = vmul.f32 %v963, %v984
    %v996 = vmul.f32 %v964, %v994
    %v998 = vperm.slane %v955, 0
    %v1000 = vmul.f32 %v995, %v998
    %v1001 = vmul.f32 %v996, %v998
    %v1003 = vperm.slane %v956, 0
    %v1005 = vadd.f32 %v1000, %v1003
    %v1006 = vadd.f32 %v1001, %v1003
    %v1007 = vld [vmem:[#allocation9] sm:$0x1]
    %v1008 = vld [vmem:[#allocation11] sm:$0x1]
    %1009 = vadd.xlane.f32.xlu0 %v260
    %v1010 = vpop.xlane.xlu0 %1009
    %1011 = vadd.xlane.f32.xlu0 %v261
    %v1012 = vpop.xlane.xlu0 %1011
    %1013 = vadd.xlane.f32.xlu0 %v262
    %v1014 = vpop.xlane.xlu0 %1013
    %1015 = vadd.xlane.f32.xlu0 %v263
    %v1016 = vpop.xlane.xlu0 %1015
    %v1017 = vmul.f32 %v1010, %v276
    %v1018 = vmul.f32 %v1012, %v276
    %v1019 = vmul.f32 %v1014, %v276
    %v1020 = vmul.f32 %v1016, %v276
    %v1021 = vsub.f32 %v260, %v1017
    %v1022 = vsub.f32 %v261, %v1018
    %v1023 = vsub.f32 %v262, %v1019
    %v1024 = vsub.f32 %v263, %v1020
    %v1025 = vmul.f32 %v1021, %v1021
    %v1026 = vmul.f32 %v1022, %v1022
    %v1027 = vmul.f32 %v1023, %v1023
    %v1028 = vmul.f32 %v1024, %v1024
    %1029 = vadd.xlane.f32.xlu0 %v1025
    %v1030 = vpop.xlane.xlu0 %1029
    %1031 = vadd.xlane.f32.xlu0 %v1026
    %v1032 = vpop.xlane.xlu0 %1031
    %1033 = vadd.xlane.f32.xlu0 %v1027
    %v1034 = vpop.xlane.xlu0 %1033
    %1035 = vadd.xlane.f32.xlu0 %v1028
    %v1036 = vpop.xlane.xlu0 %1035
    %v1037 = vmul.f32 %v1030, %v276
    %v1038 = vmul.f32 %v1032, %v276
    %v1039 = vmul.f32 %v1034, %v276
    %v1040 = vmul.f32 %v1036, %v276
    %v1041 = vadd.f32 %v1037, 1e-06
    %v1042 = vadd.f32 %v1038, 1e-06
    %v1043 = vadd.f32 %v1039, 1e-06
    %v1044 = vadd.f32 %v1040, 1e-06
    %v1045 = vrsqrt.pop %v1041
    %v1046 = vmul.f32 %v1045, %v1041
    %v1047 = vmul.f32 %v1046, %v1045
    %v1048 = vmul.f32 0.5, %v1047
    %v1049 = vsub.f32 1.5, %v1048
    %v1050 = vmul.f32 %v1045, %v1049
    %vm1051 = vweird.f32 %v1041
    %vm1052 = vweird.f32 %v1045
    %vm1053 = vmor %vm1051, %vm1052
    %v1054 = vsel %vm1053, %v1045, %v1050
    %v1055 = vrsqrt.pop %v1042
    %v1056 = vmul.f32 %v1055, %v1042
    %v1057 = vmul.f32 %v1056, %v1055
    %v1058 = vmul.f32 0.5, %v1057
    %v1059 = vsub.f32 1.5, %v1058
    %v1060 = vmul.f32 %v1055, %v1059
    %vm1061 = vweird.f32 %v1042
    %vm1062 = vweird.f32 %v1055
    %vm1063 = vmor %vm1061, %vm1062
    %v1064 = vsel %vm1063, %v1055, %v1060
    %v1065 = vrsqrt.pop %v1043
    %v1066 = vmul.f32 %v1065, %v1043
    %v1067 = vmul.f32 %v1066, %v1065
    %v1068 = vmul.f32 0.5, %v1067
    %v1069 = vsub.f32 1.5, %v1068
    %v1070 = vmul.f32 %v1065, %v1069
    %vm1071 = vweird.f32 %v1043
    %vm1072 = vweird.f32 %v1065
    %vm1073 = vmor %vm1071, %vm1072
    %v1074 = vsel %vm1073, %v1065, %v1070
    %v1075 = vrsqrt.pop %v1044
    %v1076 = vmul.f32 %v1075, %v1044
    %v1077 = vmul.f32 %v1076, %v1075
    %v1078 = vmul.f32 0.5, %v1077
    %v1079 = vsub.f32 1.5, %v1078
    %v1080 = vmul.f32 %v1075, %v1079
    %vm1081 = vweird.f32 %v1044
    %vm1082 = vweird.f32 %v1075
    %vm1083 = vmor %vm1081, %vm1082
    %v1084 = vsel %vm1083, %v1075, %v1080
    %v1085 = vmul.f32 %v1021, %v1054
    %v1086 = vmul.f32 %v1022, %v1064
    %v1087 = vmul.f32 %v1023, %v1074
    %v1088 = vmul.f32 %v1024, %v1084
    %v1090 = vperm.slane %v1007, 0
    %v1092 = vmul.f32 %v1085, %v1090
    %v1093 = vmul.f32 %v1086, %v1090
    %v1094 = vmul.f32 %v1087, %v1090
    %v1095 = vmul.f32 %v1088, %v1090
    %v1097 = vperm.slane %v1008, 0
    %v1099 = vadd.f32 %v1092, %v1097
    %v1100 = vadd.f32 %v1093, %v1097
    %v1101 = vadd.f32 %v1094, %v1097
    %v1102 = vadd.f32 %v1095, %v1097
    %v1103 = vpack.c.bf16 %v1006, %v1005
    %v1104 = vld [vmem:[#allocation17] sm:$0xf]
    %v1105 = vld [vmem:[#allocation17 + $0x4] sm:$0xf]
    %v1106 = vld [vmem:[#allocation17 + $0x8] sm:$0xf]
    %v1107 = vld [vmem:[#allocation17 + $0xc] sm:$0xf]
    %v1108 = vld [vmem:[#allocation17 + $0x10] sm:$0xf]
    %v1109 = vld [vmem:[#allocation17 + $0x14] sm:$0xf]
    %v1110 = vld [vmem:[#allocation17 + $0x18] sm:$0xf]
    %v1111 = vld [vmem:[#allocation17 + $0x1c] sm:$0xf]
    %v1112 = vld [vmem:[#allocation17 + $0x20] sm:$0xf]
    %v1113 = vld [vmem:[#allocation17 + $0x24] sm:$0xf]
    %v1114 = vld [vmem:[#allocation17 + $0x28] sm:$0xf]
    %v1115 = vld [vmem:[#allocation17 + $0x2c] sm:$0xf]
    %v1116 = vld [vmem:[#allocation17 + $0x30] sm:$0xf]
    %v1117 = vld [vmem:[#allocation17 + $0x34] sm:$0xf]
    %v1118 = vld [vmem:[#allocation17 + $0x38] sm:$0xf]
    %v1119 = vld [vmem:[#allocation17 + $0x3c] sm:$0xf]
    %v1136 = vunpack.c.l.b16 %v1104
    %v1137 = vunpack.c.l.b16 %v1105
    %v1138 = vunpack.c.l.b16 %v1106
    %v1139 = vunpack.c.l.b16 %v1107
    %v1140 = vunpack.c.l.b16 %v1108
    %v1141 = vunpack.c.l.b16 %v1109
    %v1142 = vunpack.c.l.b16 %v1110
    %v1143 = vunpack.c.l.b16 %v1111
    %v1144 = vunpack.c.l.b16 %v1112
    %v1145 = vunpack.c.l.b16 %v1113
    %v1146 = vunpack.c.l.b16 %v1114
    %v1147 = vunpack.c.l.b16 %v1115
    %v1148 = vunpack.c.l.b16 %v1116
    %v1149 = vunpack.c.l.b16 %v1117
    %v1150 = vunpack.c.l.b16 %v1118
    %v1151 = vunpack.c.l.b16 %v1119
    %v1152 = vpack.c.b16 %v1137, %v1136
    %v1153 = vpack.c.b16 %v1139, %v1138
    %v1154 = vpack.c.b16 %v1141, %v1140
    %v1155 = vpack.c.b16 %v1143, %v1142
    %v1156 = vpack.c.b16 %v1145, %v1144
    %v1157 = vpack.c.b16 %v1147, %v1146
    %v1158 = vpack.c.b16 %v1149, %v1148
    %v1159 = vpack.c.b16 %v1151, %v1150
    %1168 = vmatpush.bf16.msra.mxu0 %v1159
    %1169 = vmatpush.bf16.msra.mxu0 %v1158
    %1170 = vmatpush.bf16.msra.mxu0 %v1157
    %1171 = vmatpush.bf16.msra.mxu0 %v1156
    %1172 = vmatpush.bf16.msra.mxu0 %v1155
    %1173 = vmatpush.bf16.msra.mxu0 %v1154
    %1174 = vmatpush.bf16.msra.mxu0 %v1153
    %1175 = vmatpush.bf16.msra.mxu0 %v1152
    %1176 = vmatmul.bf16.gmra.mxu0 %v1103
    %v1177 = vpop.f32.mrf.mxu0
    %v1178 = vadd.f32 0.0, %v1177
    %v1179 = vpop.f32.mrf.mxu0
    %v1180 = vadd.f32 0.0, %v1179
    %1181 = vdwg.mxu0
    %v1182 = vpack.c.bf16 %v1100, %v1099
    %v1183 = vpack.c.bf16 %v1102, %v1101
    %v1184 = vld [vmem:[#allocation18] sm:$0xff]
    %v1185 = vld [vmem:[#allocation18 + $0x8] sm:$0xff]
    %v1186 = vld [vmem:[#allocation18 + $0x10] sm:$0xff]
    %v1187 = vld [vmem:[#allocation18 + $0x18] sm:$0xff]
    %v1188 = vld [vmem:[#allocation18 + $0x20] sm:$0xff]
    %v1189 = vld [vmem:[#allocation18 + $0x28] sm:$0xff]
    %v1190 = vld [vmem:[#allocation18 + $0x30] sm:$0xff]
    %v1191 = vld [vmem:[#allocation18 + $0x38] sm:$0xff]
    %v1192 = vld [vmem:[#allocation18 + $0x40] sm:$0xff]
    %v1193 = vld [vmem:[#allocation18 + $0x48] sm:$0xff]
    %v1194 = vld [vmem:[#allocation18 + $0x50] sm:$0xff]
    %v1195 = vld [vmem:[#allocation18 + $0x58] sm:$0xff]
    %v1196 = vld [vmem:[#allocation18 + $0x60] sm:$0xff]
    %v1197 = vld [vmem:[#allocation18 + $0x68] sm:$0xff]
    %v1198 = vld [vmem:[#allocation18 + $0x70] sm:$0xff]
    %v1199 = vld [vmem:[#allocation18 + $0x78] sm:$0xff]
    %v1216 = vunpack.c.l.b16 %v1184
    %v1217 = vunpack.c.h.b16 %v1184
    %v1218 = vunpack.c.l.b16 %v1185
    %v1219 = vunpack.c.h.b16 %v1185
    %v1220 = vunpack.c.l.b16 %v1186
    %v1221 = vunpack.c.h.b16 %v1186
    %v1222 = vunpack.c.l.b16 %v1187
    %v1223 = vunpack.c.h.b16 %v1187
    %v1224 = vunpack.c.l.b16 %v1188
    %v1225 = vunpack.c.h.b16 %v1188
    %v1226 = vunpack.c.l.b16 %v1189
    %v1227 = vunpack.c.h.b16 %v1189
    %v1228 = vunpack.c.l.b16 %v1190
    %v1229 = vunpack.c.h.b16 %v1190
    %v1230 = vunpack.c.l.b16 %v1191
    %v1231 = vunpack.c.h.b16 %v1191
    %v1232 = vunpack.c.l.b16 %v1192
    %v1233 = vunpack.c.h.b16 %v1192
    %v1234 = vunpack.c.l.b16 %v1193
    %v1235 = vunpack.c.h.b16 %v1193
    %v1236 = vunpack.c.l.b16 %v1194
    %v1237 = vunpack.c.h.b16 %v1194
    %v1238 = vunpack.c.l.b16 %v1195
    %v1239 = vunpack.c.h.b16 %v1195
    %v1240 = vunpack.c.l.b16 %v1196
    %v1241 = vunpack.c.h.b16 %v1196
    %v1242 = vunpack.c.l.b16 %v1197
    %v1243 = vunpack.c.h.b16 %v1197
    %v1244 = vunpack.c.l.b16 %v1198
    %v1245 = vunpack.c.h.b16 %v1198
    %v1246 = vunpack.c.l.b16 %v1199
    %v1247 = vunpack.c.h.b16 %v1199
    %v1248 = vpack.c.b16 %v1218, %v1216
    %v1249 = vpack.c.b16 %v1219, %v1217
    %v1250 = vpack.c.b16 %v1222, %v1220
    %v1251 = vpack.c.b16 %v1223, %v1221
    %v1252 = vpack.c.b16 %v1226, %v1224
    %v1253 = vpack.c.b16 %v1227, %v1225
    %v1254 = vpack.c.b16 %v1230, %v1228
    %v1255 = vpack.c.b16 %v1231, %v1229
    %v1256 = vpack.c.b16 %v1234, %v1232
    %v1257 = vpack.c.b16 %v1235, %v1233
    %v1258 = vpack.c.b16 %v1238, %v1236
    %v1259 = vpack.c.b16 %v1239, %v1237
    %v1260 = vpack.c.b16 %v1242, %v1240
    %v1261 = vpack.c.b16 %v1243, %v1241
    %v1262 = vpack.c.b16 %v1246, %v1244
    %v1263 = vpack.c.b16 %v1247, %v1245
    %1280 = vmatpush.bf16.msra.mxu0 %v1262
    %1281 = vmatpush.bf16.msra.mxu0 %v1260
    %1282 = vmatpush.bf16.msra.mxu0 %v1258
    %1283 = vmatpush.bf16.msra.mxu0 %v1256
    %1284 = vmatpush.bf16.msra.mxu0 %v1254
    %1285 = vmatpush.bf16.msra.mxu0 %v1252
    %1286 = vmatpush.bf16.msra.mxu0 %v1250
    %1287 = vmatpush.bf16.msra.mxu0 %v1248
    %1288 = vmatmul.bf16.gmra.mxu0 %v1182
    %v1289 = vpop.f32.mrf.mxu0
    %v1290 = vadd.f32 0.0, %v1289
    %v1291 = vpop.f32.mrf.mxu0
    %v1292 = vadd.f32 0.0, %v1291
    %1293 = vmatmul.bf16.gmra.mxu0 %v1183
    %v1294 = vpop.f32.mrf.mxu0
    %v1295 = vadd.f32 0.0, %v1294
    %v1296 = vpop.f32.mrf.mxu0
    %v1297 = vadd.f32 0.0, %v1296
    %1298 = vdwg.mxu0
    %1299 = vmatpush.bf16.msra.mxu0 %v1263
    %1300 = vmatpush.bf16.msra.mxu0 %v1261
    %1301 = vmatpush.bf16.msra.mxu0 %v1259
    %1302 = vmatpush.bf16.msra.mxu0 %v1257
    %1303 = vmatpush.bf16.msra.mxu0 %v1255
    %1304 = vmatpush.bf16.msra.mxu0 %v1253
    %1305 = vmatpush.bf16.msra.mxu0 %v1251
    %1306 = vmatpush.bf16.msra.mxu0 %v1249
    %1307 = vmatmul.bf16.gmra.mxu0 %v1182
    %v1308 = vpop.f32.mrf.mxu0
    %v1309 = vadd.f32 0.0, %v1308
    %v1310 = vpop.f32.mrf.mxu0
    %v1311 = vadd.f32 0.0, %v1310
    %1312 = vmatmul.bf16.gmra.mxu0 %v1183
    %v1313 = vpop.f32.mrf.mxu0
    %v1314 = vadd.f32 0.0, %v1313
    %v1315 = vpop.f32.mrf.mxu0
    %v1316 = vadd.f32 0.0, %v1315
    %1317 = vdwg.mxu0
    %v1318 = vpack.c.bf16 %v1178, %v1178
    %v1319 = vpack.c.bf16 %v1292, %v1290
    %v1321 = vsel %vm528, %v1318, 0
    %v1324 = vsel %vm528, %v1319, 0
    %1326 = vmatpush.bf16.xpose.msra.mxu0 0
    %1327 = vmatpush.bf16.xpose.msra.mxu0 0
    %1328 = vmatpush.bf16.xpose.msra.mxu0 0
    %1329 = vmatpush.bf16.xpose.msra.mxu0 0
    %1330 = vmatpush.bf16.xpose.msra.mxu0 0
    %1331 = vmatpush.bf16.xpose.msra.mxu0 0
    %1332 = vmatpush.bf16.xpose.msra.mxu0 0
    %1333 = vmatpush.bf16.xpose.msra.mxu0 %v1324
    %1334 = vmatmul.bf16.gmra.mxu0 %v1321
    %v1335 = vpop.f32.mrf.mxu0
    %v1336 = vadd.f32 0.0, %v1335
    %v1337 = vpop.f32.mrf.mxu0
    %1338 = vdwg.mxu0
    %vm1339 = vcmask 130048
    %v1340 = vsel %vm1339, %v1336, -inf
    %1341 = vmax.xlane.f32.xlu0 %v1340
    %v1342 = vpop.xlane.xlu0 %1341
    %v1343 = vsub.f32 %v1336, %v1342
    %v1344 = vmul.f32 %v1343, 1.442695
    %v1345 = vpow.pop %v1344
    %v1346 = vsel %vm1339, %v1345, 0.0
    %1347 = vadd.xlane.f32.xlu0 %v1346
    %v1348 = vpop.xlane.xlu0 %1347
    %v1349 = vrcp.pop %v1348
    %v1350 = vmul.f32 %v1345, %v1349
    %v1351 = vpack.c.bf16 %v1350, %v1350
    %v1352 = vpack.c.bf16 %v1311, %v1309
    %v1354 = vsel %vm1339, %v1351, 0
    %1356 = vmatpush.bf16.msra.mxu0 0
    %1357 = vmatpush.bf16.msra.mxu0 0
    %1358 = vmatpush.bf16.msra.mxu0 0
    %1359 = vmatpush.bf16.msra.mxu0 0
    %1360 = vmatpush.bf16.msra.mxu0 0
    %1361 = vmatpush.bf16.msra.mxu0 0
    %1362 = vmatpush.bf16.msra.mxu0 0
    %1363 = vmatpush.bf16.msra.mxu0 %v1352
    %1364 = vmatmul.bf16.gmra.mxu0 %v1354
    %v1365 = vpop.f32.mrf.mxu0
    %v1366 = vadd.f32 0.0, %v1365
    %v1367 = vpop.f32.mrf.mxu0
    %1368 = vdwg.mxu0
    %v1369 = vpack.c.bf16 %v1366, %v1366
    %v1370 = vld [vmem:[#allocation20] sm:$0xf]
    %v1371 = vld [vmem:[#allocation20 + $0x4] sm:$0xf]
    %v1372 = vld [vmem:[#allocation20 + $0x8] sm:$0xf]
    %v1373 = vld [vmem:[#allocation20 + $0xc] sm:$0xf]
    %v1374 = vld [vmem:[#allocation20 + $0x10] sm:$0xf]
    %v1375 = vld [vmem:[#allocation20 + $0x14] sm:$0xf]
    %v1376 = vld [vmem:[#allocation20 + $0x18] sm:$0xf]
    %v1377 = vld [vmem:[#allocation20 + $0x1c] sm:$0xf]
    %1379 = vrot.lane.b32.xlu0 %v1318, 64
    %v1380 = vpop.permute.xlu0 %1379
    %1382 = vrot.lane.b32.xlu0 %v1319, 64
    %v1383 = vpop.permute.xlu0 %1382
    %v1385 = vsel %vm528, %v1380, 0
    %v1388 = vsel %vm528, %v1383, 0
    %1390 = vmatpush.bf16.xpose.msra.mxu0 0
    %1391 = vmatpush.bf16.xpose.msra.mxu0 0
    %1392 = vmatpush.bf16.xpose.msra.mxu0 0
    %1393 = vmatpush.bf16.xpose.msra.mxu0 0
    %1394 = vmatpush.bf16.xpose.msra.mxu0 0
    %1395 = vmatpush.bf16.xpose.msra.mxu0 0
    %1396 = vmatpush.bf16.xpose.msra.mxu0 0
    %1397 = vmatpush.bf16.xpose.msra.mxu0 %v1388
    %1398 = vmatmul.bf16.gmra.mxu0 %v1385
    %v1399 = vpop.f32.mrf.mxu0
    %v1400 = vadd.f32 0.0, %v1399
    %v1401 = vpop.f32.mrf.mxu0
    %1402 = vdwg.mxu0
    %v1403 = vsel %vm1339, %v1400, -inf
    %1404 = vmax.xlane.f32.xlu0 %v1403
    %v1405 = vpop.xlane.xlu0 %1404
    %v1406 = vsub.f32 %v1400, %v1405
    %v1407 = vmul.f32 %v1406, 1.442695
    %v1408 = vpow.pop %v1407
    %v1409 = vsel %vm1339, %v1408, 0.0
    %1410 = vadd.xlane.f32.xlu0 %v1409
    %v1411 = vpop.xlane.xlu0 %1410
    %v1412 = vrcp.pop %v1411
    %v1413 = vmul.f32 %v1408, %v1412
    %v1414 = vpack.c.bf16 %v1413, %v1413
    %1416 = vrot.lane.b32.xlu0 %v1352, 64
    %v1417 = vpop.permute.xlu0 %1416
    %v1420 = vsel %vm1339, %v1414, 0
    %1422 = vmatpush.bf16.msra.mxu0 0
    %1423 = vmatpush.bf16.msra.mxu0 0
    %1424 = vmatpush.bf16.msra.mxu0 0
    %1425 = vmatpush.bf16.msra.mxu0 0
    %1426 = vmatpush.bf16.msra.mxu0 0
    %1427 = vmatpush.bf16.msra.mxu0 0
    %1428 = vmatpush.bf16.msra.mxu0 0
    %1429 = vmatpush.bf16.msra.mxu0 %v1417
    %1430 = vmatmul.bf16.gmra.mxu0 %v1420
    %v1431 = vpop.f32.mrf.mxu0
    %v1432 = vadd.f32 0.0, %v1431
    %v1433 = vpop.f32.mrf.mxu0
    %1434 = vdwg.mxu0
    %v1435 = vpack.c.bf16 %v1432, %v1432
    %v1436 = vld [vmem:[#allocation20 + $0x20] sm:$0xf]
    %v1437 = vld [vmem:[#allocation20 + $0x24] sm:$0xf]
    %v1438 = vld [vmem:[#allocation20 + $0x28] sm:$0xf]
    %v1439 = vld [vmem:[#allocation20 + $0x2c] sm:$0xf]
    %v1440 = vld [vmem:[#allocation20 + $0x30] sm:$0xf]
    %v1441 = vld [vmem:[#allocation20 + $0x34] sm:$0xf]
    %v1442 = vld [vmem:[#allocation20 + $0x38] sm:$0xf]
    %v1443 = vld [vmem:[#allocation20 + $0x3c] sm:$0xf]
    %v1452 = vunpack.c.l.b16 %v1436
    %v1453 = vunpack.c.l.b16 %v1437
    %v1454 = vunpack.c.l.b16 %v1438
    %v1455 = vunpack.c.l.b16 %v1439
    %v1456 = vunpack.c.l.b16 %v1440
    %v1457 = vunpack.c.l.b16 %v1441
    %v1458 = vunpack.c.l.b16 %v1442
    %v1459 = vunpack.c.l.b16 %v1443
    %v1460 = vpack.c.b16 %v1453, %v1452
    %v1461 = vpack.c.b16 %v1455, %v1454
    %v1462 = vpack.c.b16 %v1457, %v1456
    %v1463 = vpack.c.b16 %v1459, %v1458
    %v1469 = vsel %vm528, %v1435, 0
    %1471 = vmatpush.bf16.msra.mxu0 0
    %1472 = vmatpush.bf16.msra.mxu0 0
    %1473 = vmatpush.bf16.msra.mxu0 0
    %1474 = vmatpush.bf16.msra.mxu0 0
    %1475 = vmatpush.bf16.msra.mxu0 %v1463
    %1476 = vmatpush.bf16.msra.mxu0 %v1462
    %1477 = vmatpush.bf16.msra.mxu0 %v1461
    %1478 = vmatpush.bf16.msra.mxu0 %v1460
    %1479 = vmatmul.bf16.gmra.mxu0 %v1469
    %v1480 = vpop.f32.mrf.mxu0
    %v1481 = vadd.f32 0.0, %v1480
    %v1482 = vpop.f32.mrf.mxu0
    %1483 = vdwg.mxu0
    %v1492 = vunpack.c.l.b16 %v1370
    %v1493 = vunpack.c.l.b16 %v1371
    %v1494 = vunpack.c.l.b16 %v1372
    %v1495 = vunpack.c.l.b16 %v1373
    %v1496 = vunpack.c.l.b16 %v1374
    %v1497 = vunpack.c.l.b16 %v1375
    %v1498 = vunpack.c.l.b16 %v1376
    %v1499 = vunpack.c.l.b16 %v1377
    %v1500 = vpack.c.b16 %v1493, %v1492
    %v1501 = vpack.c.b16 %v1495, %v1494
    %v1502 = vpack.c.b16 %v1497, %v1496
    %v1503 = vpack.c.b16 %v1499, %v1498
    %v1509 = vsel %vm528, %v1369, 0
    %1511 = vmatpush.bf16.msra.mxu0 0
    %1512 = vmatpush.bf16.msra.mxu0 0
    %1513 = vmatpush.bf16.msra.mxu0 0
    %1514 = vmatpush.bf16.msra.mxu0 0
    %1515 = vmatpush.bf16.msra.mxu0 %v1503
    %1516 = vmatpush.bf16.msra.mxu0 %v1502
    %1517 = vmatpush.bf16.msra.mxu0 %v1501
    %1518 = vmatpush.bf16.msra.mxu0 %v1500
    %1519 = vmatmul.bf16.gmra.mxu0 %v1509
    %v1520 = vpop.f32.mrf.mxu0
    %v1521 = vadd.f32 %v1481, %v1520
    %v1522 = vpop.f32.mrf.mxu0
    %1523 = vdwg.mxu0
    %1524 = vst [vmem:[#allocation2] sm:$0xff] %v1521
    %v1525 = vpack.c.bf16 %v1180, %v1180
    %v1526 = vpack.c.bf16 %v1297, %v1295
    %v1528 = vsel %vm528, %v1525, 0
    %v1531 = vsel %vm528, %v1526, 0
    %1533 = vmatpush.bf16.xpose.msra.mxu0 0
    %1534 = vmatpush.bf16.xpose.msra.mxu0 0
    %1535 = vmatpush.bf16.xpose.msra.mxu0 0
    %1536 = vmatpush.bf16.xpose.msra.mxu0 0
    %1537 = vmatpush.bf16.xpose.msra.mxu0 0
    %1538 = vmatpush.bf16.xpose.msra.mxu0 0
    %1539 = vmatpush.bf16.xpose.msra.mxu0 0
    %1540 = vmatpush.bf16.xpose.msra.mxu0 %v1531
    %1541 = vmatmul.bf16.gmra.mxu0 %v1528
    %v1542 = vpop.f32.mrf.mxu0
    %v1543 = vadd.f32 0.0, %v1542
    %v1544 = vpop.f32.mrf.mxu0
    %1545 = vdwg.mxu0
    %v1546 = vsel %vm1339, %v1543, -inf
    %1547 = vmax.xlane.f32.xlu0 %v1546
    %v1548 = vpop.xlane.xlu0 %1547
    %v1549 = vsub.f32 %v1543, %v1548
    %v1550 = vmul.f32 %v1549, 1.442695
    %v1551 = vpow.pop %v1550
    %v1552 = vsel %vm1339, %v1551, 0.0
    %1553 = vadd.xlane.f32.xlu0 %v1552
    %v1554 = vpop.xlane.xlu0 %1553
    %v1555 = vrcp.pop %v1554
    %v1556 = vmul.f32 %v1551, %v1555
    %v1557 = vpack.c.bf16 %v1556, %v1556
    %v1558 = vpack.c.bf16 %v1316, %v1314
    %v1560 = vsel %vm1339, %v1557, 0
    %1562 = vmatpush.bf16.msra.mxu0 0
    %1563 = vmatpush.bf16.msra.mxu0 0
    %1564 = vmatpush.bf16.msra.mxu0 0
    %1565 = vmatpush.bf16.msra.mxu0 0
    %1566 = vmatpush.bf16.msra.mxu0 0
    %1567 = vmatpush.bf16.msra.mxu0 0
    %1568 = vmatpush.bf16.msra.mxu0 0
    %1569 = vmatpush.bf16.msra.mxu0 %v1558
    %1570 = vmatmul.bf16.gmra.mxu0 %v1560
    %v1571 = vpop.f32.mrf.mxu0
    %v1572 = vadd.f32 0.0, %v1571
    %v1573 = vpop.f32.mrf.mxu0
    %1574 = vdwg.mxu0
    %v1575 = vpack.c.bf16 %v1572, %v1572
    %v1576 = vld [vmem:[#allocation20] sm:$0xf]
    %v1577 = vld [vmem:[#allocation20 + $0x4] sm:$0xf]
    %v1578 = vld [vmem:[#allocation20 + $0x8] sm:$0xf]
    %v1579 = vld [vmem:[#allocation20 + $0xc] sm:$0xf]
    %v1580 = vld [vmem:[#allocation20 + $0x10] sm:$0xf]
    %v1581 = vld [vmem:[#allocation20 + $0x14] sm:$0xf]
    %v1582 = vld [vmem:[#allocation20 + $0x18] sm:$0xf]
    %v1583 = vld [vmem:[#allocation20 + $0x1c] sm:$0xf]
    %1585 = vrot.lane.b32.xlu0 %v1525, 64
    %v1586 = vpop.permute.xlu0 %1585
    %1588 = vrot.lane.b32.xlu0 %v1526, 64
    %v1589 = vpop.permute.xlu0 %1588
    %v1591 = vsel %vm528, %v1586, 0
    %v1594 = vsel %vm528, %v1589, 0
    %1596 = vmatpush.bf16.xpose.msra.mxu0 0
    %1597 = vmatpush.bf16.xpose.msra.mxu0 0
    %1598 = vmatpush.bf16.xpose.msra.mxu0 0
    %1599 = vmatpush.bf16.xpose.msra.mxu0 0
    %1600 = vmatpush.bf16.xpose.msra.mxu0 0
    %1601 = vmatpush.bf16.xpose.msra.mxu0 0
    %1602 = vmatpush.bf16.xpose.msra.mxu0 0
    %1603 = vmatpush.bf16.xpose.msra.mxu0 %v1594
    %1604 = vmatmul.bf16.gmra.mxu0 %v1591
    %v1605 = vpop.f32.mrf.mxu0
    %v1606 = vadd.f32 0.0, %v1605
    %v1607 = vpop.f32.mrf.mxu0
    %1608 = vdwg.mxu0
    %v1609 = vsel %vm1339, %v1606, -inf
    %1610 = vmax.xlane.f32.xlu0 %v1609
    %v1611 = vpop.xlane.xlu0 %1610
    %v1612 = vsub.f32 %v1606, %v1611
    %v1613 = vmul.f32 %v1612, 1.442695
    %v1614 = vpow.pop %v1613
    %v1615 = vsel %vm1339, %v1614, 0.0
    %1616 = vadd.xlane.f32.xlu0 %v1615
    %v1617 = vpop.xlane.xlu0 %1616
    %v1618 = vrcp.pop %v1617
    %v1619 = vmul.f32 %v1614, %v1618
    %v1620 = vpack.c.bf16 %v1619, %v1619
    %1622 = vrot.lane.b32.xlu0 %v1558, 64
    %v1623 = vpop.permute.xlu0 %1622
    %v1626 = vsel %vm1339, %v1620, 0
    %1628 = vmatpush.bf16.msra.mxu0 0
    %1629 = vmatpush.bf16.msra.mxu0 0
    %1630 = vmatpush.bf16.msra.mxu0 0
    %1631 = vmatpush.bf16.msra.mxu0 0
    %1632 = vmatpush.bf16.msra.mxu0 0
    %1633 = vmatpush.bf16.msra.mxu0 0
    %1634 = vmatpush.bf16.msra.mxu0 0
    %1635 = vmatpush.bf16.msra.mxu0 %v1623
    %1636 = vmatmul.bf16.gmra.mxu0 %v1626
    %v1637 = vpop.f32.mrf.mxu0
    %v1638 = vadd.f32 0.0, %v1637
    %v1639 = vpop.f32.mrf.mxu0
    %1640 = vdwg.mxu0
    %v1641 = vpack.c.bf16 %v1638, %v1638
    %v1642 = vld [vmem:[#allocation20 + $0x20] sm:$0xf]
    %v1643 = vld [vmem:[#allocation20 + $0x24] sm:$0xf]
    %v1644 = vld [vmem:[#allocation20 + $0x28] sm:$0xf]
    %v1645 = vld [vmem:[#allocation20 + $0x2c] sm:$0xf]
    %v1646 = vld [vmem:[#allocation20 + $0x30] sm:$0xf]
    %v1647 = vld [vmem:[#allocation20 + $0x34] sm:$0xf]
    %v1648 = vld [vmem:[#allocation20 + $0x38] sm:$0xf]
    %v1649 = vld [vmem:[#allocation20 + $0x3c] sm:$0xf]
    %v1658 = vunpack.c.l.b16 %v1642
    %v1659 = vunpack.c.l.b16 %v1643
    %v1660 = vunpack.c.l.b16 %v1644
    %v1661 = vunpack.c.l.b16 %v1645
    %v1662 = vunpack.c.l.b16 %v1646
    %v1663 = vunpack.c.l.b16 %v1647
    %v1664 = vunpack.c.l.b16 %v1648
    %v1665 = vunpack.c.l.b16 %v1649
    %v1666 = vpack.c.b16 %v1659, %v1658
    %v1667 = vpack.c.b16 %v1661, %v1660
    %v1668 = vpack.c.b16 %v1663, %v1662
    %v1669 = vpack.c.b16 %v1665, %v1664
    %v1675 = vsel %vm528, %v1641, 0
    %1677 = vmatpush.bf16.msra.mxu0 0
    %1678 = vmatpush.bf16.msra.mxu0 0
    %1679 = vmatpush.bf16.msra.mxu0 0
    %1680 = vmatpush.bf16.msra.mxu0 0
    %1681 = vmatpush.bf16.msra.mxu0 %v1669
    %1682 = vmatpush.bf16.msra.mxu0 %v1668
    %1683 = vmatpush.bf16.msra.mxu0 %v1667
    %1684 = vmatpush.bf16.msra.mxu0 %v1666
    %1685 = vmatmul.bf16.gmra.mxu0 %v1675
    %v1686 = vpop.f32.mrf.mxu0
    %v1687 = vadd.f32 0.0, %v1686
    %v1688 = vpop.f32.mrf.mxu0
    %1689 = vdwg.mxu0
    %v1698 = vunpack.c.l.b16 %v1576
    %v1699 = vunpack.c.l.b16 %v1577
    %v1700 = vunpack.c.l.b16 %v1578
    %v1701 = vunpack.c.l.b16 %v1579
    %v1702 = vunpack.c.l.b16 %v1580
    %v1703 = vunpack.c.l.b16 %v1581
    %v1704 = vunpack.c.l.b16 %v1582
    %v1705 = vunpack.c.l.b16 %v1583
    %v1706 = vpack.c.b16 %v1699, %v1698
    %v1707 = vpack.c.b16 %v1701, %v1700
    %v1708 = vpack.c.b16 %v1703, %v1702
    %v1709 = vpack.c.b16 %v1705, %v1704
    %v1715 = vsel %vm528, %v1575, 0
    %1717 = vmatpush.bf16.msra.mxu0 0
    %1718 = vmatpush.bf16.msra.mxu0 0
    %1719 = vmatpush.bf16.msra.mxu0 0
    %1720 = vmatpush.bf16.msra.mxu0 0
    %1721 = vmatpush.bf16.msra.mxu0 %v1709
    %1722 = vmatpush.bf16.msra.mxu0 %v1708
    %1723 = vmatpush.bf16.msra.mxu0 %v1707
    %1724 = vmatpush.bf16.msra.mxu0 %v1706
    %1725 = vmatmul.bf16.gmra.mxu0 %v1715
    %v1726 = vpop.f32.mrf.mxu0
    %v1727 = vadd.f32 %v1687, %v1726
    %v1728 = vpop.f32.mrf.mxu0
    %1729 = vdwg.mxu0
    %1730 = vst [vmem:[#allocation2 + $0x8] sm:$0xff] %v1727
    %v1731 = vld [vmem:[#allocation2] sm:$0xff]
    %v1732 = vld [vmem:[#allocation2 + $0x8] sm:$0xff]
    %v1733 = vadd.f32 %v1731, %v953
    %v1734 = vadd.f32 %v1732, %v954
    %v1735 = vld [vmem:[#allocation12] sm:$0x1]
    %v1736 = vld [vmem:[%s9] sm:$0x1]
    %1737 = vadd.xlane.f32.xlu0 %v1733
    %v1738 = vpop.xlane.xlu0 %1737
    %1739 = vadd.xlane.f32.xlu0 %v1734
    %v1740 = vpop.xlane.xlu0 %1739
    %v1741 = vmul.f32 %v1738, %v276
    %v1742 = vmul.f32 %v1740, %v276
    %v1743 = vsub.f32 %v1733, %v1741
    %v1744 = vsub.f32 %v1734, %v1742
    %v1745 = vmul.f32 %v1743, %v1743
    %v1746 = vmul.f32 %v1744, %v1744
    %1747 = vadd.xlane.f32.xlu0 %v1745
    %v1748 = vpop.xlane.xlu0 %1747
    %1749 = vadd.xlane.f32.xlu0 %v1746
    %v1750 = vpop.xlane.xlu0 %1749
    %v1751 = vmul.f32 %v1748, %v276
    %v1752 = vmul.f32 %v1750, %v276
    %v1753 = vadd.f32 %v1751, 1e-06
    %v1754 = vadd.f32 %v1752, 1e-06
    %v1755 = vrsqrt.pop %v1753
    %v1756 = vmul.f32 %v1755, %v1753
    %v1757 = vmul.f32 %v1756, %v1755
    %v1758 = vmul.f32 0.5, %v1757
    %v1759 = vsub.f32 1.5, %v1758
    %v1760 = vmul.f32 %v1755, %v1759
    %vm1761 = vweird.f32 %v1753
    %vm1762 = vweird.f32 %v1755
    %vm1763 = vmor %vm1761, %vm1762
    %v1764 = vsel %vm1763, %v1755, %v1760
    %v1765 = vrsqrt.pop %v1754
    %v1766 = vmul.f32 %v1765, %v1754
    %v1767 = vmul.f32 %v1766, %v1765
    %v1768 = vmul.f32 0.5, %v1767
    %v1769 = vsub.f32 1.5, %v1768
    %v1770 = vmul.f32 %v1765, %v1769
    %vm1771 = vweird.f32 %v1754
    %vm1772 = vweird.f32 %v1765
    %vm1773 = vmor %vm1771, %vm1772
    %v1774 = vsel %vm1773, %v1765, %v1770
    %v1775 = vmul.f32 %v1743, %v1764
    %v1776 = vmul.f32 %v1744, %v1774
    %v1778 = vperm.slane %v1735, 0
    %v1780 = vmul.f32 %v1775, %v1778
    %v1781 = vmul.f32 %v1776, %v1778
    %v1783 = vperm.slane %v1736, 0
    %v1785 = vadd.f32 %v1780, %v1783
    %v1786 = vadd.f32 %v1781, %v1783
    %v1787 = vpack.c.bf16 %v1786, %v1785
    %v1788 = vld [vmem:[#allocation21] sm:$0xff]
    %v1789 = vld [vmem:[#allocation21 + $0x8] sm:$0xff]
    %v1790 = vld [vmem:[#allocation21 + $0x10] sm:$0xff]
    %v1791 = vld [vmem:[#allocation21 + $0x18] sm:$0xff]
    %v1792 = vld [vmem:[#allocation21 + $0x20] sm:$0xff]
    %v1793 = vld [vmem:[#allocation21 + $0x28] sm:$0xff]
    %v1794 = vld [vmem:[#allocation21 + $0x30] sm:$0xff]
    %v1795 = vld [vmem:[#allocation21 + $0x38] sm:$0xff]
    %v1796 = vld [vmem:[#allocation21 + $0x40] sm:$0xff]
    %v1797 = vld [vmem:[#allocation21 + $0x48] sm:$0xff]
    %v1798 = vld [vmem:[#allocation21 + $0x50] sm:$0xff]
    %v1799 = vld [vmem:[#allocation21 + $0x58] sm:$0xff]
    %v1800 = vld [vmem:[#allocation21 + $0x60] sm:$0xff]
    %v1801 = vld [vmem:[#allocation21 + $0x68] sm:$0xff]
    %v1802 = vld [vmem:[#allocation21 + $0x70] sm:$0xff]
    %v1803 = vld [vmem:[#allocation21 + $0x78] sm:$0xff]
    %v1804 = vld [vmem:[#allocation21 + $0x80] sm:$0xff]
    %v1805 = vld [vmem:[#allocation21 + $0x88] sm:$0xff]
    %v1806 = vld [vmem:[#allocation21 + $0x90] sm:$0xff]
    %v1807 = vld [vmem:[#allocation21 + $0x98] sm:$0xff]
    %v1808 = vld [vmem:[#allocation21 + $0xa0] sm:$0xff]
    %v1809 = vld [vmem:[#allocation21 + $0xa8] sm:$0xff]
    %v1810 = vld [vmem:[#allocation21 + $0xb0] sm:$0xff]
    %v1811 = vld [vmem:[#allocation21 + $0xb8] sm:$0xff]
    %v1812 = vld [vmem:[#allocation21 + $0xc0] sm:$0xff]
    %v1813 = vld [vmem:[#allocation21 + $0xc8] sm:$0xff]
    %v1814 = vld [vmem:[#allocation21 + $0xd0] sm:$0xff]
    %v1815 = vld [vmem:[#allocation21 + $0xd8] sm:$0xff]
    %v1816 = vld [vmem:[#allocation21 + $0xe0] sm:$0xff]
    %v1817 = vld [vmem:[#allocation21 + $0xe8] sm:$0xff]
    %v1818 = vld [vmem:[#allocation21 + $0xf0] sm:$0xff]
    %v1819 = vld [vmem:[#allocation21 + $0xf8] sm:$0xff]
    %v1820 = vld [vmem:[%s16] sm:$0xf]
    %v1822 = vperm.slane %v1820, 0
    %v1823 = vperm.slane %v1820, 1
    %v1824 = vperm.slane %v1820, 2
    %v1825 = vperm.slane %v1820, 3
    %v1862 = vunpack.c.l.b16 %v1788
    %v1863 = vunpack.c.h.b16 %v1788
    %v1864 = vunpack.c.l.b16 %v1789
    %v1865 = vunpack.c.h.b16 %v1789
    %v1866 = vunpack.c.l.b16 %v1790
    %v1867 = vunpack.c.h.b16 %v1790
    %v1868 = vunpack.c.l.b16 %v1791
    %v1869 = vunpack.c.h.b16 %v1791
    %v1870 = vunpack.c.l.b16 %v1792
    %v1871 = vunpack.c.h.b16 %v1792
    %v1872 = vunpack.c.l.b16 %v1793
    %v1873 = vunpack.c.h.b16 %v1793
    %v1874 = vunpack.c.l.b16 %v1794
    %v1875 = vunpack.c.h.b16 %v1794
    %v1876 = vunpack.c.l.b16 %v1795
    %v1877 = vunpack.c.h.b16 %v1795
    %v1878 = vunpack.c.l.b16 %v1796
    %v1879 = vunpack.c.h.b16 %v1796
    %v1880 = vunpack.c.l.b16 %v1797
    %v1881 = vunpack.c.h.b16 %v1797
    %v1882 = vunpack.c.l.b16 %v1798
    %v1883 = vunpack.c.h.b16 %v1798
    %v1884 = vunpack.c.l.b16 %v1799
    %v1885 = vunpack.c.h.b16 %v1799
    %v1886 = vunpack.c.l.b16 %v1800
    %v1887 = vunpack.c.h.b16 %v1800
    %v1888 = vunpack.c.l.b16 %v1801
    %v1889 = vunpack.c.h.b16 %v1801
    %v1890 = vunpack.c.l.b16 %v1802
    %v1891 = vunpack.c.h.b16 %v1802
    %v1892 = vunpack.c.l.b16 %v1803
    %v1893 = vunpack.c.h.b16 %v1803
    %v1894 = vunpack.c.l.b16 %v1804
    %v1895 = vunpack.c.h.b16 %v1804
    %v1896 = vunpack.c.l.b16 %v1805
    %v1897 = vunpack.c.h.b16 %v1805
    %v1898 = vunpack.c.l.b16 %v1806
    %v1899 = vunpack.c.h.b16 %v1806
    %v1900 = vunpack.c.l.b16 %v1807
    %v1901 = vunpack.c.h.b16 %v1807
    %v1902 = vunpack.c.l.b16 %v1808
    %v1903 = vunpack.c.h.b16 %v1808
    %v1904 = vunpack.c.l.b16 %v1809
    %v1905 = vunpack.c.h.b16 %v1809
    %v1906 = vunpack.c.l.b16 %v1810
    %v1907 = vunpack.c.h.b16 %v1810
    %v1908 = vunpack.c.l.b16 %v1811
    %v1909 = vunpack.c.h.b16 %v1811
    %v1910 = vunpack.c.l.b16 %v1812
    %v1911 = vunpack.c.h.b16 %v1812
    %v1912 = vunpack.c.l.b16 %v1813
    %v1913 = vunpack.c.h.b16 %v1813
    %v1914 = vunpack.c.l.b16 %v1814
    %v1915 = vunpack.c.h.b16 %v1814
    %v1916 = vunpack.c.l.b16 %v1815
    %v1917 = vunpack.c.h.b16 %v1815
    %v1918 = vunpack.c.l.b16 %v1816
    %v1919 = vunpack.c.h.b16 %v1816
    %v1920 = vunpack.c.l.b16 %v1817
    %v1921 = vunpack.c.h.b16 %v1817
    %v1922 = vunpack.c.l.b16 %v1818
    %v1923 = vunpack.c.h.b16 %v1818
    %v1924 = vunpack.c.l.b16 %v1819
    %v1925 = vunpack.c.h.b16 %v1819
    %v1926 = vpack.c.b16 %v1866, %v1862
    %v1927 = vpack.c.b16 %v1867, %v1863
    %v1928 = vpack.c.b16 %v1868, %v1864
    %v1929 = vpack.c.b16 %v1869, %v1865
    %v1930 = vpack.c.b16 %v1874, %v1870
    %v1931 = vpack.c.b16 %v1875, %v1871
    %v1932 = vpack.c.b16 %v1876, %v1872
    %v1933 = vpack.c.b16 %v1877, %v1873
    %v1934 = vpack.c.b16 %v1882, %v1878
    %v1935 = vpack.c.b16 %v1883, %v1879
    %v1936 = vpack.c.b16 %v1884, %v1880
    %v1937 = vpack.c.b16 %v1885, %v1881
    %v1938 = vpack.c.b16 %v1890, %v1886
    %v1939 = vpack.c.b16 %v1891, %v1887
    %v1940 = vpack.c.b16 %v1892, %v1888
    %v1941 = vpack.c.b16 %v1893, %v1889
    %v1942 = vpack.c.b16 %v1898, %v1894
    %v1943 = vpack.c.b16 %v1899, %v1895
    %v1944 = vpack.c.b16 %v1900, %v1896
    %v1945 = vpack.c.b16 %v1901, %v1897
    %v1946 = vpack.c.b16 %v1906, %v1902
    %v1947 = vpack.c.b16 %v1907, %v1903
    %v1948 = vpack.c.b16 %v1908, %v1904
    %v1949 = vpack.c.b16 %v1909, %v1905
    %v1950 = vpack.c.b16 %v1914, %v1910
    %v1951 = vpack.c.b16 %v1915, %v1911
    %v1952 = vpack.c.b16 %v1916, %v1912
    %v1953 = vpack.c.b16 %v1917, %v1913
    %v1954 = vpack.c.b16 %v1922, %v1918
    %v1955 = vpack.c.b16 %v1923, %v1919
    %v1956 = vpack.c.b16 %v1924, %v1920
    %v1957 = vpack.c.b16 %v1925, %v1921
    %1990 = vmatpush.bf16.msra.mxu0 %v1954
    %1991 = vmatpush.bf16.msra.mxu0 %v1950
    %1992 = vmatpush.bf16.msra.mxu0 %v1946
    %1993 = vmatpush.bf16.msra.mxu0 %v1942
    %1994 = vmatpush.bf16.msra.mxu0 %v1938
    %1995 = vmatpush.bf16.msra.mxu0 %v1934
    %1996 = vmatpush.bf16.msra.mxu0 %v1930
    %1997 = vmatpush.bf16.msra.mxu0 %v1926
    %1998 = vmatmul.bf16.gmra.mxu0 %v1787
    %v1999 = vpop.f32.mrf.mxu0
    %v2000 = vadd.f32 %v1822, %v1999
    %v2001 = vpop.f32.mrf.mxu0
    %v2002 = vadd.f32 %v1822, %v2001
    %2003 = vdwg.mxu0
    %2004 = vmatpush.bf16.msra.mxu0 %v1955
    %2005 = vmatpush.bf16.msra.mxu0 %v1951
    %2006 = vmatpush.bf16.msra.mxu0 %v1947
    %2007 = vmatpush.bf16.msra.mxu0 %v1943
    %2008 = vmatpush.bf16.msra.mxu0 %v1939
    %2009 = vmatpush.bf16.msra.mxu0 %v1935
    %2010 = vmatpush.bf16.msra.mxu0 %v1931
    %2011 = vmatpush.bf16.msra.mxu0 %v1927
    %2012 = vmatmul.bf16.gmra.mxu0 %v1787
    %v2013 = vpop.f32.mrf.mxu0
    %v2014 = vadd.f32 %v1823, %v2013
    %v2015 = vpop.f32.mrf.mxu0
    %v2016 = vadd.f32 %v1823, %v2015
    %2017 = vdwg.mxu0
    %2018 = vmatpush.bf16.msra.mxu0 %v1956
    %2019 = vmatpush.bf16.msra.mxu0 %v1952
    %2020 = vmatpush.bf16.msra.mxu0 %v1948
    %2021 = vmatpush.bf16.msra.mxu0 %v1944
    %2022 = vmatpush.bf16.msra.mxu0 %v1940
    %2023 = vmatpush.bf16.msra.mxu0 %v1936
    %2024 = vmatpush.bf16.msra.mxu0 %v1932
    %2025 = vmatpush.bf16.msra.mxu0 %v1928
    %2026 = vmatmul.bf16.gmra.mxu0 %v1787
    %v2027 = vpop.f32.mrf.mxu0
    %v2028 = vadd.f32 %v1824, %v2027
    %v2029 = vpop.f32.mrf.mxu0
    %v2030 = vadd.f32 %v1824, %v2029
    %2031 = vdwg.mxu0
    %2032 = vmatpush.bf16.msra.mxu0 %v1957
    %2033 = vmatpush.bf16.msra.mxu0 %v1953
    %2034 = vmatpush.bf16.msra.mxu0 %v1949
    %2035 = vmatpush.bf16.msra.mxu0 %v1945
    %2036 = vmatpush.bf16.msra.mxu0 %v1941
    %2037 = vmatpush.bf16.msra.mxu0 %v1937
    %2038 = vmatpush.bf16.msra.mxu0 %v1933
    %2039 = vmatpush.bf16.msra.mxu0 %v1929
    %2040 = vmatmul.bf16.gmra.mxu0 %v1787
    %v2041 = vpop.f32.mrf.mxu0
    %v2042 = vadd.f32 %v1825, %v2041
    %v2043 = vpop.f32.mrf.mxu0
    %v2044 = vadd.f32 %v1825, %v2043
    %2045 = vdwg.mxu0
    %v2046 = vmul.f32 %v2000, %v2000
    %v2047 = vmul.f32 %v2014, %v2014
    %v2048 = vmul.f32 %v2028, %v2028
    %v2049 = vmul.f32 %v2042, %v2042
    %v2050 = vmul.f32 %v2002, %v2002
    %v2051 = vmul.f32 %v2016, %v2016
    %v2052 = vmul.f32 %v2030, %v2030
    %v2053 = vmul.f32 %v2044, %v2044
    %v2054 = vmul.f32 %v2000, %v2046
    %v2055 = vmul.f32 %v2014, %v2047
    %v2056 = vmul.f32 %v2028, %v2048
    %v2057 = vmul.f32 %v2042, %v2049
    %v2058 = vmul.f32 %v2002, %v2050
    %v2059 = vmul.f32 %v2016, %v2051
    %v2060 = vmul.f32 %v2030, %v2052
    %v2061 = vmul.f32 %v2044, %v2053
    %v2062 = vmul.f32 %v2054, 0.044715
    %v2063 = vmul.f32 %v2055, 0.044715
    %v2064 = vmul.f32 %v2056, 0.044715
    %v2065 = vmul.f32 %v2057, 0.044715
    %v2066 = vmul.f32 %v2058, 0.044715
    %v2067 = vmul.f32 %v2059, 0.044715
    %v2068 = vmul.f32 %v2060, 0.044715
    %v2069 = vmul.f32 %v2061, 0.044715
    %v2070 = vadd.f32 %v2000, %v2062
    %v2071 = vadd.f32 %v2014, %v2063
    %v2072 = vadd.f32 %v2028, %v2064
    %v2073 = vadd.f32 %v2042, %v2065
    %v2074 = vadd.f32 %v2002, %v2066
    %v2075 = vadd.f32 %v2016, %v2067
    %v2076 = vadd.f32 %v2030, %v2068
    %v2077 = vadd.f32 %v2044, %v2069
    %v2078 = vmul.f32 %v2070, 0.7978846
    %v2079 = vmul.f32 %v2071, 0.7978846
    %v2080 = vmul.f32 %v2072, 0.7978846
    %v2081 = vmul.f32 %v2073, 0.7978846
    %v2082 = vmul.f32 %v2074, 0.7978846
    %v2083 = vmul.f32 %v2075, 0.7978846
    %v2084 = vmul.f32 %v2076, 0.7978846
    %v2085 = vmul.f32 %v2077, 0.7978846
    %v2086 = vtanh.pop %v2078
    %v2087 = vtanh.pop %v2079
    %v2088 = vtanh.pop %v2080
    %v2089 = vtanh.pop %v2081
    %v2090 = vtanh.pop %v2082
    %v2091 = vtanh.pop %v2083
    %v2092 = vtanh.pop %v2084
    %v2093 = vtanh.pop %v2085
    %v2094 = vadd.f32 %v2086, 1.0
    %v2095 = vadd.f32 %v2087, 1.0
    %v2096 = vadd.f32 %v2088, 1.0
    %v2097 = vadd.f32 %v2089, 1.0
    %v2098 = vadd.f32 %v2090, 1.0
    %v2099 = vadd.f32 %v2091, 1.0
    %v2100 = vadd.f32 %v2092, 1.0
    %v2101 = vadd.f32 %v2093, 1.0
    %v2102 = vmul.f32 %v2094, 0.5
    %v2103 = vmul.f32 %v2095, 0.5
    %v2104 = vmul.f32 %v2096, 0.5
    %v2105 = vmul.f32 %v2097, 0.5
    %v2106 = vmul.f32 %v2098, 0.5
    %v2107 = vmul.f32 %v2099, 0.5
    %v2108 = vmul.f32 %v2100, 0.5
    %v2109 = vmul.f32 %v2101, 0.5
    %v2110 = vmul.f32 %v2000, %v2102
    %v2111 = vmul.f32 %v2014, %v2103
    %v2112 = vmul.f32 %v2028, %v2104
    %v2113 = vmul.f32 %v2042, %v2105
    %v2114 = vmul.f32 %v2002, %v2106
    %v2115 = vmul.f32 %v2016, %v2107
    %v2116 = vmul.f32 %v2030, %v2108
    %v2117 = vmul.f32 %v2044, %v2109
    %v2118 = vpack.c.bf16 %v2114, %v2110
    %v2119 = vpack.c.bf16 %v2115, %v2111
    %v2120 = vpack.c.bf16 %v2116, %v2112
    %v2121 = vpack.c.bf16 %v2117, %v2113
    %v2122 = vld [vmem:[#allocation23] sm:$0xf]
    %v2123 = vld [vmem:[#allocation23 + $0x4] sm:$0xf]
    %v2124 = vld [vmem:[#allocation23 + $0x8] sm:$0xf]
    %v2125 = vld [vmem:[#allocation23 + $0xc] sm:$0xf]
    %v2126 = vld [vmem:[#allocation23 + $0x10] sm:$0xf]
    %v2127 = vld [vmem:[#allocation23 + $0x14] sm:$0xf]
    %v2128 = vld [vmem:[#allocation23 + $0x18] sm:$0xf]
    %v2129 = vld [vmem:[#allocation23 + $0x1c] sm:$0xf]
    %v2130 = vld [vmem:[#allocation23 + $0x20] sm:$0xf]
    %v2131 = vld [vmem:[#allocation23 + $0x24] sm:$0xf]
    %v2132 = vld [vmem:[#allocation23 + $0x28] sm:$0xf]
    %v2133 = vld [vmem:[#allocation23 + $0x2c] sm:$0xf]
    %v2134 = vld [vmem:[#allocation23 + $0x30] sm:$0xf]
    %v2135 = vld [vmem:[#allocation23 + $0x34] sm:$0xf]
    %v2136 = vld [vmem:[#allocation23 + $0x38] sm:$0xf]
    %v2137 = vld [vmem:[#allocation23 + $0x3c] sm:$0xf]
    %v2138 = vld [vmem:[#allocation23 + $0x40] sm:$0xf]
    %v2139 = vld [vmem:[#allocation23 + $0x44] sm:$0xf]
    %v2140 = vld [vmem:[#allocation23 + $0x48] sm:$0xf]
    %v2141 = vld [vmem:[#allocation23 + $0x4c] sm:$0xf]
    %v2142 = vld [vmem:[#allocation23 + $0x50] sm:$0xf]
    %v2143 = vld [vmem:[#allocation23 + $0x54] sm:$0xf]
    %v2144 = vld [vmem:[#allocation23 + $0x58] sm:$0xf]
    %v2145 = vld [vmem:[#allocation23 + $0x5c] sm:$0xf]
    %v2146 = vld [vmem:[#allocation23 + $0x60] sm:$0xf]
    %v2147 = vld [vmem:[#allocation23 + $0x64] sm:$0xf]
    %v2148 = vld [vmem:[#allocation23 + $0x68] sm:$0xf]
    %v2149 = vld [vmem:[#allocation23 + $0x6c] sm:$0xf]
    %v2150 = vld [vmem:[#allocation23 + $0x70] sm:$0xf]
    %v2151 = vld [vmem:[#allocation23 + $0x74] sm:$0xf]
    %v2152 = vld [vmem:[#allocation23 + $0x78] sm:$0xf]
    %v2153 = vld [vmem:[#allocation23 + $0x7c] sm:$0xf]
    %v2154 = vld [vmem:[#allocation23 + $0x80] sm:$0xf]
    %v2155 = vld [vmem:[#allocation23 + $0x84] sm:$0xf]
    %v2156 = vld [vmem:[#allocation23 + $0x88] sm:$0xf]
    %v2157 = vld [vmem:[#allocation23 + $0x8c] sm:$0xf]
    %v2158 = vld [vmem:[#allocation23 + $0x90] sm:$0xf]
    %v2159 = vld [vmem:[#allocation23 + $0x94] sm:$0xf]
    %v2160 = vld [vmem:[#allocation23 + $0x98] sm:$0xf]
    %v2161 = vld [vmem:[#allocation23 + $0x9c] sm:$0xf]
    %v2162 = vld [vmem:[#allocation23 + $0xa0] sm:$0xf]
    %v2163 = vld [vmem:[#allocation23 + $0xa4] sm:$0xf]
    %v2164 = vld [vmem:[#allocation23 + $0xa8] sm:$0xf]
    %v2165 = vld [vmem:[#allocation23 + $0xac] sm:$0xf]
    %v2166 = vld [vmem:[#allocation23 + $0xb0] sm:$0xf]
    %v2167 = vld [vmem:[#allocation23 + $0xb4] sm:$0xf]
    %v2168 = vld [vmem:[#allocation23 + $0xb8] sm:$0xf]
    %v2169 = vld [vmem:[#allocation23 + $0xbc] sm:$0xf]
    %v2170 = vld [vmem:[#allocation23 + $0xc0] sm:$0xf]
    %v2171 = vld [vmem:[#allocation23 + $0xc4] sm:$0xf]
    %v2172 = vld [vmem:[#allocation23 + $0xc8] sm:$0xf]
    %v2173 = vld [vmem:[#allocation23 + $0xcc] sm:$0xf]
    %v2174 = vld [vmem:[#allocation23 + $0xd0] sm:$0xf]
    %v2175 = vld [vmem:[#allocation23 + $0xd4] sm:$0xf]
    %v2176 = vld [vmem:[#allocation23 + $0xd8] sm:$0xf]
    %v2177 = vld [vmem:[#allocation23 + $0xdc] sm:$0xf]
    %v2178 = vld [vmem:[#allocation23 + $0xe0] sm:$0xf]
    %v2179 = vld [vmem:[#allocation23 + $0xe4] sm:$0xf]
    %v2180 = vld [vmem:[#allocation23 + $0xe8] sm:$0xf]
    %v2181 = vld [vmem:[#allocation23 + $0xec] sm:$0xf]
    %v2182 = vld [vmem:[#allocation23 + $0xf0] sm:$0xf]
    %v2183 = vld [vmem:[#allocation23 + $0xf4] sm:$0xf]
    %v2184 = vld [vmem:[#allocation23 + $0xf8] sm:$0xf]
    %v2185 = vld [vmem:[#allocation23 + $0xfc] sm:$0xf]
    %v2186 = vld [vmem:[%s18] sm:$0x1]
    %v2188 = vperm.slane %v2186, 0
    %v2254 = vunpack.c.l.b16 %v2122
    %v2255 = vunpack.c.l.b16 %v2123
    %v2256 = vunpack.c.l.b16 %v2124
    %v2257 = vunpack.c.l.b16 %v2125
    %v2258 = vunpack.c.l.b16 %v2126
    %v2259 = vunpack.c.l.b16 %v2127
    %v2260 = vunpack.c.l.b16 %v2128
    %v2261 = vunpack.c.l.b16 %v2129
    %v2262 = vunpack.c.l.b16 %v2130
    %v2263 = vunpack.c.l.b16 %v2131
    %v2264 = vunpack.c.l.b16 %v2132
    %v2265 = vunpack.c.l.b16 %v2133
    %v2266 = vunpack.c.l.b16 %v2134
    %v2267 = vunpack.c.l.b16 %v2135
    %v2268 = vunpack.c.l.b16 %v2136
    %v2269 = vunpack.c.l.b16 %v2137
    %v2270 = vunpack.c.l.b16 %v2138
    %v2271 = vunpack.c.l.b16 %v2139
    %v2272 = vunpack.c.l.b16 %v2140
    %v2273 = vunpack.c.l.b16 %v2141
    %v2274 = vunpack.c.l.b16 %v2142
    %v2275 = vunpack.c.l.b16 %v2143
    %v2276 = vunpack.c.l.b16 %v2144
    %v2277 = vunpack.c.l.b16 %v2145
    %v2278 = vunpack.c.l.b16 %v2146
    %v2279 = vunpack.c.l.b16 %v2147
    %v2280 = vunpack.c.l.b16 %v2148
    %v2281 = vunpack.c.l.b16 %v2149
    %v2282 = vunpack.c.l.b16 %v2150
    %v2283 = vunpack.c.l.b16 %v2151
    %v2284 = vunpack.c.l.b16 %v2152
    %v2285 = vunpack.c.l.b16 %v2153
    %v2286 = vunpack.c.l.b16 %v2154
    %v2287 = vunpack.c.l.b16 %v2155
    %v2288 = vunpack.c.l.b16 %v2156
    %v2289 = vunpack.c.l.b16 %v2157
    %v2290 = vunpack.c.l.b16 %v2158
    %v2291 = vunpack.c.l.b16 %v2159
    %v2292 = vunpack.c.l.b16 %v2160
    %v2293 = vunpack.c.l.b16 %v2161
    %v2294 = vunpack.c.l.b16 %v2162
    %v2295 = vunpack.c.l.b16 %v2163
    %v2296 = vunpack.c.l.b16 %v2164
    %v2297 = vunpack.c.l.b16 %v2165
    %v2298 = vunpack.c.l.b16 %v2166
    %v2299 = vunpack.c.l.b16 %v2167
    %v2300 = vunpack.c.l.b16 %v2168
    %v2301 = vunpack.c.l.b16 %v2169
    %v2302 = vunpack.c.l.b16 %v2170
    %v2303 = vunpack.c.l.b16 %v2171
    %v2304 = vunpack.c.l.b16 %v2172
    %v2305 = vunpack.c.l.b16 %v2173
    %v2306 = vunpack.c.l.b16 %v2174
    %v2307 = vunpack.c.l.b16 %v2175
    %v2308 = vunpack.c.l.b16 %v2176
    %v2309 = vunpack.c.l.b16 %v2177
    %v2310 = vunpack.c.l.b16 %v2178
    %v2311 = vunpack.c.l.b16 %v2179
    %v2312 = vunpack.c.l.b16 %v2180
    %v2313 = vunpack.c.l.b16 %v2181
    %v2314 = vunpack.c.l.b16 %v2182
    %v2315 = vunpack.c.l.b16 %v2183
    %v2316 = vunpack.c.l.b16 %v2184
    %v2317 = vunpack.c.l.b16 %v2185
    %v2318 = vpack.c.b16 %v2255, %v2254
    %v2319 = vpack.c.b16 %v2257, %v2256
    %v2320 = vpack.c.b16 %v2259, %v2258
    %v2321 = vpack.c.b16 %v2261, %v2260
    %v2322 = vpack.c.b16 %v2263, %v2262
    %v2323 = vpack.c.b16 %v2265, %v2264
    %v2324 = vpack.c.b16 %v2267, %v2266
    %v2325 = vpack.c.b16 %v2269, %v2268
    %v2326 = vpack.c.b16 %v2271, %v2270
    %v2327 = vpack.c.b16 %v2273, %v2272
    %v2328 = vpack.c.b16 %v2275, %v2274
    %v2329 = vpack.c.b16 %v2277, %v2276
    %v2330 = vpack.c.b16 %v2279, %v2278
    %v2331 = vpack.c.b16 %v2281, %v2280
    %v2332 = vpack.c.b16 %v2283, %v2282
    %v2333 = vpack.c.b16 %v2285, %v2284
    %v2334 = vpack.c.b16 %v2287, %v2286
    %v2335 = vpack.c.b16 %v2289, %v2288
    %v2336 = vpack.c.b16 %v2291, %v2290
    %v2337 = vpack.c.b16 %v2293, %v2292
    %v2338 = vpack.c.b16 %v2295, %v2294
    %v2339 = vpack.c.b16 %v2297, %v2296
    %v2340 = vpack.c.b16 %v2299, %v2298
    %v2341 = vpack.c.b16 %v2301, %v2300
    %v2342 = vpack.c.b16 %v2303, %v2302
    %v2343 = vpack.c.b16 %v2305, %v2304
    %v2344 = vpack.c.b16 %v2307, %v2306
    %v2345 = vpack.c.b16 %v2309, %v2308
    %v2346 = vpack.c.b16 %v2311, %v2310
    %v2347 = vpack.c.b16 %v2313, %v2312
    %v2348 = vpack.c.b16 %v2315, %v2314
    %v2349 = vpack.c.b16 %v2317, %v2316
    %2382 = vmatpush.bf16.msra.mxu0 %v2325
    %2383 = vmatpush.bf16.msra.mxu0 %v2324
    %2384 = vmatpush.bf16.msra.mxu0 %v2323
    %2385 = vmatpush.bf16.msra.mxu0 %v2322
    %2386 = vmatpush.bf16.msra.mxu0 %v2321
    %2387 = vmatpush.bf16.msra.mxu0 %v2320
    %2388 = vmatpush.bf16.msra.mxu0 %v2319
    %2389 = vmatpush.bf16.msra.mxu0 %v2318
    %2390 = vmatmul.bf16.gmra.mxu0 %v2118
    %v2391 = vpop.f32.mrf.mxu0
    %v2392 = vadd.f32 %v2188, %v2391
    %v2393 = vpop.f32.mrf.mxu0
    %v2394 = vadd.f32 %v2188, %v2393
    %2395 = vdwg.mxu0
    %2396 = vmatpush.bf16.msra.mxu0 %v2333
    %2397 = vmatpush.bf16.msra.mxu0 %v2332
    %2398 = vmatpush.bf16.msra.mxu0 %v2331
    %2399 = vmatpush.bf16.msra.mxu0 %v2330
    %2400 = vmatpush.bf16.msra.mxu0 %v2329
    %2401 = vmatpush.bf16.msra.mxu0 %v2328
    %2402 = vmatpush.bf16.msra.mxu0 %v2327
    %2403 = vmatpush.bf16.msra.mxu0 %v2326
    %2404 = vmatmul.bf16.gmra.mxu0 %v2119
    %v2405 = vpop.f32.mrf.mxu0
    %v2406 = vadd.f32 %v2392, %v2405
    %v2407 = vpop.f32.mrf.mxu0
    %v2408 = vadd.f32 %v2394, %v2407
    %2409 = vdwg.mxu0
    %2410 = vmatpush.bf16.msra.mxu0 %v2341
    %2411 = vmatpush.bf16.msra.mxu0 %v2340
    %2412 = vmatpush.bf16.msra.mxu0 %v2339
    %2413 = vmatpush.bf16.msra.mxu0 %v2338
    %2414 = vmatpush.bf16.msra.mxu0 %v2337
    %2415 = vmatpush.bf16.msra.mxu0 %v2336
    %2416 = vmatpush.bf16.msra.mxu0 %v2335
    %2417 = vmatpush.bf16.msra.mxu0 %v2334
    %2418 = vmatmul.bf16.gmra.mxu0 %v2120
    %v2419 = vpop.f32.mrf.mxu0
    %v2420 = vadd.f32 %v2406, %v2419
    %v2421 = vpop.f32.mrf.mxu0
    %v2422 = vadd.f32 %v2408, %v2421
    %2423 = vdwg.mxu0
    %2424 = vmatpush.bf16.msra.mxu0 %v2349
    %2425 = vmatpush.bf16.msra.mxu0 %v2348
    %2426 = vmatpush.bf16.msra.mxu0 %v2347
    %2427 = vmatpush.bf16.msra.mxu0 %v2346
    %2428 = vmatpush.bf16.msra.mxu0 %v2345
    %2429 = vmatpush.bf16.msra.mxu0 %v2344
    %2430 = vmatpush.bf16.msra.mxu0 %v2343
    %2431 = vmatpush.bf16.msra.mxu0 %v2342
    %2432 = vmatmul.bf16.gmra.mxu0 %v2121
    %v2433 = vpop.f32.mrf.mxu0
    %v2434 = vadd.f32 %v2420, %v2433
    %v2435 = vpop.f32.mrf.mxu0
    %v2436 = vadd.f32 %v2422, %v2435
    %2437 = vdwg.mxu0
    %v2438 = vadd.f32 %v2434, %v1733
    %v2439 = vadd.f32 %v2436, %v1734
    %2440 = vst [vmem:[#allocation24] sm:$0xff] %v2438
    %2441 = vst [vmem:[#allocation24 + $0x8] sm:$0xff] %v2439
    // Predicated region
    $region130: #{tpu_custom_call.1} parent=1 // pred_check
      _
    $region131: #{tpu_custom_call.1} parent=1 // pred_check_branch
      %2443 = sbr.rel (0) target = $region133
    $region132: #{tpu_custom_call.1} parent=1 // pred_region
      %2445 = vsyncadd [#allocation5], 0
      %s2446 = sshll.u32 [#allocation24], 4
      %s2447 = int_to_ptr.vmem [resolvable:$true] %s2446
      %s2448 = sshll.u32 %s19, 4
      %s2449 = int_to_ptr.hbm [resolvable:$true] %s2448
      %2454 = dma.vmem_to_hbm [thread:$0]  %s2447, 256, %s2449, [#allocation5], 128, 128, 8
    $region133: #{tpu_custom_call.1} parent=1 // pred_fallthru
      _
    // Predicated region
    $region134: #{tpu_custom_call.1} parent=1 // pred_check
      _
    $region135: #{tpu_custom_call.1} parent=1 // pred_check_branch
      %2456 = sbr.rel (0) target = $region137
    $region136: #{tpu_custom_call.1} parent=1 // pred_region
      %2458 = dma.done [#allocation5], 256
    $region137: #{tpu_custom_call.1} parent=1 // pred_fallthru
      _
    %2459 = vsyncpa [#allocation4], 1
    %2460 = vsyncpa [#allocation7], 1
    %2461 = vsyncpa [#allocation10], 1
    %2462 = vsyncpa [#allocation13], 1
    %2463 = vsyncpa [#allocation16], 1
    %2464 = vsyncpa [#allocation19], 1
    %2465 = vsyncpa [#allocation22], 1
    %2466 = vsyncpa [#allocation5], 1

</llo_original>
